<compile_context>
chip_gen: v7x
topology: tpu7x:2x2x1
jax: 0.10.0
libtpu: 0.0.40
codegen_flags: <defaults>
</compile_context>

<pallas_src>
import functools

import numpy as np
import jax
import jax.numpy as jnp
from jax.experimental import pallas as pl
from jax.experimental.pallas import tpu as pltpu


# ----------------------------------------------------------------------------
# Elementwise helpers (run inside the kernel; f32 math).
# ----------------------------------------------------------------------------
def _erf(z):
    # Abramowitz & Stegun 7.1.26 rational approximation of erf (max abs err ~1.5e-7);
    # the divide is routed to the EUP via approximate reciprocal, exp also rides the EUP.
    a1, a2, a3, a4, a5 = 0.254829592, -0.284496736, 1.421413741, -1.453152027, 1.061405429
    p = 0.3275911
    s = jnp.where(z >= 0.0, 1.0, -1.0)
    za = jnp.abs(z)
    t = pl.reciprocal(1.0 + p * za, approx=True)
    poly = ((((a5 * t + a4) * t + a3) * t + a2) * t + a1) * t
    return s * (1.0 - poly * jnp.exp(-za * za))


def _gelu(x):
    # torch.nn.GELU() default: exact erf-based GELU (approximated as above).
    return 0.5 * x * (1.0 + _erf(x * 0.7071067811865476))


# ----------------------------------------------------------------------------
# Fused head kernel (per batch element):
#   conv1(1x1, BN folded, GELU) on all 9 taps as ONE matmul
#   -> conv2(3x3/s2/p1 as 9 accumulating matmuls) + bias(BN shift + padding fix) + GELU
#   -> spatial mean pool -> 3-layer MLP (GELU after each).
# ----------------------------------------------------------------------------
def _head_kernel(x_ref, w1_ref, s1_ref, w2_ref, b2_ref,
                 fw1_ref, fb1_ref, fw2_ref, fb2_ref, fw3_ref, fb3_ref,
                 o_ref):
    n_tap = w2_ref.shape[0]          # 9 conv taps, (kh, kw) row-major
    hw = b2_ref.shape[0]             # Ho*Wo output positions
    c2 = w2_ref.shape[2]             # 512

    # conv1 (1x1) + BN (folded) + GELU for all taps in one MXU matmul, M = 9*Ho*Wo.
    y1 = jnp.dot(x_ref[0], w1_ref[...], preferred_element_type=jnp.float32) + s1_ref[...]
    y1 = _gelu(y1).astype(jnp.bfloat16)                     # (9*hw, 128)

    # conv2 (3x3, stride 2, pad 1) as 9 accumulating MXU matmuls (static unrolled taps).
    acc = jnp.zeros((hw, c2), jnp.float32)
    for t in range(n_tap):
        acc = acc + jnp.dot(y1[t * hw:(t + 1) * hw, :], w2_ref[t],
                            preferred_element_type=jnp.float32)

    # b2 = BN shift - spurious zero-padding contribution (precomputed host-side).
    y2 = _gelu(acc + b2_ref[...])                           # (hw, 512) f32
    pooled = jnp.mean(y2, axis=0, keepdims=True)            # (1, 512) == AdaptiveAvgPool2d(1)

    h = _gelu(jnp.dot(pooled.astype(jnp.bfloat16), fw1_ref[...],
                      preferred_element_type=jnp.float32) + fb1_ref[...])
    h = _gelu(jnp.dot(h.astype(jnp.bfloat16), fw2_ref[...],
                      preferred_element_type=jnp.float32) + fb2_ref[...])
    y = _gelu(jnp.dot(h.astype(jnp.bfloat16), fw3_ref[...],
                      preferred_element_type=jnp.float32) + fb3_ref[...])
    o_ref[0] = y.astype(o_ref.dtype)                        # (1, NCP) lane-dense store


# ----------------------------------------------------------------------------
# Wrapper glue (plain JAX): tap-major patch gather on the raw tokens, BN folding,
# zero-padding correction.
# ----------------------------------------------------------------------------
def build_patches(x_tokens, H, W):
    """Spatial gather for a 3x3/stride-2/pad-1 conv done on the raw tokens.
    Output (B, 9*Ho*Wo, C), tap-major in (kh, kw) row-major order."""
    B, N, C = x_tokens.shape
    assert N == H * W
    Ho, Wo = (H + 1) // 2, (W + 1) // 2
    x = x_tokens.reshape(B, H, W, C)
    xp = jnp.pad(x, ((0, 0), (1, 1), (1, 1), (0, 0)))
    taps = []
    for kh in range(3):
        for kw in range(3):
            taps.append(xp[:, kh:kh + 2 * Ho - 1:2, kw:kw + 2 * Wo - 1:2, :])
    patches = jnp.stack(taps, axis=1)                 # (B, 9, Ho, Wo, C)
    return patches.reshape(B, 9 * Ho * Wo, C)


def fold_bn(conv_bias, gamma, beta, mean, var, eps=1e-5):
    # y = (x@w + b - mean) * gamma/sqrt(var+eps) + beta == x@(w*scale) + shift
    scale = gamma / jnp.sqrt(var + eps)
    shift = (conv_bias - mean) * scale + beta
    return scale, shift


def _pad_cols(a, n):
    return jnp.pad(a, [(0, 0)] * (a.ndim - 1) + [(0, n - a.shape[-1])])


def _conv2_bias(shift1p, w2p, shift2, H, W):
    """conv2's additive per-position bias = BN shift minus the spurious contribution that
    the kernel produces at zero-padded taps (it sees gelu(shift1) there, the module sees 0)."""
    Ho, Wo = (H + 1) // 2, (W + 1) // 2
    masks = []
    for kh in range(3):
        for kw in range(3):
            r = 2 * np.arange(Ho) + kh - 1
            c = 2 * np.arange(Wo) + kw - 1
            bad = ((r < 0) | (r >= H))[:, None] | ((c < 0) | (c >= W))[None, :]
            masks.append(bad.reshape(-1))
    pad_mask = jnp.asarray(np.stack(masks, 0), jnp.float32)          # (9, Ho*Wo)
    y1_pad = jax.nn.gelu(shift1p.reshape(-1), approximate=False)
    y1_pad = y1_pad.astype(jnp.bfloat16).astype(jnp.float32)         # match kernel's bf16 cast
    v = jnp.einsum('c,tcd->td', y1_pad, w2p.astype(jnp.float32))     # (9, 512)
    correction = pad_mask.T @ v                                      # (Ho*Wo, 512)
    return shift2.reshape(1, -1) - correction                        # (Ho*Wo, 512)


def classification_head_forward(x_tokens, kp, H, W, class_num):
    B, N, C = x_tokens.shape
    Ho, Wo = (H + 1) // 2, (W + 1) // 2
    HoWo = Ho * Wo
    patches = build_patches(x_tokens, H, W).astype(jnp.bfloat16)     # (B, 9*HoWo, C)

    CP = kp["w1"].shape[1]
    C2 = kp["w2"].shape[2]
    D1 = kp["fw1"].shape[1]
    D2 = kp["fw2"].shape[1]
    NCP = kp["fw3"].shape[1]

    args = (patches, kp["w1"], kp["shift1"], kp["w2"], kp["bias2"],
            kp["fw1"], kp["fb1"], kp["fw2"], kp["fb2"], kp["fw3"], kp["fb3"])
    flops = 2 * B * (9 * HoWo * (C * CP + CP * C2) + C2 * D1 + D1 * D2 + D2 * NCP)
    trans = 2 * B * (9 * HoWo * CP + HoWo * C2 + D1 + D2 + NCP)
    bytes_accessed = int(sum(int(a.size) * a.dtype.itemsize for a in args) + B * NCP * 4)

    out = pl.pallas_call(
        _head_kernel,
        out_shape=jax.ShapeDtypeStruct((B, 1, NCP), jnp.float32),
        grid=(B,),
        in_specs=[
            pl.BlockSpec((1, 9 * HoWo, C), lambda b: (b, 0, 0)),  # tap-major patches
            pl.BlockSpec((C, CP), lambda b: (0, 0)),              # conv1 weight (BN folded)
            pl.BlockSpec((1, CP), lambda b: (0, 0)),              # conv1 shift
            pl.BlockSpec((9, CP, C2), lambda b: (0, 0, 0)),       # conv2 weight per tap
            pl.BlockSpec((HoWo, C2), lambda b: (0, 0)),           # conv2 bias (shift - pad fix)
            pl.BlockSpec((C2, D1), lambda b: (0, 0)),
            pl.BlockSpec((1, D1), lambda b: (0, 0)),
            pl.BlockSpec((D1, D2), lambda b: (0, 0)),
            pl.BlockSpec((1, D2), lambda b: (0, 0)),
            pl.BlockSpec((D2, NCP), lambda b: (0, 0)),
            pl.BlockSpec((1, NCP), lambda b: (0, 0)),
        ],
        out_specs=pl.BlockSpec((1, 1, NCP), lambda b: (b, 0, 0)),
        compiler_params=pltpu.CompilerParams(dimension_semantics=("parallel",)),
        cost_estimate=pl.CostEstimate(flops=flops, transcendentals=trans,
                                      bytes_accessed=bytes_accessed),
    )(*args)
    return out.reshape(B, NCP)[:, :class_num]


# ----------------------------------------------------------------------------
# Synthetic torch-equivalent parameters (f32) + kernel-ready (folded/padded/bf16) params.
# ----------------------------------------------------------------------------
def make_raw_params(key, embedding_dim, class_num):
    ks = jax.random.split(key, 18)
    f32 = jnp.float32
    nrm = lambda k, shape, s: s * jax.random.normal(k, shape, f32)
    return dict(
        # convblock[0]: Conv2d(embedding_dim, 64, 1, 1); torch weight (64,C,1,1) -> (C,64)
        w1=nrm(ks[0], (embedding_dim, 64), embedding_dim ** -0.5),
        b1=nrm(ks[1], (64,), 0.1),
        g1=1.0 + nrm(ks[2], (64,), 0.1), be1=nrm(ks[3], (64,), 0.1),
        m1=nrm(ks[4], (64,), 0.05), v1=1.0 + 0.1 * jax.random.uniform(ks[5], (64,), f32),
        # convblock[3]: Conv2d(64, 512, 3, 2, 1); torch weight (O,I,KH,KW) -> HWIO (3,3,64,512)
        w2=nrm(ks[6], (3, 3, 64, 512), (9 * 64) ** -0.5),
        b2=nrm(ks[7], (512,), 0.1),
        g2=1.0 + nrm(ks[8], (512,), 0.1), be2=nrm(ks[9], (512,), 0.1),
        m2=nrm(ks[10], (512,), 0.05), v2=1.0 + 0.1 * jax.random.uniform(ks[11], (512,), f32),
        # classifier Linear weights stored as (in, out) == torch weight.T
        fw1=nrm(ks[12], (512, 1024), 512 ** -0.5), fb1=nrm(ks[13], (1024,), 0.05),
        fw2=nrm(ks[14], (1024, 1024), 1024 ** -0.5), fb2=nrm(ks[15], (1024,), 0.05),
        fw3=nrm(ks[16], (1024, class_num), 1024 ** -0.5), fb3=nrm(ks[17], (class_num,), 0.05),
    )


def prepare_kernel_params(raw, H, W, class_num):
    CP = 128                                            # conv1 channels padded 64 -> 128
    NCP = max(128, -(-class_num // 128) * 128)          # logits padded to multiple of 128

    scale1, shift1 = fold_bn(raw["b1"], raw["g1"], raw["be1"], raw["m1"], raw["v1"])
    w1p = _pad_cols(raw["w1"] * scale1[None, :], CP).astype(jnp.bfloat16)      # (C, 128)
    shift1p = _pad_cols(shift1[None, :], CP)                                   # (1, 128)

    scale2, shift2 = fold_bn(raw["b2"], raw["g2"], raw["be2"], raw["m2"], raw["v2"])
    w2f = raw["w2"] * scale2[None, None, None, :]                              # (3,3,64,512)
    w2p = jnp.zeros((3, 3, CP, 512), jnp.float32).at[:, :, :64, :].set(w2f)
    w2p = w2p.reshape(9, CP, 512).astype(jnp.bfloat16)                         # (9, 128, 512)
    bias2 = _conv2_bias(shift1p, w2p, shift2, H, W)                            # (HoWo, 512)

    return dict(
        w1=w1p, shift1=shift1p, w2=w2p, bias2=bias2,
        fw1=raw["fw1"].astype(jnp.bfloat16), fb1=raw["fb1"].reshape(1, -1),
        fw2=raw["fw2"].astype(jnp.bfloat16), fb2=raw["fb2"].reshape(1, -1),
        fw3=_pad_cols(raw["fw3"], NCP).astype(jnp.bfloat16),
        fb3=_pad_cols(raw["fb3"].reshape(1, -1), NCP),
    )


# ----------------------------------------------------------------------------
# Pure-JAX f32 reference of the PyTorch head (eval mode) for validation.
# ----------------------------------------------------------------------------
def reference_head(x_tokens, raw, H, W):
    B, N, C = x_tokens.shape
    x = x_tokens.reshape(B, H, W, C)
    bn = lambda v, g, b, m, var: (v - m) * (g * jax.lax.rsqrt(var + 1e-5)) + b
    gelu = lambda v: jax.nn.gelu(v, approximate=False)
    y1 = gelu(bn(jnp.einsum('bhwc,co->bhwo', x, raw["w1"]) + raw["b1"],
                 raw["g1"], raw["be1"], raw["m1"], raw["v1"]))
    y2 = jax.lax.conv_general_dilated(
        y1, raw["w2"], window_strides=(2, 2), padding=((1, 1), (1, 1)),
        dimension_numbers=('NHWC', 'HWIO', 'NHWC')) + raw["b2"]
    y2 = gelu(bn(y2, raw["g2"], raw["be2"], raw["m2"], raw["v2"]))
    pooled = y2.mean(axis=(1, 2))
    h = gelu(pooled @ raw["fw1"] + raw["fb1"])
    h = gelu(h @ raw["fw2"] + raw["fb2"])
    return gelu(h @ raw["fw3"] + raw["fb3"])


if __name__ == "__main__":
    B, H, W = 2, 8, 8
    embedding_dim = 256          # model_size='small'
    class_num = 10

    key = jax.random.PRNGKey(0)
    k_par, k_x = jax.random.split(key)
    raw = make_raw_params(k_par, embedding_dim, class_num)
    kparams = prepare_kernel_params(raw, H, W, class_num)

    # Stand-in for SpectralSharedEncoder.encoder_forward output tokens.
    x_tokens = jax.random.normal(k_x, (B, H * W, embedding_dim), jnp.float32)
    wavelength = jnp.linspace(400.0, 1000.0, H * W)  # consumed only by the (untranslated) encoder

    fwd = jax.jit(functools.partial(classification_head_forward,
                                    H=H, W=W, class_num=class_num))
    out = fwd(x_tokens, kparams)
    jax.block_until_ready(out)
    assert out.shape == (B, class_num), out.shape
    assert bool(jnp.all(jnp.isfinite(out)))

    ref = reference_head(x_tokens, raw, H, W)
    err = float(jnp.max(jnp.abs(out - ref)))
    tol = 2e-2 + 5e-2 * float(jnp.max(jnp.abs(ref)))   # loose: bf16 matmul inputs vs f32 ref
    assert err <= tol, (err, tol)
    print("KERNEL_OK")
</pallas_src>

<mosaic_0001>
module attributes {stable_mosaic.version = 11 : i64} {
  func.func @_head_kernel(%arg0: i32, %arg1: memref<1x144x256xbf16, #tpu.memory_space<vmem>>, %arg2: memref<256x128xbf16, #tpu.memory_space<vmem>>, %arg3: memref<1x128xf32, #tpu.memory_space<vmem>>, %arg4: memref<9x128x512xbf16, #tpu.memory_space<vmem>>, %arg5: memref<16x512xf32, #tpu.memory_space<vmem>>, %arg6: memref<512x1024xbf16, #tpu.memory_space<vmem>>, %arg7: memref<1x1024xf32, #tpu.memory_space<vmem>>, %arg8: memref<1024x1024xbf16, #tpu.memory_space<vmem>>, %arg9: memref<1x1024xf32, #tpu.memory_space<vmem>>, %arg10: memref<1024x128xbf16, #tpu.memory_space<vmem>>, %arg11: memref<1x128xf32, #tpu.memory_space<vmem>>, %arg12: memref<1x1x128xf32, #tpu.memory_space<vmem>>) attributes {dimension_semantics = [#tpu.dimension_semantics<parallel>], iteration_bounds = array<i64: 2>, scalar_prefetch = 0 : i64, scratch_operands = 0 : i64, tpu.core_type = #tpu.core_type<tc>, window_params = [{transform_indices = @transform_0, window_bounds = array<i64: 1, 144, 256>}, {pipeline_mode = #tpu.pipeline_mode<synchronous>, transform_indices = @transform_1, window_bounds = array<i64: 256, 128>}, {pipeline_mode = #tpu.pipeline_mode<synchronous>, transform_indices = @transform_2, window_bounds = array<i64: 1, 128>}, {pipeline_mode = #tpu.pipeline_mode<synchronous>, transform_indices = @transform_3, window_bounds = array<i64: 9, 128, 512>}, {pipeline_mode = #tpu.pipeline_mode<synchronous>, transform_indices = @transform_4, window_bounds = array<i64: 16, 512>}, {pipeline_mode = #tpu.pipeline_mode<synchronous>, transform_indices = @transform_5, window_bounds = array<i64: 512, 1024>}, {pipeline_mode = #tpu.pipeline_mode<synchronous>, transform_indices = @transform_6, window_bounds = array<i64: 1, 1024>}, {pipeline_mode = #tpu.pipeline_mode<synchronous>, transform_indices = @transform_7, window_bounds = array<i64: 1024, 1024>}, {pipeline_mode = #tpu.pipeline_mode<synchronous>, transform_indices = @transform_8, window_bounds = array<i64: 1, 1024>}, {pipeline_mode = #tpu.pipeline_mode<synchronous>, transform_indices = @transform_9, window_bounds = array<i64: 1024, 128>}, {pipeline_mode = #tpu.pipeline_mode<synchronous>, transform_indices = @transform_10, window_bounds = array<i64: 1, 128>}, {transform_indices = @transform_11, window_bounds = array<i64: 1, 1, 128>}]} {
    %c0 = arith.constant 0 : index
    %c0_0 = arith.constant 0 : index
    %c0_1 = arith.constant 0 : index
    %0 = vector.load %arg1[%c0, %c0_0, %c0_1] : memref<1x144x256xbf16, #tpu.memory_space<vmem>>, vector<1x144x256xbf16>
    %1 = vector.shape_cast %0 : vector<1x144x256xbf16> to vector<144x256xbf16>
    %c0_2 = arith.constant 0 : index
    %c0_3 = arith.constant 0 : index
    %2 = vector.load %arg2[%c0_2, %c0_3] : memref<256x128xbf16, #tpu.memory_space<vmem>>, vector<256x128xbf16>
    %cst = arith.constant dense<0.000000e+00> : vector<144x128xf32>
    %3 = tpu.matmul %1, %2, %cst {dimension_numbers = #tpu.dot_dimension_numbers<[1], [0], [0], [1], [0, 0, 1, 1], [], []>} : vector<144x256xbf16>, vector<256x128xbf16>, vector<144x128xf32> -> vector<144x128xf32>
    %c0_4 = arith.constant 0 : index
    %c0_5 = arith.constant 0 : index
    %4 = vector.load %arg3[%c0_4, %c0_5] : memref<1x128xf32, #tpu.memory_space<vmem>>, vector<1x128xf32>
    %5 = vector.broadcast %4 : vector<1x128xf32> to vector<144x128xf32>
    %6 = arith.addf %3, %5 : vector<144x128xf32>
    %cst_6 = arith.constant 5.000000e-01 : f32
    %7 = vector.broadcast %cst_6 : f32 to vector<144x128xf32>
    %8 = arith.mulf %7, %6 : vector<144x128xf32>
    %cst_7 = arith.constant 0.707106769 : f32
    %9 = vector.broadcast %cst_7 : f32 to vector<144x128xf32>
    %10 = arith.mulf %6, %9 : vector<144x128xf32>
    %cst_8 = arith.constant 0.000000e+00 : f32
    %11 = vector.broadcast %cst_8 : f32 to vector<144x128xf32>
    %12 = arith.cmpf oge, %10, %11 : vector<144x128xf32>
    %cst_9 = arith.constant 1.000000e+00 : f32
    %cst_10 = arith.constant -1.000000e+00 : f32
    %13 = vector.broadcast %cst_9 : f32 to vector<144x128xf32>
    %14 = vector.broadcast %cst_10 : f32 to vector<144x128xf32>
    %15 = arith.select %12, %13, %14 : vector<144x128xi1>, vector<144x128xf32>
    %16 = math.absf %10 : vector<144x128xf32>
    %cst_11 = arith.constant 0.327591091 : f32
    %17 = vector.broadcast %cst_11 : f32 to vector<144x128xf32>
    %18 = arith.mulf %17, %16 : vector<144x128xf32>
    %cst_12 = arith.constant 1.000000e+00 : f32
    %19 = vector.broadcast %cst_12 : f32 to vector<144x128xf32>
    %20 = arith.addf %19, %18 : vector<144x128xf32>
    %21 = tpu.reciprocal %20 {approx = true} : vector<144x128xf32> -> vector<144x128xf32>
    %cst_13 = arith.constant 1.06140542 : f32
    %22 = vector.broadcast %cst_13 : f32 to vector<144x128xf32>
    %23 = arith.mulf %22, %21 : vector<144x128xf32>
    %cst_14 = arith.constant -1.45315206 : f32
    %24 = vector.broadcast %cst_14 : f32 to vector<144x128xf32>
    %25 = arith.addf %23, %24 : vector<144x128xf32>
    %26 = arith.mulf %25, %21 : vector<144x128xf32>
    %cst_15 = arith.constant 1.42141378 : f32
    %27 = vector.broadcast %cst_15 : f32 to vector<144x128xf32>
    %28 = arith.addf %26, %27 : vector<144x128xf32>
    %29 = arith.mulf %28, %21 : vector<144x128xf32>
    %cst_16 = arith.constant -0.284496725 : f32
    %30 = vector.broadcast %cst_16 : f32 to vector<144x128xf32>
    %31 = arith.addf %29, %30 : vector<144x128xf32>
    %32 = arith.mulf %31, %21 : vector<144x128xf32>
    %cst_17 = arith.constant 0.254829586 : f32
    %33 = vector.broadcast %cst_17 : f32 to vector<144x128xf32>
    %34 = arith.addf %32, %33 : vector<144x128xf32>
    %35 = arith.mulf %34, %21 : vector<144x128xf32>
    %cst_18 = arith.constant 0.000000e+00 : f32
    %36 = vector.broadcast %cst_18 : f32 to vector<144x128xf32>
    %37 = arith.subf %36, %16 : vector<144x128xf32>
    %38 = arith.mulf %37, %16 : vector<144x128xf32>
    %39 = math.exp %38 : vector<144x128xf32>
    %40 = arith.mulf %35, %39 : vector<144x128xf32>
    %cst_19 = arith.constant 1.000000e+00 : f32
    %41 = vector.broadcast %cst_19 : f32 to vector<144x128xf32>
    %42 = arith.subf %41, %40 : vector<144x128xf32>
    %43 = arith.mulf %15, %42 : vector<144x128xf32>
    %cst_20 = arith.constant 1.000000e+00 : f32
    %44 = vector.broadcast %cst_20 : f32 to vector<144x128xf32>
    %45 = arith.addf %44, %43 : vector<144x128xf32>
    %46 = arith.mulf %8, %45 : vector<144x128xf32>
    %47 = arith.truncf %46 : vector<144x128xf32> to vector<144x128xbf16>
    %cst_21 = arith.constant 0.000000e+00 : f32
    %48 = vector.broadcast %cst_21 : f32 to vector<16x512xf32>
    %49 = vector.extract_strided_slice %47 {offsets = [0, 0], sizes = [16, 128], strides = [1, 1]} : vector<144x128xbf16> to vector<16x128xbf16>
    %c0_22 = arith.constant 0 : index
    %c0_23 = arith.constant 0 : index
    %c0_24 = arith.constant 0 : index
    %50 = vector.load %arg4[%c0_22, %c0_23, %c0_24] : memref<9x128x512xbf16, #tpu.memory_space<vmem>>, vector<1x128x512xbf16>
    %51 = vector.shape_cast %50 : vector<1x128x512xbf16> to vector<128x512xbf16>
    %cst_25 = arith.constant dense<0.000000e+00> : vector<16x512xf32>
    %52 = tpu.matmul %49, %51, %cst_25 {dimension_numbers = #tpu.dot_dimension_numbers<[1], [0], [0], [1], [0, 0, 1, 1], [], []>} : vector<16x128xbf16>, vector<128x512xbf16>, vector<16x512xf32> -> vector<16x512xf32>
    %53 = arith.addf %48, %52 : vector<16x512xf32>
    %54 = vector.extract_strided_slice %47 {offsets = [16, 0], sizes = [16, 128], strides = [1, 1]} : vector<144x128xbf16> to vector<16x128xbf16>
    %c1 = arith.constant 1 : index
    %c0_26 = arith.constant 0 : index
    %c0_27 = arith.constant 0 : index
    %55 = vector.load %arg4[%c1, %c0_26, %c0_27] : memref<9x128x512xbf16, #tpu.memory_space<vmem>>, vector<1x128x512xbf16>
    %56 = vector.shape_cast %55 : vector<1x128x512xbf16> to vector<128x512xbf16>
    %cst_28 = arith.constant dense<0.000000e+00> : vector<16x512xf32>
    %57 = tpu.matmul %54, %56, %cst_28 {dimension_numbers = #tpu.dot_dimension_numbers<[1], [0], [0], [1], [0, 0, 1, 1], [], []>} : vector<16x128xbf16>, vector<128x512xbf16>, vector<16x512xf32> -> vector<16x512xf32>
    %58 = arith.addf %53, %57 : vector<16x512xf32>
    %59 = vector.extract_strided_slice %47 {offsets = [32, 0], sizes = [16, 128], strides = [1, 1]} : vector<144x128xbf16> to vector<16x128xbf16>
    %c2 = arith.constant 2 : index
    %c0_29 = arith.constant 0 : index
    %c0_30 = arith.constant 0 : index
    %60 = vector.load %arg4[%c2, %c0_29, %c0_30] : memref<9x128x512xbf16, #tpu.memory_space<vmem>>, vector<1x128x512xbf16>
    %61 = vector.shape_cast %60 : vector<1x128x512xbf16> to vector<128x512xbf16>
    %cst_31 = arith.constant dense<0.000000e+00> : vector<16x512xf32>
    %62 = tpu.matmul %59, %61, %cst_31 {dimension_numbers = #tpu.dot_dimension_numbers<[1], [0], [0], [1], [0, 0, 1, 1], [], []>} : vector<16x128xbf16>, vector<128x512xbf16>, vector<16x512xf32> -> vector<16x512xf32>
    %63 = arith.addf %58, %62 : vector<16x512xf32>
    %64 = vector.extract_strided_slice %47 {offsets = [48, 0], sizes = [16, 128], strides = [1, 1]} : vector<144x128xbf16> to vector<16x128xbf16>
    %c3 = arith.constant 3 : index
    %c0_32 = arith.constant 0 : index
    %c0_33 = arith.constant 0 : index
    %65 = vector.load %arg4[%c3, %c0_32, %c0_33] : memref<9x128x512xbf16, #tpu.memory_space<vmem>>, vector<1x128x512xbf16>
    %66 = vector.shape_cast %65 : vector<1x128x512xbf16> to vector<128x512xbf16>
    %cst_34 = arith.constant dense<0.000000e+00> : vector<16x512xf32>
    %67 = tpu.matmul %64, %66, %cst_34 {dimension_numbers = #tpu.dot_dimension_numbers<[1], [0], [0], [1], [0, 0, 1, 1], [], []>} : vector<16x128xbf16>, vector<128x512xbf16>, vector<16x512xf32> -> vector<16x512xf32>
    %68 = arith.addf %63, %67 : vector<16x512xf32>
    %69 = vector.extract_strided_slice %47 {offsets = [64, 0], sizes = [16, 128], strides = [1, 1]} : vector<144x128xbf16> to vector<16x128xbf16>
    %c4 = arith.constant 4 : index
    %c0_35 = arith.constant 0 : index
    %c0_36 = arith.constant 0 : index
    %70 = vector.load %arg4[%c4, %c0_35, %c0_36] : memref<9x128x512xbf16, #tpu.memory_space<vmem>>, vector<1x128x512xbf16>
    %71 = vector.shape_cast %70 : vector<1x128x512xbf16> to vector<128x512xbf16>
    %cst_37 = arith.constant dense<0.000000e+00> : vector<16x512xf32>
    %72 = tpu.matmul %69, %71, %cst_37 {dimension_numbers = #tpu.dot_dimension_numbers<[1], [0], [0], [1], [0, 0, 1, 1], [], []>} : vector<16x128xbf16>, vector<128x512xbf16>, vector<16x512xf32> -> vector<16x512xf32>
    %73 = arith.addf %68, %72 : vector<16x512xf32>
    %74 = vector.extract_strided_slice %47 {offsets = [80, 0], sizes = [16, 128], strides = [1, 1]} : vector<144x128xbf16> to vector<16x128xbf16>
    %c5 = arith.constant 5 : index
    %c0_38 = arith.constant 0 : index
    %c0_39 = arith.constant 0 : index
    %75 = vector.load %arg4[%c5, %c0_38, %c0_39] : memref<9x128x512xbf16, #tpu.memory_space<vmem>>, vector<1x128x512xbf16>
    %76 = vector.shape_cast %75 : vector<1x128x512xbf16> to vector<128x512xbf16>
    %cst_40 = arith.constant dense<0.000000e+00> : vector<16x512xf32>
    %77 = tpu.matmul %74, %76, %cst_40 {dimension_numbers = #tpu.dot_dimension_numbers<[1], [0], [0], [1], [0, 0, 1, 1], [], []>} : vector<16x128xbf16>, vector<128x512xbf16>, vector<16x512xf32> -> vector<16x512xf32>
    %78 = arith.addf %73, %77 : vector<16x512xf32>
    %79 = vector.extract_strided_slice %47 {offsets = [96, 0], sizes = [16, 128], strides = [1, 1]} : vector<144x128xbf16> to vector<16x128xbf16>
    %c6 = arith.constant 6 : index
    %c0_41 = arith.constant 0 : index
    %c0_42 = arith.constant 0 : index
    %80 = vector.load %arg4[%c6, %c0_41, %c0_42] : memref<9x128x512xbf16, #tpu.memory_space<vmem>>, vector<1x128x512xbf16>
    %81 = vector.shape_cast %80 : vector<1x128x512xbf16> to vector<128x512xbf16>
    %cst_43 = arith.constant dense<0.000000e+00> : vector<16x512xf32>
    %82 = tpu.matmul %79, %81, %cst_43 {dimension_numbers = #tpu.dot_dimension_numbers<[1], [0], [0], [1], [0, 0, 1, 1], [], []>} : vector<16x128xbf16>, vector<128x512xbf16>, vector<16x512xf32> -> vector<16x512xf32>
    %83 = arith.addf %78, %82 : vector<16x512xf32>
    %84 = vector.extract_strided_slice %47 {offsets = [112, 0], sizes = [16, 128], strides = [1, 1]} : vector<144x128xbf16> to vector<16x128xbf16>
    %c7 = arith.constant 7 : index
    %c0_44 = arith.constant 0 : index
    %c0_45 = arith.constant 0 : index
    %85 = vector.load %arg4[%c7, %c0_44, %c0_45] : memref<9x128x512xbf16, #tpu.memory_space<vmem>>, vector<1x128x512xbf16>
    %86 = vector.shape_cast %85 : vector<1x128x512xbf16> to vector<128x512xbf16>
    %cst_46 = arith.constant dense<0.000000e+00> : vector<16x512xf32>
    %87 = tpu.matmul %84, %86, %cst_46 {dimension_numbers = #tpu.dot_dimension_numbers<[1], [0], [0], [1], [0, 0, 1, 1], [], []>} : vector<16x128xbf16>, vector<128x512xbf16>, vector<16x512xf32> -> vector<16x512xf32>
    %88 = arith.addf %83, %87 : vector<16x512xf32>
    %89 = vector.extract_strided_slice %47 {offsets = [128, 0], sizes = [16, 128], strides = [1, 1]} : vector<144x128xbf16> to vector<16x128xbf16>
    %c8 = arith.constant 8 : index
    %c0_47 = arith.constant 0 : index
    %c0_48 = arith.constant 0 : index
    %90 = vector.load %arg4[%c8, %c0_47, %c0_48] : memref<9x128x512xbf16, #tpu.memory_space<vmem>>, vector<1x128x512xbf16>
    %91 = vector.shape_cast %90 : vector<1x128x512xbf16> to vector<128x512xbf16>
    %cst_49 = arith.constant dense<0.000000e+00> : vector<16x512xf32>
    %92 = tpu.matmul %89, %91, %cst_49 {dimension_numbers = #tpu.dot_dimension_numbers<[1], [0], [0], [1], [0, 0, 1, 1], [], []>} : vector<16x128xbf16>, vector<128x512xbf16>, vector<16x512xf32> -> vector<16x512xf32>
    %93 = arith.addf %88, %92 : vector<16x512xf32>
    %c0_50 = arith.constant 0 : index
    %c0_51 = arith.constant 0 : index
    %94 = vector.load %arg5[%c0_50, %c0_51] : memref<16x512xf32, #tpu.memory_space<vmem>>, vector<16x512xf32>
    %95 = arith.addf %93, %94 : vector<16x512xf32>
    %cst_52 = arith.constant 5.000000e-01 : f32
    %96 = vector.broadcast %cst_52 : f32 to vector<16x512xf32>
    %97 = arith.mulf %96, %95 : vector<16x512xf32>
    %cst_53 = arith.constant 0.707106769 : f32
    %98 = vector.broadcast %cst_53 : f32 to vector<16x512xf32>
    %99 = arith.mulf %95, %98 : vector<16x512xf32>
    %cst_54 = arith.constant 0.000000e+00 : f32
    %100 = vector.broadcast %cst_54 : f32 to vector<16x512xf32>
    %101 = arith.cmpf oge, %99, %100 : vector<16x512xf32>
    %cst_55 = arith.constant 1.000000e+00 : f32
    %cst_56 = arith.constant -1.000000e+00 : f32
    %102 = vector.broadcast %cst_55 : f32 to vector<16x512xf32>
    %103 = vector.broadcast %cst_56 : f32 to vector<16x512xf32>
    %104 = arith.select %101, %102, %103 : vector<16x512xi1>, vector<16x512xf32>
    %105 = math.absf %99 : vector<16x512xf32>
    %cst_57 = arith.constant 0.327591091 : f32
    %106 = vector.broadcast %cst_57 : f32 to vector<16x512xf32>
    %107 = arith.mulf %106, %105 : vector<16x512xf32>
    %cst_58 = arith.constant 1.000000e+00 : f32
    %108 = vector.broadcast %cst_58 : f32 to vector<16x512xf32>
    %109 = arith.addf %108, %107 : vector<16x512xf32>
    %110 = tpu.reciprocal %109 {approx = true} : vector<16x512xf32> -> vector<16x512xf32>
    %cst_59 = arith.constant 1.06140542 : f32
    %111 = vector.broadcast %cst_59 : f32 to vector<16x512xf32>
    %112 = arith.mulf %111, %110 : vector<16x512xf32>
    %cst_60 = arith.constant -1.45315206 : f32
    %113 = vector.broadcast %cst_60 : f32 to vector<16x512xf32>
    %114 = arith.addf %112, %113 : vector<16x512xf32>
    %115 = arith.mulf %114, %110 : vector<16x512xf32>
    %cst_61 = arith.constant 1.42141378 : f32
    %116 = vector.broadcast %cst_61 : f32 to vector<16x512xf32>
    %117 = arith.addf %115, %116 : vector<16x512xf32>
    %118 = arith.mulf %117, %110 : vector<16x512xf32>
    %cst_62 = arith.constant -0.284496725 : f32
    %119 = vector.broadcast %cst_62 : f32 to vector<16x512xf32>
    %120 = arith.addf %118, %119 : vector<16x512xf32>
    %121 = arith.mulf %120, %110 : vector<16x512xf32>
    %cst_63 = arith.constant 0.254829586 : f32
    %122 = vector.broadcast %cst_63 : f32 to vector<16x512xf32>
    %123 = arith.addf %121, %122 : vector<16x512xf32>
    %124 = arith.mulf %123, %110 : vector<16x512xf32>
    %cst_64 = arith.constant 0.000000e+00 : f32
    %125 = vector.broadcast %cst_64 : f32 to vector<16x512xf32>
    %126 = arith.subf %125, %105 : vector<16x512xf32>
    %127 = arith.mulf %126, %105 : vector<16x512xf32>
    %128 = math.exp %127 : vector<16x512xf32>
    %129 = arith.mulf %124, %128 : vector<16x512xf32>
    %cst_65 = arith.constant 1.000000e+00 : f32
    %130 = vector.broadcast %cst_65 : f32 to vector<16x512xf32>
    %131 = arith.subf %130, %129 : vector<16x512xf32>
    %132 = arith.mulf %104, %131 : vector<16x512xf32>
    %cst_66 = arith.constant 1.000000e+00 : f32
    %133 = vector.broadcast %cst_66 : f32 to vector<16x512xf32>
    %134 = arith.addf %133, %132 : vector<16x512xf32>
    %135 = arith.mulf %97, %134 : vector<16x512xf32>
    %cst_67 = arith.constant dense<0.000000e+00> : vector<512xf32>
    %136 = vector.multi_reduction <add>, %135, %cst_67 [0] : vector<16x512xf32> to vector<512xf32>
    %137 = vector.shape_cast %136 : vector<512xf32> to vector<1x512xf32>
    %cst_68 = arith.constant 1.600000e+01 : f32
    %138 = vector.broadcast %cst_68 : f32 to vector<1x512xf32>
    %139 = arith.divf %137, %138 : vector<1x512xf32>
    %140 = arith.truncf %139 : vector<1x512xf32> to vector<1x512xbf16>
    %c0_69 = arith.constant 0 : index
    %c0_70 = arith.constant 0 : index
    %141 = vector.load %arg6[%c0_69, %c0_70] : memref<512x1024xbf16, #tpu.memory_space<vmem>>, vector<512x1024xbf16>
    %cst_71 = arith.constant dense<0.000000e+00> : vector<1x1024xf32>
    %142 = tpu.matmul %140, %141, %cst_71 {dimension_numbers = #tpu.dot_dimension_numbers<[1], [0], [0], [1], [0, 0, 1, 1], [], []>} : vector<1x512xbf16>, vector<512x1024xbf16>, vector<1x1024xf32> -> vector<1x1024xf32>
    %c0_72 = arith.constant 0 : index
    %c0_73 = arith.constant 0 : index
    %143 = vector.load %arg7[%c0_72, %c0_73] : memref<1x1024xf32, #tpu.memory_space<vmem>>, vector<1x1024xf32>
    %144 = arith.addf %142, %143 : vector<1x1024xf32>
    %cst_74 = arith.constant 5.000000e-01 : f32
    %145 = vector.broadcast %cst_74 : f32 to vector<1x1024xf32>
    %146 = arith.mulf %145, %144 : vector<1x1024xf32>
    %cst_75 = arith.constant 0.707106769 : f32
    %147 = vector.broadcast %cst_75 : f32 to vector<1x1024xf32>
    %148 = arith.mulf %144, %147 : vector<1x1024xf32>
    %cst_76 = arith.constant 0.000000e+00 : f32
    %149 = vector.broadcast %cst_76 : f32 to vector<1x1024xf32>
    %150 = arith.cmpf oge, %148, %149 : vector<1x1024xf32>
    %cst_77 = arith.constant 1.000000e+00 : f32
    %cst_78 = arith.constant -1.000000e+00 : f32
    %151 = vector.broadcast %cst_77 : f32 to vector<1x1024xf32>
    %152 = vector.broadcast %cst_78 : f32 to vector<1x1024xf32>
    %153 = arith.select %150, %151, %152 : vector<1x1024xi1>, vector<1x1024xf32>
    %154 = math.absf %148 : vector<1x1024xf32>
    %cst_79 = arith.constant 0.327591091 : f32
    %155 = vector.broadcast %cst_79 : f32 to vector<1x1024xf32>
    %156 = arith.mulf %155, %154 : vector<1x1024xf32>
    %cst_80 = arith.constant 1.000000e+00 : f32
    %157 = vector.broadcast %cst_80 : f32 to vector<1x1024xf32>
    %158 = arith.addf %157, %156 : vector<1x1024xf32>
    %159 = tpu.reciprocal %158 {approx = true} : vector<1x1024xf32> -> vector<1x1024xf32>
    %cst_81 = arith.constant 1.06140542 : f32
    %160 = vector.broadcast %cst_81 : f32 to vector<1x1024xf32>
    %161 = arith.mulf %160, %159 : vector<1x1024xf32>
    %cst_82 = arith.constant -1.45315206 : f32
    %162 = vector.broadcast %cst_82 : f32 to vector<1x1024xf32>
    %163 = arith.addf %161, %162 : vector<1x1024xf32>
    %164 = arith.mulf %163, %159 : vector<1x1024xf32>
    %cst_83 = arith.constant 1.42141378 : f32
    %165 = vector.broadcast %cst_83 : f32 to vector<1x1024xf32>
    %166 = arith.addf %164, %165 : vector<1x1024xf32>
    %167 = arith.mulf %166, %159 : vector<1x1024xf32>
    %cst_84 = arith.constant -0.284496725 : f32
    %168 = vector.broadcast %cst_84 : f32 to vector<1x1024xf32>
    %169 = arith.addf %167, %168 : vector<1x1024xf32>
    %170 = arith.mulf %169, %159 : vector<1x1024xf32>
    %cst_85 = arith.constant 0.254829586 : f32
    %171 = vector.broadcast %cst_85 : f32 to vector<1x1024xf32>
    %172 = arith.addf %170, %171 : vector<1x1024xf32>
    %173 = arith.mulf %172, %159 : vector<1x1024xf32>
    %cst_86 = arith.constant 0.000000e+00 : f32
    %174 = vector.broadcast %cst_86 : f32 to vector<1x1024xf32>
    %175 = arith.subf %174, %154 : vector<1x1024xf32>
    %176 = arith.mulf %175, %154 : vector<1x1024xf32>
    %177 = math.exp %176 : vector<1x1024xf32>
    %178 = arith.mulf %173, %177 : vector<1x1024xf32>
    %cst_87 = arith.constant 1.000000e+00 : f32
    %179 = vector.broadcast %cst_87 : f32 to vector<1x1024xf32>
    %180 = arith.subf %179, %178 : vector<1x1024xf32>
    %181 = arith.mulf %153, %180 : vector<1x1024xf32>
    %cst_88 = arith.constant 1.000000e+00 : f32
    %182 = vector.broadcast %cst_88 : f32 to vector<1x1024xf32>
    %183 = arith.addf %182, %181 : vector<1x1024xf32>
    %184 = arith.mulf %146, %183 : vector<1x1024xf32>
    %185 = arith.truncf %184 : vector<1x1024xf32> to vector<1x1024xbf16>
    %c0_89 = arith.constant 0 : index
    %c0_90 = arith.constant 0 : index
    %186 = vector.load %arg8[%c0_89, %c0_90] : memref<1024x1024xbf16, #tpu.memory_space<vmem>>, vector<1024x1024xbf16>
    %cst_91 = arith.constant dense<0.000000e+00> : vector<1x1024xf32>
    %187 = tpu.matmul %185, %186, %cst_91 {dimension_numbers = #tpu.dot_dimension_numbers<[1], [0], [0], [1], [0, 0, 1, 1], [], []>} : vector<1x1024xbf16>, vector<1024x1024xbf16>, vector<1x1024xf32> -> vector<1x1024xf32>
    %c0_92 = arith.constant 0 : index
    %c0_93 = arith.constant 0 : index
    %188 = vector.load %arg9[%c0_92, %c0_93] : memref<1x1024xf32, #tpu.memory_space<vmem>>, vector<1x1024xf32>
    %189 = arith.addf %187, %188 : vector<1x1024xf32>
    %cst_94 = arith.constant 5.000000e-01 : f32
    %190 = vector.broadcast %cst_94 : f32 to vector<1x1024xf32>
    %191 = arith.mulf %190, %189 : vector<1x1024xf32>
    %cst_95 = arith.constant 0.707106769 : f32
    %192 = vector.broadcast %cst_95 : f32 to vector<1x1024xf32>
    %193 = arith.mulf %189, %192 : vector<1x1024xf32>
    %cst_96 = arith.constant 0.000000e+00 : f32
    %194 = vector.broadcast %cst_96 : f32 to vector<1x1024xf32>
    %195 = arith.cmpf oge, %193, %194 : vector<1x1024xf32>
    %cst_97 = arith.constant 1.000000e+00 : f32
    %cst_98 = arith.constant -1.000000e+00 : f32
    %196 = vector.broadcast %cst_97 : f32 to vector<1x1024xf32>
    %197 = vector.broadcast %cst_98 : f32 to vector<1x1024xf32>
    %198 = arith.select %195, %196, %197 : vector<1x1024xi1>, vector<1x1024xf32>
    %199 = math.absf %193 : vector<1x1024xf32>
    %cst_99 = arith.constant 0.327591091 : f32
    %200 = vector.broadcast %cst_99 : f32 to vector<1x1024xf32>
    %201 = arith.mulf %200, %199 : vector<1x1024xf32>
    %cst_100 = arith.constant 1.000000e+00 : f32
    %202 = vector.broadcast %cst_100 : f32 to vector<1x1024xf32>
    %203 = arith.addf %202, %201 : vector<1x1024xf32>
    %204 = tpu.reciprocal %203 {approx = true} : vector<1x1024xf32> -> vector<1x1024xf32>
    %cst_101 = arith.constant 1.06140542 : f32
    %205 = vector.broadcast %cst_101 : f32 to vector<1x1024xf32>
    %206 = arith.mulf %205, %204 : vector<1x1024xf32>
    %cst_102 = arith.constant -1.45315206 : f32
    %207 = vector.broadcast %cst_102 : f32 to vector<1x1024xf32>
    %208 = arith.addf %206, %207 : vector<1x1024xf32>
    %209 = arith.mulf %208, %204 : vector<1x1024xf32>
    %cst_103 = arith.constant 1.42141378 : f32
    %210 = vector.broadcast %cst_103 : f32 to vector<1x1024xf32>
    %211 = arith.addf %209, %210 : vector<1x1024xf32>
    %212 = arith.mulf %211, %204 : vector<1x1024xf32>
    %cst_104 = arith.constant -0.284496725 : f32
    %213 = vector.broadcast %cst_104 : f32 to vector<1x1024xf32>
    %214 = arith.addf %212, %213 : vector<1x1024xf32>
    %215 = arith.mulf %214, %204 : vector<1x1024xf32>
    %cst_105 = arith.constant 0.254829586 : f32
    %216 = vector.broadcast %cst_105 : f32 to vector<1x1024xf32>
    %217 = arith.addf %215, %216 : vector<1x1024xf32>
    %218 = arith.mulf %217, %204 : vector<1x1024xf32>
    %cst_106 = arith.constant 0.000000e+00 : f32
    %219 = vector.broadcast %cst_106 : f32 to vector<1x1024xf32>
    %220 = arith.subf %219, %199 : vector<1x1024xf32>
    %221 = arith.mulf %220, %199 : vector<1x1024xf32>
    %222 = math.exp %221 : vector<1x1024xf32>
    %223 = arith.mulf %218, %222 : vector<1x1024xf32>
    %cst_107 = arith.constant 1.000000e+00 : f32
    %224 = vector.broadcast %cst_107 : f32 to vector<1x1024xf32>
    %225 = arith.subf %224, %223 : vector<1x1024xf32>
    %226 = arith.mulf %198, %225 : vector<1x1024xf32>
    %cst_108 = arith.constant 1.000000e+00 : f32
    %227 = vector.broadcast %cst_108 : f32 to vector<1x1024xf32>
    %228 = arith.addf %227, %226 : vector<1x1024xf32>
    %229 = arith.mulf %191, %228 : vector<1x1024xf32>
    %230 = arith.truncf %229 : vector<1x1024xf32> to vector<1x1024xbf16>
    %c0_109 = arith.constant 0 : index
    %c0_110 = arith.constant 0 : index
    %231 = vector.load %arg10[%c0_109, %c0_110] : memref<1024x128xbf16, #tpu.memory_space<vmem>>, vector<1024x128xbf16>
    %cst_111 = arith.constant dense<0.000000e+00> : vector<1x128xf32>
    %232 = tpu.matmul %230, %231, %cst_111 {dimension_numbers = #tpu.dot_dimension_numbers<[1], [0], [0], [1], [0, 0, 1, 1], [], []>} : vector<1x1024xbf16>, vector<1024x128xbf16>, vector<1x128xf32> -> vector<1x128xf32>
    %c0_112 = arith.constant 0 : index
    %c0_113 = arith.constant 0 : index
    %233 = vector.load %arg11[%c0_112, %c0_113] : memref<1x128xf32, #tpu.memory_space<vmem>>, vector<1x128xf32>
    %234 = arith.addf %232, %233 : vector<1x128xf32>
    %cst_114 = arith.constant 5.000000e-01 : f32
    %235 = vector.broadcast %cst_114 : f32 to vector<1x128xf32>
    %236 = arith.mulf %235, %234 : vector<1x128xf32>
    %cst_115 = arith.constant 0.707106769 : f32
    %237 = vector.broadcast %cst_115 : f32 to vector<1x128xf32>
    %238 = arith.mulf %234, %237 : vector<1x128xf32>
    %cst_116 = arith.constant 0.000000e+00 : f32
    %239 = vector.broadcast %cst_116 : f32 to vector<1x128xf32>
    %240 = arith.cmpf oge, %238, %239 : vector<1x128xf32>
    %cst_117 = arith.constant 1.000000e+00 : f32
    %cst_118 = arith.constant -1.000000e+00 : f32
    %241 = vector.broadcast %cst_117 : f32 to vector<1x128xf32>
    %242 = vector.broadcast %cst_118 : f32 to vector<1x128xf32>
    %243 = arith.select %240, %241, %242 : vector<1x128xi1>, vector<1x128xf32>
    %244 = math.absf %238 : vector<1x128xf32>
    %cst_119 = arith.constant 0.327591091 : f32
    %245 = vector.broadcast %cst_119 : f32 to vector<1x128xf32>
    %246 = arith.mulf %245, %244 : vector<1x128xf32>
    %cst_120 = arith.constant 1.000000e+00 : f32
    %247 = vector.broadcast %cst_120 : f32 to vector<1x128xf32>
    %248 = arith.addf %247, %246 : vector<1x128xf32>
    %249 = tpu.reciprocal %248 {approx = true} : vector<1x128xf32> -> vector<1x128xf32>
    %cst_121 = arith.constant 1.06140542 : f32
    %250 = vector.broadcast %cst_121 : f32 to vector<1x128xf32>
    %251 = arith.mulf %250, %249 : vector<1x128xf32>
    %cst_122 = arith.constant -1.45315206 : f32
    %252 = vector.broadcast %cst_122 : f32 to vector<1x128xf32>
    %253 = arith.addf %251, %252 : vector<1x128xf32>
    %254 = arith.mulf %253, %249 : vector<1x128xf32>
    %cst_123 = arith.constant 1.42141378 : f32
    %255 = vector.broadcast %cst_123 : f32 to vector<1x128xf32>
    %256 = arith.addf %254, %255 : vector<1x128xf32>
    %257 = arith.mulf %256, %249 : vector<1x128xf32>
    %cst_124 = arith.constant -0.284496725 : f32
    %258 = vector.broadcast %cst_124 : f32 to vector<1x128xf32>
    %259 = arith.addf %257, %258 : vector<1x128xf32>
    %260 = arith.mulf %259, %249 : vector<1x128xf32>
    %cst_125 = arith.constant 0.254829586 : f32
    %261 = vector.broadcast %cst_125 : f32 to vector<1x128xf32>
    %262 = arith.addf %260, %261 : vector<1x128xf32>
    %263 = arith.mulf %262, %249 : vector<1x128xf32>
    %cst_126 = arith.constant 0.000000e+00 : f32
    %264 = vector.broadcast %cst_126 : f32 to vector<1x128xf32>
    %265 = arith.subf %264, %244 : vector<1x128xf32>
    %266 = arith.mulf %265, %244 : vector<1x128xf32>
    %267 = math.exp %266 : vector<1x128xf32>
    %268 = arith.mulf %263, %267 : vector<1x128xf32>
    %cst_127 = arith.constant 1.000000e+00 : f32
    %269 = vector.broadcast %cst_127 : f32 to vector<1x128xf32>
    %270 = arith.subf %269, %268 : vector<1x128xf32>
    %271 = arith.mulf %243, %270 : vector<1x128xf32>
    %cst_128 = arith.constant 1.000000e+00 : f32
    %272 = vector.broadcast %cst_128 : f32 to vector<1x128xf32>
    %273 = arith.addf %272, %271 : vector<1x128xf32>
    %274 = arith.mulf %236, %273 : vector<1x128xf32>
    %c0_129 = arith.constant 0 : index
    %c0_130 = arith.constant 0 : index
    %c0_131 = arith.constant 0 : index
    %275 = vector.load %arg12[%c0_129, %c0_130, %c0_131] : memref<1x1x128xf32, #tpu.memory_space<vmem>>, vector<1x1x128xf32>
    %276 = vector.shape_cast %275 : vector<1x1x128xf32> to vector<1x128xf32>
    %277 = vector.shape_cast %274 : vector<1x128xf32> to vector<1x1x128xf32>
    tpu.vector_store %arg12[%c0_129, %c0_130, %c0_131], %277 {strides = array<i32>} : memref<1x1x128xf32, #tpu.memory_space<vmem>>, vector<1x1x128xf32>,
    return
  }
  func.func @transform_0(%arg0: i32) -> (i32, i32, i32) {
    %c0_i32 = arith.constant 0 : i32
    %c0_i32_0 = arith.constant 0 : i32
    %c0_i32_1 = arith.constant 0 : i32
    return %arg0, %c0_i32, %c0_i32_0 : i32, i32, i32
  }
  func.func @transform_1(%arg0: i32) -> (i32, i32) {
    %c0_i32 = arith.constant 0 : i32
    %c0_i32_0 = arith.constant 0 : i32
    %c0_i32_1 = arith.constant 0 : i32
    return %c0_i32, %c0_i32_0 : i32, i32
  }
  func.func @transform_2(%arg0: i32) -> (i32, i32) {
    %c0_i32 = arith.constant 0 : i32
    %c0_i32_0 = arith.constant 0 : i32
    %c0_i32_1 = arith.constant 0 : i32
    return %c0_i32, %c0_i32_0 : i32, i32
  }
  func.func @transform_3(%arg0: i32) -> (i32, i32, i32) {
    %c0_i32 = arith.constant 0 : i32
    %c0_i32_0 = arith.constant 0 : i32
    %c0_i32_1 = arith.constant 0 : i32
    %c0_i32_2 = arith.constant 0 : i32
    return %c0_i32, %c0_i32_0, %c0_i32_1 : i32, i32, i32
  }
  func.func @transform_4(%arg0: i32) -> (i32, i32) {
    %c0_i32 = arith.constant 0 : i32
    %c0_i32_0 = arith.constant 0 : i32
    %c0_i32_1 = arith.constant 0 : i32
    return %c0_i32, %c0_i32_0 : i32, i32
  }
  func.func @transform_5(%arg0: i32) -> (i32, i32) {
    %c0_i32 = arith.constant 0 : i32
    %c0_i32_0 = arith.constant 0 : i32
    %c0_i32_1 = arith.constant 0 : i32
    return %c0_i32, %c0_i32_0 : i32, i32
  }
  func.func @transform_6(%arg0: i32) -> (i32, i32) {
    %c0_i32 = arith.constant 0 : i32
    %c0_i32_0 = arith.constant 0 : i32
    %c0_i32_1 = arith.constant 0 : i32
    return %c0_i32, %c0_i32_0 : i32, i32
  }
  func.func @transform_7(%arg0: i32) -> (i32, i32) {
    %c0_i32 = arith.constant 0 : i32
    %c0_i32_0 = arith.constant 0 : i32
    %c0_i32_1 = arith.constant 0 : i32
    return %c0_i32, %c0_i32_0 : i32, i32
  }
  func.func @transform_8(%arg0: i32) -> (i32, i32) {
    %c0_i32 = arith.constant 0 : i32
    %c0_i32_0 = arith.constant 0 : i32
    %c0_i32_1 = arith.constant 0 : i32
    return %c0_i32, %c0_i32_0 : i32, i32
  }
  func.func @transform_9(%arg0: i32) -> (i32, i32) {
    %c0_i32 = arith.constant 0 : i32
    %c0_i32_0 = arith.constant 0 : i32
    %c0_i32_1 = arith.constant 0 : i32
    return %c0_i32, %c0_i32_0 : i32, i32
  }
  func.func @transform_10(%arg0: i32) -> (i32, i32) {
    %c0_i32 = arith.constant 0 : i32
    %c0_i32_0 = arith.constant 0 : i32
    %c0_i32_1 = arith.constant 0 : i32
    return %c0_i32, %c0_i32_0 : i32, i32
  }
  func.func @transform_11(%arg0: i32) -> (i32, i32, i32) {
    %c0_i32 = arith.constant 0 : i32
    %c0_i32_0 = arith.constant 0 : i32
    %c0_i32_1 = arith.constant 0 : i32
    return %arg0, %c0_i32, %c0_i32_0 : i32, i32, i32
  }
}

</mosaic_0001>

<llo_original>
// kernel: classification_head_forward.1
$region0: #{classification_head_forward.1}
  #allocation0 [shape = 'u32[]', space=smem, size = 0x4, offset = 0x4, fixed_abs, tag = 'smem constant byte address 0x4 - core index']
  #allocation1 [shape = 'u32[144,128]{1,0:T(1,128)}', space=vmem, size = 0x12000, scoped, tag = 'internal scratch']
  %s0 = inlined_call_operand.vmem [shape: bf16[2,144,256], index: 0, kind: input, shape index: {}]
  %s1 = inlined_call_operand.hbm [shape: bf16[256,128], index: 1, kind: input, shape index: {}]
  %s2 = inlined_call_operand.hbm [shape: f32[1,128], index: 2, kind: input, shape index: {}]
  %s3 = inlined_call_operand.hbm [shape: bf16[9,128,512], index: 3, kind: input, shape index: {}]
  %s4 = inlined_call_operand.hbm [shape: f32[16,512], index: 4, kind: input, shape index: {}]
  %s5 = inlined_call_operand.hbm [shape: bf16[512,1024], index: 5, kind: input, shape index: {}]
  %s6 = inlined_call_operand.hbm [shape: f32[1,1024], index: 6, kind: input, shape index: {}]
  %s7 = inlined_call_operand.hbm [shape: bf16[1024,1024], index: 7, kind: input, shape index: {}]
  %s8 = inlined_call_operand.hbm [shape: f32[1,1024], index: 8, kind: input, shape index: {}]
  %s9 = inlined_call_operand.hbm [shape: bf16[1024,128], index: 9, kind: input, shape index: {}]
  %s10 = inlined_call_operand.hbm [shape: f32[1,128], index: 10, kind: input, shape index: {}]
  %s11 = inlined_call_operand.hbm [shape: f32[2,1,128], index: 11, kind: output, shape index: {}]
  %s12 = sld [smem:[#allocation0]]
  $region117: #{classification_head_forward.1} parent=0
    _
  %s14 = ssub.s32 1, %s12
  %s15 = scalar_select 0, %s14, %s12
  $region1: #{classification_head_forward.1} parent=0
    #allocation2 [shape = 'u8[65536]{0}', space=vmem, size = 0x10000, scoped, tag = 'input window, operand 1, single buffered']
    #allocation3 [shape = 's32[2]{0}', space=sflag, size = 0x8, scoped, tag = 'scoped memory for classification_head_forward.1']
    #allocation4 [shape = 's32[2]{0}', space=sflag, size = 0x8, scoped, tag = 'scoped memory for classification_head_forward.1']
    #allocation5 [shape = 'u8[512]{0}', space=vmem, size = 0x400, scoped, tag = 'input window, operand 2, single buffered']
    #allocation6 [shape = 's32[1]{0}', space=sflag, size = 0x4, scoped, tag = 'scoped memory for classification_head_forward.1']
    #allocation7 [shape = 'u8[1179648]{0}', space=vmem, size = 0x120000, scoped, tag = 'input window, operand 3, single buffered']
    #allocation8 [shape = 'u8[32768]{0}', space=vmem, size = 0x8000, scoped, tag = 'input window, operand 4, single buffered']
    #allocation9 [shape = 's32[1]{0}', space=sflag, size = 0x4, scoped, tag = 'scoped memory for classification_head_forward.1']
    #allocation10 [shape = 'u8[1048576]{0}', space=vmem, size = 0x100000, scoped, tag = 'input window, operand 5, single buffered']
    #allocation11 [shape = 'u8[4096]{0}', space=vmem, size = 0x1000, scoped, tag = 'input window, operand 6, single buffered']
    #allocation12 [shape = 's32[1]{0}', space=sflag, size = 0x4, scoped, tag = 'scoped memory for classification_head_forward.1']
    #allocation13 [shape = 'u8[2097152]{0}', space=vmem, size = 0x200000, scoped, tag = 'input window, operand 7, single buffered']
    #allocation14 [shape = 'u8[4096]{0}', space=vmem, size = 0x1000, scoped, tag = 'input window, operand 8, single buffered']
    #allocation15 [shape = 's32[1]{0}', space=sflag, size = 0x4, scoped, tag = 'scoped memory for classification_head_forward.1']
    #allocation16 [shape = 'u8[262144]{0}', space=vmem, size = 0x40000, scoped, tag = 'input window, operand 9, single buffered']
    #allocation17 [shape = 'u8[512]{0}', space=vmem, size = 0x400, scoped, tag = 'input window, operand 10, single buffered']
    #allocation18 [shape = 's32[1]{0}', space=sflag, size = 0x4, scoped, tag = 'scoped memory for classification_head_forward.1']
    #allocation19 [shape = 'u8[1024]{0}', space=vmem, size = 0x400, scoped, tag = 'output window, operand 0']
    %16 = vsyncpa [#allocation3], 0
    %17 = vsyncpa [#allocation6], 0
    %18 = vsyncpa [#allocation9], 0
    %19 = vsyncpa [#allocation12], 0
    %20 = vsyncpa [#allocation15], 0
    %21 = vsyncpa [#allocation18], 0
    %22 = vsyncpa [#allocation4], 0
    %s23 = scalar_lea.sflag [#allocation4], 1
    %24 = vsyncpa %s23, 0
    loop: start=0, step=1, limit=4
    $region2: #{classification_head_forward.1} parent=1 // loop_pre_header
      _
    $region3: #{classification_head_forward.1} parent=1 // loop_header
      %s26 = sphi 0, %s30
      %p27 = scmp.ge.s32.totalorder %s26, 4
      %s36 = sphi 0, %s38
      %s39 = sphi 0, %s36
      %s40 = sphi 0, %s39
      %s56 = sphi 0, %s40
      %s60 = sphi 0, %s60
      %s62 = sphi 0, %s60
      %s63 = sphi 0, %s62
      %s77 = sphi 0, %s63
      %s81 = sphi 0, %s81
      %s83 = sphi 0, %s81
      %s84 = sphi 0, %s83
      %s98 = sphi 0, %s84
      %s102 = sphi 0, %s102
      %s104 = sphi 0, %s102
      %s105 = sphi 0, %s104
      %s119 = sphi 0, %s105
      %s123 = sphi 0, %s123
      %s125 = sphi 0, %s123
      %s126 = sphi 0, %s125
      %s140 = sphi 0, %s126
      %s144 = sphi 0, %s144
      %s146 = sphi 0, %s144
      %s147 = sphi 0, %s146
      %s161 = sphi 0, %s147
      %s165 = sphi 0, %s165
      %s167 = sphi 0, %s165
      %s168 = sphi 0, %s167
      %s182 = sphi 0, %s168
      %s186 = sphi 0, %s186
      %s188 = sphi 0, %s186
      %s189 = sphi 0, %s188
      %s203 = sphi 0, %s189
      %s207 = sphi 0, %s207
      %s209 = sphi 0, %s207
      %s210 = sphi 0, %s209
      %s224 = sphi 0, %s210
      %s228 = sphi 0, %s228
      %s230 = sphi 0, %s228
      %s231 = sphi 0, %s230
      %s245 = sphi 0, %s231
      %s249 = sphi 0, %s249
      %s251 = sphi 0, %s249
      %s252 = sphi 0, %s251
      %s266 = sphi 0, %s252
      %s272 = sphi 0, %s274
      %s275 = sphi 0, %s272
      %s276 = sphi 0, %s275
      %s292 = sphi 0, %s276
    $region4: #{classification_head_forward.1} parent=1 // loop_header_branch
      %29 = sbr.rel (%p27) target = $region8
    $region5: #{classification_head_forward.1} parent=1 // loop_body
      %s31 = ssub.s32 %s26, 1
      %s32 = ssub.s32 %s26, 2
      %s33 = sadd.s32 %s26, 1
      %s34 = ssub.s32 %s26, %s33
      %p35 = scmp.eq.s32.totalorder %s34, 0
      %s37 = sadd.s32 %s36, 1
      %s38 = scalar_select %p35, %s36, %s37
      %p41 = pneg %p35
      %p42 = scmp.eq.s32.totalorder %s26, 1
      %p43 = por %p41, %p42
      %p44 = scmp.ne.s32.totalorder %s36, %s39
      %p45 = scmp.eq.s32.totalorder %s26, 0
      %p46 = por %p44, %p45
      %p47 = scmp.ne.s32.totalorder %s36, %s39
      %p48 = scmp.eq.s32.totalorder %s31, 1
      %p49 = por %p47, %p48
      %p50 = scmp.ne.s32.totalorder %s39, %s40
      %p51 = scmp.eq.s32.totalorder %s31, 0
      %p52 = por %p50, %p51
      %p53 = scmp.ne.s32.totalorder %s39, %s40
      %p54 = scmp.eq.s32.totalorder %s32, 1
      %p55 = por %p53, %p54
      %p57 = scmp.ne.s32.totalorder %s40, %s56
      %p58 = scmp.eq.s32.totalorder %s32, 0
      %p59 = por %p57, %p58
      %s61 = sadd.s32 %s60, 1
      %p64 = scmp.eq.s32.totalorder %s26, 1
      %p65 = scmp.ne.s32.totalorder %s60, %s62
      %p66 = scmp.eq.s32.totalorder %s26, 0
      %p67 = por %p65, %p66
      %p68 = scmp.ne.s32.totalorder %s60, %s62
      %p69 = scmp.eq.s32.totalorder %s31, 1
      %p70 = por %p68, %p69
      %p71 = scmp.ne.s32.totalorder %s62, %s63
      %p72 = scmp.eq.s32.totalorder %s31, 0
      %p73 = por %p71, %p72
      %p74 = scmp.ne.s32.totalorder %s62, %s63
      %p75 = scmp.eq.s32.totalorder %s32, 1
      %p76 = por %p74, %p75
      %p78 = scmp.ne.s32.totalorder %s63, %s77
      %p79 = scmp.eq.s32.totalorder %s32, 0
      %p80 = por %p78, %p79
      %s82 = sadd.s32 %s81, 1
      %p85 = scmp.eq.s32.totalorder %s26, 1
      %p86 = scmp.ne.s32.totalorder %s81, %s83
      %p87 = scmp.eq.s32.totalorder %s26, 0
      %p88 = por %p86, %p87
      %p89 = scmp.ne.s32.totalorder %s81, %s83
      %p90 = scmp.eq.s32.totalorder %s31, 1
      %p91 = por %p89, %p90
      %p92 = scmp.ne.s32.totalorder %s83, %s84
      %p93 = scmp.eq.s32.totalorder %s31, 0
      %p94 = por %p92, %p93
      %p95 = scmp.ne.s32.totalorder %s83, %s84
      %p96 = scmp.eq.s32.totalorder %s32, 1
      %p97 = por %p95, %p96
      %p99 = scmp.ne.s32.totalorder %s84, %s98
      %p100 = scmp.eq.s32.totalorder %s32, 0
      %p101 = por %p99, %p100
      %s103 = sadd.s32 %s102, 1
      %p106 = scmp.eq.s32.totalorder %s26, 1
      %p107 = scmp.ne.s32.totalorder %s102, %s104
      %p108 = scmp.eq.s32.totalorder %s26, 0
      %p109 = por %p107, %p108
      %p110 = scmp.ne.s32.totalorder %s102, %s104
      %p111 = scmp.eq.s32.totalorder %s31, 1
      %p112 = por %p110, %p111
      %p113 = scmp.ne.s32.totalorder %s104, %s105
      %p114 = scmp.eq.s32.totalorder %s31, 0
      %p115 = por %p113, %p114
      %p116 = scmp.ne.s32.totalorder %s104, %s105
      %p117 = scmp.eq.s32.totalorder %s32, 1
      %p118 = por %p116, %p117
      %p120 = scmp.ne.s32.totalorder %s105, %s119
      %p121 = scmp.eq.s32.totalorder %s32, 0
      %p122 = por %p120, %p121
      %s124 = sadd.s32 %s123, 1
      %p127 = scmp.eq.s32.totalorder %s26, 1
      %p128 = scmp.ne.s32.totalorder %s123, %s125
      %p129 = scmp.eq.s32.totalorder %s26, 0
      %p130 = por %p128, %p129
      %p131 = scmp.ne.s32.totalorder %s123, %s125
      %p132 = scmp.eq.s32.totalorder %s31, 1
      %p133 = por %p131, %p132
      %p134 = scmp.ne.s32.totalorder %s125, %s126
      %p135 = scmp.eq.s32.totalorder %s31, 0
      %p136 = por %p134, %p135
      %p137 = scmp.ne.s32.totalorder %s125, %s126
      %p138 = scmp.eq.s32.totalorder %s32, 1
      %p139 = por %p137, %p138
      %p141 = scmp.ne.s32.totalorder %s126, %s140
      %p142 = scmp.eq.s32.totalorder %s32, 0
      %p143 = por %p141, %p142
      %s145 = sadd.s32 %s144, 1
      %p148 = scmp.eq.s32.totalorder %s26, 1
      %p149 = scmp.ne.s32.totalorder %s144, %s146
      %p150 = scmp.eq.s32.totalorder %s26, 0
      %p151 = por %p149, %p150
      %p152 = scmp.ne.s32.totalorder %s144, %s146
      %p153 = scmp.eq.s32.totalorder %s31, 1
      %p154 = por %p152, %p153
      %p155 = scmp.ne.s32.totalorder %s146, %s147
      %p156 = scmp.eq.s32.totalorder %s31, 0
      %p157 = por %p155, %p156
      %p158 = scmp.ne.s32.totalorder %s146, %s147
      %p159 = scmp.eq.s32.totalorder %s32, 1
      %p160 = por %p158, %p159
      %p162 = scmp.ne.s32.totalorder %s147, %s161
      %p163 = scmp.eq.s32.totalorder %s32, 0
      %p164 = por %p162, %p163
      %s166 = sadd.s32 %s165, 1
      %p169 = scmp.eq.s32.totalorder %s26, 1
      %p170 = scmp.ne.s32.totalorder %s165, %s167
      %p171 = scmp.eq.s32.totalorder %s26, 0
      %p172 = por %p170, %p171
      %p173 = scmp.ne.s32.totalorder %s165, %s167
      %p174 = scmp.eq.s32.totalorder %s31, 1
      %p175 = por %p173, %p174
      %p176 = scmp.ne.s32.totalorder %s167, %s168
      %p177 = scmp.eq.s32.totalorder %s31, 0
      %p178 = por %p176, %p177
      %p179 = scmp.ne.s32.totalorder %s167, %s168
      %p180 = scmp.eq.s32.totalorder %s32, 1
      %p181 = por %p179, %p180
      %p183 = scmp.ne.s32.totalorder %s168, %s182
      %p184 = scmp.eq.s32.totalorder %s32, 0
      %p185 = por %p183, %p184
      %s187 = sadd.s32 %s186, 1
      %p190 = scmp.eq.s32.totalorder %s26, 1
      %p191 = scmp.ne.s32.totalorder %s186, %s188
      %p192 = scmp.eq.s32.totalorder %s26, 0
      %p193 = por %p191, %p192
      %p194 = scmp.ne.s32.totalorder %s186, %s188
      %p195 = scmp.eq.s32.totalorder %s31, 1
      %p196 = por %p194, %p195
      %p197 = scmp.ne.s32.totalorder %s188, %s189
      %p198 = scmp.eq.s32.totalorder %s31, 0
      %p199 = por %p197, %p198
      %p200 = scmp.ne.s32.totalorder %s188, %s189
      %p201 = scmp.eq.s32.totalorder %s32, 1
      %p202 = por %p200, %p201
      %p204 = scmp.ne.s32.totalorder %s189, %s203
      %p205 = scmp.eq.s32.totalorder %s32, 0
      %p206 = por %p204, %p205
      %s208 = sadd.s32 %s207, 1
      %p211 = scmp.eq.s32.totalorder %s26, 1
      %p212 = scmp.ne.s32.totalorder %s207, %s209
      %p213 = scmp.eq.s32.totalorder %s26, 0
      %p214 = por %p212, %p213
      %p215 = scmp.ne.s32.totalorder %s207, %s209
      %p216 = scmp.eq.s32.totalorder %s31, 1
      %p217 = por %p215, %p216
      %p218 = scmp.ne.s32.totalorder %s209, %s210
      %p219 = scmp.eq.s32.totalorder %s31, 0
      %p220 = por %p218, %p219
      %p221 = scmp.ne.s32.totalorder %s209, %s210
      %p222 = scmp.eq.s32.totalorder %s32, 1
      %p223 = por %p221, %p222
      %p225 = scmp.ne.s32.totalorder %s210, %s224
      %p226 = scmp.eq.s32.totalorder %s32, 0
      %p227 = por %p225, %p226
      %s229 = sadd.s32 %s228, 1
      %p232 = scmp.eq.s32.totalorder %s26, 1
      %p233 = scmp.ne.s32.totalorder %s228, %s230
      %p234 = scmp.eq.s32.totalorder %s26, 0
      %p235 = por %p233, %p234
      %p236 = scmp.ne.s32.totalorder %s228, %s230
      %p237 = scmp.eq.s32.totalorder %s31, 1
      %p238 = por %p236, %p237
      %p239 = scmp.ne.s32.totalorder %s230, %s231
      %p240 = scmp.eq.s32.totalorder %s31, 0
      %p241 = por %p239, %p240
      %p242 = scmp.ne.s32.totalorder %s230, %s231
      %p243 = scmp.eq.s32.totalorder %s32, 1
      %p244 = por %p242, %p243
      %p246 = scmp.ne.s32.totalorder %s231, %s245
      %p247 = scmp.eq.s32.totalorder %s32, 0
      %p248 = por %p246, %p247
      %s250 = sadd.s32 %s249, 1
      %p253 = scmp.eq.s32.totalorder %s26, 1
      %p254 = scmp.ne.s32.totalorder %s249, %s251
      %p255 = scmp.eq.s32.totalorder %s26, 0
      %p256 = por %p254, %p255
      %p257 = scmp.ne.s32.totalorder %s249, %s251
      %p258 = scmp.eq.s32.totalorder %s31, 1
      %p259 = por %p257, %p258
      %p260 = scmp.ne.s32.totalorder %s251, %s252
      %p261 = scmp.eq.s32.totalorder %s31, 0
      %p262 = por %p260, %p261
      %p263 = scmp.ne.s32.totalorder %s251, %s252
      %p264 = scmp.eq.s32.totalorder %s32, 1
      %p265 = por %p263, %p264
      %p267 = scmp.ne.s32.totalorder %s252, %s266
      %p268 = scmp.eq.s32.totalorder %s32, 0
      %p269 = por %p267, %p268
      %s270 = ssub.s32 %s26, %s33
      %p271 = scmp.eq.s32.totalorder %s270, 0
      %s273 = sadd.s32 %s272, 1
      %s274 = scalar_select %p271, %s272, %s273
      %p277 = pneg %p271
      %p278 = scmp.eq.s32.totalorder %s26, 1
      %p279 = por %p277, %p278
      %p280 = scmp.ne.s32.totalorder %s272, %s275
      %p281 = scmp.eq.s32.totalorder %s26, 0
      %p282 = por %p280, %p281
      %p283 = scmp.ne.s32.totalorder %s272, %s275
      %p284 = scmp.eq.s32.totalorder %s31, 1
      %p285 = por %p283, %p284
      %p286 = scmp.ne.s32.totalorder %s275, %s276
      %p287 = scmp.eq.s32.totalorder %s31, 0
      %p288 = por %p286, %p287
      %p289 = scmp.ne.s32.totalorder %s275, %s276
      %p290 = scmp.eq.s32.totalorder %s32, 1
      %p291 = por %p289, %p290
      %p293 = scmp.ne.s32.totalorder %s276, %s292
      %p294 = scmp.eq.s32.totalorder %s32, 0
      %p295 = por %p293, %p294
      %p296 = scmp.le.s32.totalorder 1, %s26
      %p297 = scmp.lt.s32.totalorder %s26, 3
      %p298 = pnand %p296, %p297
      %p299 = pneg %p298
      // Predicated region
      $region9: #{classification_head_forward.1} parent=5 // pred_check
        _
      $region10: #{classification_head_forward.1} parent=5 // pred_check_branch
        %301 = sbr.rel (%p298) target = $region12
      $region11: #{classification_head_forward.1} parent=5 // pred_region
        %s302 = ssub.s32 %s26, 1
        // Predicated region
        $region13: #{classification_head_forward.1} parent=11 // pred_check
          %p303 = pneg %p73
        $region14: #{classification_head_forward.1} parent=11 // pred_check_branch
          %305 = sbr.rel (%p303) target = $region16
        $region15: #{classification_head_forward.1} parent=11 // pred_region
          %s307 = ssub.s32 2048, 2048
          %308 = vsyncadd [#allocation3], %s307
          %s309 = sshll.u32 [#allocation2], 4
          %s310 = int_to_ptr.vmem [resolvable:$true] %s309
          %315 = dma.hbm_to_vmem [thread:$0]  %s1, 2048, %s310, [#allocation3], 64, 64, 4
        $region16: #{classification_head_forward.1} parent=11 // pred_fallthru
          _
        // Predicated region
        $region17: #{classification_head_forward.1} parent=11 // pred_check
          %p316 = pneg %p94
        $region18: #{classification_head_forward.1} parent=11 // pred_check_branch
          %318 = sbr.rel (%p316) target = $region20
        $region19: #{classification_head_forward.1} parent=11 // pred_region
          %s320 = ssub.s32 16, 16
          %321 = vsyncadd [#allocation6], %s320
          %s323 = sshll.u32 [#allocation5], 4
          %s324 = int_to_ptr.vmem [resolvable:$true] %s323
          %326 = dma.hbm_to_vmem [thread:$0]  %s2, 16, %s324, [#allocation6]
        $region20: #{classification_head_forward.1} parent=11 // pred_fallthru
          _
        // Predicated region
        $region21: #{classification_head_forward.1} parent=11 // pred_check
          %p327 = pneg %p115
        $region22: #{classification_head_forward.1} parent=11 // pred_check_branch
          %329 = sbr.rel (%p327) target = $region24
        $region23: #{classification_head_forward.1} parent=11 // pred_region
          %s331 = ssub.s32 36864, 36864
          %332 = vsyncadd [#allocation6], %s331
          %s333 = sshll.u32 [#allocation7], 4
          %s334 = int_to_ptr.vmem [resolvable:$true] %s333
          %339 = dma.hbm_to_vmem [thread:$0]  %s3, 36864, %s334, [#allocation6], 256, 256, 16
        $region24: #{classification_head_forward.1} parent=11 // pred_fallthru
          _
        // Predicated region
        $region25: #{classification_head_forward.1} parent=11 // pred_check
          %p340 = pneg %p136
        $region26: #{classification_head_forward.1} parent=11 // pred_check_branch
          %342 = sbr.rel (%p340) target = $region28
        $region27: #{classification_head_forward.1} parent=11 // pred_region
          %s344 = ssub.s32 1024, 1024
          %345 = vsyncadd [#allocation9], %s344
          %s346 = sshll.u32 [#allocation8], 4
          %s347 = int_to_ptr.vmem [resolvable:$true] %s346
          %352 = dma.hbm_to_vmem [thread:$0]  %s4, 1024, %s347, [#allocation9], 512, 512, 32
        $region28: #{classification_head_forward.1} parent=11 // pred_fallthru
          _
        // Predicated region
        $region29: #{classification_head_forward.1} parent=11 // pred_check
          %p353 = pneg %p157
        $region30: #{classification_head_forward.1} parent=11 // pred_check_branch
          %355 = sbr.rel (%p353) target = $region32
        $region31: #{classification_head_forward.1} parent=11 // pred_region
          %s357 = ssub.s32 32768, 32768
          %358 = vsyncadd [#allocation9], %s357
          %s359 = sshll.u32 [#allocation10], 4
          %s360 = int_to_ptr.vmem [resolvable:$true] %s359
          %365 = dma.hbm_to_vmem [thread:$0]  %s5, 32768, %s360, [#allocation9], 512, 512, 32
        $region32: #{classification_head_forward.1} parent=11 // pred_fallthru
          _
        // Predicated region
        $region33: #{classification_head_forward.1} parent=11 // pred_check
          %p366 = pneg %p178
        $region34: #{classification_head_forward.1} parent=11 // pred_check_branch
          %368 = sbr.rel (%p366) target = $region36
        $region35: #{classification_head_forward.1} parent=11 // pred_region
          %s370 = ssub.s32 128, 128
          %371 = vsyncadd [#allocation12], %s370
          %s373 = sshll.u32 [#allocation11], 4
          %s374 = int_to_ptr.vmem [resolvable:$true] %s373
          %376 = dma.hbm_to_vmem [thread:$0]  %s6, 128, %s374, [#allocation12]
        $region36: #{classification_head_forward.1} parent=11 // pred_fallthru
          _
        // Predicated region
        $region37: #{classification_head_forward.1} parent=11 // pred_check
          %p377 = pneg %p199
        $region38: #{classification_head_forward.1} parent=11 // pred_check_branch
          %379 = sbr.rel (%p377) target = $region40
        $region39: #{classification_head_forward.1} parent=11 // pred_region
          %s381 = ssub.s32 65536, 65536
          %382 = vsyncadd [#allocation12], %s381
          %s383 = sshll.u32 [#allocation13], 4
          %s384 = int_to_ptr.vmem [resolvable:$true] %s383
          %389 = dma.hbm_to_vmem [thread:$0]  %s7, 65536, %s384, [#allocation12], 512, 512, 32
        $region40: #{classification_head_forward.1} parent=11 // pred_fallthru
          _
        // Predicated region
        $region41: #{classification_head_forward.1} parent=11 // pred_check
          %p390 = pneg %p220
        $region42: #{classification_head_forward.1} parent=11 // pred_check_branch
          %392 = sbr.rel (%p390) target = $region44
        $region43: #{classification_head_forward.1} parent=11 // pred_region
          %s394 = ssub.s32 128, 128
          %395 = vsyncadd [#allocation15], %s394
          %s397 = sshll.u32 [#allocation14], 4
          %s398 = int_to_ptr.vmem [resolvable:$true] %s397
          %400 = dma.hbm_to_vmem [thread:$0]  %s8, 128, %s398, [#allocation15]
        $region44: #{classification_head_forward.1} parent=11 // pred_fallthru
          _
        // Predicated region
        $region45: #{classification_head_forward.1} parent=11 // pred_check
          %p401 = pneg %p241
        $region46: #{classification_head_forward.1} parent=11 // pred_check_branch
          %403 = sbr.rel (%p401) target = $region48
        $region47: #{classification_head_forward.1} parent=11 // pred_region
          %s405 = ssub.s32 8192, 8192
          %406 = vsyncadd [#allocation15], %s405
          %s407 = sshll.u32 [#allocation16], 4
          %s408 = int_to_ptr.vmem [resolvable:$true] %s407
          %413 = dma.hbm_to_vmem [thread:$0]  %s9, 8192, %s408, [#allocation15], 64, 64, 4
        $region48: #{classification_head_forward.1} parent=11 // pred_fallthru
          _
        // Predicated region
        $region49: #{classification_head_forward.1} parent=11 // pred_check
          %p414 = pneg %p262
        $region50: #{classification_head_forward.1} parent=11 // pred_check_branch
          %416 = sbr.rel (%p414) target = $region52
        $region51: #{classification_head_forward.1} parent=11 // pred_region
          %s418 = ssub.s32 16, 16
          %419 = vsyncadd [#allocation18], %s418
          %s421 = sshll.u32 [#allocation17], 4
          %s422 = int_to_ptr.vmem [resolvable:$true] %s421
          %424 = dma.hbm_to_vmem [thread:$0]  %s10, 16, %s422, [#allocation18]
        $region52: #{classification_head_forward.1} parent=11 // pred_fallthru
          _
      $region12: #{classification_head_forward.1} parent=5 // pred_fallthru
        _
      %p425 = scmp.lt.s32.totalorder %s26, 2
      // Predicated region
      $region53: #{classification_head_forward.1} parent=5 // pred_check
        %p426 = pneg %p425
      $region54: #{classification_head_forward.1} parent=5 // pred_check_branch
        %428 = sbr.rel (%p426) target = $region56
      $region55: #{classification_head_forward.1} parent=5 // pred_region
        // Predicated region
        $region57: #{classification_head_forward.1} parent=55 // pred_check
          %p429 = pneg %p46
        $region58: #{classification_head_forward.1} parent=55 // pred_check_branch
          %431 = sbr.rel (%p429) target = $region60
        $region59: #{classification_head_forward.1} parent=55 // pred_region
          %p432 = scmp.lt.s32.totalorder %s26, 1
          %s433 = scalar_select %p432, %s26, 1
          %s434 = smul.addr %s433, 36
          %s435 = smul.addr %s434, 4
          %s436 = scalar_lea.vmem %s0, %s435
        $region60: #{classification_head_forward.1} parent=55 // pred_fallthru
          _
      $region56: #{classification_head_forward.1} parent=5 // pred_fallthru
        _
      %p437 = scmp.le.s32.totalorder 1, %s26
      %p438 = scmp.lt.s32.totalorder %s26, 3
      %p439 = pnand %p437, %p438
      %p440 = pneg %p439
      // Predicated region
      $region61: #{classification_head_forward.1} parent=5 // pred_check
        _
      $region62: #{classification_head_forward.1} parent=5 // pred_check_branch
        %442 = sbr.rel (%p439) target = $region64
      $region63: #{classification_head_forward.1} parent=5 // pred_region
        %s443 = ssub.s32 %s26, 1
        // Predicated region
        $region65: #{classification_head_forward.1} parent=63 // pred_check
          %p444 = pneg %p73
        $region66: #{classification_head_forward.1} parent=63 // pred_check_branch
          %446 = sbr.rel (%p444) target = $region68
        $region67: #{classification_head_forward.1} parent=63 // pred_region
          %447 = dma.done [#allocation3], 2048
        $region68: #{classification_head_forward.1} parent=63 // pred_fallthru
          _
        // Predicated region
        $region69: #{classification_head_forward.1} parent=63 // pred_check
          %p448 = pneg %p94
        $region70: #{classification_head_forward.1} parent=63 // pred_check_branch
          %450 = sbr.rel (%p448) target = $region72
        $region71: #{classification_head_forward.1} parent=63 // pred_region
          %451 = dma.done [#allocation6], 16
        $region72: #{classification_head_forward.1} parent=63 // pred_fallthru
          _
        // Predicated region
        $region73: #{classification_head_forward.1} parent=63 // pred_check
          %p452 = pneg %p115
        $region74: #{classification_head_forward.1} parent=63 // pred_check_branch
          %454 = sbr.rel (%p452) target = $region76
        $region75: #{classification_head_forward.1} parent=63 // pred_region
          %455 = dma.done [#allocation6], 36864
        $region76: #{classification_head_forward.1} parent=63 // pred_fallthru
          _
        // Predicated region
        $region77: #{classification_head_forward.1} parent=63 // pred_check
          %p456 = pneg %p136
        $region78: #{classification_head_forward.1} parent=63 // pred_check_branch
          %458 = sbr.rel (%p456) target = $region80
        $region79: #{classification_head_forward.1} parent=63 // pred_region
          %459 = dma.done [#allocation9], 1024
        $region80: #{classification_head_forward.1} parent=63 // pred_fallthru
          _
        // Predicated region
        $region81: #{classification_head_forward.1} parent=63 // pred_check
          %p460 = pneg %p157
        $region82: #{classification_head_forward.1} parent=63 // pred_check_branch
          %462 = sbr.rel (%p460) target = $region84
        $region83: #{classification_head_forward.1} parent=63 // pred_region
          %463 = dma.done [#allocation9], 32768
        $region84: #{classification_head_forward.1} parent=63 // pred_fallthru
          _
        // Predicated region
        $region85: #{classification_head_forward.1} parent=63 // pred_check
          %p464 = pneg %p178
        $region86: #{classification_head_forward.1} parent=63 // pred_check_branch
          %466 = sbr.rel (%p464) target = $region88
        $region87: #{classification_head_forward.1} parent=63 // pred_region
          %467 = dma.done [#allocation12], 128
        $region88: #{classification_head_forward.1} parent=63 // pred_fallthru
          _
        // Predicated region
        $region89: #{classification_head_forward.1} parent=63 // pred_check
          %p468 = pneg %p199
        $region90: #{classification_head_forward.1} parent=63 // pred_check_branch
          %470 = sbr.rel (%p468) target = $region92
        $region91: #{classification_head_forward.1} parent=63 // pred_region
          %471 = dma.done [#allocation12], 65536
        $region92: #{classification_head_forward.1} parent=63 // pred_fallthru
          _
        // Predicated region
        $region93: #{classification_head_forward.1} parent=63 // pred_check
          %p472 = pneg %p220
        $region94: #{classification_head_forward.1} parent=63 // pred_check_branch
          %474 = sbr.rel (%p472) target = $region96
        $region95: #{classification_head_forward.1} parent=63 // pred_region
          %475 = dma.done [#allocation15], 128
        $region96: #{classification_head_forward.1} parent=63 // pred_fallthru
          _
        // Predicated region
        $region97: #{classification_head_forward.1} parent=63 // pred_check
          %p476 = pneg %p241
        $region98: #{classification_head_forward.1} parent=63 // pred_check_branch
          %478 = sbr.rel (%p476) target = $region100
        $region99: #{classification_head_forward.1} parent=63 // pred_region
          %479 = dma.done [#allocation15], 8192
        $region100: #{classification_head_forward.1} parent=63 // pred_fallthru
          _
        // Predicated region
        $region101: #{classification_head_forward.1} parent=63 // pred_check
          %p480 = pneg %p262
        $region102: #{classification_head_forward.1} parent=63 // pred_check_branch
          %482 = sbr.rel (%p480) target = $region104
        $region103: #{classification_head_forward.1} parent=63 // pred_region
          %483 = dma.done [#allocation18], 16
        $region104: #{classification_head_forward.1} parent=63 // pred_fallthru
          _
        %p484 = scmp.lt.s32.totalorder %s31, 1
        %s485 = scalar_select %p484, %s31, 1
        %s486 = smul.addr %s485, 36
        %s487 = smul.addr %s486, 4
        %s488 = scalar_lea.vmem %s0, %s487
        %p489 = pneg %p52
        %p490 = pneg %p49
        %p491 = pneg %p73
        %p492 = pneg %p70
        %p493 = pneg %p94
        %p494 = pneg %p91
        %p495 = pneg %p115
        %p496 = pneg %p112
        %p497 = pneg %p136
        %p498 = pneg %p133
        %p499 = pneg %p157
        %p500 = pneg %p154
        %p501 = pneg %p178
        %p502 = pneg %p175
        %p503 = pneg %p199
        %p504 = pneg %p196
        %p505 = pneg %p220
        %p506 = pneg %p217
        %p507 = pneg %p241
        %p508 = pneg %p238
        %p509 = pneg %p262
        %p510 = pneg %p259
        %p511 = pneg %p288
        %p512 = pneg %p285
        %s513 = sand.u32 %s275, 1
        %s514 = scalar_lea.sflag [#allocation4], %s513
        %s515 = sand.u32 %s275, 1
        %s516 = scalar_lea.vmem [#allocation19], %s515
        %p517 = scmp.lt.s32.totalorder %s31, 1
        %s518 = scalar_select %p517, %s31, 1
        %s519 = smul.addr %s518, 36
        %s520 = smul.addr %s519, 4
        %s521 = scalar_lea.vmem %s0, %s520
        %v523 = vld [vmem:[%s521] sm:$0xff]
        %v524 = vld [vmem:[%s521 + $0x8] sm:$0xff]
        %v525 = vld [vmem:[%s521 + $0x10] sm:$0xff]
        %v526 = vld [vmem:[%s521 + $0x18] sm:$0xff]
        %v527 = vld [vmem:[%s521 + $0x20] sm:$0xff]
        %v528 = vld [vmem:[%s521 + $0x28] sm:$0xff]
        %v529 = vld [vmem:[%s521 + $0x30] sm:$0xff]
        %v530 = vld [vmem:[%s521 + $0x38] sm:$0xff]
        %v531 = vld [vmem:[%s521 + $0x40] sm:$0xff]
        %v532 = vld [vmem:[%s521 + $0x48] sm:$0xff]
        %v533 = vld [vmem:[%s521 + $0x50] sm:$0xff]
        %v534 = vld [vmem:[%s521 + $0x58] sm:$0xff]
        %v535 = vld [vmem:[%s521 + $0x60] sm:$0xff]
        %v536 = vld [vmem:[%s521 + $0x68] sm:$0xff]
        %v537 = vld [vmem:[%s521 + $0x70] sm:$0xff]
        %v538 = vld [vmem:[%s521 + $0x78] sm:$0xff]
        %v539 = vld [vmem:[%s521 + $0x80] sm:$0xff]
        %v540 = vld [vmem:[%s521 + $0x88] sm:$0xff]
        %v541 = vld [vmem:[#allocation2] sm:$0xf]
        %v542 = vld [vmem:[#allocation2 + $0x4] sm:$0xf]
        %v543 = vld [vmem:[#allocation2 + $0x8] sm:$0xf]
        %v544 = vld [vmem:[#allocation2 + $0xc] sm:$0xf]
        %v545 = vld [vmem:[#allocation2 + $0x10] sm:$0xf]
        %v546 = vld [vmem:[#allocation2 + $0x14] sm:$0xf]
        %v547 = vld [vmem:[#allocation2 + $0x18] sm:$0xf]
        %v548 = vld [vmem:[#allocation2 + $0x1c] sm:$0xf]
        %v549 = vld [vmem:[#allocation2 + $0x20] sm:$0xf]
        %v550 = vld [vmem:[#allocation2 + $0x24] sm:$0xf]
        %v551 = vld [vmem:[#allocation2 + $0x28] sm:$0xf]
        %v552 = vld [vmem:[#allocation2 + $0x2c] sm:$0xf]
        %v553 = vld [vmem:[#allocation2 + $0x30] sm:$0xf]
        %v554 = vld [vmem:[#allocation2 + $0x34] sm:$0xf]
        %v555 = vld [vmem:[#allocation2 + $0x38] sm:$0xf]
        %v556 = vld [vmem:[#allocation2 + $0x3c] sm:$0xf]
        %v557 = vld [vmem:[#allocation2 + $0x40] sm:$0xf]
        %v558 = vld [vmem:[#allocation2 + $0x44] sm:$0xf]
        %v559 = vld [vmem:[#allocation2 + $0x48] sm:$0xf]
        %v560 = vld [vmem:[#allocation2 + $0x4c] sm:$0xf]
        %v561 = vld [vmem:[#allocation2 + $0x50] sm:$0xf]
        %v562 = vld [vmem:[#allocation2 + $0x54] sm:$0xf]
        %v563 = vld [vmem:[#allocation2 + $0x58] sm:$0xf]
        %v564 = vld [vmem:[#allocation2 + $0x5c] sm:$0xf]
        %v565 = vld [vmem:[#allocation2 + $0x60] sm:$0xf]
        %v566 = vld [vmem:[#allocation2 + $0x64] sm:$0xf]
        %v567 = vld [vmem:[#allocation2 + $0x68] sm:$0xf]
        %v568 = vld [vmem:[#allocation2 + $0x6c] sm:$0xf]
        %v569 = vld [vmem:[#allocation2 + $0x70] sm:$0xf]
        %v570 = vld [vmem:[#allocation2 + $0x74] sm:$0xf]
        %v571 = vld [vmem:[#allocation2 + $0x78] sm:$0xf]
        %v572 = vld [vmem:[#allocation2 + $0x7c] sm:$0xf]
        %v573 = vld [vmem:[#allocation5] sm:$0x1]
        %v575 = vlaneseq
        %v576 = vshrl.u32 %v575, 7
        %v577 = vsub.s32 0, %v576
        %v578 = vrot.slane %v573, %v577
        %v598 = vunpack.c.l.b16 %v523
        %v599 = vunpack.c.h.b16 %v523
        %v600 = vunpack.c.l.b16 %v524
        %v601 = vunpack.c.h.b16 %v524
        %v602 = vunpack.c.l.b16 %v525
        %v603 = vunpack.c.h.b16 %v525
        %v604 = vunpack.c.l.b16 %v526
        %v605 = vunpack.c.h.b16 %v526
        %v606 = vunpack.c.l.b16 %v527
        %v607 = vunpack.c.h.b16 %v527
        %v608 = vunpack.c.l.b16 %v528
        %v609 = vunpack.c.h.b16 %v528
        %v610 = vunpack.c.l.b16 %v529
        %v611 = vunpack.c.h.b16 %v529
        %v612 = vunpack.c.l.b16 %v530
        %v613 = vunpack.c.h.b16 %v530
        %v614 = vunpack.c.l.b16 %v531
        %v615 = vunpack.c.h.b16 %v531
        %v616 = vunpack.c.l.b16 %v532
        %v617 = vunpack.c.h.b16 %v532
        %v618 = vunpack.c.l.b16 %v533
        %v619 = vunpack.c.h.b16 %v533
        %v620 = vunpack.c.l.b16 %v534
        %v621 = vunpack.c.h.b16 %v534
        %v622 = vunpack.c.l.b16 %v535
        %v623 = vunpack.c.h.b16 %v535
        %v624 = vunpack.c.l.b16 %v536
        %v625 = vunpack.c.h.b16 %v536
        %v626 = vunpack.c.l.b16 %v537
        %v627 = vunpack.c.h.b16 %v537
        %v628 = vunpack.c.l.b16 %v538
        %v629 = vunpack.c.h.b16 %v538
        %v630 = vunpack.c.l.b16 %v539
        %v631 = vunpack.c.h.b16 %v539
        %v632 = vunpack.c.l.b16 %v540
        %v633 = vunpack.c.h.b16 %v540
        %v634 = vpack.c.b16 %v600, %v598
        %v635 = vpack.c.b16 %v601, %v599
        %v636 = vpack.c.b16 %v604, %v602
        %v637 = vpack.c.b16 %v605, %v603
        %v638 = vpack.c.b16 %v608, %v606
        %v639 = vpack.c.b16 %v609, %v607
        %v640 = vpack.c.b16 %v612, %v610
        %v641 = vpack.c.b16 %v613, %v611
        %v642 = vpack.c.b16 %v616, %v614
        %v643 = vpack.c.b16 %v617, %v615
        %v644 = vpack.c.b16 %v620, %v618
        %v645 = vpack.c.b16 %v621, %v619
        %v646 = vpack.c.b16 %v624, %v622
        %v647 = vpack.c.b16 %v625, %v623
        %v648 = vpack.c.b16 %v628, %v626
        %v649 = vpack.c.b16 %v629, %v627
        %v650 = vpack.c.b16 %v632, %v630
        %v651 = vpack.c.b16 %v633, %v631
        %v702 = vunpack.c.l.b16 %v541
        %v703 = vunpack.c.l.b16 %v542
        %v704 = vunpack.c.l.b16 %v543
        %v705 = vunpack.c.l.b16 %v544
        %v706 = vunpack.c.l.b16 %v545
        %v707 = vunpack.c.l.b16 %v546
        %v708 = vunpack.c.l.b16 %v547
        %v709 = vunpack.c.l.b16 %v548
        %v710 = vunpack.c.l.b16 %v549
        %v711 = vunpack.c.l.b16 %v550
        %v712 = vunpack.c.l.b16 %v551
        %v713 = vunpack.c.l.b16 %v552
        %v714 = vunpack.c.l.b16 %v553
        %v715 = vunpack.c.l.b16 %v554
        %v716 = vunpack.c.l.b16 %v555
        %v717 = vunpack.c.l.b16 %v556
        %v718 = vunpack.c.l.b16 %v557
        %v719 = vunpack.c.l.b16 %v558
        %v720 = vunpack.c.l.b16 %v559
        %v721 = vunpack.c.l.b16 %v560
        %v722 = vunpack.c.l.b16 %v561
        %v723 = vunpack.c.l.b16 %v562
        %v724 = vunpack.c.l.b16 %v563
        %v725 = vunpack.c.l.b16 %v564
        %v726 = vunpack.c.l.b16 %v565
        %v727 = vunpack.c.l.b16 %v566
        %v728 = vunpack.c.l.b16 %v567
        %v729 = vunpack.c.l.b16 %v568
        %v730 = vunpack.c.l.b16 %v569
        %v731 = vunpack.c.l.b16 %v570
        %v732 = vunpack.c.l.b16 %v571
        %v733 = vunpack.c.l.b16 %v572
        %v734 = vpack.c.b16 %v703, %v702
        %v735 = vpack.c.b16 %v705, %v704
        %v736 = vpack.c.b16 %v707, %v706
        %v737 = vpack.c.b16 %v709, %v708
        %v738 = vpack.c.b16 %v711, %v710
        %v739 = vpack.c.b16 %v713, %v712
        %v740 = vpack.c.b16 %v715, %v714
        %v741 = vpack.c.b16 %v717, %v716
        %v742 = vpack.c.b16 %v719, %v718
        %v743 = vpack.c.b16 %v721, %v720
        %v744 = vpack.c.b16 %v723, %v722
        %v745 = vpack.c.b16 %v725, %v724
        %v746 = vpack.c.b16 %v727, %v726
        %v747 = vpack.c.b16 %v729, %v728
        %v748 = vpack.c.b16 %v731, %v730
        %v749 = vpack.c.b16 %v733, %v732
        %766 = vmatprep.subr.bf16.mxu0 0
        %767 = vmatpush1.bf16.msra.mxu0 %v734
        %768 = vmatprep.subr.bf16.mxu0 0
        %769 = vmatpush1.bf16.msra.mxu0 %v735
        %770 = vmatprep.subr.bf16.mxu0 0
        %771 = vmatpush1.bf16.msra.mxu0 %v736
        %772 = vmatprep.subr.bf16.mxu0 0
        %773 = vmatpush1.bf16.msra.mxu0 %v737
        %774 = vmatprep.subr.bf16.mxu0 0
        %775 = vmatpush1.bf16.msra.mxu0 %v738
        %776 = vmatprep.subr.bf16.mxu0 0
        %777 = vmatpush1.bf16.msra.mxu0 %v739
        %778 = vmatprep.subr.bf16.mxu0 0
        %779 = vmatpush1.bf16.msra.mxu0 %v740
        %780 = vmatprep.subr.bf16.mxu0 0
        %781 = vmatpush1.bf16.msra.mxu0 %v741
        %782 = vmatprep.subr.bf16.mxu0 0
        %783 = vmatpush1.bf16.msra.mxu0 %v742
        %784 = vmatprep.subr.bf16.mxu0 0
        %785 = vmatpush1.bf16.msra.mxu0 %v743
        %786 = vmatprep.subr.bf16.mxu0 0
        %787 = vmatpush1.bf16.msra.mxu0 %v744
        %788 = vmatprep.subr.bf16.mxu0 0
        %789 = vmatpush1.bf16.msra.mxu0 %v745
        %790 = vmatprep.subr.bf16.mxu0 0
        %791 = vmatpush1.bf16.msra.mxu0 %v746
        %792 = vmatprep.subr.bf16.mxu0 0
        %793 = vmatpush1.bf16.msra.mxu0 %v747
        %794 = vmatprep.subr.bf16.mxu0 0
        %795 = vmatpush1.bf16.msra.mxu0 %v748
        %796 = vmatprep.subr.bf16.mxu0 0
        %797 = vmatpush1.bf16.msra.mxu0 %v749
        %798 = vmatprep.mubr.bf16.mxu0 %v635
        %799 = vmatmul.mubr.bf16.gmra.mrb[0].mxu0 %v634
        %v800 = vpop.f32.mrb[0].mxu0
        %v801 = vadd.f32 %v578, %v800
        %v802 = vpop.f32.mrb[0].mxu0
        %v803 = vpop.f32.mrb[0].mxu0
        %v804 = vadd.f32 %v578, %v803
        %v805 = vpop.f32.mrb[0].mxu0
        %806 = vmatprep.mubr.bf16.mxu0 %v637
        %807 = vmatmul.mubr.bf16.gmra.mrb[0].mxu0 %v636
        %v808 = vpop.f32.mrb[0].mxu0
        %v809 = vadd.f32 %v578, %v808
        %v810 = vpop.f32.mrb[0].mxu0
        %v811 = vpop.f32.mrb[0].mxu0
        %v812 = vadd.f32 %v578, %v811
        %v813 = vpop.f32.mrb[0].mxu0
        %814 = vmatprep.mubr.bf16.mxu0 %v639
        %815 = vmatmul.mubr.bf16.gmra.mrb[0].mxu0 %v638
        %v816 = vpop.f32.mrb[0].mxu0
        %v817 = vadd.f32 %v578, %v816
        %v818 = vpop.f32.mrb[0].mxu0
        %v819 = vpop.f32.mrb[0].mxu0
        %v820 = vadd.f32 %v578, %v819
        %v821 = vpop.f32.mrb[0].mxu0
        %822 = vmatprep.mubr.bf16.mxu0 %v641
        %823 = vmatmul.mubr.bf16.gmra.mrb[0].mxu0 %v640
        %v824 = vpop.f32.mrb[0].mxu0
        %v825 = vadd.f32 %v578, %v824
        %v826 = vpop.f32.mrb[0].mxu0
        %v827 = vpop.f32.mrb[0].mxu0
        %v828 = vadd.f32 %v578, %v827
        %v829 = vpop.f32.mrb[0].mxu0
        %830 = vmatprep.mubr.bf16.mxu0 %v643
        %831 = vmatmul.mubr.bf16.gmra.mrb[0].mxu0 %v642
        %v832 = vpop.f32.mrb[0].mxu0
        %v833 = vadd.f32 %v578, %v832
        %v834 = vpop.f32.mrb[0].mxu0
        %v835 = vpop.f32.mrb[0].mxu0
        %v836 = vadd.f32 %v578, %v835
        %v837 = vpop.f32.mrb[0].mxu0
        %838 = vmatprep.mubr.bf16.mxu0 %v645
        %839 = vmatmul.mubr.bf16.gmra.mrb[0].mxu0 %v644
        %v840 = vpop.f32.mrb[0].mxu0
        %v841 = vadd.f32 %v578, %v840
        %v842 = vpop.f32.mrb[0].mxu0
        %v843 = vpop.f32.mrb[0].mxu0
        %v844 = vadd.f32 %v578, %v843
        %v845 = vpop.f32.mrb[0].mxu0
        %846 = vmatprep.mubr.bf16.mxu0 %v647
        %847 = vmatmul.mubr.bf16.gmra.mrb[0].mxu0 %v646
        %v848 = vpop.f32.mrb[0].mxu0
        %v849 = vadd.f32 %v578, %v848
        %v850 = vpop.f32.mrb[0].mxu0
        %v851 = vpop.f32.mrb[0].mxu0
        %v852 = vadd.f32 %v578, %v851
        %v853 = vpop.f32.mrb[0].mxu0
        %854 = vmatprep.mubr.bf16.mxu0 %v649
        %855 = vmatmul.mubr.bf16.gmra.mrb[0].mxu0 %v648
        %v856 = vpop.f32.mrb[0].mxu0
        %v857 = vadd.f32 %v578, %v856
        %v858 = vpop.f32.mrb[0].mxu0
        %v859 = vpop.f32.mrb[0].mxu0
        %v860 = vadd.f32 %v578, %v859
        %v861 = vpop.f32.mrb[0].mxu0
        %862 = vmatprep.mubr.bf16.mxu0 %v651
        %863 = vmatmul.mubr.bf16.gmra.mrb[0].mxu0 %v650
        %v864 = vpop.f32.mrb[0].mxu0
        %v865 = vadd.f32 %v578, %v864
        %v866 = vpop.f32.mrb[0].mxu0
        %v867 = vpop.f32.mrb[0].mxu0
        %v868 = vadd.f32 %v578, %v867
        %v869 = vpop.f32.mrb[0].mxu0
        %870 = vdwg.mxu0
        %v871 = vmul.f32 %v801, 0.5
        %v872 = vmul.f32 %v804, 0.5
        %v873 = vmul.f32 %v809, 0.5
        %v874 = vmul.f32 %v812, 0.5
        %v875 = vmul.f32 %v817, 0.5
        %v876 = vmul.f32 %v820, 0.5
        %v877 = vmul.f32 %v825, 0.5
        %v878 = vmul.f32 %v828, 0.5
        %v879 = vmul.f32 %v833, 0.5
        %v880 = vmul.f32 %v836, 0.5
        %v881 = vmul.f32 %v841, 0.5
        %v882 = vmul.f32 %v844, 0.5
        %v883 = vmul.f32 %v849, 0.5
        %v884 = vmul.f32 %v852, 0.5
        %v885 = vmul.f32 %v857, 0.5
        %v886 = vmul.f32 %v860, 0.5
        %v887 = vmul.f32 %v865, 0.5
        %v888 = vmul.f32 %v868, 0.5
        %v889 = vmul.f32 %v801, 0.70710677
        %v890 = vmul.f32 %v804, 0.70710677
        %v891 = vmul.f32 %v809, 0.70710677
        %v892 = vmul.f32 %v812, 0.70710677
        %v893 = vmul.f32 %v817, 0.70710677
        %v894 = vmul.f32 %v820, 0.70710677
        %v895 = vmul.f32 %v825, 0.70710677
        %v896 = vmul.f32 %v828, 0.70710677
        %v897 = vmul.f32 %v833, 0.70710677
        %v898 = vmul.f32 %v836, 0.70710677
        %v899 = vmul.f32 %v841, 0.70710677
        %v900 = vmul.f32 %v844, 0.70710677
        %v901 = vmul.f32 %v849, 0.70710677
        %v902 = vmul.f32 %v852, 0.70710677
        %v903 = vmul.f32 %v857, 0.70710677
        %v904 = vmul.f32 %v860, 0.70710677
        %v905 = vmul.f32 %v865, 0.70710677
        %v906 = vmul.f32 %v868, 0.70710677
        %vm907 = vcmp.ge.f32.partialorder %v889, 0.0
        %vm908 = vcmp.ge.f32.partialorder %v890, 0.0
        %vm909 = vcmp.ge.f32.partialorder %v891, 0.0
        %vm910 = vcmp.ge.f32.partialorder %v892, 0.0
        %vm911 = vcmp.ge.f32.partialorder %v893, 0.0
        %vm912 = vcmp.ge.f32.partialorder %v894, 0.0
        %vm913 = vcmp.ge.f32.partialorder %v895, 0.0
        %vm914 = vcmp.ge.f32.partialorder %v896, 0.0
        %vm915 = vcmp.ge.f32.partialorder %v897, 0.0
        %vm916 = vcmp.ge.f32.partialorder %v898, 0.0
        %vm917 = vcmp.ge.f32.partialorder %v899, 0.0
        %vm918 = vcmp.ge.f32.partialorder %v900, 0.0
        %vm919 = vcmp.ge.f32.partialorder %v901, 0.0
        %vm920 = vcmp.ge.f32.partialorder %v902, 0.0
        %vm921 = vcmp.ge.f32.partialorder %v903, 0.0
        %vm922 = vcmp.ge.f32.partialorder %v904, 0.0
        %vm923 = vcmp.ge.f32.partialorder %v905, 0.0
        %vm924 = vcmp.ge.f32.partialorder %v906, 0.0
        %v925 = vsel %vm907, 1.0, -1.0
        %v926 = vsel %vm908, 1.0, -1.0
        %v927 = vsel %vm909, 1.0, -1.0
        %v928 = vsel %vm910, 1.0, -1.0
        %v929 = vsel %vm911, 1.0, -1.0
        %v930 = vsel %vm912, 1.0, -1.0
        %v931 = vsel %vm913, 1.0, -1.0
        %v932 = vsel %vm914, 1.0, -1.0
        %v933 = vsel %vm915, 1.0, -1.0
        %v934 = vsel %vm916, 1.0, -1.0
        %v935 = vsel %vm917, 1.0, -1.0
        %v936 = vsel %vm918, 1.0, -1.0
        %v937 = vsel %vm919, 1.0, -1.0
        %v938 = vsel %vm920, 1.0, -1.0
        %v939 = vsel %vm921, 1.0, -1.0
        %v940 = vsel %vm922, 1.0, -1.0
        %v941 = vsel %vm923, 1.0, -1.0
        %v942 = vsel %vm924, 1.0, -1.0
        %v943 = vand.u32 2147483647, %v889
        %v944 = vand.u32 2147483647, %v890
        %v945 = vand.u32 2147483647, %v891
        %v946 = vand.u32 2147483647, %v892
        %v947 = vand.u32 2147483647, %v893
        %v948 = vand.u32 2147483647, %v894
        %v949 = vand.u32 2147483647, %v895
        %v950 = vand.u32 2147483647, %v896
        %v951 = vand.u32 2147483647, %v897
        %v952 = vand.u32 2147483647, %v898
        %v953 = vand.u32 2147483647, %v899
        %v954 = vand.u32 2147483647, %v900
        %v955 = vand.u32 2147483647, %v901
        %v956 = vand.u32 2147483647, %v902
        %v957 = vand.u32 2147483647, %v903
        %v958 = vand.u32 2147483647, %v904
        %v959 = vand.u32 2147483647, %v905
        %v960 = vand.u32 2147483647, %v906
        %v961 = vmul.f32 %v943, 0.3275911
        %v962 = vmul.f32 %v944, 0.3275911
        %v963 = vmul.f32 %v945, 0.3275911
        %v964 = vmul.f32 %v946, 0.3275911
        %v965 = vmul.f32 %v947, 0.3275911
        %v966 = vmul.f32 %v948, 0.3275911
        %v967 = vmul.f32 %v949, 0.3275911
        %v968 = vmul.f32 %v950, 0.3275911
        %v969 = vmul.f32 %v951, 0.3275911
        %v970 = vmul.f32 %v952, 0.3275911
        %v971 = vmul.f32 %v953, 0.3275911
        %v972 = vmul.f32 %v954, 0.3275911
        %v973 = vmul.f32 %v955, 0.3275911
        %v974 = vmul.f32 %v956, 0.3275911
        %v975 = vmul.f32 %v957, 0.3275911
        %v976 = vmul.f32 %v958, 0.3275911
        %v977 = vmul.f32 %v959, 0.3275911
        %v978 = vmul.f32 %v960, 0.3275911
        %v979 = vadd.f32 %v961, 1.0
        %v980 = vadd.f32 %v962, 1.0
        %v981 = vadd.f32 %v963, 1.0
        %v982 = vadd.f32 %v964, 1.0
        %v983 = vadd.f32 %v965, 1.0
        %v984 = vadd.f32 %v966, 1.0
        %v985 = vadd.f32 %v967, 1.0
        %v986 = vadd.f32 %v968, 1.0
        %v987 = vadd.f32 %v969, 1.0
        %v988 = vadd.f32 %v970, 1.0
        %v989 = vadd.f32 %v971, 1.0
        %v990 = vadd.f32 %v972, 1.0
        %v991 = vadd.f32 %v973, 1.0
        %v992 = vadd.f32 %v974, 1.0
        %v993 = vadd.f32 %v975, 1.0
        %v994 = vadd.f32 %v976, 1.0
        %v995 = vadd.f32 %v977, 1.0
        %v996 = vadd.f32 %v978, 1.0
        %v997 = vrcp.pop %v979
        %v998 = vrcp.pop %v980
        %v999 = vrcp.pop %v981
        %v1000 = vrcp.pop %v982
        %v1001 = vrcp.pop %v983
        %v1002 = vrcp.pop %v984
        %v1003 = vrcp.pop %v985
        %v1004 = vrcp.pop %v986
        %v1005 = vrcp.pop %v987
        %v1006 = vrcp.pop %v988
        %v1007 = vrcp.pop %v989
        %v1008 = vrcp.pop %v990
        %v1009 = vrcp.pop %v991
        %v1010 = vrcp.pop %v992
        %v1011 = vrcp.pop %v993
        %v1012 = vrcp.pop %v994
        %v1013 = vrcp.pop %v995
        %v1014 = vrcp.pop %v996
        %v1015 = vmul.f32 %v997, 1.0614054
        %v1016 = vmul.f32 %v998, 1.0614054
        %v1017 = vmul.f32 %v999, 1.0614054
        %v1018 = vmul.f32 %v1000, 1.0614054
        %v1019 = vmul.f32 %v1001, 1.0614054
        %v1020 = vmul.f32 %v1002, 1.0614054
        %v1021 = vmul.f32 %v1003, 1.0614054
        %v1022 = vmul.f32 %v1004, 1.0614054
        %v1023 = vmul.f32 %v1005, 1.0614054
        %v1024 = vmul.f32 %v1006, 1.0614054
        %v1025 = vmul.f32 %v1007, 1.0614054
        %v1026 = vmul.f32 %v1008, 1.0614054
        %v1027 = vmul.f32 %v1009, 1.0614054
        %v1028 = vmul.f32 %v1010, 1.0614054
        %v1029 = vmul.f32 %v1011, 1.0614054
        %v1030 = vmul.f32 %v1012, 1.0614054
        %v1031 = vmul.f32 %v1013, 1.0614054
        %v1032 = vmul.f32 %v1014, 1.0614054
        %v1033 = vadd.f32 %v1015, -1.4531521
        %v1034 = vadd.f32 %v1016, -1.4531521
        %v1035 = vadd.f32 %v1017, -1.4531521
        %v1036 = vadd.f32 %v1018, -1.4531521
        %v1037 = vadd.f32 %v1019, -1.4531521
        %v1038 = vadd.f32 %v1020, -1.4531521
        %v1039 = vadd.f32 %v1021, -1.4531521
        %v1040 = vadd.f32 %v1022, -1.4531521
        %v1041 = vadd.f32 %v1023, -1.4531521
        %v1042 = vadd.f32 %v1024, -1.4531521
        %v1043 = vadd.f32 %v1025, -1.4531521
        %v1044 = vadd.f32 %v1026, -1.4531521
        %v1045 = vadd.f32 %v1027, -1.4531521
        %v1046 = vadd.f32 %v1028, -1.4531521
        %v1047 = vadd.f32 %v1029, -1.4531521
        %v1048 = vadd.f32 %v1030, -1.4531521
        %v1049 = vadd.f32 %v1031, -1.4531521
        %v1050 = vadd.f32 %v1032, -1.4531521
        %v1051 = vmul.f32 %v1033, %v997
        %v1052 = vmul.f32 %v1034, %v998
        %v1053 = vmul.f32 %v1035, %v999
        %v1054 = vmul.f32 %v1036, %v1000
        %v1055 = vmul.f32 %v1037, %v1001
        %v1056 = vmul.f32 %v1038, %v1002
        %v1057 = vmul.f32 %v1039, %v1003
        %v1058 = vmul.f32 %v1040, %v1004
        %v1059 = vmul.f32 %v1041, %v1005
        %v1060 = vmul.f32 %v1042, %v1006
        %v1061 = vmul.f32 %v1043, %v1007
        %v1062 = vmul.f32 %v1044, %v1008
        %v1063 = vmul.f32 %v1045, %v1009
        %v1064 = vmul.f32 %v1046, %v1010
        %v1065 = vmul.f32 %v1047, %v1011
        %v1066 = vmul.f32 %v1048, %v1012
        %v1067 = vmul.f32 %v1049, %v1013
        %v1068 = vmul.f32 %v1050, %v1014
        %v1069 = vadd.f32 %v1051, 1.4214138
        %v1070 = vadd.f32 %v1052, 1.4214138
        %v1071 = vadd.f32 %v1053, 1.4214138
        %v1072 = vadd.f32 %v1054, 1.4214138
        %v1073 = vadd.f32 %v1055, 1.4214138
        %v1074 = vadd.f32 %v1056, 1.4214138
        %v1075 = vadd.f32 %v1057, 1.4214138
        %v1076 = vadd.f32 %v1058, 1.4214138
        %v1077 = vadd.f32 %v1059, 1.4214138
        %v1078 = vadd.f32 %v1060, 1.4214138
        %v1079 = vadd.f32 %v1061, 1.4214138
        %v1080 = vadd.f32 %v1062, 1.4214138
        %v1081 = vadd.f32 %v1063, 1.4214138
        %v1082 = vadd.f32 %v1064, 1.4214138
        %v1083 = vadd.f32 %v1065, 1.4214138
        %v1084 = vadd.f32 %v1066, 1.4214138
        %v1085 = vadd.f32 %v1067, 1.4214138
        %v1086 = vadd.f32 %v1068, 1.4214138
        %v1087 = vmul.f32 %v1069, %v997
        %v1088 = vmul.f32 %v1070, %v998
        %v1089 = vmul.f32 %v1071, %v999
        %v1090 = vmul.f32 %v1072, %v1000
        %v1091 = vmul.f32 %v1073, %v1001
        %v1092 = vmul.f32 %v1074, %v1002
        %v1093 = vmul.f32 %v1075, %v1003
        %v1094 = vmul.f32 %v1076, %v1004
        %v1095 = vmul.f32 %v1077, %v1005
        %v1096 = vmul.f32 %v1078, %v1006
        %v1097 = vmul.f32 %v1079, %v1007
        %v1098 = vmul.f32 %v1080, %v1008
        %v1099 = vmul.f32 %v1081, %v1009
        %v1100 = vmul.f32 %v1082, %v1010
        %v1101 = vmul.f32 %v1083, %v1011
        %v1102 = vmul.f32 %v1084, %v1012
        %v1103 = vmul.f32 %v1085, %v1013
        %v1104 = vmul.f32 %v1086, %v1014
        %v1105 = vadd.f32 %v1087, -0.28449672
        %v1106 = vadd.f32 %v1088, -0.28449672
        %v1107 = vadd.f32 %v1089, -0.28449672
        %v1108 = vadd.f32 %v1090, -0.28449672
        %v1109 = vadd.f32 %v1091, -0.28449672
        %v1110 = vadd.f32 %v1092, -0.28449672
        %v1111 = vadd.f32 %v1093, -0.28449672
        %v1112 = vadd.f32 %v1094, -0.28449672
        %v1113 = vadd.f32 %v1095, -0.28449672
        %v1114 = vadd.f32 %v1096, -0.28449672
        %v1115 = vadd.f32 %v1097, -0.28449672
        %v1116 = vadd.f32 %v1098, -0.28449672
        %v1117 = vadd.f32 %v1099, -0.28449672
        %v1118 = vadd.f32 %v1100, -0.28449672
        %v1119 = vadd.f32 %v1101, -0.28449672
        %v1120 = vadd.f32 %v1102, -0.28449672
        %v1121 = vadd.f32 %v1103, -0.28449672
        %v1122 = vadd.f32 %v1104, -0.28449672
        %v1123 = vmul.f32 %v1105, %v997
        %v1124 = vmul.f32 %v1106, %v998
        %v1125 = vmul.f32 %v1107, %v999
        %v1126 = vmul.f32 %v1108, %v1000
        %v1127 = vmul.f32 %v1109, %v1001
        %v1128 = vmul.f32 %v1110, %v1002
        %v1129 = vmul.f32 %v1111, %v1003
        %v1130 = vmul.f32 %v1112, %v1004
        %v1131 = vmul.f32 %v1113, %v1005
        %v1132 = vmul.f32 %v1114, %v1006
        %v1133 = vmul.f32 %v1115, %v1007
        %v1134 = vmul.f32 %v1116, %v1008
        %v1135 = vmul.f32 %v1117, %v1009
        %v1136 = vmul.f32 %v1118, %v1010
        %v1137 = vmul.f32 %v1119, %v1011
        %v1138 = vmul.f32 %v1120, %v1012
        %v1139 = vmul.f32 %v1121, %v1013
        %v1140 = vmul.f32 %v1122, %v1014
        %v1141 = vadd.f32 %v1123, 0.2548296
        %v1142 = vadd.f32 %v1124, 0.2548296
        %v1143 = vadd.f32 %v1125, 0.2548296
        %v1144 = vadd.f32 %v1126, 0.2548296
        %v1145 = vadd.f32 %v1127, 0.2548296
        %v1146 = vadd.f32 %v1128, 0.2548296
        %v1147 = vadd.f32 %v1129, 0.2548296
        %v1148 = vadd.f32 %v1130, 0.2548296
        %v1149 = vadd.f32 %v1131, 0.2548296
        %v1150 = vadd.f32 %v1132, 0.2548296
        %v1151 = vadd.f32 %v1133, 0.2548296
        %v1152 = vadd.f32 %v1134, 0.2548296
        %v1153 = vadd.f32 %v1135, 0.2548296
        %v1154 = vadd.f32 %v1136, 0.2548296
        %v1155 = vadd.f32 %v1137, 0.2548296
        %v1156 = vadd.f32 %v1138, 0.2548296
        %v1157 = vadd.f32 %v1139, 0.2548296
        %v1158 = vadd.f32 %v1140, 0.2548296
        %v1159 = vmul.f32 %v1141, %v997
        %v1160 = vmul.f32 %v1142, %v998
        %v1161 = vmul.f32 %v1143, %v999
        %v1162 = vmul.f32 %v1144, %v1000
        %v1163 = vmul.f32 %v1145, %v1001
        %v1164 = vmul.f32 %v1146, %v1002
        %v1165 = vmul.f32 %v1147, %v1003
        %v1166 = vmul.f32 %v1148, %v1004
        %v1167 = vmul.f32 %v1149, %v1005
        %v1168 = vmul.f32 %v1150, %v1006
        %v1169 = vmul.f32 %v1151, %v1007
        %v1170 = vmul.f32 %v1152, %v1008
        %v1171 = vmul.f32 %v1153, %v1009
        %v1172 = vmul.f32 %v1154, %v1010
        %v1173 = vmul.f32 %v1155, %v1011
        %v1174 = vmul.f32 %v1156, %v1012
        %v1175 = vmul.f32 %v1157, %v1013
        %v1176 = vmul.f32 %v1158, %v1014
        %v1177 = vsub.f32 0.0, %v943
        %v1178 = vsub.f32 0.0, %v944
        %v1179 = vsub.f32 0.0, %v945
        %v1180 = vsub.f32 0.0, %v946
        %v1181 = vsub.f32 0.0, %v947
        %v1182 = vsub.f32 0.0, %v948
        %v1183 = vsub.f32 0.0, %v949
        %v1184 = vsub.f32 0.0, %v950
        %v1185 = vsub.f32 0.0, %v951
        %v1186 = vsub.f32 0.0, %v952
        %v1187 = vsub.f32 0.0, %v953
        %v1188 = vsub.f32 0.0, %v954
        %v1189 = vsub.f32 0.0, %v955
        %v1190 = vsub.f32 0.0, %v956
        %v1191 = vsub.f32 0.0, %v957
        %v1192 = vsub.f32 0.0, %v958
        %v1193 = vsub.f32 0.0, %v959
        %v1194 = vsub.f32 0.0, %v960
        %v1195 = vmul.f32 %v1177, %v943
        %v1196 = vmul.f32 %v1178, %v944
        %v1197 = vmul.f32 %v1179, %v945
        %v1198 = vmul.f32 %v1180, %v946
        %v1199 = vmul.f32 %v1181, %v947
        %v1200 = vmul.f32 %v1182, %v948
        %v1201 = vmul.f32 %v1183, %v949
        %v1202 = vmul.f32 %v1184, %v950
        %v1203 = vmul.f32 %v1185, %v951
        %v1204 = vmul.f32 %v1186, %v952
        %v1205 = vmul.f32 %v1187, %v953
        %v1206 = vmul.f32 %v1188, %v954
        %v1207 = vmul.f32 %v1189, %v955
        %v1208 = vmul.f32 %v1190, %v956
        %v1209 = vmul.f32 %v1191, %v957
        %v1210 = vmul.f32 %v1192, %v958
        %v1211 = vmul.f32 %v1193, %v959
        %v1212 = vmul.f32 %v1194, %v960
        %v1213 = vmul.f32 %v1195, 1.442695
        %v1214 = vpow.pop %v1213
        %v1215 = vmul.f32 %v1196, 1.442695
        %v1216 = vpow.pop %v1215
        %v1217 = vmul.f32 %v1197, 1.442695
        %v1218 = vpow.pop %v1217
        %v1219 = vmul.f32 %v1198, 1.442695
        %v1220 = vpow.pop %v1219
        %v1221 = vmul.f32 %v1199, 1.442695
        %v1222 = vpow.pop %v1221
        %v1223 = vmul.f32 %v1200, 1.442695
        %v1224 = vpow.pop %v1223
        %v1225 = vmul.f32 %v1201, 1.442695
        %v1226 = vpow.pop %v1225
        %v1227 = vmul.f32 %v1202, 1.442695
        %v1228 = vpow.pop %v1227
        %v1229 = vmul.f32 %v1203, 1.442695
        %v1230 = vpow.pop %v1229
        %v1231 = vmul.f32 %v1204, 1.442695
        %v1232 = vpow.pop %v1231
        %v1233 = vmul.f32 %v1205, 1.442695
        %v1234 = vpow.pop %v1233
        %v1235 = vmul.f32 %v1206, 1.442695
        %v1236 = vpow.pop %v1235
        %v1237 = vmul.f32 %v1207, 1.442695
        %v1238 = vpow.pop %v1237
        %v1239 = vmul.f32 %v1208, 1.442695
        %v1240 = vpow.pop %v1239
        %v1241 = vmul.f32 %v1209, 1.442695
        %v1242 = vpow.pop %v1241
        %v1243 = vmul.f32 %v1210, 1.442695
        %v1244 = vpow.pop %v1243
        %v1245 = vmul.f32 %v1211, 1.442695
        %v1246 = vpow.pop %v1245
        %v1247 = vmul.f32 %v1212, 1.442695
        %v1248 = vpow.pop %v1247
        %v1249 = vmul.f32 %v1159, %v1214
        %v1250 = vmul.f32 %v1160, %v1216
        %v1251 = vmul.f32 %v1161, %v1218
        %v1252 = vmul.f32 %v1162, %v1220
        %v1253 = vmul.f32 %v1163, %v1222
        %v1254 = vmul.f32 %v1164, %v1224
        %v1255 = vmul.f32 %v1165, %v1226
        %v1256 = vmul.f32 %v1166, %v1228
        %v1257 = vmul.f32 %v1167, %v1230
        %v1258 = vmul.f32 %v1168, %v1232
        %v1259 = vmul.f32 %v1169, %v1234
        %v1260 = vmul.f32 %v1170, %v1236
        %v1261 = vmul.f32 %v1171, %v1238
        %v1262 = vmul.f32 %v1172, %v1240
        %v1263 = vmul.f32 %v1173, %v1242
        %v1264 = vmul.f32 %v1174, %v1244
        %v1265 = vmul.f32 %v1175, %v1246
        %v1266 = vmul.f32 %v1176, %v1248
        %v1267 = vsub.f32 1.0, %v1249
        %v1268 = vsub.f32 1.0, %v1250
        %v1269 = vsub.f32 1.0, %v1251
        %v1270 = vsub.f32 1.0, %v1252
        %v1271 = vsub.f32 1.0, %v1253
        %v1272 = vsub.f32 1.0, %v1254
        %v1273 = vsub.f32 1.0, %v1255
        %v1274 = vsub.f32 1.0, %v1256
        %v1275 = vsub.f32 1.0, %v1257
        %v1276 = vsub.f32 1.0, %v1258
        %v1277 = vsub.f32 1.0, %v1259
        %v1278 = vsub.f32 1.0, %v1260
        %v1279 = vsub.f32 1.0, %v1261
        %v1280 = vsub.f32 1.0, %v1262
        %v1281 = vsub.f32 1.0, %v1263
        %v1282 = vsub.f32 1.0, %v1264
        %v1283 = vsub.f32 1.0, %v1265
        %v1284 = vsub.f32 1.0, %v1266
        %v1285 = vmul.f32 %v925, %v1267
        %v1286 = vmul.f32 %v926, %v1268
        %v1287 = vmul.f32 %v927, %v1269
        %v1288 = vmul.f32 %v928, %v1270
        %v1289 = vmul.f32 %v929, %v1271
        %v1290 = vmul.f32 %v930, %v1272
        %v1291 = vmul.f32 %v931, %v1273
        %v1292 = vmul.f32 %v932, %v1274
        %v1293 = vmul.f32 %v933, %v1275
        %v1294 = vmul.f32 %v934, %v1276
        %v1295 = vmul.f32 %v935, %v1277
        %v1296 = vmul.f32 %v936, %v1278
        %v1297 = vmul.f32 %v937, %v1279
        %v1298 = vmul.f32 %v938, %v1280
        %v1299 = vmul.f32 %v939, %v1281
        %v1300 = vmul.f32 %v940, %v1282
        %v1301 = vmul.f32 %v941, %v1283
        %v1302 = vmul.f32 %v942, %v1284
        %v1303 = vadd.f32 %v1285, 1.0
        %v1304 = vadd.f32 %v1286, 1.0
        %v1305 = vadd.f32 %v1287, 1.0
        %v1306 = vadd.f32 %v1288, 1.0
        %v1307 = vadd.f32 %v1289, 1.0
        %v1308 = vadd.f32 %v1290, 1.0
        %v1309 = vadd.f32 %v1291, 1.0
        %v1310 = vadd.f32 %v1292, 1.0
        %v1311 = vadd.f32 %v1293, 1.0
        %v1312 = vadd.f32 %v1294, 1.0
        %v1313 = vadd.f32 %v1295, 1.0
        %v1314 = vadd.f32 %v1296, 1.0
        %v1315 = vadd.f32 %v1297, 1.0
        %v1316 = vadd.f32 %v1298, 1.0
        %v1317 = vadd.f32 %v1299, 1.0
        %v1318 = vadd.f32 %v1300, 1.0
        %v1319 = vadd.f32 %v1301, 1.0
        %v1320 = vadd.f32 %v1302, 1.0
        %v1321 = vmul.f32 %v871, %v1303
        %v1322 = vmul.f32 %v872, %v1304
        %v1323 = vmul.f32 %v873, %v1305
        %v1324 = vmul.f32 %v874, %v1306
        %v1325 = vmul.f32 %v875, %v1307
        %v1326 = vmul.f32 %v876, %v1308
        %v1327 = vmul.f32 %v877, %v1309
        %v1328 = vmul.f32 %v878, %v1310
        %v1329 = vmul.f32 %v879, %v1311
        %v1330 = vmul.f32 %v880, %v1312
        %v1331 = vmul.f32 %v881, %v1313
        %v1332 = vmul.f32 %v882, %v1314
        %v1333 = vmul.f32 %v883, %v1315
        %v1334 = vmul.f32 %v884, %v1316
        %v1335 = vmul.f32 %v885, %v1317
        %v1336 = vmul.f32 %v886, %v1318
        %v1337 = vmul.f32 %v887, %v1319
        %v1338 = vmul.f32 %v888, %v1320
        %v1339 = vpack.c.bf16 %v1322, %v1321
        %v1340 = vpack.c.bf16 %v1324, %v1323
        %v1341 = vpack.c.bf16 %v1326, %v1325
        %v1342 = vpack.c.bf16 %v1328, %v1327
        %v1343 = vpack.c.bf16 %v1330, %v1329
        %v1344 = vpack.c.bf16 %v1332, %v1331
        %v1345 = vpack.c.bf16 %v1334, %v1333
        %v1346 = vpack.c.bf16 %v1336, %v1335
        %v1347 = vpack.c.bf16 %v1338, %v1337
        %v1348 = vld [vmem:[#allocation7] sm:$0xff]
        %v1349 = vld [vmem:[#allocation7 + $0x8] sm:$0xff]
        %v1350 = vld [vmem:[#allocation7 + $0x10] sm:$0xff]
        %v1351 = vld [vmem:[#allocation7 + $0x18] sm:$0xff]
        %v1352 = vld [vmem:[#allocation7 + $0x20] sm:$0xff]
        %v1353 = vld [vmem:[#allocation7 + $0x28] sm:$0xff]
        %v1354 = vld [vmem:[#allocation7 + $0x30] sm:$0xff]
        %v1355 = vld [vmem:[#allocation7 + $0x38] sm:$0xff]
        %v1356 = vld [vmem:[#allocation7 + $0x40] sm:$0xff]
        %v1357 = vld [vmem:[#allocation7 + $0x48] sm:$0xff]
        %v1358 = vld [vmem:[#allocation7 + $0x50] sm:$0xff]
        %v1359 = vld [vmem:[#allocation7 + $0x58] sm:$0xff]
        %v1360 = vld [vmem:[#allocation7 + $0x60] sm:$0xff]
        %v1361 = vld [vmem:[#allocation7 + $0x68] sm:$0xff]
        %v1362 = vld [vmem:[#allocation7 + $0x70] sm:$0xff]
        %v1363 = vld [vmem:[#allocation7 + $0x78] sm:$0xff]
        %v1364 = vld [vmem:[#allocation7 + $0x80] sm:$0xff]
        %v1365 = vld [vmem:[#allocation7 + $0x88] sm:$0xff]
        %v1366 = vld [vmem:[#allocation7 + $0x90] sm:$0xff]
        %v1367 = vld [vmem:[#allocation7 + $0x98] sm:$0xff]
        %v1368 = vld [vmem:[#allocation7 + $0xa0] sm:$0xff]
        %v1369 = vld [vmem:[#allocation7 + $0xa8] sm:$0xff]
        %v1370 = vld [vmem:[#allocation7 + $0xb0] sm:$0xff]
        %v1371 = vld [vmem:[#allocation7 + $0xb8] sm:$0xff]
        %v1372 = vld [vmem:[#allocation7 + $0xc0] sm:$0xff]
        %v1373 = vld [vmem:[#allocation7 + $0xc8] sm:$0xff]
        %v1374 = vld [vmem:[#allocation7 + $0xd0] sm:$0xff]
        %v1375 = vld [vmem:[#allocation7 + $0xd8] sm:$0xff]
        %v1376 = vld [vmem:[#allocation7 + $0xe0] sm:$0xff]
        %v1377 = vld [vmem:[#allocation7 + $0xe8] sm:$0xff]
        %v1378 = vld [vmem:[#allocation7 + $0xf0] sm:$0xff]
        %v1379 = vld [vmem:[#allocation7 + $0xf8] sm:$0xff]
        %s1380 = scalar_lea.vmem [#allocation7], 256
        %v1381 = vld [vmem:[%s1380] sm:$0xff]
        %v1382 = vld [vmem:[%s1380 + $0x8] sm:$0xff]
        %v1383 = vld [vmem:[%s1380 + $0x10] sm:$0xff]
        %v1384 = vld [vmem:[%s1380 + $0x18] sm:$0xff]
        %v1385 = vld [vmem:[%s1380 + $0x20] sm:$0xff]
        %v1386 = vld [vmem:[%s1380 + $0x28] sm:$0xff]
        %v1387 = vld [vmem:[%s1380 + $0x30] sm:$0xff]
        %v1388 = vld [vmem:[%s1380 + $0x38] sm:$0xff]
        %v1389 = vld [vmem:[%s1380 + $0x40] sm:$0xff]
        %v1390 = vld [vmem:[%s1380 + $0x48] sm:$0xff]
        %v1391 = vld [vmem:[%s1380 + $0x50] sm:$0xff]
        %v1392 = vld [vmem:[%s1380 + $0x58] sm:$0xff]
        %v1393 = vld [vmem:[%s1380 + $0x60] sm:$0xff]
        %v1394 = vld [vmem:[%s1380 + $0x68] sm:$0xff]
        %v1395 = vld [vmem:[%s1380 + $0x70] sm:$0xff]
        %v1396 = vld [vmem:[%s1380 + $0x78] sm:$0xff]
        %v1397 = vld [vmem:[%s1380 + $0x80] sm:$0xff]
        %v1398 = vld [vmem:[%s1380 + $0x88] sm:$0xff]
        %v1399 = vld [vmem:[%s1380 + $0x90] sm:$0xff]
        %v1400 = vld [vmem:[%s1380 + $0x98] sm:$0xff]
        %v1401 = vld [vmem:[%s1380 + $0xa0] sm:$0xff]
        %v1402 = vld [vmem:[%s1380 + $0xa8] sm:$0xff]
        %v1403 = vld [vmem:[%s1380 + $0xb0] sm:$0xff]
        %v1404 = vld [vmem:[%s1380 + $0xb8] sm:$0xff]
        %v1405 = vld [vmem:[%s1380 + $0xc0] sm:$0xff]
        %v1406 = vld [vmem:[%s1380 + $0xc8] sm:$0xff]
        %v1407 = vld [vmem:[%s1380 + $0xd0] sm:$0xff]
        %v1408 = vld [vmem:[%s1380 + $0xd8] sm:$0xff]
        %v1409 = vld [vmem:[%s1380 + $0xe0] sm:$0xff]
        %v1410 = vld [vmem:[%s1380 + $0xe8] sm:$0xff]
        %v1411 = vld [vmem:[%s1380 + $0xf0] sm:$0xff]
        %v1412 = vld [vmem:[%s1380 + $0xf8] sm:$0xff]
        %v1445 = vunpack.c.l.b16 %v1381
        %v1446 = vunpack.c.h.b16 %v1381
        %v1447 = vunpack.c.l.b16 %v1382
        %v1448 = vunpack.c.h.b16 %v1382
        %v1449 = vunpack.c.l.b16 %v1383
        %v1450 = vunpack.c.h.b16 %v1383
        %v1451 = vunpack.c.l.b16 %v1384
        %v1452 = vunpack.c.h.b16 %v1384
        %v1453 = vunpack.c.l.b16 %v1385
        %v1454 = vunpack.c.h.b16 %v1385
        %v1455 = vunpack.c.l.b16 %v1386
        %v1456 = vunpack.c.h.b16 %v1386
        %v1457 = vunpack.c.l.b16 %v1387
        %v1458 = vunpack.c.h.b16 %v1387
        %v1459 = vunpack.c.l.b16 %v1388
        %v1460 = vunpack.c.h.b16 %v1388
        %v1461 = vunpack.c.l.b16 %v1389
        %v1462 = vunpack.c.h.b16 %v1389
        %v1463 = vunpack.c.l.b16 %v1390
        %v1464 = vunpack.c.h.b16 %v1390
        %v1465 = vunpack.c.l.b16 %v1391
        %v1466 = vunpack.c.h.b16 %v1391
        %v1467 = vunpack.c.l.b16 %v1392
        %v1468 = vunpack.c.h.b16 %v1392
        %v1469 = vunpack.c.l.b16 %v1393
        %v1470 = vunpack.c.h.b16 %v1393
        %v1471 = vunpack.c.l.b16 %v1394
        %v1472 = vunpack.c.h.b16 %v1394
        %v1473 = vunpack.c.l.b16 %v1395
        %v1474 = vunpack.c.h.b16 %v1395
        %v1475 = vunpack.c.l.b16 %v1396
        %v1476 = vunpack.c.h.b16 %v1396
        %v1477 = vunpack.c.l.b16 %v1397
        %v1478 = vunpack.c.h.b16 %v1397
        %v1479 = vunpack.c.l.b16 %v1398
        %v1480 = vunpack.c.h.b16 %v1398
        %v1481 = vunpack.c.l.b16 %v1399
        %v1482 = vunpack.c.h.b16 %v1399
        %v1483 = vunpack.c.l.b16 %v1400
        %v1484 = vunpack.c.h.b16 %v1400
        %v1485 = vunpack.c.l.b16 %v1401
        %v1486 = vunpack.c.h.b16 %v1401
        %v1487 = vunpack.c.l.b16 %v1402
        %v1488 = vunpack.c.h.b16 %v1402
        %v1489 = vunpack.c.l.b16 %v1403
        %v1490 = vunpack.c.h.b16 %v1403
        %v1491 = vunpack.c.l.b16 %v1404
        %v1492 = vunpack.c.h.b16 %v1404
        %v1493 = vunpack.c.l.b16 %v1405
        %v1494 = vunpack.c.h.b16 %v1405
        %v1495 = vunpack.c.l.b16 %v1406
        %v1496 = vunpack.c.h.b16 %v1406
        %v1497 = vunpack.c.l.b16 %v1407
        %v1498 = vunpack.c.h.b16 %v1407
        %v1499 = vunpack.c.l.b16 %v1408
        %v1500 = vunpack.c.h.b16 %v1408
        %v1501 = vunpack.c.l.b16 %v1409
        %v1502 = vunpack.c.h.b16 %v1409
        %v1503 = vunpack.c.l.b16 %v1410
        %v1504 = vunpack.c.h.b16 %v1410
        %v1505 = vunpack.c.l.b16 %v1411
        %v1506 = vunpack.c.h.b16 %v1411
        %v1507 = vunpack.c.l.b16 %v1412
        %v1508 = vunpack.c.h.b16 %v1412
        %v1509 = vpack.c.b16 %v1449, %v1445
        %v1510 = vpack.c.b16 %v1450, %v1446
        %v1511 = vpack.c.b16 %v1451, %v1447
        %v1512 = vpack.c.b16 %v1452, %v1448
        %v1513 = vpack.c.b16 %v1457, %v1453
        %v1514 = vpack.c.b16 %v1458, %v1454
        %v1515 = vpack.c.b16 %v1459, %v1455
        %v1516 = vpack.c.b16 %v1460, %v1456
        %v1517 = vpack.c.b16 %v1465, %v1461
        %v1518 = vpack.c.b16 %v1466, %v1462
        %v1519 = vpack.c.b16 %v1467, %v1463
        %v1520 = vpack.c.b16 %v1468, %v1464
        %v1521 = vpack.c.b16 %v1473, %v1469
        %v1522 = vpack.c.b16 %v1474, %v1470
        %v1523 = vpack.c.b16 %v1475, %v1471
        %v1524 = vpack.c.b16 %v1476, %v1472
        %v1525 = vpack.c.b16 %v1481, %v1477
        %v1526 = vpack.c.b16 %v1482, %v1478
        %v1527 = vpack.c.b16 %v1483, %v1479
        %v1528 = vpack.c.b16 %v1484, %v1480
        %v1529 = vpack.c.b16 %v1489, %v1485
        %v1530 = vpack.c.b16 %v1490, %v1486
        %v1531 = vpack.c.b16 %v1491, %v1487
        %v1532 = vpack.c.b16 %v1492, %v1488
        %v1533 = vpack.c.b16 %v1497, %v1493
        %v1534 = vpack.c.b16 %v1498, %v1494
        %v1535 = vpack.c.b16 %v1499, %v1495
        %v1536 = vpack.c.b16 %v1500, %v1496
        %v1537 = vpack.c.b16 %v1505, %v1501
        %v1538 = vpack.c.b16 %v1506, %v1502
        %v1539 = vpack.c.b16 %v1507, %v1503
        %v1540 = vpack.c.b16 %v1508, %v1504
        %1573 = vmatprep.subr.bf16.mxu0 %v1510
        %1574 = vmatpush1.bf16.msra.mxu0 %v1509
        %1575 = vmatprep.subr.bf16.mxu0 %v1514
        %1576 = vmatpush1.bf16.msra.mxu0 %v1513
        %1577 = vmatprep.subr.bf16.mxu0 %v1518
        %1578 = vmatpush1.bf16.msra.mxu0 %v1517
        %1579 = vmatprep.subr.bf16.mxu0 %v1522
        %1580 = vmatpush1.bf16.msra.mxu0 %v1521
        %1581 = vmatprep.subr.bf16.mxu0 %v1526
        %1582 = vmatpush1.bf16.msra.mxu0 %v1525
        %1583 = vmatprep.subr.bf16.mxu0 %v1530
        %1584 = vmatpush1.bf16.msra.mxu0 %v1529
        %1585 = vmatprep.subr.bf16.mxu0 %v1534
        %1586 = vmatpush1.bf16.msra.mxu0 %v1533
        %1587 = vmatprep.subr.bf16.mxu0 %v1538
        %1588 = vmatpush1.bf16.msra.mxu0 %v1537
        %1589 = vmatprep.subr.bf16.mxu0 0
        %1590 = vmatpush1.bf16.msra.mxu0 0
        %1591 = vmatprep.subr.bf16.mxu0 0
        %1592 = vmatpush1.bf16.msra.mxu0 0
        %1593 = vmatprep.subr.bf16.mxu0 0
        %1594 = vmatpush1.bf16.msra.mxu0 0
        %1595 = vmatprep.subr.bf16.mxu0 0
        %1596 = vmatpush1.bf16.msra.mxu0 0
        %1597 = vmatprep.subr.bf16.mxu0 0
        %1598 = vmatpush1.bf16.msra.mxu0 0
        %1599 = vmatprep.subr.bf16.mxu0 0
        %1600 = vmatpush1.bf16.msra.mxu0 0
        %1601 = vmatprep.subr.bf16.mxu0 0
        %1602 = vmatpush1.bf16.msra.mxu0 0
        %1603 = vmatprep.subr.bf16.mxu0 0
        %1604 = vmatpush1.bf16.msra.mxu0 0
        %1605 = vmatprep.mubr.bf16.mxu0 0
        %1606 = vmatmul.mubr.bf16.gmra.mrb[0].mxu0 %v1340
        %v1607 = vpop.f32.mrb[0].mxu0
        %v1608 = vadd.f32 0.0, %v1607
        %v1609 = vpop.f32.mrb[0].mxu0
        %v1610 = vadd.f32 0.0, %v1609
        %v1611 = vpop.f32.mrb[0].mxu0
        %v1612 = vadd.f32 0.0, %v1611
        %v1613 = vpop.f32.mrb[0].mxu0
        %v1614 = vadd.f32 0.0, %v1613
        %1615 = vdwg.mxu0
        %1616 = vmatprep.subr.bf16.mxu0 %v1512
        %1617 = vmatpush1.bf16.msra.mxu0 %v1511
        %1618 = vmatprep.subr.bf16.mxu0 %v1516
        %1619 = vmatpush1.bf16.msra.mxu0 %v1515
        %1620 = vmatprep.subr.bf16.mxu0 %v1520
        %1621 = vmatpush1.bf16.msra.mxu0 %v1519
        %1622 = vmatprep.subr.bf16.mxu0 %v1524
        %1623 = vmatpush1.bf16.msra.mxu0 %v1523
        %1624 = vmatprep.subr.bf16.mxu0 %v1528
        %1625 = vmatpush1.bf16.msra.mxu0 %v1527
        %1626 = vmatprep.subr.bf16.mxu0 %v1532
        %1627 = vmatpush1.bf16.msra.mxu0 %v1531
        %1628 = vmatprep.subr.bf16.mxu0 %v1536
        %1629 = vmatpush1.bf16.msra.mxu0 %v1535
        %1630 = vmatprep.subr.bf16.mxu0 %v1540
        %1631 = vmatpush1.bf16.msra.mxu0 %v1539
        %1632 = vmatprep.subr.bf16.mxu0 0
        %1633 = vmatpush1.bf16.msra.mxu0 0
        %1634 = vmatprep.subr.bf16.mxu0 0
        %1635 = vmatpush1.bf16.msra.mxu0 0
        %1636 = vmatprep.subr.bf16.mxu0 0
        %1637 = vmatpush1.bf16.msra.mxu0 0
        %1638 = vmatprep.subr.bf16.mxu0 0
        %1639 = vmatpush1.bf16.msra.mxu0 0
        %1640 = vmatprep.subr.bf16.mxu0 0
        %1641 = vmatpush1.bf16.msra.mxu0 0
        %1642 = vmatprep.subr.bf16.mxu0 0
        %1643 = vmatpush1.bf16.msra.mxu0 0
        %1644 = vmatprep.subr.bf16.mxu0 0
        %1645 = vmatpush1.bf16.msra.mxu0 0
        %1646 = vmatprep.subr.bf16.mxu0 0
        %1647 = vmatpush1.bf16.msra.mxu0 0
        %1648 = vmatprep.mubr.bf16.mxu0 0
        %1649 = vmatmul.mubr.bf16.gmra.mrb[0].mxu0 %v1340
        %v1650 = vpop.f32.mrb[0].mxu0
        %v1651 = vadd.f32 0.0, %v1650
        %v1652 = vpop.f32.mrb[0].mxu0
        %v1653 = vadd.f32 0.0, %v1652
        %v1654 = vpop.f32.mrb[0].mxu0
        %v1655 = vadd.f32 0.0, %v1654
        %v1656 = vpop.f32.mrb[0].mxu0
        %v1657 = vadd.f32 0.0, %v1656
        %1658 = vdwg.mxu0
        %v1691 = vunpack.c.l.b16 %v1348
        %v1692 = vunpack.c.h.b16 %v1348
        %v1693 = vunpack.c.l.b16 %v1349
        %v1694 = vunpack.c.h.b16 %v1349
        %v1695 = vunpack.c.l.b16 %v1350
        %v1696 = vunpack.c.h.b16 %v1350
        %v1697 = vunpack.c.l.b16 %v1351
        %v1698 = vunpack.c.h.b16 %v1351
        %v1699 = vunpack.c.l.b16 %v1352
        %v1700 = vunpack.c.h.b16 %v1352
        %v1701 = vunpack.c.l.b16 %v1353
        %v1702 = vunpack.c.h.b16 %v1353
        %v1703 = vunpack.c.l.b16 %v1354
        %v1704 = vunpack.c.h.b16 %v1354
        %v1705 = vunpack.c.l.b16 %v1355
        %v1706 = vunpack.c.h.b16 %v1355
        %v1707 = vunpack.c.l.b16 %v1356
        %v1708 = vunpack.c.h.b16 %v1356
        %v1709 = vunpack.c.l.b16 %v1357
        %v1710 = vunpack.c.h.b16 %v1357
        %v1711 = vunpack.c.l.b16 %v1358
        %v1712 = vunpack.c.h.b16 %v1358
        %v1713 = vunpack.c.l.b16 %v1359
        %v1714 = vunpack.c.h.b16 %v1359
        %v1715 = vunpack.c.l.b16 %v1360
        %v1716 = vunpack.c.h.b16 %v1360
        %v1717 = vunpack.c.l.b16 %v1361
        %v1718 = vunpack.c.h.b16 %v1361
        %v1719 = vunpack.c.l.b16 %v1362
        %v1720 = vunpack.c.h.b16 %v1362
        %v1721 = vunpack.c.l.b16 %v1363
        %v1722 = vunpack.c.h.b16 %v1363
        %v1723 = vunpack.c.l.b16 %v1364
        %v1724 = vunpack.c.h.b16 %v1364
        %v1725 = vunpack.c.l.b16 %v1365
        %v1726 = vunpack.c.h.b16 %v1365
        %v1727 = vunpack.c.l.b16 %v1366
        %v1728 = vunpack.c.h.b16 %v1366
        %v1729 = vunpack.c.l.b16 %v1367
        %v1730 = vunpack.c.h.b16 %v1367
        %v1731 = vunpack.c.l.b16 %v1368
        %v1732 = vunpack.c.h.b16 %v1368
        %v1733 = vunpack.c.l.b16 %v1369
        %v1734 = vunpack.c.h.b16 %v1369
        %v1735 = vunpack.c.l.b16 %v1370
        %v1736 = vunpack.c.h.b16 %v1370
        %v1737 = vunpack.c.l.b16 %v1371
        %v1738 = vunpack.c.h.b16 %v1371
        %v1739 = vunpack.c.l.b16 %v1372
        %v1740 = vunpack.c.h.b16 %v1372
        %v1741 = vunpack.c.l.b16 %v1373
        %v1742 = vunpack.c.h.b16 %v1373
        %v1743 = vunpack.c.l.b16 %v1374
        %v1744 = vunpack.c.h.b16 %v1374
        %v1745 = vunpack.c.l.b16 %v1375
        %v1746 = vunpack.c.h.b16 %v1375
        %v1747 = vunpack.c.l.b16 %v1376
        %v1748 = vunpack.c.h.b16 %v1376
        %v1749 = vunpack.c.l.b16 %v1377
        %v1750 = vunpack.c.h.b16 %v1377
        %v1751 = vunpack.c.l.b16 %v1378
        %v1752 = vunpack.c.h.b16 %v1378
        %v1753 = vunpack.c.l.b16 %v1379
        %v1754 = vunpack.c.h.b16 %v1379
        %v1755 = vpack.c.b16 %v1695, %v1691
        %v1756 = vpack.c.b16 %v1696, %v1692
        %v1757 = vpack.c.b16 %v1697, %v1693
        %v1758 = vpack.c.b16 %v1698, %v1694
        %v1759 = vpack.c.b16 %v1703, %v1699
        %v1760 = vpack.c.b16 %v1704, %v1700
        %v1761 = vpack.c.b16 %v1705, %v1701
        %v1762 = vpack.c.b16 %v1706, %v1702
        %v1763 = vpack.c.b16 %v1711, %v1707
        %v1764 = vpack.c.b16 %v1712, %v1708
        %v1765 = vpack.c.b16 %v1713, %v1709
        %v1766 = vpack.c.b16 %v1714, %v1710
        %v1767 = vpack.c.b16 %v1719, %v1715
        %v1768 = vpack.c.b16 %v1720, %v1716
        %v1769 = vpack.c.b16 %v1721, %v1717
        %v1770 = vpack.c.b16 %v1722, %v1718
        %v1771 = vpack.c.b16 %v1727, %v1723
        %v1772 = vpack.c.b16 %v1728, %v1724
        %v1773 = vpack.c.b16 %v1729, %v1725
        %v1774 = vpack.c.b16 %v1730, %v1726
        %v1775 = vpack.c.b16 %v1735, %v1731
        %v1776 = vpack.c.b16 %v1736, %v1732
        %v1777 = vpack.c.b16 %v1737, %v1733
        %v1778 = vpack.c.b16 %v1738, %v1734
        %v1779 = vpack.c.b16 %v1743, %v1739
        %v1780 = vpack.c.b16 %v1744, %v1740
        %v1781 = vpack.c.b16 %v1745, %v1741
        %v1782 = vpack.c.b16 %v1746, %v1742
        %v1783 = vpack.c.b16 %v1751, %v1747
        %v1784 = vpack.c.b16 %v1752, %v1748
        %v1785 = vpack.c.b16 %v1753, %v1749
        %v1786 = vpack.c.b16 %v1754, %v1750
        %1819 = vmatprep.subr.bf16.mxu0 %v1756
        %1820 = vmatpush1.bf16.msra.mxu0 %v1755
        %1821 = vmatprep.subr.bf16.mxu0 %v1760
        %1822 = vmatpush1.bf16.msra.mxu0 %v1759
        %1823 = vmatprep.subr.bf16.mxu0 %v1764
        %1824 = vmatpush1.bf16.msra.mxu0 %v1763
        %1825 = vmatprep.subr.bf16.mxu0 %v1768
        %1826 = vmatpush1.bf16.msra.mxu0 %v1767
        %1827 = vmatprep.subr.bf16.mxu0 %v1772
        %1828 = vmatpush1.bf16.msra.mxu0 %v1771
        %1829 = vmatprep.subr.bf16.mxu0 %v1776
        %1830 = vmatpush1.bf16.msra.mxu0 %v1775
        %1831 = vmatprep.subr.bf16.mxu0 %v1780
        %1832 = vmatpush1.bf16.msra.mxu0 %v1779
        %1833 = vmatprep.subr.bf16.mxu0 %v1784
        %1834 = vmatpush1.bf16.msra.mxu0 %v1783
        %1835 = vmatprep.subr.bf16.mxu0 0
        %1836 = vmatpush1.bf16.msra.mxu0 0
        %1837 = vmatprep.subr.bf16.mxu0 0
        %1838 = vmatpush1.bf16.msra.mxu0 0
        %1839 = vmatprep.subr.bf16.mxu0 0
        %1840 = vmatpush1.bf16.msra.mxu0 0
        %1841 = vmatprep.subr.bf16.mxu0 0
        %1842 = vmatpush1.bf16.msra.mxu0 0
        %1843 = vmatprep.subr.bf16.mxu0 0
        %1844 = vmatpush1.bf16.msra.mxu0 0
        %1845 = vmatprep.subr.bf16.mxu0 0
        %1846 = vmatpush1.bf16.msra.mxu0 0
        %1847 = vmatprep.subr.bf16.mxu0 0
        %1848 = vmatpush1.bf16.msra.mxu0 0
        %1849 = vmatprep.subr.bf16.mxu0 0
        %1850 = vmatpush1.bf16.msra.mxu0 0
        %1851 = vmatprep.mubr.bf16.mxu0 0
        %1852 = vmatmul.mubr.bf16.gmra.mrb[0].mxu0 %v1339
        %v1853 = vpop.f32.mrb[0].mxu0
        %v1854 = vadd.f32 %v1608, %v1853
        %v1855 = vpop.f32.mrb[0].mxu0
        %v1856 = vadd.f32 %v1610, %v1855
        %v1857 = vpop.f32.mrb[0].mxu0
        %v1858 = vadd.f32 %v1612, %v1857
        %v1859 = vpop.f32.mrb[0].mxu0
        %v1860 = vadd.f32 %v1614, %v1859
        %1861 = vdwg.mxu0
        %1862 = vmatprep.subr.bf16.mxu0 %v1758
        %1863 = vmatpush1.bf16.msra.mxu0 %v1757
        %1864 = vmatprep.subr.bf16.mxu0 %v1762
        %1865 = vmatpush1.bf16.msra.mxu0 %v1761
        %1866 = vmatprep.subr.bf16.mxu0 %v1766
        %1867 = vmatpush1.bf16.msra.mxu0 %v1765
        %1868 = vmatprep.subr.bf16.mxu0 %v1770
        %1869 = vmatpush1.bf16.msra.mxu0 %v1769
        %1870 = vmatprep.subr.bf16.mxu0 %v1774
        %1871 = vmatpush1.bf16.msra.mxu0 %v1773
        %1872 = vmatprep.subr.bf16.mxu0 %v1778
        %1873 = vmatpush1.bf16.msra.mxu0 %v1777
        %1874 = vmatprep.subr.bf16.mxu0 %v1782
        %1875 = vmatpush1.bf16.msra.mxu0 %v1781
        %1876 = vmatprep.subr.bf16.mxu0 %v1786
        %1877 = vmatpush1.bf16.msra.mxu0 %v1785
        %1878 = vmatprep.subr.bf16.mxu0 0
        %1879 = vmatpush1.bf16.msra.mxu0 0
        %1880 = vmatprep.subr.bf16.mxu0 0
        %1881 = vmatpush1.bf16.msra.mxu0 0
        %1882 = vmatprep.subr.bf16.mxu0 0
        %1883 = vmatpush1.bf16.msra.mxu0 0
        %1884 = vmatprep.subr.bf16.mxu0 0
        %1885 = vmatpush1.bf16.msra.mxu0 0
        %1886 = vmatprep.subr.bf16.mxu0 0
        %1887 = vmatpush1.bf16.msra.mxu0 0
        %1888 = vmatprep.subr.bf16.mxu0 0
        %1889 = vmatpush1.bf16.msra.mxu0 0
        %1890 = vmatprep.subr.bf16.mxu0 0
        %1891 = vmatpush1.bf16.msra.mxu0 0
        %1892 = vmatprep.subr.bf16.mxu0 0
        %1893 = vmatpush1.bf16.msra.mxu0 0
        %1894 = vmatprep.mubr.bf16.mxu0 0
        %1895 = vmatmul.mubr.bf16.gmra.mrb[0].mxu0 %v1339
        %v1896 = vpop.f32.mrb[0].mxu0
        %v1897 = vadd.f32 %v1651, %v1896
        %v1898 = vpop.f32.mrb[0].mxu0
        %v1899 = vadd.f32 %v1653, %v1898
        %v1900 = vpop.f32.mrb[0].mxu0
        %v1901 = vadd.f32 %v1655, %v1900
        %v1902 = vpop.f32.mrb[0].mxu0
        %v1903 = vadd.f32 %v1657, %v1902
        %1904 = vdwg.mxu0
        %s1905 = scalar_lea.vmem [#allocation7], 512
        %v1906 = vld [vmem:[%s1905] sm:$0xff]
        %v1907 = vld [vmem:[%s1905 + $0x8] sm:$0xff]
        %v1908 = vld [vmem:[%s1905 + $0x10] sm:$0xff]
        %v1909 = vld [vmem:[%s1905 + $0x18] sm:$0xff]
        %v1910 = vld [vmem:[%s1905 + $0x20] sm:$0xff]
        %v1911 = vld [vmem:[%s1905 + $0x28] sm:$0xff]
        %v1912 = vld [vmem:[%s1905 + $0x30] sm:$0xff]
        %v1913 = vld [vmem:[%s1905 + $0x38] sm:$0xff]
        %v1914 = vld [vmem:[%s1905 + $0x40] sm:$0xff]
        %v1915 = vld [vmem:[%s1905 + $0x48] sm:$0xff]
        %v1916 = vld [vmem:[%s1905 + $0x50] sm:$0xff]
        %v1917 = vld [vmem:[%s1905 + $0x58] sm:$0xff]
        %v1918 = vld [vmem:[%s1905 + $0x60] sm:$0xff]
        %v1919 = vld [vmem:[%s1905 + $0x68] sm:$0xff]
        %v1920 = vld [vmem:[%s1905 + $0x70] sm:$0xff]
        %v1921 = vld [vmem:[%s1905 + $0x78] sm:$0xff]
        %v1922 = vld [vmem:[%s1905 + $0x80] sm:$0xff]
        %v1923 = vld [vmem:[%s1905 + $0x88] sm:$0xff]
        %v1924 = vld [vmem:[%s1905 + $0x90] sm:$0xff]
        %v1925 = vld [vmem:[%s1905 + $0x98] sm:$0xff]
        %v1926 = vld [vmem:[%s1905 + $0xa0] sm:$0xff]
        %v1927 = vld [vmem:[%s1905 + $0xa8] sm:$0xff]
        %v1928 = vld [vmem:[%s1905 + $0xb0] sm:$0xff]
        %v1929 = vld [vmem:[%s1905 + $0xb8] sm:$0xff]
        %v1930 = vld [vmem:[%s1905 + $0xc0] sm:$0xff]
        %v1931 = vld [vmem:[%s1905 + $0xc8] sm:$0xff]
        %v1932 = vld [vmem:[%s1905 + $0xd0] sm:$0xff]
        %v1933 = vld [vmem:[%s1905 + $0xd8] sm:$0xff]
        %v1934 = vld [vmem:[%s1905 + $0xe0] sm:$0xff]
        %v1935 = vld [vmem:[%s1905 + $0xe8] sm:$0xff]
        %v1936 = vld [vmem:[%s1905 + $0xf0] sm:$0xff]
        %v1937 = vld [vmem:[%s1905 + $0xf8] sm:$0xff]
        %v1970 = vunpack.c.l.b16 %v1906
        %v1971 = vunpack.c.h.b16 %v1906
        %v1972 = vunpack.c.l.b16 %v1907
        %v1973 = vunpack.c.h.b16 %v1907
        %v1974 = vunpack.c.l.b16 %v1908
        %v1975 = vunpack.c.h.b16 %v1908
        %v1976 = vunpack.c.l.b16 %v1909
        %v1977 = vunpack.c.h.b16 %v1909
        %v1978 = vunpack.c.l.b16 %v1910
        %v1979 = vunpack.c.h.b16 %v1910
        %v1980 = vunpack.c.l.b16 %v1911
        %v1981 = vunpack.c.h.b16 %v1911
        %v1982 = vunpack.c.l.b16 %v1912
        %v1983 = vunpack.c.h.b16 %v1912
        %v1984 = vunpack.c.l.b16 %v1913
        %v1985 = vunpack.c.h.b16 %v1913
        %v1986 = vunpack.c.l.b16 %v1914
        %v1987 = vunpack.c.h.b16 %v1914
        %v1988 = vunpack.c.l.b16 %v1915
        %v1989 = vunpack.c.h.b16 %v1915
        %v1990 = vunpack.c.l.b16 %v1916
        %v1991 = vunpack.c.h.b16 %v1916
        %v1992 = vunpack.c.l.b16 %v1917
        %v1993 = vunpack.c.h.b16 %v1917
        %v1994 = vunpack.c.l.b16 %v1918
        %v1995 = vunpack.c.h.b16 %v1918
        %v1996 = vunpack.c.l.b16 %v1919
        %v1997 = vunpack.c.h.b16 %v1919
        %v1998 = vunpack.c.l.b16 %v1920
        %v1999 = vunpack.c.h.b16 %v1920
        %v2000 = vunpack.c.l.b16 %v1921
        %v2001 = vunpack.c.h.b16 %v1921
        %v2002 = vunpack.c.l.b16 %v1922
        %v2003 = vunpack.c.h.b16 %v1922
        %v2004 = vunpack.c.l.b16 %v1923
        %v2005 = vunpack.c.h.b16 %v1923
        %v2006 = vunpack.c.l.b16 %v1924
        %v2007 = vunpack.c.h.b16 %v1924
        %v2008 = vunpack.c.l.b16 %v1925
        %v2009 = vunpack.c.h.b16 %v1925
        %v2010 = vunpack.c.l.b16 %v1926
        %v2011 = vunpack.c.h.b16 %v1926
        %v2012 = vunpack.c.l.b16 %v1927
        %v2013 = vunpack.c.h.b16 %v1927
        %v2014 = vunpack.c.l.b16 %v1928
        %v2015 = vunpack.c.h.b16 %v1928
        %v2016 = vunpack.c.l.b16 %v1929
        %v2017 = vunpack.c.h.b16 %v1929
        %v2018 = vunpack.c.l.b16 %v1930
        %v2019 = vunpack.c.h.b16 %v1930
        %v2020 = vunpack.c.l.b16 %v1931
        %v2021 = vunpack.c.h.b16 %v1931
        %v2022 = vunpack.c.l.b16 %v1932
        %v2023 = vunpack.c.h.b16 %v1932
        %v2024 = vunpack.c.l.b16 %v1933
        %v2025 = vunpack.c.h.b16 %v1933
        %v2026 = vunpack.c.l.b16 %v1934
        %v2027 = vunpack.c.h.b16 %v1934
        %v2028 = vunpack.c.l.b16 %v1935
        %v2029 = vunpack.c.h.b16 %v1935
        %v2030 = vunpack.c.l.b16 %v1936
        %v2031 = vunpack.c.h.b16 %v1936
        %v2032 = vunpack.c.l.b16 %v1937
        %v2033 = vunpack.c.h.b16 %v1937
        %v2034 = vpack.c.b16 %v1974, %v1970
        %v2035 = vpack.c.b16 %v1975, %v1971
        %v2036 = vpack.c.b16 %v1976, %v1972
        %v2037 = vpack.c.b16 %v1977, %v1973
        %v2038 = vpack.c.b16 %v1982, %v1978
        %v2039 = vpack.c.b16 %v1983, %v1979
        %v2040 = vpack.c.b16 %v1984, %v1980
        %v2041 = vpack.c.b16 %v1985, %v1981
        %v2042 = vpack.c.b16 %v1990, %v1986
        %v2043 = vpack.c.b16 %v1991, %v1987
        %v2044 = vpack.c.b16 %v1992, %v1988
        %v2045 = vpack.c.b16 %v1993, %v1989
        %v2046 = vpack.c.b16 %v1998, %v1994
        %v2047 = vpack.c.b16 %v1999, %v1995
        %v2048 = vpack.c.b16 %v2000, %v1996
        %v2049 = vpack.c.b16 %v2001, %v1997
        %v2050 = vpack.c.b16 %v2006, %v2002
        %v2051 = vpack.c.b16 %v2007, %v2003
        %v2052 = vpack.c.b16 %v2008, %v2004
        %v2053 = vpack.c.b16 %v2009, %v2005
        %v2054 = vpack.c.b16 %v2014, %v2010
        %v2055 = vpack.c.b16 %v2015, %v2011
        %v2056 = vpack.c.b16 %v2016, %v2012
        %v2057 = vpack.c.b16 %v2017, %v2013
        %v2058 = vpack.c.b16 %v2022, %v2018
        %v2059 = vpack.c.b16 %v2023, %v2019
        %v2060 = vpack.c.b16 %v2024, %v2020
        %v2061 = vpack.c.b16 %v2025, %v2021
        %v2062 = vpack.c.b16 %v2030, %v2026
        %v2063 = vpack.c.b16 %v2031, %v2027
        %v2064 = vpack.c.b16 %v2032, %v2028
        %v2065 = vpack.c.b16 %v2033, %v2029
        %2098 = vmatprep.subr.bf16.mxu0 %v2035
        %2099 = vmatpush1.bf16.msra.mxu0 %v2034
        %2100 = vmatprep.subr.bf16.mxu0 %v2039
        %2101 = vmatpush1.bf16.msra.mxu0 %v2038
        %2102 = vmatprep.subr.bf16.mxu0 %v2043
        %2103 = vmatpush1.bf16.msra.mxu0 %v2042
        %2104 = vmatprep.subr.bf16.mxu0 %v2047
        %2105 = vmatpush1.bf16.msra.mxu0 %v2046
        %2106 = vmatprep.subr.bf16.mxu0 %v2051
        %2107 = vmatpush1.bf16.msra.mxu0 %v2050
        %2108 = vmatprep.subr.bf16.mxu0 %v2055
        %2109 = vmatpush1.bf16.msra.mxu0 %v2054
        %2110 = vmatprep.subr.bf16.mxu0 %v2059
        %2111 = vmatpush1.bf16.msra.mxu0 %v2058
        %2112 = vmatprep.subr.bf16.mxu0 %v2063
        %2113 = vmatpush1.bf16.msra.mxu0 %v2062
        %2114 = vmatprep.subr.bf16.mxu0 0
        %2115 = vmatpush1.bf16.msra.mxu0 0
        %2116 = vmatprep.subr.bf16.mxu0 0
        %2117 = vmatpush1.bf16.msra.mxu0 0
        %2118 = vmatprep.subr.bf16.mxu0 0
        %2119 = vmatpush1.bf16.msra.mxu0 0
        %2120 = vmatprep.subr.bf16.mxu0 0
        %2121 = vmatpush1.bf16.msra.mxu0 0
        %2122 = vmatprep.subr.bf16.mxu0 0
        %2123 = vmatpush1.bf16.msra.mxu0 0
        %2124 = vmatprep.subr.bf16.mxu0 0
        %2125 = vmatpush1.bf16.msra.mxu0 0
        %2126 = vmatprep.subr.bf16.mxu0 0
        %2127 = vmatpush1.bf16.msra.mxu0 0
        %2128 = vmatprep.subr.bf16.mxu0 0
        %2129 = vmatpush1.bf16.msra.mxu0 0
        %2130 = vmatprep.mubr.bf16.mxu0 0
        %2131 = vmatmul.mubr.bf16.gmra.mrb[0].mxu0 %v1341
        %v2132 = vpop.f32.mrb[0].mxu0
        %v2133 = vadd.f32 0.0, %v2132
        %v2134 = vpop.f32.mrb[0].mxu0
        %v2135 = vadd.f32 0.0, %v2134
        %v2136 = vpop.f32.mrb[0].mxu0
        %v2137 = vadd.f32 0.0, %v2136
        %v2138 = vpop.f32.mrb[0].mxu0
        %v2139 = vadd.f32 0.0, %v2138
        %2140 = vdwg.mxu0
        %2141 = vmatprep.subr.bf16.mxu0 %v2037
        %2142 = vmatpush1.bf16.msra.mxu0 %v2036
        %2143 = vmatprep.subr.bf16.mxu0 %v2041
        %2144 = vmatpush1.bf16.msra.mxu0 %v2040
        %2145 = vmatprep.subr.bf16.mxu0 %v2045
        %2146 = vmatpush1.bf16.msra.mxu0 %v2044
        %2147 = vmatprep.subr.bf16.mxu0 %v2049
        %2148 = vmatpush1.bf16.msra.mxu0 %v2048
        %2149 = vmatprep.subr.bf16.mxu0 %v2053
        %2150 = vmatpush1.bf16.msra.mxu0 %v2052
        %2151 = vmatprep.subr.bf16.mxu0 %v2057
        %2152 = vmatpush1.bf16.msra.mxu0 %v2056
        %2153 = vmatprep.subr.bf16.mxu0 %v2061
        %2154 = vmatpush1.bf16.msra.mxu0 %v2060
        %2155 = vmatprep.subr.bf16.mxu0 %v2065
        %2156 = vmatpush1.bf16.msra.mxu0 %v2064
        %2157 = vmatprep.subr.bf16.mxu0 0
        %2158 = vmatpush1.bf16.msra.mxu0 0
        %2159 = vmatprep.subr.bf16.mxu0 0
        %2160 = vmatpush1.bf16.msra.mxu0 0
        %2161 = vmatprep.subr.bf16.mxu0 0
        %2162 = vmatpush1.bf16.msra.mxu0 0
        %2163 = vmatprep.subr.bf16.mxu0 0
        %2164 = vmatpush1.bf16.msra.mxu0 0
        %2165 = vmatprep.subr.bf16.mxu0 0
        %2166 = vmatpush1.bf16.msra.mxu0 0
        %2167 = vmatprep.subr.bf16.mxu0 0
        %2168 = vmatpush1.bf16.msra.mxu0 0
        %2169 = vmatprep.subr.bf16.mxu0 0
        %2170 = vmatpush1.bf16.msra.mxu0 0
        %2171 = vmatprep.subr.bf16.mxu0 0
        %2172 = vmatpush1.bf16.msra.mxu0 0
        %2173 = vmatprep.mubr.bf16.mxu0 0
        %2174 = vmatmul.mubr.bf16.gmra.mrb[0].mxu0 %v1341
        %v2175 = vpop.f32.mrb[0].mxu0
        %v2176 = vadd.f32 0.0, %v2175
        %v2177 = vpop.f32.mrb[0].mxu0
        %v2178 = vadd.f32 0.0, %v2177
        %v2179 = vpop.f32.mrb[0].mxu0
        %v2180 = vadd.f32 0.0, %v2179
        %v2181 = vpop.f32.mrb[0].mxu0
        %v2182 = vadd.f32 0.0, %v2181
        %2183 = vdwg.mxu0
        %v2184 = vadd.f32 %v1854, %v2133
        %v2185 = vadd.f32 %v1856, %v2135
        %v2186 = vadd.f32 %v1897, %v2176
        %v2187 = vadd.f32 %v1899, %v2178
        %v2188 = vadd.f32 %v1858, %v2137
        %v2189 = vadd.f32 %v1860, %v2139
        %v2190 = vadd.f32 %v1901, %v2180
        %v2191 = vadd.f32 %v1903, %v2182
        %s2192 = scalar_lea.vmem [#allocation7], 768
        %v2193 = vld [vmem:[%s2192] sm:$0xff]
        %v2194 = vld [vmem:[%s2192 + $0x8] sm:$0xff]
        %v2195 = vld [vmem:[%s2192 + $0x10] sm:$0xff]
        %v2196 = vld [vmem:[%s2192 + $0x18] sm:$0xff]
        %v2197 = vld [vmem:[%s2192 + $0x20] sm:$0xff]
        %v2198 = vld [vmem:[%s2192 + $0x28] sm:$0xff]
        %v2199 = vld [vmem:[%s2192 + $0x30] sm:$0xff]
        %v2200 = vld [vmem:[%s2192 + $0x38] sm:$0xff]
        %v2201 = vld [vmem:[%s2192 + $0x40] sm:$0xff]
        %v2202 = vld [vmem:[%s2192 + $0x48] sm:$0xff]
        %v2203 = vld [vmem:[%s2192 + $0x50] sm:$0xff]
        %v2204 = vld [vmem:[%s2192 + $0x58] sm:$0xff]
        %v2205 = vld [vmem:[%s2192 + $0x60] sm:$0xff]
        %v2206 = vld [vmem:[%s2192 + $0x68] sm:$0xff]
        %v2207 = vld [vmem:[%s2192 + $0x70] sm:$0xff]
        %v2208 = vld [vmem:[%s2192 + $0x78] sm:$0xff]
        %v2209 = vld [vmem:[%s2192 + $0x80] sm:$0xff]
        %v2210 = vld [vmem:[%s2192 + $0x88] sm:$0xff]
        %v2211 = vld [vmem:[%s2192 + $0x90] sm:$0xff]
        %v2212 = vld [vmem:[%s2192 + $0x98] sm:$0xff]
        %v2213 = vld [vmem:[%s2192 + $0xa0] sm:$0xff]
        %v2214 = vld [vmem:[%s2192 + $0xa8] sm:$0xff]
        %v2215 = vld [vmem:[%s2192 + $0xb0] sm:$0xff]
        %v2216 = vld [vmem:[%s2192 + $0xb8] sm:$0xff]
        %v2217 = vld [vmem:[%s2192 + $0xc0] sm:$0xff]
        %v2218 = vld [vmem:[%s2192 + $0xc8] sm:$0xff]
        %v2219 = vld [vmem:[%s2192 + $0xd0] sm:$0xff]
        %v2220 = vld [vmem:[%s2192 + $0xd8] sm:$0xff]
        %v2221 = vld [vmem:[%s2192 + $0xe0] sm:$0xff]
        %v2222 = vld [vmem:[%s2192 + $0xe8] sm:$0xff]
        %v2223 = vld [vmem:[%s2192 + $0xf0] sm:$0xff]
        %v2224 = vld [vmem:[%s2192 + $0xf8] sm:$0xff]
        %v2257 = vunpack.c.l.b16 %v2193
        %v2258 = vunpack.c.h.b16 %v2193
        %v2259 = vunpack.c.l.b16 %v2194
        %v2260 = vunpack.c.h.b16 %v2194
        %v2261 = vunpack.c.l.b16 %v2195
        %v2262 = vunpack.c.h.b16 %v2195
        %v2263 = vunpack.c.l.b16 %v2196
        %v2264 = vunpack.c.h.b16 %v2196
        %v2265 = vunpack.c.l.b16 %v2197
        %v2266 = vunpack.c.h.b16 %v2197
        %v2267 = vunpack.c.l.b16 %v2198
        %v2268 = vunpack.c.h.b16 %v2198
        %v2269 = vunpack.c.l.b16 %v2199
        %v2270 = vunpack.c.h.b16 %v2199
        %v2271 = vunpack.c.l.b16 %v2200
        %v2272 = vunpack.c.h.b16 %v2200
        %v2273 = vunpack.c.l.b16 %v2201
        %v2274 = vunpack.c.h.b16 %v2201
        %v2275 = vunpack.c.l.b16 %v2202
        %v2276 = vunpack.c.h.b16 %v2202
        %v2277 = vunpack.c.l.b16 %v2203
        %v2278 = vunpack.c.h.b16 %v2203
        %v2279 = vunpack.c.l.b16 %v2204
        %v2280 = vunpack.c.h.b16 %v2204
        %v2281 = vunpack.c.l.b16 %v2205
        %v2282 = vunpack.c.h.b16 %v2205
        %v2283 = vunpack.c.l.b16 %v2206
        %v2284 = vunpack.c.h.b16 %v2206
        %v2285 = vunpack.c.l.b16 %v2207
        %v2286 = vunpack.c.h.b16 %v2207
        %v2287 = vunpack.c.l.b16 %v2208
        %v2288 = vunpack.c.h.b16 %v2208
        %v2289 = vunpack.c.l.b16 %v2209
        %v2290 = vunpack.c.h.b16 %v2209
        %v2291 = vunpack.c.l.b16 %v2210
        %v2292 = vunpack.c.h.b16 %v2210
        %v2293 = vunpack.c.l.b16 %v2211
        %v2294 = vunpack.c.h.b16 %v2211
        %v2295 = vunpack.c.l.b16 %v2212
        %v2296 = vunpack.c.h.b16 %v2212
        %v2297 = vunpack.c.l.b16 %v2213
        %v2298 = vunpack.c.h.b16 %v2213
        %v2299 = vunpack.c.l.b16 %v2214
        %v2300 = vunpack.c.h.b16 %v2214
        %v2301 = vunpack.c.l.b16 %v2215
        %v2302 = vunpack.c.h.b16 %v2215
        %v2303 = vunpack.c.l.b16 %v2216
        %v2304 = vunpack.c.h.b16 %v2216
        %v2305 = vunpack.c.l.b16 %v2217
        %v2306 = vunpack.c.h.b16 %v2217
        %v2307 = vunpack.c.l.b16 %v2218
        %v2308 = vunpack.c.h.b16 %v2218
        %v2309 = vunpack.c.l.b16 %v2219
        %v2310 = vunpack.c.h.b16 %v2219
        %v2311 = vunpack.c.l.b16 %v2220
        %v2312 = vunpack.c.h.b16 %v2220
        %v2313 = vunpack.c.l.b16 %v2221
        %v2314 = vunpack.c.h.b16 %v2221
        %v2315 = vunpack.c.l.b16 %v2222
        %v2316 = vunpack.c.h.b16 %v2222
        %v2317 = vunpack.c.l.b16 %v2223
        %v2318 = vunpack.c.h.b16 %v2223
        %v2319 = vunpack.c.l.b16 %v2224
        %v2320 = vunpack.c.h.b16 %v2224
        %v2321 = vpack.c.b16 %v2261, %v2257
        %v2322 = vpack.c.b16 %v2262, %v2258
        %v2323 = vpack.c.b16 %v2263, %v2259
        %v2324 = vpack.c.b16 %v2264, %v2260
        %v2325 = vpack.c.b16 %v2269, %v2265
        %v2326 = vpack.c.b16 %v2270, %v2266
        %v2327 = vpack.c.b16 %v2271, %v2267
        %v2328 = vpack.c.b16 %v2272, %v2268
        %v2329 = vpack.c.b16 %v2277, %v2273
        %v2330 = vpack.c.b16 %v2278, %v2274
        %v2331 = vpack.c.b16 %v2279, %v2275
        %v2332 = vpack.c.b16 %v2280, %v2276
        %v2333 = vpack.c.b16 %v2285, %v2281
        %v2334 = vpack.c.b16 %v2286, %v2282
        %v2335 = vpack.c.b16 %v2287, %v2283
        %v2336 = vpack.c.b16 %v2288, %v2284
        %v2337 = vpack.c.b16 %v2293, %v2289
        %v2338 = vpack.c.b16 %v2294, %v2290
        %v2339 = vpack.c.b16 %v2295, %v2291
        %v2340 = vpack.c.b16 %v2296, %v2292
        %v2341 = vpack.c.b16 %v2301, %v2297
        %v2342 = vpack.c.b16 %v2302, %v2298
        %v2343 = vpack.c.b16 %v2303, %v2299
        %v2344 = vpack.c.b16 %v2304, %v2300
        %v2345 = vpack.c.b16 %v2309, %v2305
        %v2346 = vpack.c.b16 %v2310, %v2306
        %v2347 = vpack.c.b16 %v2311, %v2307
        %v2348 = vpack.c.b16 %v2312, %v2308
        %v2349 = vpack.c.b16 %v2317, %v2313
        %v2350 = vpack.c.b16 %v2318, %v2314
        %v2351 = vpack.c.b16 %v2319, %v2315
        %v2352 = vpack.c.b16 %v2320, %v2316
        %2385 = vmatprep.subr.bf16.mxu0 %v2322
        %2386 = vmatpush1.bf16.msra.mxu0 %v2321
        %2387 = vmatprep.subr.bf16.mxu0 %v2326
        %2388 = vmatpush1.bf16.msra.mxu0 %v2325
        %2389 = vmatprep.subr.bf16.mxu0 %v2330
        %2390 = vmatpush1.bf16.msra.mxu0 %v2329
        %2391 = vmatprep.subr.bf16.mxu0 %v2334
        %2392 = vmatpush1.bf16.msra.mxu0 %v2333
        %2393 = vmatprep.subr.bf16.mxu0 %v2338
        %2394 = vmatpush1.bf16.msra.mxu0 %v2337
        %2395 = vmatprep.subr.bf16.mxu0 %v2342
        %2396 = vmatpush1.bf16.msra.mxu0 %v2341
        %2397 = vmatprep.subr.bf16.mxu0 %v2346
        %2398 = vmatpush1.bf16.msra.mxu0 %v2345
        %2399 = vmatprep.subr.bf16.mxu0 %v2350
        %2400 = vmatpush1.bf16.msra.mxu0 %v2349
        %2401 = vmatprep.subr.bf16.mxu0 0
        %2402 = vmatpush1.bf16.msra.mxu0 0
        %2403 = vmatprep.subr.bf16.mxu0 0
        %2404 = vmatpush1.bf16.msra.mxu0 0
        %2405 = vmatprep.subr.bf16.mxu0 0
        %2406 = vmatpush1.bf16.msra.mxu0 0
        %2407 = vmatprep.subr.bf16.mxu0 0
        %2408 = vmatpush1.bf16.msra.mxu0 0
        %2409 = vmatprep.subr.bf16.mxu0 0
        %2410 = vmatpush1.bf16.msra.mxu0 0
        %2411 = vmatprep.subr.bf16.mxu0 0
        %2412 = vmatpush1.bf16.msra.mxu0 0
        %2413 = vmatprep.subr.bf16.mxu0 0
        %2414 = vmatpush1.bf16.msra.mxu0 0
        %2415 = vmatprep.subr.bf16.mxu0 0
        %2416 = vmatpush1.bf16.msra.mxu0 0
        %2417 = vmatprep.mubr.bf16.mxu0 0
        %2418 = vmatmul.mubr.bf16.gmra.mrb[0].mxu0 %v1342
        %v2419 = vpop.f32.mrb[0].mxu0
        %v2420 = vadd.f32 0.0, %v2419
        %v2421 = vpop.f32.mrb[0].mxu0
        %v2422 = vadd.f32 0.0, %v2421
        %v2423 = vpop.f32.mrb[0].mxu0
        %v2424 = vadd.f32 0.0, %v2423
        %v2425 = vpop.f32.mrb[0].mxu0
        %v2426 = vadd.f32 0.0, %v2425
        %2427 = vdwg.mxu0
        %2428 = vmatprep.subr.bf16.mxu0 %v2324
        %2429 = vmatpush1.bf16.msra.mxu0 %v2323
        %2430 = vmatprep.subr.bf16.mxu0 %v2328
        %2431 = vmatpush1.bf16.msra.mxu0 %v2327
        %2432 = vmatprep.subr.bf16.mxu0 %v2332
        %2433 = vmatpush1.bf16.msra.mxu0 %v2331
        %2434 = vmatprep.subr.bf16.mxu0 %v2336
        %2435 = vmatpush1.bf16.msra.mxu0 %v2335
        %2436 = vmatprep.subr.bf16.mxu0 %v2340
        %2437 = vmatpush1.bf16.msra.mxu0 %v2339
        %2438 = vmatprep.subr.bf16.mxu0 %v2344
        %2439 = vmatpush1.bf16.msra.mxu0 %v2343
        %2440 = vmatprep.subr.bf16.mxu0 %v2348
        %2441 = vmatpush1.bf16.msra.mxu0 %v2347
        %2442 = vmatprep.subr.bf16.mxu0 %v2352
        %2443 = vmatpush1.bf16.msra.mxu0 %v2351
        %2444 = vmatprep.subr.bf16.mxu0 0
        %2445 = vmatpush1.bf16.msra.mxu0 0
        %2446 = vmatprep.subr.bf16.mxu0 0
        %2447 = vmatpush1.bf16.msra.mxu0 0
        %2448 = vmatprep.subr.bf16.mxu0 0
        %2449 = vmatpush1.bf16.msra.mxu0 0
        %2450 = vmatprep.subr.bf16.mxu0 0
        %2451 = vmatpush1.bf16.msra.mxu0 0
        %2452 = vmatprep.subr.bf16.mxu0 0
        %2453 = vmatpush1.bf16.msra.mxu0 0
        %2454 = vmatprep.subr.bf16.mxu0 0
        %2455 = vmatpush1.bf16.msra.mxu0 0
        %2456 = vmatprep.subr.bf16.mxu0 0
        %2457 = vmatpush1.bf16.msra.mxu0 0
        %2458 = vmatprep.subr.bf16.mxu0 0
        %2459 = vmatpush1.bf16.msra.mxu0 0
        %2460 = vmatprep.mubr.bf16.mxu0 0
        %2461 = vmatmul.mubr.bf16.gmra.mrb[0].mxu0 %v1342
        %v2462 = vpop.f32.mrb[0].mxu0
        %v2463 = vadd.f32 0.0, %v2462
        %v2464 = vpop.f32.mrb[0].mxu0
        %v2465 = vadd.f32 0.0, %v2464
        %v2466 = vpop.f32.mrb[0].mxu0
        %v2467 = vadd.f32 0.0, %v2466
        %v2468 = vpop.f32.mrb[0].mxu0
        %v2469 = vadd.f32 0.0, %v2468
        %2470 = vdwg.mxu0
        %v2471 = vadd.f32 %v2184, %v2420
        %v2472 = vadd.f32 %v2185, %v2422
        %v2473 = vadd.f32 %v2186, %v2463
        %v2474 = vadd.f32 %v2187, %v2465
        %v2475 = vadd.f32 %v2188, %v2424
        %v2476 = vadd.f32 %v2189, %v2426
        %v2477 = vadd.f32 %v2190, %v2467
        %v2478 = vadd.f32 %v2191, %v2469
        %s2479 = scalar_lea.vmem [#allocation7], 1024
        %v2480 = vld [vmem:[%s2479] sm:$0xff]
        %v2481 = vld [vmem:[%s2479 + $0x8] sm:$0xff]
        %v2482 = vld [vmem:[%s2479 + $0x10] sm:$0xff]
        %v2483 = vld [vmem:[%s2479 + $0x18] sm:$0xff]
        %v2484 = vld [vmem:[%s2479 + $0x20] sm:$0xff]
        %v2485 = vld [vmem:[%s2479 + $0x28] sm:$0xff]
        %v2486 = vld [vmem:[%s2479 + $0x30] sm:$0xff]
        %v2487 = vld [vmem:[%s2479 + $0x38] sm:$0xff]
        %v2488 = vld [vmem:[%s2479 + $0x40] sm:$0xff]
        %v2489 = vld [vmem:[%s2479 + $0x48] sm:$0xff]
        %v2490 = vld [vmem:[%s2479 + $0x50] sm:$0xff]
        %v2491 = vld [vmem:[%s2479 + $0x58] sm:$0xff]
        %v2492 = vld [vmem:[%s2479 + $0x60] sm:$0xff]
        %v2493 = vld [vmem:[%s2479 + $0x68] sm:$0xff]
        %v2494 = vld [vmem:[%s2479 + $0x70] sm:$0xff]
        %v2495 = vld [vmem:[%s2479 + $0x78] sm:$0xff]
        %v2496 = vld [vmem:[%s2479 + $0x80] sm:$0xff]
        %v2497 = vld [vmem:[%s2479 + $0x88] sm:$0xff]
        %v2498 = vld [vmem:[%s2479 + $0x90] sm:$0xff]
        %v2499 = vld [vmem:[%s2479 + $0x98] sm:$0xff]
        %v2500 = vld [vmem:[%s2479 + $0xa0] sm:$0xff]
        %v2501 = vld [vmem:[%s2479 + $0xa8] sm:$0xff]
        %v2502 = vld [vmem:[%s2479 + $0xb0] sm:$0xff]
        %v2503 = vld [vmem:[%s2479 + $0xb8] sm:$0xff]
        %v2504 = vld [vmem:[%s2479 + $0xc0] sm:$0xff]
        %v2505 = vld [vmem:[%s2479 + $0xc8] sm:$0xff]
        %v2506 = vld [vmem:[%s2479 + $0xd0] sm:$0xff]
        %v2507 = vld [vmem:[%s2479 + $0xd8] sm:$0xff]
        %v2508 = vld [vmem:[%s2479 + $0xe0] sm:$0xff]
        %v2509 = vld [vmem:[%s2479 + $0xe8] sm:$0xff]
        %v2510 = vld [vmem:[%s2479 + $0xf0] sm:$0xff]
        %v2511 = vld [vmem:[%s2479 + $0xf8] sm:$0xff]
        %v2544 = vunpack.c.l.b16 %v2480
        %v2545 = vunpack.c.h.b16 %v2480
        %v2546 = vunpack.c.l.b16 %v2481
        %v2547 = vunpack.c.h.b16 %v2481
        %v2548 = vunpack.c.l.b16 %v2482
        %v2549 = vunpack.c.h.b16 %v2482
        %v2550 = vunpack.c.l.b16 %v2483
        %v2551 = vunpack.c.h.b16 %v2483
        %v2552 = vunpack.c.l.b16 %v2484
        %v2553 = vunpack.c.h.b16 %v2484
        %v2554 = vunpack.c.l.b16 %v2485
        %v2555 = vunpack.c.h.b16 %v2485
        %v2556 = vunpack.c.l.b16 %v2486
        %v2557 = vunpack.c.h.b16 %v2486
        %v2558 = vunpack.c.l.b16 %v2487
        %v2559 = vunpack.c.h.b16 %v2487
        %v2560 = vunpack.c.l.b16 %v2488
        %v2561 = vunpack.c.h.b16 %v2488
        %v2562 = vunpack.c.l.b16 %v2489
        %v2563 = vunpack.c.h.b16 %v2489
        %v2564 = vunpack.c.l.b16 %v2490
        %v2565 = vunpack.c.h.b16 %v2490
        %v2566 = vunpack.c.l.b16 %v2491
        %v2567 = vunpack.c.h.b16 %v2491
        %v2568 = vunpack.c.l.b16 %v2492
        %v2569 = vunpack.c.h.b16 %v2492
        %v2570 = vunpack.c.l.b16 %v2493
        %v2571 = vunpack.c.h.b16 %v2493
        %v2572 = vunpack.c.l.b16 %v2494
        %v2573 = vunpack.c.h.b16 %v2494
        %v2574 = vunpack.c.l.b16 %v2495
        %v2575 = vunpack.c.h.b16 %v2495
        %v2576 = vunpack.c.l.b16 %v2496
        %v2577 = vunpack.c.h.b16 %v2496
        %v2578 = vunpack.c.l.b16 %v2497
        %v2579 = vunpack.c.h.b16 %v2497
        %v2580 = vunpack.c.l.b16 %v2498
        %v2581 = vunpack.c.h.b16 %v2498
        %v2582 = vunpack.c.l.b16 %v2499
        %v2583 = vunpack.c.h.b16 %v2499
        %v2584 = vunpack.c.l.b16 %v2500
        %v2585 = vunpack.c.h.b16 %v2500
        %v2586 = vunpack.c.l.b16 %v2501
        %v2587 = vunpack.c.h.b16 %v2501
        %v2588 = vunpack.c.l.b16 %v2502
        %v2589 = vunpack.c.h.b16 %v2502
        %v2590 = vunpack.c.l.b16 %v2503
        %v2591 = vunpack.c.h.b16 %v2503
        %v2592 = vunpack.c.l.b16 %v2504
        %v2593 = vunpack.c.h.b16 %v2504
        %v2594 = vunpack.c.l.b16 %v2505
        %v2595 = vunpack.c.h.b16 %v2505
        %v2596 = vunpack.c.l.b16 %v2506
        %v2597 = vunpack.c.h.b16 %v2506
        %v2598 = vunpack.c.l.b16 %v2507
        %v2599 = vunpack.c.h.b16 %v2507
        %v2600 = vunpack.c.l.b16 %v2508
        %v2601 = vunpack.c.h.b16 %v2508
        %v2602 = vunpack.c.l.b16 %v2509
        %v2603 = vunpack.c.h.b16 %v2509
        %v2604 = vunpack.c.l.b16 %v2510
        %v2605 = vunpack.c.h.b16 %v2510
        %v2606 = vunpack.c.l.b16 %v2511
        %v2607 = vunpack.c.h.b16 %v2511
        %v2608 = vpack.c.b16 %v2548, %v2544
        %v2609 = vpack.c.b16 %v2549, %v2545
        %v2610 = vpack.c.b16 %v2550, %v2546
        %v2611 = vpack.c.b16 %v2551, %v2547
        %v2612 = vpack.c.b16 %v2556, %v2552
        %v2613 = vpack.c.b16 %v2557, %v2553
        %v2614 = vpack.c.b16 %v2558, %v2554
        %v2615 = vpack.c.b16 %v2559, %v2555
        %v2616 = vpack.c.b16 %v2564, %v2560
        %v2617 = vpack.c.b16 %v2565, %v2561
        %v2618 = vpack.c.b16 %v2566, %v2562
        %v2619 = vpack.c.b16 %v2567, %v2563
        %v2620 = vpack.c.b16 %v2572, %v2568
        %v2621 = vpack.c.b16 %v2573, %v2569
        %v2622 = vpack.c.b16 %v2574, %v2570
        %v2623 = vpack.c.b16 %v2575, %v2571
        %v2624 = vpack.c.b16 %v2580, %v2576
        %v2625 = vpack.c.b16 %v2581, %v2577
        %v2626 = vpack.c.b16 %v2582, %v2578
        %v2627 = vpack.c.b16 %v2583, %v2579
        %v2628 = vpack.c.b16 %v2588, %v2584
        %v2629 = vpack.c.b16 %v2589, %v2585
        %v2630 = vpack.c.b16 %v2590, %v2586
        %v2631 = vpack.c.b16 %v2591, %v2587
        %v2632 = vpack.c.b16 %v2596, %v2592
        %v2633 = vpack.c.b16 %v2597, %v2593
        %v2634 = vpack.c.b16 %v2598, %v2594
        %v2635 = vpack.c.b16 %v2599, %v2595
        %v2636 = vpack.c.b16 %v2604, %v2600
        %v2637 = vpack.c.b16 %v2605, %v2601
        %v2638 = vpack.c.b16 %v2606, %v2602
        %v2639 = vpack.c.b16 %v2607, %v2603
        %2672 = vmatprep.subr.bf16.mxu0 %v2609
        %2673 = vmatpush1.bf16.msra.mxu0 %v2608
        %2674 = vmatprep.subr.bf16.mxu0 %v2613
        %2675 = vmatpush1.bf16.msra.mxu0 %v2612
        %2676 = vmatprep.subr.bf16.mxu0 %v2617
        %2677 = vmatpush1.bf16.msra.mxu0 %v2616
        %2678 = vmatprep.subr.bf16.mxu0 %v2621
        %2679 = vmatpush1.bf16.msra.mxu0 %v2620
        %2680 = vmatprep.subr.bf16.mxu0 %v2625
        %2681 = vmatpush1.bf16.msra.mxu0 %v2624
        %2682 = vmatprep.subr.bf16.mxu0 %v2629
        %2683 = vmatpush1.bf16.msra.mxu0 %v2628
        %2684 = vmatprep.subr.bf16.mxu0 %v2633
        %2685 = vmatpush1.bf16.msra.mxu0 %v2632
        %2686 = vmatprep.subr.bf16.mxu0 %v2637
        %2687 = vmatpush1.bf16.msra.mxu0 %v2636
        %2688 = vmatprep.subr.bf16.mxu0 0
        %2689 = vmatpush1.bf16.msra.mxu0 0
        %2690 = vmatprep.subr.bf16.mxu0 0
        %2691 = vmatpush1.bf16.msra.mxu0 0
        %2692 = vmatprep.subr.bf16.mxu0 0
        %2693 = vmatpush1.bf16.msra.mxu0 0
        %2694 = vmatprep.subr.bf16.mxu0 0
        %2695 = vmatpush1.bf16.msra.mxu0 0
        %2696 = vmatprep.subr.bf16.mxu0 0
        %2697 = vmatpush1.bf16.msra.mxu0 0
        %2698 = vmatprep.subr.bf16.mxu0 0
        %2699 = vmatpush1.bf16.msra.mxu0 0
        %2700 = vmatprep.subr.bf16.mxu0 0
        %2701 = vmatpush1.bf16.msra.mxu0 0
        %2702 = vmatprep.subr.bf16.mxu0 0
        %2703 = vmatpush1.bf16.msra.mxu0 0
        %2704 = vmatprep.mubr.bf16.mxu0 0
        %2705 = vmatmul.mubr.bf16.gmra.mrb[0].mxu0 %v1343
        %v2706 = vpop.f32.mrb[0].mxu0
        %v2707 = vadd.f32 0.0, %v2706
        %v2708 = vpop.f32.mrb[0].mxu0
        %v2709 = vadd.f32 0.0, %v2708
        %v2710 = vpop.f32.mrb[0].mxu0
        %v2711 = vadd.f32 0.0, %v2710
        %v2712 = vpop.f32.mrb[0].mxu0
        %v2713 = vadd.f32 0.0, %v2712
        %2714 = vdwg.mxu0
        %2715 = vmatprep.subr.bf16.mxu0 %v2611
        %2716 = vmatpush1.bf16.msra.mxu0 %v2610
        %2717 = vmatprep.subr.bf16.mxu0 %v2615
        %2718 = vmatpush1.bf16.msra.mxu0 %v2614
        %2719 = vmatprep.subr.bf16.mxu0 %v2619
        %2720 = vmatpush1.bf16.msra.mxu0 %v2618
        %2721 = vmatprep.subr.bf16.mxu0 %v2623
        %2722 = vmatpush1.bf16.msra.mxu0 %v2622
        %2723 = vmatprep.subr.bf16.mxu0 %v2627
        %2724 = vmatpush1.bf16.msra.mxu0 %v2626
        %2725 = vmatprep.subr.bf16.mxu0 %v2631
        %2726 = vmatpush1.bf16.msra.mxu0 %v2630
        %2727 = vmatprep.subr.bf16.mxu0 %v2635
        %2728 = vmatpush1.bf16.msra.mxu0 %v2634
        %2729 = vmatprep.subr.bf16.mxu0 %v2639
        %2730 = vmatpush1.bf16.msra.mxu0 %v2638
        %2731 = vmatprep.subr.bf16.mxu0 0
        %2732 = vmatpush1.bf16.msra.mxu0 0
        %2733 = vmatprep.subr.bf16.mxu0 0
        %2734 = vmatpush1.bf16.msra.mxu0 0
        %2735 = vmatprep.subr.bf16.mxu0 0
        %2736 = vmatpush1.bf16.msra.mxu0 0
        %2737 = vmatprep.subr.bf16.mxu0 0
        %2738 = vmatpush1.bf16.msra.mxu0 0
        %2739 = vmatprep.subr.bf16.mxu0 0
        %2740 = vmatpush1.bf16.msra.mxu0 0
        %2741 = vmatprep.subr.bf16.mxu0 0
        %2742 = vmatpush1.bf16.msra.mxu0 0
        %2743 = vmatprep.subr.bf16.mxu0 0
        %2744 = vmatpush1.bf16.msra.mxu0 0
        %2745 = vmatprep.subr.bf16.mxu0 0
        %2746 = vmatpush1.bf16.msra.mxu0 0
        %2747 = vmatprep.mubr.bf16.mxu0 0
        %2748 = vmatmul.mubr.bf16.gmra.mrb[0].mxu0 %v1343
        %v2749 = vpop.f32.mrb[0].mxu0
        %v2750 = vadd.f32 0.0, %v2749
        %v2751 = vpop.f32.mrb[0].mxu0
        %v2752 = vadd.f32 0.0, %v2751
        %v2753 = vpop.f32.mrb[0].mxu0
        %v2754 = vadd.f32 0.0, %v2753
        %v2755 = vpop.f32.mrb[0].mxu0
        %v2756 = vadd.f32 0.0, %v2755
        %2757 = vdwg.mxu0
        %v2758 = vadd.f32 %v2471, %v2707
        %v2759 = vadd.f32 %v2472, %v2709
        %v2760 = vadd.f32 %v2473, %v2750
        %v2761 = vadd.f32 %v2474, %v2752
        %v2762 = vadd.f32 %v2475, %v2711
        %v2763 = vadd.f32 %v2476, %v2713
        %v2764 = vadd.f32 %v2477, %v2754
        %v2765 = vadd.f32 %v2478, %v2756
        %s2766 = scalar_lea.vmem [#allocation7], 1280
        %v2767 = vld [vmem:[%s2766] sm:$0xff]
        %v2768 = vld [vmem:[%s2766 + $0x8] sm:$0xff]
        %v2769 = vld [vmem:[%s2766 + $0x10] sm:$0xff]
        %v2770 = vld [vmem:[%s2766 + $0x18] sm:$0xff]
        %v2771 = vld [vmem:[%s2766 + $0x20] sm:$0xff]
        %v2772 = vld [vmem:[%s2766 + $0x28] sm:$0xff]
        %v2773 = vld [vmem:[%s2766 + $0x30] sm:$0xff]
        %v2774 = vld [vmem:[%s2766 + $0x38] sm:$0xff]
        %v2775 = vld [vmem:[%s2766 + $0x40] sm:$0xff]
        %v2776 = vld [vmem:[%s2766 + $0x48] sm:$0xff]
        %v2777 = vld [vmem:[%s2766 + $0x50] sm:$0xff]
        %v2778 = vld [vmem:[%s2766 + $0x58] sm:$0xff]
        %v2779 = vld [vmem:[%s2766 + $0x60] sm:$0xff]
        %v2780 = vld [vmem:[%s2766 + $0x68] sm:$0xff]
        %v2781 = vld [vmem:[%s2766 + $0x70] sm:$0xff]
        %v2782 = vld [vmem:[%s2766 + $0x78] sm:$0xff]
        %v2783 = vld [vmem:[%s2766 + $0x80] sm:$0xff]
        %v2784 = vld [vmem:[%s2766 + $0x88] sm:$0xff]
        %v2785 = vld [vmem:[%s2766 + $0x90] sm:$0xff]
        %v2786 = vld [vmem:[%s2766 + $0x98] sm:$0xff]
        %v2787 = vld [vmem:[%s2766 + $0xa0] sm:$0xff]
        %v2788 = vld [vmem:[%s2766 + $0xa8] sm:$0xff]
        %v2789 = vld [vmem:[%s2766 + $0xb0] sm:$0xff]
        %v2790 = vld [vmem:[%s2766 + $0xb8] sm:$0xff]
        %v2791 = vld [vmem:[%s2766 + $0xc0] sm:$0xff]
        %v2792 = vld [vmem:[%s2766 + $0xc8] sm:$0xff]
        %v2793 = vld [vmem:[%s2766 + $0xd0] sm:$0xff]
        %v2794 = vld [vmem:[%s2766 + $0xd8] sm:$0xff]
        %v2795 = vld [vmem:[%s2766 + $0xe0] sm:$0xff]
        %v2796 = vld [vmem:[%s2766 + $0xe8] sm:$0xff]
        %v2797 = vld [vmem:[%s2766 + $0xf0] sm:$0xff]
        %v2798 = vld [vmem:[%s2766 + $0xf8] sm:$0xff]
        %v2831 = vunpack.c.l.b16 %v2767
        %v2832 = vunpack.c.h.b16 %v2767
        %v2833 = vunpack.c.l.b16 %v2768
        %v2834 = vunpack.c.h.b16 %v2768
        %v2835 = vunpack.c.l.b16 %v2769
        %v2836 = vunpack.c.h.b16 %v2769
        %v2837 = vunpack.c.l.b16 %v2770
        %v2838 = vunpack.c.h.b16 %v2770
        %v2839 = vunpack.c.l.b16 %v2771
        %v2840 = vunpack.c.h.b16 %v2771
        %v2841 = vunpack.c.l.b16 %v2772
        %v2842 = vunpack.c.h.b16 %v2772
        %v2843 = vunpack.c.l.b16 %v2773
        %v2844 = vunpack.c.h.b16 %v2773
        %v2845 = vunpack.c.l.b16 %v2774
        %v2846 = vunpack.c.h.b16 %v2774
        %v2847 = vunpack.c.l.b16 %v2775
        %v2848 = vunpack.c.h.b16 %v2775
        %v2849 = vunpack.c.l.b16 %v2776
        %v2850 = vunpack.c.h.b16 %v2776
        %v2851 = vunpack.c.l.b16 %v2777
        %v2852 = vunpack.c.h.b16 %v2777
        %v2853 = vunpack.c.l.b16 %v2778
        %v2854 = vunpack.c.h.b16 %v2778
        %v2855 = vunpack.c.l.b16 %v2779
        %v2856 = vunpack.c.h.b16 %v2779
        %v2857 = vunpack.c.l.b16 %v2780
        %v2858 = vunpack.c.h.b16 %v2780
        %v2859 = vunpack.c.l.b16 %v2781
        %v2860 = vunpack.c.h.b16 %v2781
        %v2861 = vunpack.c.l.b16 %v2782
        %v2862 = vunpack.c.h.b16 %v2782
        %v2863 = vunpack.c.l.b16 %v2783
        %v2864 = vunpack.c.h.b16 %v2783
        %v2865 = vunpack.c.l.b16 %v2784
        %v2866 = vunpack.c.h.b16 %v2784
        %v2867 = vunpack.c.l.b16 %v2785
        %v2868 = vunpack.c.h.b16 %v2785
        %v2869 = vunpack.c.l.b16 %v2786
        %v2870 = vunpack.c.h.b16 %v2786
        %v2871 = vunpack.c.l.b16 %v2787
        %v2872 = vunpack.c.h.b16 %v2787
        %v2873 = vunpack.c.l.b16 %v2788
        %v2874 = vunpack.c.h.b16 %v2788
        %v2875 = vunpack.c.l.b16 %v2789
        %v2876 = vunpack.c.h.b16 %v2789
        %v2877 = vunpack.c.l.b16 %v2790
        %v2878 = vunpack.c.h.b16 %v2790
        %v2879 = vunpack.c.l.b16 %v2791
        %v2880 = vunpack.c.h.b16 %v2791
        %v2881 = vunpack.c.l.b16 %v2792
        %v2882 = vunpack.c.h.b16 %v2792
        %v2883 = vunpack.c.l.b16 %v2793
        %v2884 = vunpack.c.h.b16 %v2793
        %v2885 = vunpack.c.l.b16 %v2794
        %v2886 = vunpack.c.h.b16 %v2794
        %v2887 = vunpack.c.l.b16 %v2795
        %v2888 = vunpack.c.h.b16 %v2795
        %v2889 = vunpack.c.l.b16 %v2796
        %v2890 = vunpack.c.h.b16 %v2796
        %v2891 = vunpack.c.l.b16 %v2797
        %v2892 = vunpack.c.h.b16 %v2797
        %v2893 = vunpack.c.l.b16 %v2798
        %v2894 = vunpack.c.h.b16 %v2798
        %v2895 = vpack.c.b16 %v2835, %v2831
        %v2896 = vpack.c.b16 %v2836, %v2832
        %v2897 = vpack.c.b16 %v2837, %v2833
        %v2898 = vpack.c.b16 %v2838, %v2834
        %v2899 = vpack.c.b16 %v2843, %v2839
        %v2900 = vpack.c.b16 %v2844, %v2840
        %v2901 = vpack.c.b16 %v2845, %v2841
        %v2902 = vpack.c.b16 %v2846, %v2842
        %v2903 = vpack.c.b16 %v2851, %v2847
        %v2904 = vpack.c.b16 %v2852, %v2848
        %v2905 = vpack.c.b16 %v2853, %v2849
        %v2906 = vpack.c.b16 %v2854, %v2850
        %v2907 = vpack.c.b16 %v2859, %v2855
        %v2908 = vpack.c.b16 %v2860, %v2856
        %v2909 = vpack.c.b16 %v2861, %v2857
        %v2910 = vpack.c.b16 %v2862, %v2858
        %v2911 = vpack.c.b16 %v2867, %v2863
        %v2912 = vpack.c.b16 %v2868, %v2864
        %v2913 = vpack.c.b16 %v2869, %v2865
        %v2914 = vpack.c.b16 %v2870, %v2866
        %v2915 = vpack.c.b16 %v2875, %v2871
        %v2916 = vpack.c.b16 %v2876, %v2872
        %v2917 = vpack.c.b16 %v2877, %v2873
        %v2918 = vpack.c.b16 %v2878, %v2874
        %v2919 = vpack.c.b16 %v2883, %v2879
        %v2920 = vpack.c.b16 %v2884, %v2880
        %v2921 = vpack.c.b16 %v2885, %v2881
        %v2922 = vpack.c.b16 %v2886, %v2882
        %v2923 = vpack.c.b16 %v2891, %v2887
        %v2924 = vpack.c.b16 %v2892, %v2888
        %v2925 = vpack.c.b16 %v2893, %v2889
        %v2926 = vpack.c.b16 %v2894, %v2890
        %2959 = vmatprep.subr.bf16.mxu0 %v2896
        %2960 = vmatpush1.bf16.msra.mxu0 %v2895
        %2961 = vmatprep.subr.bf16.mxu0 %v2900
        %2962 = vmatpush1.bf16.msra.mxu0 %v2899
        %2963 = vmatprep.subr.bf16.mxu0 %v2904
        %2964 = vmatpush1.bf16.msra.mxu0 %v2903
        %2965 = vmatprep.subr.bf16.mxu0 %v2908
        %2966 = vmatpush1.bf16.msra.mxu0 %v2907
        %2967 = vmatprep.subr.bf16.mxu0 %v2912
        %2968 = vmatpush1.bf16.msra.mxu0 %v2911
        %2969 = vmatprep.subr.bf16.mxu0 %v2916
        %2970 = vmatpush1.bf16.msra.mxu0 %v2915
        %2971 = vmatprep.subr.bf16.mxu0 %v2920
        %2972 = vmatpush1.bf16.msra.mxu0 %v2919
        %2973 = vmatprep.subr.bf16.mxu0 %v2924
        %2974 = vmatpush1.bf16.msra.mxu0 %v2923
        %2975 = vmatprep.subr.bf16.mxu0 0
        %2976 = vmatpush1.bf16.msra.mxu0 0
        %2977 = vmatprep.subr.bf16.mxu0 0
        %2978 = vmatpush1.bf16.msra.mxu0 0
        %2979 = vmatprep.subr.bf16.mxu0 0
        %2980 = vmatpush1.bf16.msra.mxu0 0
        %2981 = vmatprep.subr.bf16.mxu0 0
        %2982 = vmatpush1.bf16.msra.mxu0 0
        %2983 = vmatprep.subr.bf16.mxu0 0
        %2984 = vmatpush1.bf16.msra.mxu0 0
        %2985 = vmatprep.subr.bf16.mxu0 0
        %2986 = vmatpush1.bf16.msra.mxu0 0
        %2987 = vmatprep.subr.bf16.mxu0 0
        %2988 = vmatpush1.bf16.msra.mxu0 0
        %2989 = vmatprep.subr.bf16.mxu0 0
        %2990 = vmatpush1.bf16.msra.mxu0 0
        %2991 = vmatprep.mubr.bf16.mxu0 0
        %2992 = vmatmul.mubr.bf16.gmra.mrb[0].mxu0 %v1344
        %v2993 = vpop.f32.mrb[0].mxu0
        %v2994 = vadd.f32 0.0, %v2993
        %v2995 = vpop.f32.mrb[0].mxu0
        %v2996 = vadd.f32 0.0, %v2995
        %v2997 = vpop.f32.mrb[0].mxu0
        %v2998 = vadd.f32 0.0, %v2997
        %v2999 = vpop.f32.mrb[0].mxu0
        %v3000 = vadd.f32 0.0, %v2999
        %3001 = vdwg.mxu0
        %3002 = vmatprep.subr.bf16.mxu0 %v2898
        %3003 = vmatpush1.bf16.msra.mxu0 %v2897
        %3004 = vmatprep.subr.bf16.mxu0 %v2902
        %3005 = vmatpush1.bf16.msra.mxu0 %v2901
        %3006 = vmatprep.subr.bf16.mxu0 %v2906
        %3007 = vmatpush1.bf16.msra.mxu0 %v2905
        %3008 = vmatprep.subr.bf16.mxu0 %v2910
        %3009 = vmatpush1.bf16.msra.mxu0 %v2909
        %3010 = vmatprep.subr.bf16.mxu0 %v2914
        %3011 = vmatpush1.bf16.msra.mxu0 %v2913
        %3012 = vmatprep.subr.bf16.mxu0 %v2918
        %3013 = vmatpush1.bf16.msra.mxu0 %v2917
        %3014 = vmatprep.subr.bf16.mxu0 %v2922
        %3015 = vmatpush1.bf16.msra.mxu0 %v2921
        %3016 = vmatprep.subr.bf16.mxu0 %v2926
        %3017 = vmatpush1.bf16.msra.mxu0 %v2925
        %3018 = vmatprep.subr.bf16.mxu0 0
        %3019 = vmatpush1.bf16.msra.mxu0 0
        %3020 = vmatprep.subr.bf16.mxu0 0
        %3021 = vmatpush1.bf16.msra.mxu0 0
        %3022 = vmatprep.subr.bf16.mxu0 0
        %3023 = vmatpush1.bf16.msra.mxu0 0
        %3024 = vmatprep.subr.bf16.mxu0 0
        %3025 = vmatpush1.bf16.msra.mxu0 0
        %3026 = vmatprep.subr.bf16.mxu0 0
        %3027 = vmatpush1.bf16.msra.mxu0 0
        %3028 = vmatprep.subr.bf16.mxu0 0
        %3029 = vmatpush1.bf16.msra.mxu0 0
        %3030 = vmatprep.subr.bf16.mxu0 0
        %3031 = vmatpush1.bf16.msra.mxu0 0
        %3032 = vmatprep.subr.bf16.mxu0 0
        %3033 = vmatpush1.bf16.msra.mxu0 0
        %3034 = vmatprep.mubr.bf16.mxu0 0
        %3035 = vmatmul.mubr.bf16.gmra.mrb[0].mxu0 %v1344
        %v3036 = vpop.f32.mrb[0].mxu0
        %v3037 = vadd.f32 0.0, %v3036
        %v3038 = vpop.f32.mrb[0].mxu0
        %v3039 = vadd.f32 0.0, %v3038
        %v3040 = vpop.f32.mrb[0].mxu0
        %v3041 = vadd.f32 0.0, %v3040
        %v3042 = vpop.f32.mrb[0].mxu0
        %v3043 = vadd.f32 0.0, %v3042
        %3044 = vdwg.mxu0
        %v3045 = vadd.f32 %v2758, %v2994
        %v3046 = vadd.f32 %v2759, %v2996
        %v3047 = vadd.f32 %v2760, %v3037
        %v3048 = vadd.f32 %v2761, %v3039
        %v3049 = vadd.f32 %v2762, %v2998
        %v3050 = vadd.f32 %v2763, %v3000
        %v3051 = vadd.f32 %v2764, %v3041
        %v3052 = vadd.f32 %v2765, %v3043
        %s3053 = scalar_lea.vmem [#allocation7], 1536
        %v3054 = vld [vmem:[%s3053] sm:$0xff]
        %v3055 = vld [vmem:[%s3053 + $0x8] sm:$0xff]
        %v3056 = vld [vmem:[%s3053 + $0x10] sm:$0xff]
        %v3057 = vld [vmem:[%s3053 + $0x18] sm:$0xff]
        %v3058 = vld [vmem:[%s3053 + $0x20] sm:$0xff]
        %v3059 = vld [vmem:[%s3053 + $0x28] sm:$0xff]
        %v3060 = vld [vmem:[%s3053 + $0x30] sm:$0xff]
        %v3061 = vld [vmem:[%s3053 + $0x38] sm:$0xff]
        %v3062 = vld [vmem:[%s3053 + $0x40] sm:$0xff]
        %v3063 = vld [vmem:[%s3053 + $0x48] sm:$0xff]
        %v3064 = vld [vmem:[%s3053 + $0x50] sm:$0xff]
        %v3065 = vld [vmem:[%s3053 + $0x58] sm:$0xff]
        %v3066 = vld [vmem:[%s3053 + $0x60] sm:$0xff]
        %v3067 = vld [vmem:[%s3053 + $0x68] sm:$0xff]
        %v3068 = vld [vmem:[%s3053 + $0x70] sm:$0xff]
        %v3069 = vld [vmem:[%s3053 + $0x78] sm:$0xff]
        %v3070 = vld [vmem:[%s3053 + $0x80] sm:$0xff]
        %v3071 = vld [vmem:[%s3053 + $0x88] sm:$0xff]
        %v3072 = vld [vmem:[%s3053 + $0x90] sm:$0xff]
        %v3073 = vld [vmem:[%s3053 + $0x98] sm:$0xff]
        %v3074 = vld [vmem:[%s3053 + $0xa0] sm:$0xff]
        %v3075 = vld [vmem:[%s3053 + $0xa8] sm:$0xff]
        %v3076 = vld [vmem:[%s3053 + $0xb0] sm:$0xff]
        %v3077 = vld [vmem:[%s3053 + $0xb8] sm:$0xff]
        %v3078 = vld [vmem:[%s3053 + $0xc0] sm:$0xff]
        %v3079 = vld [vmem:[%s3053 + $0xc8] sm:$0xff]
        %v3080 = vld [vmem:[%s3053 + $0xd0] sm:$0xff]
        %v3081 = vld [vmem:[%s3053 + $0xd8] sm:$0xff]
        %v3082 = vld [vmem:[%s3053 + $0xe0] sm:$0xff]
        %v3083 = vld [vmem:[%s3053 + $0xe8] sm:$0xff]
        %v3084 = vld [vmem:[%s3053 + $0xf0] sm:$0xff]
        %v3085 = vld [vmem:[%s3053 + $0xf8] sm:$0xff]
        %v3118 = vunpack.c.l.b16 %v3054
        %v3119 = vunpack.c.h.b16 %v3054
        %v3120 = vunpack.c.l.b16 %v3055
        %v3121 = vunpack.c.h.b16 %v3055
        %v3122 = vunpack.c.l.b16 %v3056
        %v3123 = vunpack.c.h.b16 %v3056
        %v3124 = vunpack.c.l.b16 %v3057
        %v3125 = vunpack.c.h.b16 %v3057
        %v3126 = vunpack.c.l.b16 %v3058
        %v3127 = vunpack.c.h.b16 %v3058
        %v3128 = vunpack.c.l.b16 %v3059
        %v3129 = vunpack.c.h.b16 %v3059
        %v3130 = vunpack.c.l.b16 %v3060
        %v3131 = vunpack.c.h.b16 %v3060
        %v3132 = vunpack.c.l.b16 %v3061
        %v3133 = vunpack.c.h.b16 %v3061
        %v3134 = vunpack.c.l.b16 %v3062
        %v3135 = vunpack.c.h.b16 %v3062
        %v3136 = vunpack.c.l.b16 %v3063
        %v3137 = vunpack.c.h.b16 %v3063
        %v3138 = vunpack.c.l.b16 %v3064
        %v3139 = vunpack.c.h.b16 %v3064
        %v3140 = vunpack.c.l.b16 %v3065
        %v3141 = vunpack.c.h.b16 %v3065
        %v3142 = vunpack.c.l.b16 %v3066
        %v3143 = vunpack.c.h.b16 %v3066
        %v3144 = vunpack.c.l.b16 %v3067
        %v3145 = vunpack.c.h.b16 %v3067
        %v3146 = vunpack.c.l.b16 %v3068
        %v3147 = vunpack.c.h.b16 %v3068
        %v3148 = vunpack.c.l.b16 %v3069
        %v3149 = vunpack.c.h.b16 %v3069
        %v3150 = vunpack.c.l.b16 %v3070
        %v3151 = vunpack.c.h.b16 %v3070
        %v3152 = vunpack.c.l.b16 %v3071
        %v3153 = vunpack.c.h.b16 %v3071
        %v3154 = vunpack.c.l.b16 %v3072
        %v3155 = vunpack.c.h.b16 %v3072
        %v3156 = vunpack.c.l.b16 %v3073
        %v3157 = vunpack.c.h.b16 %v3073
        %v3158 = vunpack.c.l.b16 %v3074
        %v3159 = vunpack.c.h.b16 %v3074
        %v3160 = vunpack.c.l.b16 %v3075
        %v3161 = vunpack.c.h.b16 %v3075
        %v3162 = vunpack.c.l.b16 %v3076
        %v3163 = vunpack.c.h.b16 %v3076
        %v3164 = vunpack.c.l.b16 %v3077
        %v3165 = vunpack.c.h.b16 %v3077
        %v3166 = vunpack.c.l.b16 %v3078
        %v3167 = vunpack.c.h.b16 %v3078
        %v3168 = vunpack.c.l.b16 %v3079
        %v3169 = vunpack.c.h.b16 %v3079
        %v3170 = vunpack.c.l.b16 %v3080
        %v3171 = vunpack.c.h.b16 %v3080
        %v3172 = vunpack.c.l.b16 %v3081
        %v3173 = vunpack.c.h.b16 %v3081
        %v3174 = vunpack.c.l.b16 %v3082
        %v3175 = vunpack.c.h.b16 %v3082
        %v3176 = vunpack.c.l.b16 %v3083
        %v3177 = vunpack.c.h.b16 %v3083
        %v3178 = vunpack.c.l.b16 %v3084
        %v3179 = vunpack.c.h.b16 %v3084
        %v3180 = vunpack.c.l.b16 %v3085
        %v3181 = vunpack.c.h.b16 %v3085
        %v3182 = vpack.c.b16 %v3122, %v3118
        %v3183 = vpack.c.b16 %v3123, %v3119
        %v3184 = vpack.c.b16 %v3124, %v3120
        %v3185 = vpack.c.b16 %v3125, %v3121
        %v3186 = vpack.c.b16 %v3130, %v3126
        %v3187 = vpack.c.b16 %v3131, %v3127
        %v3188 = vpack.c.b16 %v3132, %v3128
        %v3189 = vpack.c.b16 %v3133, %v3129
        %v3190 = vpack.c.b16 %v3138, %v3134
        %v3191 = vpack.c.b16 %v3139, %v3135
        %v3192 = vpack.c.b16 %v3140, %v3136
        %v3193 = vpack.c.b16 %v3141, %v3137
        %v3194 = vpack.c.b16 %v3146, %v3142
        %v3195 = vpack.c.b16 %v3147, %v3143
        %v3196 = vpack.c.b16 %v3148, %v3144
        %v3197 = vpack.c.b16 %v3149, %v3145
        %v3198 = vpack.c.b16 %v3154, %v3150
        %v3199 = vpack.c.b16 %v3155, %v3151
        %v3200 = vpack.c.b16 %v3156, %v3152
        %v3201 = vpack.c.b16 %v3157, %v3153
        %v3202 = vpack.c.b16 %v3162, %v3158
        %v3203 = vpack.c.b16 %v3163, %v3159
        %v3204 = vpack.c.b16 %v3164, %v3160
        %v3205 = vpack.c.b16 %v3165, %v3161
        %v3206 = vpack.c.b16 %v3170, %v3166
        %v3207 = vpack.c.b16 %v3171, %v3167
        %v3208 = vpack.c.b16 %v3172, %v3168
        %v3209 = vpack.c.b16 %v3173, %v3169
        %v3210 = vpack.c.b16 %v3178, %v3174
        %v3211 = vpack.c.b16 %v3179, %v3175
        %v3212 = vpack.c.b16 %v3180, %v3176
        %v3213 = vpack.c.b16 %v3181, %v3177
        %3246 = vmatprep.subr.bf16.mxu0 %v3183
        %3247 = vmatpush1.bf16.msra.mxu0 %v3182
        %3248 = vmatprep.subr.bf16.mxu0 %v3187
        %3249 = vmatpush1.bf16.msra.mxu0 %v3186
        %3250 = vmatprep.subr.bf16.mxu0 %v3191
        %3251 = vmatpush1.bf16.msra.mxu0 %v3190
        %3252 = vmatprep.subr.bf16.mxu0 %v3195
        %3253 = vmatpush1.bf16.msra.mxu0 %v3194
        %3254 = vmatprep.subr.bf16.mxu0 %v3199
        %3255 = vmatpush1.bf16.msra.mxu0 %v3198
        %3256 = vmatprep.subr.bf16.mxu0 %v3203
        %3257 = vmatpush1.bf16.msra.mxu0 %v3202
        %3258 = vmatprep.subr.bf16.mxu0 %v3207
        %3259 = vmatpush1.bf16.msra.mxu0 %v3206
        %3260 = vmatprep.subr.bf16.mxu0 %v3211
        %3261 = vmatpush1.bf16.msra.mxu0 %v3210
        %3262 = vmatprep.subr.bf16.mxu0 0
        %3263 = vmatpush1.bf16.msra.mxu0 0
        %3264 = vmatprep.subr.bf16.mxu0 0
        %3265 = vmatpush1.bf16.msra.mxu0 0
        %3266 = vmatprep.subr.bf16.mxu0 0
        %3267 = vmatpush1.bf16.msra.mxu0 0
        %3268 = vmatprep.subr.bf16.mxu0 0
        %3269 = vmatpush1.bf16.msra.mxu0 0
        %3270 = vmatprep.subr.bf16.mxu0 0
        %3271 = vmatpush1.bf16.msra.mxu0 0
        %3272 = vmatprep.subr.bf16.mxu0 0
        %3273 = vmatpush1.bf16.msra.mxu0 0
        %3274 = vmatprep.subr.bf16.mxu0 0
        %3275 = vmatpush1.bf16.msra.mxu0 0
        %3276 = vmatprep.subr.bf16.mxu0 0
        %3277 = vmatpush1.bf16.msra.mxu0 0
        %3278 = vmatprep.mubr.bf16.mxu0 0
        %3279 = vmatmul.mubr.bf16.gmra.mrb[0].mxu0 %v1345
        %v3280 = vpop.f32.mrb[0].mxu0
        %v3281 = vadd.f32 0.0, %v3280
        %v3282 = vpop.f32.mrb[0].mxu0
        %v3283 = vadd.f32 0.0, %v3282
        %v3284 = vpop.f32.mrb[0].mxu0
        %v3285 = vadd.f32 0.0, %v3284
        %v3286 = vpop.f32.mrb[0].mxu0
        %v3287 = vadd.f32 0.0, %v3286
        %3288 = vdwg.mxu0
        %3289 = vmatprep.subr.bf16.mxu0 %v3185
        %3290 = vmatpush1.bf16.msra.mxu0 %v3184
        %3291 = vmatprep.subr.bf16.mxu0 %v3189
        %3292 = vmatpush1.bf16.msra.mxu0 %v3188
        %3293 = vmatprep.subr.bf16.mxu0 %v3193
        %3294 = vmatpush1.bf16.msra.mxu0 %v3192
        %3295 = vmatprep.subr.bf16.mxu0 %v3197
        %3296 = vmatpush1.bf16.msra.mxu0 %v3196
        %3297 = vmatprep.subr.bf16.mxu0 %v3201
        %3298 = vmatpush1.bf16.msra.mxu0 %v3200
        %3299 = vmatprep.subr.bf16.mxu0 %v3205
        %3300 = vmatpush1.bf16.msra.mxu0 %v3204
        %3301 = vmatprep.subr.bf16.mxu0 %v3209
        %3302 = vmatpush1.bf16.msra.mxu0 %v3208
        %3303 = vmatprep.subr.bf16.mxu0 %v3213
        %3304 = vmatpush1.bf16.msra.mxu0 %v3212
        %3305 = vmatprep.subr.bf16.mxu0 0
        %3306 = vmatpush1.bf16.msra.mxu0 0
        %3307 = vmatprep.subr.bf16.mxu0 0
        %3308 = vmatpush1.bf16.msra.mxu0 0
        %3309 = vmatprep.subr.bf16.mxu0 0
        %3310 = vmatpush1.bf16.msra.mxu0 0
        %3311 = vmatprep.subr.bf16.mxu0 0
        %3312 = vmatpush1.bf16.msra.mxu0 0
        %3313 = vmatprep.subr.bf16.mxu0 0
        %3314 = vmatpush1.bf16.msra.mxu0 0
        %3315 = vmatprep.subr.bf16.mxu0 0
        %3316 = vmatpush1.bf16.msra.mxu0 0
        %3317 = vmatprep.subr.bf16.mxu0 0
        %3318 = vmatpush1.bf16.msra.mxu0 0
        %3319 = vmatprep.subr.bf16.mxu0 0
        %3320 = vmatpush1.bf16.msra.mxu0 0
        %3321 = vmatprep.mubr.bf16.mxu0 0
        %3322 = vmatmul.mubr.bf16.gmra.mrb[0].mxu0 %v1345
        %v3323 = vpop.f32.mrb[0].mxu0
        %v3324 = vadd.f32 0.0, %v3323
        %v3325 = vpop.f32.mrb[0].mxu0
        %v3326 = vadd.f32 0.0, %v3325
        %v3327 = vpop.f32.mrb[0].mxu0
        %v3328 = vadd.f32 0.0, %v3327
        %v3329 = vpop.f32.mrb[0].mxu0
        %v3330 = vadd.f32 0.0, %v3329
        %3331 = vdwg.mxu0
        %v3332 = vadd.f32 %v3045, %v3281
        %v3333 = vadd.f32 %v3046, %v3283
        %v3334 = vadd.f32 %v3047, %v3324
        %v3335 = vadd.f32 %v3048, %v3326
        %v3336 = vadd.f32 %v3049, %v3285
        %v3337 = vadd.f32 %v3050, %v3287
        %v3338 = vadd.f32 %v3051, %v3328
        %v3339 = vadd.f32 %v3052, %v3330
        %s3340 = scalar_lea.vmem [#allocation7], 1792
        %v3341 = vld [vmem:[%s3340] sm:$0xff]
        %v3342 = vld [vmem:[%s3340 + $0x8] sm:$0xff]
        %v3343 = vld [vmem:[%s3340 + $0x10] sm:$0xff]
        %v3344 = vld [vmem:[%s3340 + $0x18] sm:$0xff]
        %v3345 = vld [vmem:[%s3340 + $0x20] sm:$0xff]
        %v3346 = vld [vmem:[%s3340 + $0x28] sm:$0xff]
        %v3347 = vld [vmem:[%s3340 + $0x30] sm:$0xff]
        %v3348 = vld [vmem:[%s3340 + $0x38] sm:$0xff]
        %v3349 = vld [vmem:[%s3340 + $0x40] sm:$0xff]
        %v3350 = vld [vmem:[%s3340 + $0x48] sm:$0xff]
        %v3351 = vld [vmem:[%s3340 + $0x50] sm:$0xff]
        %v3352 = vld [vmem:[%s3340 + $0x58] sm:$0xff]
        %v3353 = vld [vmem:[%s3340 + $0x60] sm:$0xff]
        %v3354 = vld [vmem:[%s3340 + $0x68] sm:$0xff]
        %v3355 = vld [vmem:[%s3340 + $0x70] sm:$0xff]
        %v3356 = vld [vmem:[%s3340 + $0x78] sm:$0xff]
        %v3357 = vld [vmem:[%s3340 + $0x80] sm:$0xff]
        %v3358 = vld [vmem:[%s3340 + $0x88] sm:$0xff]
        %v3359 = vld [vmem:[%s3340 + $0x90] sm:$0xff]
        %v3360 = vld [vmem:[%s3340 + $0x98] sm:$0xff]
        %v3361 = vld [vmem:[%s3340 + $0xa0] sm:$0xff]
        %v3362 = vld [vmem:[%s3340 + $0xa8] sm:$0xff]
        %v3363 = vld [vmem:[%s3340 + $0xb0] sm:$0xff]
        %v3364 = vld [vmem:[%s3340 + $0xb8] sm:$0xff]
        %v3365 = vld [vmem:[%s3340 + $0xc0] sm:$0xff]
        %v3366 = vld [vmem:[%s3340 + $0xc8] sm:$0xff]
        %v3367 = vld [vmem:[%s3340 + $0xd0] sm:$0xff]
        %v3368 = vld [vmem:[%s3340 + $0xd8] sm:$0xff]
        %v3369 = vld [vmem:[%s3340 + $0xe0] sm:$0xff]
        %v3370 = vld [vmem:[%s3340 + $0xe8] sm:$0xff]
        %v3371 = vld [vmem:[%s3340 + $0xf0] sm:$0xff]
        %v3372 = vld [vmem:[%s3340 + $0xf8] sm:$0xff]
        %v3405 = vunpack.c.l.b16 %v3341
        %v3406 = vunpack.c.h.b16 %v3341
        %v3407 = vunpack.c.l.b16 %v3342
        %v3408 = vunpack.c.h.b16 %v3342
        %v3409 = vunpack.c.l.b16 %v3343
        %v3410 = vunpack.c.h.b16 %v3343
        %v3411 = vunpack.c.l.b16 %v3344
        %v3412 = vunpack.c.h.b16 %v3344
        %v3413 = vunpack.c.l.b16 %v3345
        %v3414 = vunpack.c.h.b16 %v3345
        %v3415 = vunpack.c.l.b16 %v3346
        %v3416 = vunpack.c.h.b16 %v3346
        %v3417 = vunpack.c.l.b16 %v3347
        %v3418 = vunpack.c.h.b16 %v3347
        %v3419 = vunpack.c.l.b16 %v3348
        %v3420 = vunpack.c.h.b16 %v3348
        %v3421 = vunpack.c.l.b16 %v3349
        %v3422 = vunpack.c.h.b16 %v3349
        %v3423 = vunpack.c.l.b16 %v3350
        %v3424 = vunpack.c.h.b16 %v3350
        %v3425 = vunpack.c.l.b16 %v3351
        %v3426 = vunpack.c.h.b16 %v3351
        %v3427 = vunpack.c.l.b16 %v3352
        %v3428 = vunpack.c.h.b16 %v3352
        %v3429 = vunpack.c.l.b16 %v3353
        %v3430 = vunpack.c.h.b16 %v3353
        %v3431 = vunpack.c.l.b16 %v3354
        %v3432 = vunpack.c.h.b16 %v3354
        %v3433 = vunpack.c.l.b16 %v3355
        %v3434 = vunpack.c.h.b16 %v3355
        %v3435 = vunpack.c.l.b16 %v3356
        %v3436 = vunpack.c.h.b16 %v3356
        %v3437 = vunpack.c.l.b16 %v3357
        %v3438 = vunpack.c.h.b16 %v3357
        %v3439 = vunpack.c.l.b16 %v3358
        %v3440 = vunpack.c.h.b16 %v3358
        %v3441 = vunpack.c.l.b16 %v3359
        %v3442 = vunpack.c.h.b16 %v3359
        %v3443 = vunpack.c.l.b16 %v3360
        %v3444 = vunpack.c.h.b16 %v3360
        %v3445 = vunpack.c.l.b16 %v3361
        %v3446 = vunpack.c.h.b16 %v3361
        %v3447 = vunpack.c.l.b16 %v3362
        %v3448 = vunpack.c.h.b16 %v3362
        %v3449 = vunpack.c.l.b16 %v3363
        %v3450 = vunpack.c.h.b16 %v3363
        %v3451 = vunpack.c.l.b16 %v3364
        %v3452 = vunpack.c.h.b16 %v3364
        %v3453 = vunpack.c.l.b16 %v3365
        %v3454 = vunpack.c.h.b16 %v3365
        %v3455 = vunpack.c.l.b16 %v3366
        %v3456 = vunpack.c.h.b16 %v3366
        %v3457 = vunpack.c.l.b16 %v3367
        %v3458 = vunpack.c.h.b16 %v3367
        %v3459 = vunpack.c.l.b16 %v3368
        %v3460 = vunpack.c.h.b16 %v3368
        %v3461 = vunpack.c.l.b16 %v3369
        %v3462 = vunpack.c.h.b16 %v3369
        %v3463 = vunpack.c.l.b16 %v3370
        %v3464 = vunpack.c.h.b16 %v3370
        %v3465 = vunpack.c.l.b16 %v3371
        %v3466 = vunpack.c.h.b16 %v3371
        %v3467 = vunpack.c.l.b16 %v3372
        %v3468 = vunpack.c.h.b16 %v3372
        %v3469 = vpack.c.b16 %v3409, %v3405
        %v3470 = vpack.c.b16 %v3410, %v3406
        %v3471 = vpack.c.b16 %v3411, %v3407
        %v3472 = vpack.c.b16 %v3412, %v3408
        %v3473 = vpack.c.b16 %v3417, %v3413
        %v3474 = vpack.c.b16 %v3418, %v3414
        %v3475 = vpack.c.b16 %v3419, %v3415
        %v3476 = vpack.c.b16 %v3420, %v3416
        %v3477 = vpack.c.b16 %v3425, %v3421
        %v3478 = vpack.c.b16 %v3426, %v3422
        %v3479 = vpack.c.b16 %v3427, %v3423
        %v3480 = vpack.c.b16 %v3428, %v3424
        %v3481 = vpack.c.b16 %v3433, %v3429
        %v3482 = vpack.c.b16 %v3434, %v3430
        %v3483 = vpack.c.b16 %v3435, %v3431
        %v3484 = vpack.c.b16 %v3436, %v3432
        %v3485 = vpack.c.b16 %v3441, %v3437
        %v3486 = vpack.c.b16 %v3442, %v3438
        %v3487 = vpack.c.b16 %v3443, %v3439
        %v3488 = vpack.c.b16 %v3444, %v3440
        %v3489 = vpack.c.b16 %v3449, %v3445
        %v3490 = vpack.c.b16 %v3450, %v3446
        %v3491 = vpack.c.b16 %v3451, %v3447
        %v3492 = vpack.c.b16 %v3452, %v3448
        %v3493 = vpack.c.b16 %v3457, %v3453
        %v3494 = vpack.c.b16 %v3458, %v3454
        %v3495 = vpack.c.b16 %v3459, %v3455
        %v3496 = vpack.c.b16 %v3460, %v3456
        %v3497 = vpack.c.b16 %v3465, %v3461
        %v3498 = vpack.c.b16 %v3466, %v3462
        %v3499 = vpack.c.b16 %v3467, %v3463
        %v3500 = vpack.c.b16 %v3468, %v3464
        %3533 = vmatprep.subr.bf16.mxu0 %v3470
        %3534 = vmatpush1.bf16.msra.mxu0 %v3469
        %3535 = vmatprep.subr.bf16.mxu0 %v3474
        %3536 = vmatpush1.bf16.msra.mxu0 %v3473
        %3537 = vmatprep.subr.bf16.mxu0 %v3478
        %3538 = vmatpush1.bf16.msra.mxu0 %v3477
        %3539 = vmatprep.subr.bf16.mxu0 %v3482
        %3540 = vmatpush1.bf16.msra.mxu0 %v3481
        %3541 = vmatprep.subr.bf16.mxu0 %v3486
        %3542 = vmatpush1.bf16.msra.mxu0 %v3485
        %3543 = vmatprep.subr.bf16.mxu0 %v3490
        %3544 = vmatpush1.bf16.msra.mxu0 %v3489
        %3545 = vmatprep.subr.bf16.mxu0 %v3494
        %3546 = vmatpush1.bf16.msra.mxu0 %v3493
        %3547 = vmatprep.subr.bf16.mxu0 %v3498
        %3548 = vmatpush1.bf16.msra.mxu0 %v3497
        %3549 = vmatprep.subr.bf16.mxu0 0
        %3550 = vmatpush1.bf16.msra.mxu0 0
        %3551 = vmatprep.subr.bf16.mxu0 0
        %3552 = vmatpush1.bf16.msra.mxu0 0
        %3553 = vmatprep.subr.bf16.mxu0 0
        %3554 = vmatpush1.bf16.msra.mxu0 0
        %3555 = vmatprep.subr.bf16.mxu0 0
        %3556 = vmatpush1.bf16.msra.mxu0 0
        %3557 = vmatprep.subr.bf16.mxu0 0
        %3558 = vmatpush1.bf16.msra.mxu0 0
        %3559 = vmatprep.subr.bf16.mxu0 0
        %3560 = vmatpush1.bf16.msra.mxu0 0
        %3561 = vmatprep.subr.bf16.mxu0 0
        %3562 = vmatpush1.bf16.msra.mxu0 0
        %3563 = vmatprep.subr.bf16.mxu0 0
        %3564 = vmatpush1.bf16.msra.mxu0 0
        %3565 = vmatprep.mubr.bf16.mxu0 0
        %3566 = vmatmul.mubr.bf16.gmra.mrb[0].mxu0 %v1346
        %v3567 = vpop.f32.mrb[0].mxu0
        %v3568 = vadd.f32 0.0, %v3567
        %v3569 = vpop.f32.mrb[0].mxu0
        %v3570 = vadd.f32 0.0, %v3569
        %v3571 = vpop.f32.mrb[0].mxu0
        %v3572 = vadd.f32 0.0, %v3571
        %v3573 = vpop.f32.mrb[0].mxu0
        %v3574 = vadd.f32 0.0, %v3573
        %3575 = vdwg.mxu0
        %3576 = vmatprep.subr.bf16.mxu0 %v3472
        %3577 = vmatpush1.bf16.msra.mxu0 %v3471
        %3578 = vmatprep.subr.bf16.mxu0 %v3476
        %3579 = vmatpush1.bf16.msra.mxu0 %v3475
        %3580 = vmatprep.subr.bf16.mxu0 %v3480
        %3581 = vmatpush1.bf16.msra.mxu0 %v3479
        %3582 = vmatprep.subr.bf16.mxu0 %v3484
        %3583 = vmatpush1.bf16.msra.mxu0 %v3483
        %3584 = vmatprep.subr.bf16.mxu0 %v3488
        %3585 = vmatpush1.bf16.msra.mxu0 %v3487
        %3586 = vmatprep.subr.bf16.mxu0 %v3492
        %3587 = vmatpush1.bf16.msra.mxu0 %v3491
        %3588 = vmatprep.subr.bf16.mxu0 %v3496
        %3589 = vmatpush1.bf16.msra.mxu0 %v3495
        %3590 = vmatprep.subr.bf16.mxu0 %v3500
        %3591 = vmatpush1.bf16.msra.mxu0 %v3499
        %3592 = vmatprep.subr.bf16.mxu0 0
        %3593 = vmatpush1.bf16.msra.mxu0 0
        %3594 = vmatprep.subr.bf16.mxu0 0
        %3595 = vmatpush1.bf16.msra.mxu0 0
        %3596 = vmatprep.subr.bf16.mxu0 0
        %3597 = vmatpush1.bf16.msra.mxu0 0
        %3598 = vmatprep.subr.bf16.mxu0 0
        %3599 = vmatpush1.bf16.msra.mxu0 0
        %3600 = vmatprep.subr.bf16.mxu0 0
        %3601 = vmatpush1.bf16.msra.mxu0 0
        %3602 = vmatprep.subr.bf16.mxu0 0
        %3603 = vmatpush1.bf16.msra.mxu0 0
        %3604 = vmatprep.subr.bf16.mxu0 0
        %3605 = vmatpush1.bf16.msra.mxu0 0
        %3606 = vmatprep.subr.bf16.mxu0 0
        %3607 = vmatpush1.bf16.msra.mxu0 0
        %3608 = vmatprep.mubr.bf16.mxu0 0
        %3609 = vmatmul.mubr.bf16.gmra.mrb[0].mxu0 %v1346
        %v3610 = vpop.f32.mrb[0].mxu0
        %v3611 = vadd.f32 0.0, %v3610
        %v3612 = vpop.f32.mrb[0].mxu0
        %v3613 = vadd.f32 0.0, %v3612
        %v3614 = vpop.f32.mrb[0].mxu0
        %v3615 = vadd.f32 0.0, %v3614
        %v3616 = vpop.f32.mrb[0].mxu0
        %v3617 = vadd.f32 0.0, %v3616
        %3618 = vdwg.mxu0
        %v3619 = vadd.f32 %v3332, %v3568
        %v3620 = vadd.f32 %v3333, %v3570
        %v3621 = vadd.f32 %v3334, %v3611
        %v3622 = vadd.f32 %v3335, %v3613
        %v3623 = vadd.f32 %v3336, %v3572
        %v3624 = vadd.f32 %v3337, %v3574
        %v3625 = vadd.f32 %v3338, %v3615
        %v3626 = vadd.f32 %v3339, %v3617
        %s3627 = scalar_lea.vmem [#allocation7], 2048
        %v3628 = vld [vmem:[%s3627] sm:$0xff]
        %v3629 = vld [vmem:[%s3627 + $0x8] sm:$0xff]
        %v3630 = vld [vmem:[%s3627 + $0x10] sm:$0xff]
        %v3631 = vld [vmem:[%s3627 + $0x18] sm:$0xff]
        %v3632 = vld [vmem:[%s3627 + $0x20] sm:$0xff]
        %v3633 = vld [vmem:[%s3627 + $0x28] sm:$0xff]
        %v3634 = vld [vmem:[%s3627 + $0x30] sm:$0xff]
        %v3635 = vld [vmem:[%s3627 + $0x38] sm:$0xff]
        %v3636 = vld [vmem:[%s3627 + $0x40] sm:$0xff]
        %v3637 = vld [vmem:[%s3627 + $0x48] sm:$0xff]
        %v3638 = vld [vmem:[%s3627 + $0x50] sm:$0xff]
        %v3639 = vld [vmem:[%s3627 + $0x58] sm:$0xff]
        %v3640 = vld [vmem:[%s3627 + $0x60] sm:$0xff]
        %v3641 = vld [vmem:[%s3627 + $0x68] sm:$0xff]
        %v3642 = vld [vmem:[%s3627 + $0x70] sm:$0xff]
        %v3643 = vld [vmem:[%s3627 + $0x78] sm:$0xff]
        %v3644 = vld [vmem:[%s3627 + $0x80] sm:$0xff]
        %v3645 = vld [vmem:[%s3627 + $0x88] sm:$0xff]
        %v3646 = vld [vmem:[%s3627 + $0x90] sm:$0xff]
        %v3647 = vld [vmem:[%s3627 + $0x98] sm:$0xff]
        %v3648 = vld [vmem:[%s3627 + $0xa0] sm:$0xff]
        %v3649 = vld [vmem:[%s3627 + $0xa8] sm:$0xff]
        %v3650 = vld [vmem:[%s3627 + $0xb0] sm:$0xff]
        %v3651 = vld [vmem:[%s3627 + $0xb8] sm:$0xff]
        %v3652 = vld [vmem:[%s3627 + $0xc0] sm:$0xff]
        %v3653 = vld [vmem:[%s3627 + $0xc8] sm:$0xff]
        %v3654 = vld [vmem:[%s3627 + $0xd0] sm:$0xff]
        %v3655 = vld [vmem:[%s3627 + $0xd8] sm:$0xff]
        %v3656 = vld [vmem:[%s3627 + $0xe0] sm:$0xff]
        %v3657 = vld [vmem:[%s3627 + $0xe8] sm:$0xff]
        %v3658 = vld [vmem:[%s3627 + $0xf0] sm:$0xff]
        %v3659 = vld [vmem:[%s3627 + $0xf8] sm:$0xff]
        %v3692 = vunpack.c.l.b16 %v3628
        %v3693 = vunpack.c.h.b16 %v3628
        %v3694 = vunpack.c.l.b16 %v3629
        %v3695 = vunpack.c.h.b16 %v3629
        %v3696 = vunpack.c.l.b16 %v3630
        %v3697 = vunpack.c.h.b16 %v3630
        %v3698 = vunpack.c.l.b16 %v3631
        %v3699 = vunpack.c.h.b16 %v3631
        %v3700 = vunpack.c.l.b16 %v3632
        %v3701 = vunpack.c.h.b16 %v3632
        %v3702 = vunpack.c.l.b16 %v3633
        %v3703 = vunpack.c.h.b16 %v3633
        %v3704 = vunpack.c.l.b16 %v3634
        %v3705 = vunpack.c.h.b16 %v3634
        %v3706 = vunpack.c.l.b16 %v3635
        %v3707 = vunpack.c.h.b16 %v3635
        %v3708 = vunpack.c.l.b16 %v3636
        %v3709 = vunpack.c.h.b16 %v3636
        %v3710 = vunpack.c.l.b16 %v3637
        %v3711 = vunpack.c.h.b16 %v3637
        %v3712 = vunpack.c.l.b16 %v3638
        %v3713 = vunpack.c.h.b16 %v3638
        %v3714 = vunpack.c.l.b16 %v3639
        %v3715 = vunpack.c.h.b16 %v3639
        %v3716 = vunpack.c.l.b16 %v3640
        %v3717 = vunpack.c.h.b16 %v3640
        %v3718 = vunpack.c.l.b16 %v3641
        %v3719 = vunpack.c.h.b16 %v3641
        %v3720 = vunpack.c.l.b16 %v3642
        %v3721 = vunpack.c.h.b16 %v3642
        %v3722 = vunpack.c.l.b16 %v3643
        %v3723 = vunpack.c.h.b16 %v3643
        %v3724 = vunpack.c.l.b16 %v3644
        %v3725 = vunpack.c.h.b16 %v3644
        %v3726 = vunpack.c.l.b16 %v3645
        %v3727 = vunpack.c.h.b16 %v3645
        %v3728 = vunpack.c.l.b16 %v3646
        %v3729 = vunpack.c.h.b16 %v3646
        %v3730 = vunpack.c.l.b16 %v3647
        %v3731 = vunpack.c.h.b16 %v3647
        %v3732 = vunpack.c.l.b16 %v3648
        %v3733 = vunpack.c.h.b16 %v3648
        %v3734 = vunpack.c.l.b16 %v3649
        %v3735 = vunpack.c.h.b16 %v3649
        %v3736 = vunpack.c.l.b16 %v3650
        %v3737 = vunpack.c.h.b16 %v3650
        %v3738 = vunpack.c.l.b16 %v3651
        %v3739 = vunpack.c.h.b16 %v3651
        %v3740 = vunpack.c.l.b16 %v3652
        %v3741 = vunpack.c.h.b16 %v3652
        %v3742 = vunpack.c.l.b16 %v3653
        %v3743 = vunpack.c.h.b16 %v3653
        %v3744 = vunpack.c.l.b16 %v3654
        %v3745 = vunpack.c.h.b16 %v3654
        %v3746 = vunpack.c.l.b16 %v3655
        %v3747 = vunpack.c.h.b16 %v3655
        %v3748 = vunpack.c.l.b16 %v3656
        %v3749 = vunpack.c.h.b16 %v3656
        %v3750 = vunpack.c.l.b16 %v3657
        %v3751 = vunpack.c.h.b16 %v3657
        %v3752 = vunpack.c.l.b16 %v3658
        %v3753 = vunpack.c.h.b16 %v3658
        %v3754 = vunpack.c.l.b16 %v3659
        %v3755 = vunpack.c.h.b16 %v3659
        %v3756 = vpack.c.b16 %v3696, %v3692
        %v3757 = vpack.c.b16 %v3697, %v3693
        %v3758 = vpack.c.b16 %v3698, %v3694
        %v3759 = vpack.c.b16 %v3699, %v3695
        %v3760 = vpack.c.b16 %v3704, %v3700
        %v3761 = vpack.c.b16 %v3705, %v3701
        %v3762 = vpack.c.b16 %v3706, %v3702
        %v3763 = vpack.c.b16 %v3707, %v3703
        %v3764 = vpack.c.b16 %v3712, %v3708
        %v3765 = vpack.c.b16 %v3713, %v3709
        %v3766 = vpack.c.b16 %v3714, %v3710
        %v3767 = vpack.c.b16 %v3715, %v3711
        %v3768 = vpack.c.b16 %v3720, %v3716
        %v3769 = vpack.c.b16 %v3721, %v3717
        %v3770 = vpack.c.b16 %v3722, %v3718
        %v3771 = vpack.c.b16 %v3723, %v3719
        %v3772 = vpack.c.b16 %v3728, %v3724
        %v3773 = vpack.c.b16 %v3729, %v3725
        %v3774 = vpack.c.b16 %v3730, %v3726
        %v3775 = vpack.c.b16 %v3731, %v3727
        %v3776 = vpack.c.b16 %v3736, %v3732
        %v3777 = vpack.c.b16 %v3737, %v3733
        %v3778 = vpack.c.b16 %v3738, %v3734
        %v3779 = vpack.c.b16 %v3739, %v3735
        %v3780 = vpack.c.b16 %v3744, %v3740
        %v3781 = vpack.c.b16 %v3745, %v3741
        %v3782 = vpack.c.b16 %v3746, %v3742
        %v3783 = vpack.c.b16 %v3747, %v3743
        %v3784 = vpack.c.b16 %v3752, %v3748
        %v3785 = vpack.c.b16 %v3753, %v3749
        %v3786 = vpack.c.b16 %v3754, %v3750
        %v3787 = vpack.c.b16 %v3755, %v3751
        %3820 = vmatprep.subr.bf16.mxu0 %v3757
        %3821 = vmatpush1.bf16.msra.mxu0 %v3756
        %3822 = vmatprep.subr.bf16.mxu0 %v3761
        %3823 = vmatpush1.bf16.msra.mxu0 %v3760
        %3824 = vmatprep.subr.bf16.mxu0 %v3765
        %3825 = vmatpush1.bf16.msra.mxu0 %v3764
        %3826 = vmatprep.subr.bf16.mxu0 %v3769
        %3827 = vmatpush1.bf16.msra.mxu0 %v3768
        %3828 = vmatprep.subr.bf16.mxu0 %v3773
        %3829 = vmatpush1.bf16.msra.mxu0 %v3772
        %3830 = vmatprep.subr.bf16.mxu0 %v3777
        %3831 = vmatpush1.bf16.msra.mxu0 %v3776
        %3832 = vmatprep.subr.bf16.mxu0 %v3781
        %3833 = vmatpush1.bf16.msra.mxu0 %v3780
        %3834 = vmatprep.subr.bf16.mxu0 %v3785
        %3835 = vmatpush1.bf16.msra.mxu0 %v3784
        %3836 = vmatprep.subr.bf16.mxu0 0
        %3837 = vmatpush1.bf16.msra.mxu0 0
        %3838 = vmatprep.subr.bf16.mxu0 0
        %3839 = vmatpush1.bf16.msra.mxu0 0
        %3840 = vmatprep.subr.bf16.mxu0 0
        %3841 = vmatpush1.bf16.msra.mxu0 0
        %3842 = vmatprep.subr.bf16.mxu0 0
        %3843 = vmatpush1.bf16.msra.mxu0 0
        %3844 = vmatprep.subr.bf16.mxu0 0
        %3845 = vmatpush1.bf16.msra.mxu0 0
        %3846 = vmatprep.subr.bf16.mxu0 0
        %3847 = vmatpush1.bf16.msra.mxu0 0
        %3848 = vmatprep.subr.bf16.mxu0 0
        %3849 = vmatpush1.bf16.msra.mxu0 0
        %3850 = vmatprep.subr.bf16.mxu0 0
        %3851 = vmatpush1.bf16.msra.mxu0 0
        %3852 = vmatprep.mubr.bf16.mxu0 0
        %3853 = vmatmul.mubr.bf16.gmra.mrb[0].mxu0 %v1347
        %v3854 = vpop.f32.mrb[0].mxu0
        %v3855 = vadd.f32 0.0, %v3854
        %v3856 = vpop.f32.mrb[0].mxu0
        %v3857 = vadd.f32 0.0, %v3856
        %v3858 = vpop.f32.mrb[0].mxu0
        %v3859 = vadd.f32 0.0, %v3858
        %v3860 = vpop.f32.mrb[0].mxu0
        %v3861 = vadd.f32 0.0, %v3860
        %3862 = vdwg.mxu0
        %3863 = vmatprep.subr.bf16.mxu0 %v3759
        %3864 = vmatpush1.bf16.msra.mxu0 %v3758
        %3865 = vmatprep.subr.bf16.mxu0 %v3763
        %3866 = vmatpush1.bf16.msra.mxu0 %v3762
        %3867 = vmatprep.subr.bf16.mxu0 %v3767
        %3868 = vmatpush1.bf16.msra.mxu0 %v3766
        %3869 = vmatprep.subr.bf16.mxu0 %v3771
        %3870 = vmatpush1.bf16.msra.mxu0 %v3770
        %3871 = vmatprep.subr.bf16.mxu0 %v3775
        %3872 = vmatpush1.bf16.msra.mxu0 %v3774
        %3873 = vmatprep.subr.bf16.mxu0 %v3779
        %3874 = vmatpush1.bf16.msra.mxu0 %v3778
        %3875 = vmatprep.subr.bf16.mxu0 %v3783
        %3876 = vmatpush1.bf16.msra.mxu0 %v3782
        %3877 = vmatprep.subr.bf16.mxu0 %v3787
        %3878 = vmatpush1.bf16.msra.mxu0 %v3786
        %3879 = vmatprep.subr.bf16.mxu0 0
        %3880 = vmatpush1.bf16.msra.mxu0 0
        %3881 = vmatprep.subr.bf16.mxu0 0
        %3882 = vmatpush1.bf16.msra.mxu0 0
        %3883 = vmatprep.subr.bf16.mxu0 0
        %3884 = vmatpush1.bf16.msra.mxu0 0
        %3885 = vmatprep.subr.bf16.mxu0 0
        %3886 = vmatpush1.bf16.msra.mxu0 0
        %3887 = vmatprep.subr.bf16.mxu0 0
        %3888 = vmatpush1.bf16.msra.mxu0 0
        %3889 = vmatprep.subr.bf16.mxu0 0
        %3890 = vmatpush1.bf16.msra.mxu0 0
        %3891 = vmatprep.subr.bf16.mxu0 0
        %3892 = vmatpush1.bf16.msra.mxu0 0
        %3893 = vmatprep.subr.bf16.mxu0 0
        %3894 = vmatpush1.bf16.msra.mxu0 0
        %3895 = vmatprep.mubr.bf16.mxu0 0
        %3896 = vmatmul.mubr.bf16.gmra.mrb[0].mxu0 %v1347
        %v3897 = vpop.f32.mrb[0].mxu0
        %v3898 = vadd.f32 0.0, %v3897
        %v3899 = vpop.f32.mrb[0].mxu0
        %v3900 = vadd.f32 0.0, %v3899
        %v3901 = vpop.f32.mrb[0].mxu0
        %v3902 = vadd.f32 0.0, %v3901
        %v3903 = vpop.f32.mrb[0].mxu0
        %v3904 = vadd.f32 0.0, %v3903
        %3905 = vdwg.mxu0
        %v3906 = vadd.f32 %v3619, %v3855
        %v3907 = vadd.f32 %v3620, %v3857
        %v3908 = vadd.f32 %v3621, %v3898
        %v3909 = vadd.f32 %v3622, %v3900
        %v3910 = vadd.f32 %v3623, %v3859
        %v3911 = vadd.f32 %v3624, %v3861
        %v3912 = vadd.f32 %v3625, %v3902
        %v3913 = vadd.f32 %v3626, %v3904
        %v3914 = vld [vmem:[#allocation8] sm:$0xff]
        %v3915 = vld [vmem:[#allocation8 + $0x8] sm:$0xff]
        %v3916 = vld [vmem:[#allocation8 + $0x10] sm:$0xff]
        %v3917 = vld [vmem:[#allocation8 + $0x18] sm:$0xff]
        %v3918 = vld [vmem:[#allocation8 + $0x20] sm:$0xff]
        %v3919 = vld [vmem:[#allocation8 + $0x28] sm:$0xff]
        %v3920 = vld [vmem:[#allocation8 + $0x30] sm:$0xff]
        %v3921 = vld [vmem:[#allocation8 + $0x38] sm:$0xff]
        %v3922 = vadd.f32 %v3906, %v3914
        %v3923 = vadd.f32 %v3907, %v3915
        %v3924 = vadd.f32 %v3908, %v3916
        %v3925 = vadd.f32 %v3909, %v3917
        %v3926 = vadd.f32 %v3910, %v3918
        %v3927 = vadd.f32 %v3911, %v3919
        %v3928 = vadd.f32 %v3912, %v3920
        %v3929 = vadd.f32 %v3913, %v3921
        %v3930 = vmul.f32 %v3922, 0.5
        %v3931 = vmul.f32 %v3923, 0.5
        %v3932 = vmul.f32 %v3924, 0.5
        %v3933 = vmul.f32 %v3925, 0.5
        %v3934 = vmul.f32 %v3926, 0.5
        %v3935 = vmul.f32 %v3927, 0.5
        %v3936 = vmul.f32 %v3928, 0.5
        %v3937 = vmul.f32 %v3929, 0.5
        %v3938 = vmul.f32 %v3922, 0.70710677
        %v3939 = vmul.f32 %v3923, 0.70710677
        %v3940 = vmul.f32 %v3924, 0.70710677
        %v3941 = vmul.f32 %v3925, 0.70710677
        %v3942 = vmul.f32 %v3926, 0.70710677
        %v3943 = vmul.f32 %v3927, 0.70710677
        %v3944 = vmul.f32 %v3928, 0.70710677
        %v3945 = vmul.f32 %v3929, 0.70710677
        %vm3946 = vcmp.ge.f32.partialorder %v3938, 0.0
        %vm3947 = vcmp.ge.f32.partialorder %v3939, 0.0
        %vm3948 = vcmp.ge.f32.partialorder %v3940, 0.0
        %vm3949 = vcmp.ge.f32.partialorder %v3941, 0.0
        %vm3950 = vcmp.ge.f32.partialorder %v3942, 0.0
        %vm3951 = vcmp.ge.f32.partialorder %v3943, 0.0
        %vm3952 = vcmp.ge.f32.partialorder %v3944, 0.0
        %vm3953 = vcmp.ge.f32.partialorder %v3945, 0.0
        %v3954 = vsel %vm3946, 1.0, -1.0
        %v3955 = vsel %vm3947, 1.0, -1.0
        %v3956 = vsel %vm3948, 1.0, -1.0
        %v3957 = vsel %vm3949, 1.0, -1.0
        %v3958 = vsel %vm3950, 1.0, -1.0
        %v3959 = vsel %vm3951, 1.0, -1.0
        %v3960 = vsel %vm3952, 1.0, -1.0
        %v3961 = vsel %vm3953, 1.0, -1.0
        %v3962 = vand.u32 2147483647, %v3938
        %v3963 = vand.u32 2147483647, %v3939
        %v3964 = vand.u32 2147483647, %v3940
        %v3965 = vand.u32 2147483647, %v3941
        %v3966 = vand.u32 2147483647, %v3942
        %v3967 = vand.u32 2147483647, %v3943
        %v3968 = vand.u32 2147483647, %v3944
        %v3969 = vand.u32 2147483647, %v3945
        %v3970 = vmul.f32 %v3962, 0.3275911
        %v3971 = vmul.f32 %v3963, 0.3275911
        %v3972 = vmul.f32 %v3964, 0.3275911
        %v3973 = vmul.f32 %v3965, 0.3275911
        %v3974 = vmul.f32 %v3966, 0.3275911
        %v3975 = vmul.f32 %v3967, 0.3275911
        %v3976 = vmul.f32 %v3968, 0.3275911
        %v3977 = vmul.f32 %v3969, 0.3275911
        %v3978 = vadd.f32 %v3970, 1.0
        %v3979 = vadd.f32 %v3971, 1.0
        %v3980 = vadd.f32 %v3972, 1.0
        %v3981 = vadd.f32 %v3973, 1.0
        %v3982 = vadd.f32 %v3974, 1.0
        %v3983 = vadd.f32 %v3975, 1.0
        %v3984 = vadd.f32 %v3976, 1.0
        %v3985 = vadd.f32 %v3977, 1.0
        %v3986 = vrcp.pop %v3978
        %v3987 = vrcp.pop %v3979
        %v3988 = vrcp.pop %v3980
        %v3989 = vrcp.pop %v3981
        %v3990 = vrcp.pop %v3982
        %v3991 = vrcp.pop %v3983
        %v3992 = vrcp.pop %v3984
        %v3993 = vrcp.pop %v3985
        %v3994 = vmul.f32 %v3986, 1.0614054
        %v3995 = vmul.f32 %v3987, 1.0614054
        %v3996 = vmul.f32 %v3988, 1.0614054
        %v3997 = vmul.f32 %v3989, 1.0614054
        %v3998 = vmul.f32 %v3990, 1.0614054
        %v3999 = vmul.f32 %v3991, 1.0614054
        %v4000 = vmul.f32 %v3992, 1.0614054
        %v4001 = vmul.f32 %v3993, 1.0614054
        %v4002 = vadd.f32 %v3994, -1.4531521
        %v4003 = vadd.f32 %v3995, -1.4531521
        %v4004 = vadd.f32 %v3996, -1.4531521
        %v4005 = vadd.f32 %v3997, -1.4531521
        %v4006 = vadd.f32 %v3998, -1.4531521
        %v4007 = vadd.f32 %v3999, -1.4531521
        %v4008 = vadd.f32 %v4000, -1.4531521
        %v4009 = vadd.f32 %v4001, -1.4531521
        %v4010 = vmul.f32 %v4002, %v3986
        %v4011 = vmul.f32 %v4003, %v3987
        %v4012 = vmul.f32 %v4004, %v3988
        %v4013 = vmul.f32 %v4005, %v3989
        %v4014 = vmul.f32 %v4006, %v3990
        %v4015 = vmul.f32 %v4007, %v3991
        %v4016 = vmul.f32 %v4008, %v3992
        %v4017 = vmul.f32 %v4009, %v3993
        %v4018 = vadd.f32 %v4010, 1.4214138
        %v4019 = vadd.f32 %v4011, 1.4214138
        %v4020 = vadd.f32 %v4012, 1.4214138
        %v4021 = vadd.f32 %v4013, 1.4214138
        %v4022 = vadd.f32 %v4014, 1.4214138
        %v4023 = vadd.f32 %v4015, 1.4214138
        %v4024 = vadd.f32 %v4016, 1.4214138
        %v4025 = vadd.f32 %v4017, 1.4214138
        %v4026 = vmul.f32 %v4018, %v3986
        %v4027 = vmul.f32 %v4019, %v3987
        %v4028 = vmul.f32 %v4020, %v3988
        %v4029 = vmul.f32 %v4021, %v3989
        %v4030 = vmul.f32 %v4022, %v3990
        %v4031 = vmul.f32 %v4023, %v3991
        %v4032 = vmul.f32 %v4024, %v3992
        %v4033 = vmul.f32 %v4025, %v3993
        %v4034 = vadd.f32 %v4026, -0.28449672
        %v4035 = vadd.f32 %v4027, -0.28449672
        %v4036 = vadd.f32 %v4028, -0.28449672
        %v4037 = vadd.f32 %v4029, -0.28449672
        %v4038 = vadd.f32 %v4030, -0.28449672
        %v4039 = vadd.f32 %v4031, -0.28449672
        %v4040 = vadd.f32 %v4032, -0.28449672
        %v4041 = vadd.f32 %v4033, -0.28449672
        %v4042 = vmul.f32 %v4034, %v3986
        %v4043 = vmul.f32 %v4035, %v3987
        %v4044 = vmul.f32 %v4036, %v3988
        %v4045 = vmul.f32 %v4037, %v3989
        %v4046 = vmul.f32 %v4038, %v3990
        %v4047 = vmul.f32 %v4039, %v3991
        %v4048 = vmul.f32 %v4040, %v3992
        %v4049 = vmul.f32 %v4041, %v3993
        %v4050 = vadd.f32 %v4042, 0.2548296
        %v4051 = vadd.f32 %v4043, 0.2548296
        %v4052 = vadd.f32 %v4044, 0.2548296
        %v4053 = vadd.f32 %v4045, 0.2548296
        %v4054 = vadd.f32 %v4046, 0.2548296
        %v4055 = vadd.f32 %v4047, 0.2548296
        %v4056 = vadd.f32 %v4048, 0.2548296
        %v4057 = vadd.f32 %v4049, 0.2548296
        %v4058 = vmul.f32 %v4050, %v3986
        %v4059 = vmul.f32 %v4051, %v3987
        %v4060 = vmul.f32 %v4052, %v3988
        %v4061 = vmul.f32 %v4053, %v3989
        %v4062 = vmul.f32 %v4054, %v3990
        %v4063 = vmul.f32 %v4055, %v3991
        %v4064 = vmul.f32 %v4056, %v3992
        %v4065 = vmul.f32 %v4057, %v3993
        %v4066 = vsub.f32 0.0, %v3962
        %v4067 = vsub.f32 0.0, %v3963
        %v4068 = vsub.f32 0.0, %v3964
        %v4069 = vsub.f32 0.0, %v3965
        %v4070 = vsub.f32 0.0, %v3966
        %v4071 = vsub.f32 0.0, %v3967
        %v4072 = vsub.f32 0.0, %v3968
        %v4073 = vsub.f32 0.0, %v3969
        %v4074 = vmul.f32 %v4066, %v3962
        %v4075 = vmul.f32 %v4067, %v3963
        %v4076 = vmul.f32 %v4068, %v3964
        %v4077 = vmul.f32 %v4069, %v3965
        %v4078 = vmul.f32 %v4070, %v3966
        %v4079 = vmul.f32 %v4071, %v3967
        %v4080 = vmul.f32 %v4072, %v3968
        %v4081 = vmul.f32 %v4073, %v3969
        %v4082 = vmul.f32 %v4074, 1.442695
        %v4083 = vpow.pop %v4082
        %v4084 = vmul.f32 %v4075, 1.442695
        %v4085 = vpow.pop %v4084
        %v4086 = vmul.f32 %v4076, 1.442695
        %v4087 = vpow.pop %v4086
        %v4088 = vmul.f32 %v4077, 1.442695
        %v4089 = vpow.pop %v4088
        %v4090 = vmul.f32 %v4078, 1.442695
        %v4091 = vpow.pop %v4090
        %v4092 = vmul.f32 %v4079, 1.442695
        %v4093 = vpow.pop %v4092
        %v4094 = vmul.f32 %v4080, 1.442695
        %v4095 = vpow.pop %v4094
        %v4096 = vmul.f32 %v4081, 1.442695
        %v4097 = vpow.pop %v4096
        %v4098 = vmul.f32 %v4058, %v4083
        %v4099 = vmul.f32 %v4059, %v4085
        %v4100 = vmul.f32 %v4060, %v4087
        %v4101 = vmul.f32 %v4061, %v4089
        %v4102 = vmul.f32 %v4062, %v4091
        %v4103 = vmul.f32 %v4063, %v4093
        %v4104 = vmul.f32 %v4064, %v4095
        %v4105 = vmul.f32 %v4065, %v4097
        %v4106 = vsub.f32 1.0, %v4098
        %v4107 = vsub.f32 1.0, %v4099
        %v4108 = vsub.f32 1.0, %v4100
        %v4109 = vsub.f32 1.0, %v4101
        %v4110 = vsub.f32 1.0, %v4102
        %v4111 = vsub.f32 1.0, %v4103
        %v4112 = vsub.f32 1.0, %v4104
        %v4113 = vsub.f32 1.0, %v4105
        %v4114 = vmul.f32 %v3954, %v4106
        %v4115 = vmul.f32 %v3955, %v4107
        %v4116 = vmul.f32 %v3956, %v4108
        %v4117 = vmul.f32 %v3957, %v4109
        %v4118 = vmul.f32 %v3958, %v4110
        %v4119 = vmul.f32 %v3959, %v4111
        %v4120 = vmul.f32 %v3960, %v4112
        %v4121 = vmul.f32 %v3961, %v4113
        %v4122 = vadd.f32 %v4114, 1.0
        %v4123 = vadd.f32 %v4115, 1.0
        %v4124 = vadd.f32 %v4116, 1.0
        %v4125 = vadd.f32 %v4117, 1.0
        %v4126 = vadd.f32 %v4118, 1.0
        %v4127 = vadd.f32 %v4119, 1.0
        %v4128 = vadd.f32 %v4120, 1.0
        %v4129 = vadd.f32 %v4121, 1.0
        %v4130 = vmul.f32 %v3930, %v4122
        %v4131 = vmul.f32 %v3931, %v4123
        %v4132 = vmul.f32 %v3932, %v4124
        %v4133 = vmul.f32 %v3933, %v4125
        %v4134 = vmul.f32 %v3934, %v4126
        %v4135 = vmul.f32 %v3935, %v4127
        %v4136 = vmul.f32 %v3936, %v4128
        %v4137 = vmul.f32 %v3937, %v4129
        %v4138 = vadd.f32 %v4130, %v4134
        %v4139 = vrot.slane %v4138, 4
        %v4140 = vadd.f32 %v4138, %v4139
        %v4141 = vrot.slane %v4140, 2
        %v4142 = vadd.f32 %v4140, %v4141
        %v4143 = vrot.slane %v4142, 1
        %v4144 = vadd.f32 %v4142, %v4143
        %v4145 = vadd.f32 %v4131, %v4135
        %v4146 = vrot.slane %v4145, 4
        %v4147 = vadd.f32 %v4145, %v4146
        %v4148 = vrot.slane %v4147, 2
        %v4149 = vadd.f32 %v4147, %v4148
        %v4150 = vrot.slane %v4149, 1
        %v4151 = vadd.f32 %v4149, %v4150
        %v4152 = vadd.f32 %v4132, %v4136
        %v4153 = vrot.slane %v4152, 4
        %v4154 = vadd.f32 %v4152, %v4153
        %v4155 = vrot.slane %v4154, 2
        %v4156 = vadd.f32 %v4154, %v4155
        %v4157 = vrot.slane %v4156, 1
        %v4158 = vadd.f32 %v4156, %v4157
        %v4159 = vadd.f32 %v4133, %v4137
        %v4160 = vrot.slane %v4159, 4
        %v4161 = vadd.f32 %v4159, %v4160
        %v4162 = vrot.slane %v4161, 2
        %v4163 = vadd.f32 %v4161, %v4162
        %v4164 = vrot.slane %v4163, 1
        %v4165 = vadd.f32 %v4163, %v4164
        %v4166 = vrcp.pop 16.0
        %v4167 = vmul.f32 %v4144, %v4166
        %v4168 = vmul.f32 %v4151, %v4166
        %v4169 = vmul.f32 %v4158, %v4166
        %v4170 = vmul.f32 %v4165, %v4166
        %v4171 = vpack.c.bf16 %v4167, %v4167
        %v4172 = vpack.c.bf16 %v4168, %v4168
        %v4173 = vpack.c.bf16 %v4169, %v4169
        %v4174 = vpack.c.bf16 %v4170, %v4170
        %v4175 = vld [vmem:[#allocation10] sm:$0xff]
        %v4176 = vld [vmem:[#allocation10 + $0x8] sm:$0xff]
        %v4177 = vld [vmem:[#allocation10 + $0x10] sm:$0xff]
        %v4178 = vld [vmem:[#allocation10 + $0x18] sm:$0xff]
        %v4179 = vld [vmem:[#allocation10 + $0x20] sm:$0xff]
        %v4180 = vld [vmem:[#allocation10 + $0x28] sm:$0xff]
        %v4181 = vld [vmem:[#allocation10 + $0x30] sm:$0xff]
        %v4182 = vld [vmem:[#allocation10 + $0x38] sm:$0xff]
        %v4183 = vld [vmem:[#allocation10 + $0x40] sm:$0xff]
        %v4184 = vld [vmem:[#allocation10 + $0x48] sm:$0xff]
        %v4185 = vld [vmem:[#allocation10 + $0x50] sm:$0xff]
        %v4186 = vld [vmem:[#allocation10 + $0x58] sm:$0xff]
        %v4187 = vld [vmem:[#allocation10 + $0x60] sm:$0xff]
        %v4188 = vld [vmem:[#allocation10 + $0x68] sm:$0xff]
        %v4189 = vld [vmem:[#allocation10 + $0x70] sm:$0xff]
        %v4190 = vld [vmem:[#allocation10 + $0x78] sm:$0xff]
        %v4191 = vld [vmem:[#allocation10 + $0x80] sm:$0xff]
        %v4192 = vld [vmem:[#allocation10 + $0x88] sm:$0xff]
        %v4193 = vld [vmem:[#allocation10 + $0x90] sm:$0xff]
        %v4194 = vld [vmem:[#allocation10 + $0x98] sm:$0xff]
        %v4195 = vld [vmem:[#allocation10 + $0xa0] sm:$0xff]
        %v4196 = vld [vmem:[#allocation10 + $0xa8] sm:$0xff]
        %v4197 = vld [vmem:[#allocation10 + $0xb0] sm:$0xff]
        %v4198 = vld [vmem:[#allocation10 + $0xb8] sm:$0xff]
        %v4199 = vld [vmem:[#allocation10 + $0xc0] sm:$0xff]
        %v4200 = vld [vmem:[#allocation10 + $0xc8] sm:$0xff]
        %v4201 = vld [vmem:[#allocation10 + $0xd0] sm:$0xff]
        %v4202 = vld [vmem:[#allocation10 + $0xd8] sm:$0xff]
        %v4203 = vld [vmem:[#allocation10 + $0xe0] sm:$0xff]
        %v4204 = vld [vmem:[#allocation10 + $0xe8] sm:$0xff]
        %v4205 = vld [vmem:[#allocation10 + $0xf0] sm:$0xff]
        %v4206 = vld [vmem:[#allocation10 + $0xf8] sm:$0xff]
        %v4207 = vld [vmem:[#allocation10 + $0x100] sm:$0xff]
        %v4208 = vld [vmem:[#allocation10 + $0x108] sm:$0xff]
        %v4209 = vld [vmem:[#allocation10 + $0x110] sm:$0xff]
        %v4210 = vld [vmem:[#allocation10 + $0x118] sm:$0xff]
        %v4211 = vld [vmem:[#allocation10 + $0x120] sm:$0xff]
        %v4212 = vld [vmem:[#allocation10 + $0x128] sm:$0xff]
        %v4213 = vld [vmem:[#allocation10 + $0x130] sm:$0xff]
        %v4214 = vld [vmem:[#allocation10 + $0x138] sm:$0xff]
        %v4215 = vld [vmem:[#allocation10 + $0x140] sm:$0xff]
        %v4216 = vld [vmem:[#allocation10 + $0x148] sm:$0xff]
        %v4217 = vld [vmem:[#allocation10 + $0x150] sm:$0xff]
        %v4218 = vld [vmem:[#allocation10 + $0x158] sm:$0xff]
        %v4219 = vld [vmem:[#allocation10 + $0x160] sm:$0xff]
        %v4220 = vld [vmem:[#allocation10 + $0x168] sm:$0xff]
        %v4221 = vld [vmem:[#allocation10 + $0x170] sm:$0xff]
        %v4222 = vld [vmem:[#allocation10 + $0x178] sm:$0xff]
        %v4223 = vld [vmem:[#allocation10 + $0x180] sm:$0xff]
        %v4224 = vld [vmem:[#allocation10 + $0x188] sm:$0xff]
        %v4225 = vld [vmem:[#allocation10 + $0x190] sm:$0xff]
        %v4226 = vld [vmem:[#allocation10 + $0x198] sm:$0xff]
        %v4227 = vld [vmem:[#allocation10 + $0x1a0] sm:$0xff]
        %v4228 = vld [vmem:[#allocation10 + $0x1a8] sm:$0xff]
        %v4229 = vld [vmem:[#allocation10 + $0x1b0] sm:$0xff]
        %v4230 = vld [vmem:[#allocation10 + $0x1b8] sm:$0xff]
        %v4231 = vld [vmem:[#allocation10 + $0x1c0] sm:$0xff]
        %v4232 = vld [vmem:[#allocation10 + $0x1c8] sm:$0xff]
        %v4233 = vld [vmem:[#allocation10 + $0x1d0] sm:$0xff]
        %v4234 = vld [vmem:[#allocation10 + $0x1d8] sm:$0xff]
        %v4235 = vld [vmem:[#allocation10 + $0x1e0] sm:$0xff]
        %v4236 = vld [vmem:[#allocation10 + $0x1e8] sm:$0xff]
        %v4237 = vld [vmem:[#allocation10 + $0x1f0] sm:$0xff]
        %v4238 = vld [vmem:[#allocation10 + $0x1f8] sm:$0xff]
        %v4239 = vld [vmem:[#allocation10 + $0x200] sm:$0xff]
        %v4240 = vld [vmem:[#allocation10 + $0x208] sm:$0xff]
        %v4241 = vld [vmem:[#allocation10 + $0x210] sm:$0xff]
        %v4242 = vld [vmem:[#allocation10 + $0x218] sm:$0xff]
        %v4243 = vld [vmem:[#allocation10 + $0x220] sm:$0xff]
        %v4244 = vld [vmem:[#allocation10 + $0x228] sm:$0xff]
        %v4245 = vld [vmem:[#allocation10 + $0x230] sm:$0xff]
        %v4246 = vld [vmem:[#allocation10 + $0x238] sm:$0xff]
        %v4247 = vld [vmem:[#allocation10 + $0x240] sm:$0xff]
        %v4248 = vld [vmem:[#allocation10 + $0x248] sm:$0xff]
        %v4249 = vld [vmem:[#allocation10 + $0x250] sm:$0xff]
        %v4250 = vld [vmem:[#allocation10 + $0x258] sm:$0xff]
        %v4251 = vld [vmem:[#allocation10 + $0x260] sm:$0xff]
        %v4252 = vld [vmem:[#allocation10 + $0x268] sm:$0xff]
        %v4253 = vld [vmem:[#allocation10 + $0x270] sm:$0xff]
        %v4254 = vld [vmem:[#allocation10 + $0x278] sm:$0xff]
        %v4255 = vld [vmem:[#allocation10 + $0x280] sm:$0xff]
        %v4256 = vld [vmem:[#allocation10 + $0x288] sm:$0xff]
        %v4257 = vld [vmem:[#allocation10 + $0x290] sm:$0xff]
        %v4258 = vld [vmem:[#allocation10 + $0x298] sm:$0xff]
        %v4259 = vld [vmem:[#allocation10 + $0x2a0] sm:$0xff]
        %v4260 = vld [vmem:[#allocation10 + $0x2a8] sm:$0xff]
        %v4261 = vld [vmem:[#allocation10 + $0x2b0] sm:$0xff]
        %v4262 = vld [vmem:[#allocation10 + $0x2b8] sm:$0xff]
        %v4263 = vld [vmem:[#allocation10 + $0x2c0] sm:$0xff]
        %v4264 = vld [vmem:[#allocation10 + $0x2c8] sm:$0xff]
        %v4265 = vld [vmem:[#allocation10 + $0x2d0] sm:$0xff]
        %v4266 = vld [vmem:[#allocation10 + $0x2d8] sm:$0xff]
        %v4267 = vld [vmem:[#allocation10 + $0x2e0] sm:$0xff]
        %v4268 = vld [vmem:[#allocation10 + $0x2e8] sm:$0xff]
        %v4269 = vld [vmem:[#allocation10 + $0x2f0] sm:$0xff]
        %v4270 = vld [vmem:[#allocation10 + $0x2f8] sm:$0xff]
        %v4271 = vld [vmem:[#allocation10 + $0x300] sm:$0xff]
        %v4272 = vld [vmem:[#allocation10 + $0x308] sm:$0xff]
        %v4273 = vld [vmem:[#allocation10 + $0x310] sm:$0xff]
        %v4274 = vld [vmem:[#allocation10 + $0x318] sm:$0xff]
        %v4275 = vld [vmem:[#allocation10 + $0x320] sm:$0xff]
        %v4276 = vld [vmem:[#allocation10 + $0x328] sm:$0xff]
        %v4277 = vld [vmem:[#allocation10 + $0x330] sm:$0xff]
        %v4278 = vld [vmem:[#allocation10 + $0x338] sm:$0xff]
        %v4279 = vld [vmem:[#allocation10 + $0x340] sm:$0xff]
        %v4280 = vld [vmem:[#allocation10 + $0x348] sm:$0xff]
        %v4281 = vld [vmem:[#allocation10 + $0x350] sm:$0xff]
        %v4282 = vld [vmem:[#allocation10 + $0x358] sm:$0xff]
        %v4283 = vld [vmem:[#allocation10 + $0x360] sm:$0xff]
        %v4284 = vld [vmem:[#allocation10 + $0x368] sm:$0xff]
        %v4285 = vld [vmem:[#allocation10 + $0x370] sm:$0xff]
        %v4286 = vld [vmem:[#allocation10 + $0x378] sm:$0xff]
        %v4287 = vld [vmem:[#allocation10 + $0x380] sm:$0xff]
        %v4288 = vld [vmem:[#allocation10 + $0x388] sm:$0xff]
        %v4289 = vld [vmem:[#allocation10 + $0x390] sm:$0xff]
        %v4290 = vld [vmem:[#allocation10 + $0x398] sm:$0xff]
        %v4291 = vld [vmem:[#allocation10 + $0x3a0] sm:$0xff]
        %v4292 = vld [vmem:[#allocation10 + $0x3a8] sm:$0xff]
        %v4293 = vld [vmem:[#allocation10 + $0x3b0] sm:$0xff]
        %v4294 = vld [vmem:[#allocation10 + $0x3b8] sm:$0xff]
        %v4295 = vld [vmem:[#allocation10 + $0x3c0] sm:$0xff]
        %v4296 = vld [vmem:[#allocation10 + $0x3c8] sm:$0xff]
        %v4297 = vld [vmem:[#allocation10 + $0x3d0] sm:$0xff]
        %v4298 = vld [vmem:[#allocation10 + $0x3d8] sm:$0xff]
        %v4299 = vld [vmem:[#allocation10 + $0x3e0] sm:$0xff]
        %v4300 = vld [vmem:[#allocation10 + $0x3e8] sm:$0xff]
        %v4301 = vld [vmem:[#allocation10 + $0x3f0] sm:$0xff]
        %v4302 = vld [vmem:[#allocation10 + $0x3f8] sm:$0xff]
        %v4303 = vld [vmem:[#allocation10 + $0x400] sm:$0xff]
        %v4304 = vld [vmem:[#allocation10 + $0x408] sm:$0xff]
        %v4305 = vld [vmem:[#allocation10 + $0x410] sm:$0xff]
        %v4306 = vld [vmem:[#allocation10 + $0x418] sm:$0xff]
        %v4307 = vld [vmem:[#allocation10 + $0x420] sm:$0xff]
        %v4308 = vld [vmem:[#allocation10 + $0x428] sm:$0xff]
        %v4309 = vld [vmem:[#allocation10 + $0x430] sm:$0xff]
        %v4310 = vld [vmem:[#allocation10 + $0x438] sm:$0xff]
        %v4311 = vld [vmem:[#allocation10 + $0x440] sm:$0xff]
        %v4312 = vld [vmem:[#allocation10 + $0x448] sm:$0xff]
        %v4313 = vld [vmem:[#allocation10 + $0x450] sm:$0xff]
        %v4314 = vld [vmem:[#allocation10 + $0x458] sm:$0xff]
        %v4315 = vld [vmem:[#allocation10 + $0x460] sm:$0xff]
        %v4316 = vld [vmem:[#allocation10 + $0x468] sm:$0xff]
        %v4317 = vld [vmem:[#allocation10 + $0x470] sm:$0xff]
        %v4318 = vld [vmem:[#allocation10 + $0x478] sm:$0xff]
        %v4319 = vld [vmem:[#allocation10 + $0x480] sm:$0xff]
        %v4320 = vld [vmem:[#allocation10 + $0x488] sm:$0xff]
        %v4321 = vld [vmem:[#allocation10 + $0x490] sm:$0xff]
        %v4322 = vld [vmem:[#allocation10 + $0x498] sm:$0xff]
        %v4323 = vld [vmem:[#allocation10 + $0x4a0] sm:$0xff]
        %v4324 = vld [vmem:[#allocation10 + $0x4a8] sm:$0xff]
        %v4325 = vld [vmem:[#allocation10 + $0x4b0] sm:$0xff]
        %v4326 = vld [vmem:[#allocation10 + $0x4b8] sm:$0xff]
        %v4327 = vld [vmem:[#allocation10 + $0x4c0] sm:$0xff]
        %v4328 = vld [vmem:[#allocation10 + $0x4c8] sm:$0xff]
        %v4329 = vld [vmem:[#allocation10 + $0x4d0] sm:$0xff]
        %v4330 = vld [vmem:[#allocation10 + $0x4d8] sm:$0xff]
        %v4331 = vld [vmem:[#allocation10 + $0x4e0] sm:$0xff]
        %v4332 = vld [vmem:[#allocation10 + $0x4e8] sm:$0xff]
        %v4333 = vld [vmem:[#allocation10 + $0x4f0] sm:$0xff]
        %v4334 = vld [vmem:[#allocation10 + $0x4f8] sm:$0xff]
        %v4335 = vld [vmem:[#allocation10 + $0x500] sm:$0xff]
        %v4336 = vld [vmem:[#allocation10 + $0x508] sm:$0xff]
        %v4337 = vld [vmem:[#allocation10 + $0x510] sm:$0xff]
        %v4338 = vld [vmem:[#allocation10 + $0x518] sm:$0xff]
        %v4339 = vld [vmem:[#allocation10 + $0x520] sm:$0xff]
        %v4340 = vld [vmem:[#allocation10 + $0x528] sm:$0xff]
        %v4341 = vld [vmem:[#allocation10 + $0x530] sm:$0xff]
        %v4342 = vld [vmem:[#allocation10 + $0x538] sm:$0xff]
        %v4343 = vld [vmem:[#allocation10 + $0x540] sm:$0xff]
        %v4344 = vld [vmem:[#allocation10 + $0x548] sm:$0xff]
        %v4345 = vld [vmem:[#allocation10 + $0x550] sm:$0xff]
        %v4346 = vld [vmem:[#allocation10 + $0x558] sm:$0xff]
        %v4347 = vld [vmem:[#allocation10 + $0x560] sm:$0xff]
        %v4348 = vld [vmem:[#allocation10 + $0x568] sm:$0xff]
        %v4349 = vld [vmem:[#allocation10 + $0x570] sm:$0xff]
        %v4350 = vld [vmem:[#allocation10 + $0x578] sm:$0xff]
        %v4351 = vld [vmem:[#allocation10 + $0x580] sm:$0xff]
        %v4352 = vld [vmem:[#allocation10 + $0x588] sm:$0xff]
        %v4353 = vld [vmem:[#allocation10 + $0x590] sm:$0xff]
        %v4354 = vld [vmem:[#allocation10 + $0x598] sm:$0xff]
        %v4355 = vld [vmem:[#allocation10 + $0x5a0] sm:$0xff]
        %v4356 = vld [vmem:[#allocation10 + $0x5a8] sm:$0xff]
        %v4357 = vld [vmem:[#allocation10 + $0x5b0] sm:$0xff]
        %v4358 = vld [vmem:[#allocation10 + $0x5b8] sm:$0xff]
        %v4359 = vld [vmem:[#allocation10 + $0x5c0] sm:$0xff]
        %v4360 = vld [vmem:[#allocation10 + $0x5c8] sm:$0xff]
        %v4361 = vld [vmem:[#allocation10 + $0x5d0] sm:$0xff]
        %v4362 = vld [vmem:[#allocation10 + $0x5d8] sm:$0xff]
        %v4363 = vld [vmem:[#allocation10 + $0x5e0] sm:$0xff]
        %v4364 = vld [vmem:[#allocation10 + $0x5e8] sm:$0xff]
        %v4365 = vld [vmem:[#allocation10 + $0x5f0] sm:$0xff]
        %v4366 = vld [vmem:[#allocation10 + $0x5f8] sm:$0xff]
        %v4367 = vld [vmem:[#allocation10 + $0x600] sm:$0xff]
        %v4368 = vld [vmem:[#allocation10 + $0x608] sm:$0xff]
        %v4369 = vld [vmem:[#allocation10 + $0x610] sm:$0xff]
        %v4370 = vld [vmem:[#allocation10 + $0x618] sm:$0xff]
        %v4371 = vld [vmem:[#allocation10 + $0x620] sm:$0xff]
        %v4372 = vld [vmem:[#allocation10 + $0x628] sm:$0xff]
        %v4373 = vld [vmem:[#allocation10 + $0x630] sm:$0xff]
        %v4374 = vld [vmem:[#allocation10 + $0x638] sm:$0xff]
        %v4375 = vld [vmem:[#allocation10 + $0x640] sm:$0xff]
        %v4376 = vld [vmem:[#allocation10 + $0x648] sm:$0xff]
        %v4377 = vld [vmem:[#allocation10 + $0x650] sm:$0xff]
        %v4378 = vld [vmem:[#allocation10 + $0x658] sm:$0xff]
        %v4379 = vld [vmem:[#allocation10 + $0x660] sm:$0xff]
        %v4380 = vld [vmem:[#allocation10 + $0x668] sm:$0xff]
        %v4381 = vld [vmem:[#allocation10 + $0x670] sm:$0xff]
        %v4382 = vld [vmem:[#allocation10 + $0x678] sm:$0xff]
        %v4383 = vld [vmem:[#allocation10 + $0x680] sm:$0xff]
        %v4384 = vld [vmem:[#allocation10 + $0x688] sm:$0xff]
        %v4385 = vld [vmem:[#allocation10 + $0x690] sm:$0xff]
        %v4386 = vld [vmem:[#allocation10 + $0x698] sm:$0xff]
        %v4387 = vld [vmem:[#allocation10 + $0x6a0] sm:$0xff]
        %v4388 = vld [vmem:[#allocation10 + $0x6a8] sm:$0xff]
        %v4389 = vld [vmem:[#allocation10 + $0x6b0] sm:$0xff]
        %v4390 = vld [vmem:[#allocation10 + $0x6b8] sm:$0xff]
        %v4391 = vld [vmem:[#allocation10 + $0x6c0] sm:$0xff]
        %v4392 = vld [vmem:[#allocation10 + $0x6c8] sm:$0xff]
        %v4393 = vld [vmem:[#allocation10 + $0x6d0] sm:$0xff]
        %v4394 = vld [vmem:[#allocation10 + $0x6d8] sm:$0xff]
        %v4395 = vld [vmem:[#allocation10 + $0x6e0] sm:$0xff]
        %v4396 = vld [vmem:[#allocation10 + $0x6e8] sm:$0xff]
        %v4397 = vld [vmem:[#allocation10 + $0x6f0] sm:$0xff]
        %v4398 = vld [vmem:[#allocation10 + $0x6f8] sm:$0xff]
        %v4399 = vld [vmem:[#allocation10 + $0x700] sm:$0xff]
        %v4400 = vld [vmem:[#allocation10 + $0x708] sm:$0xff]
        %v4401 = vld [vmem:[#allocation10 + $0x710] sm:$0xff]
        %v4402 = vld [vmem:[#allocation10 + $0x718] sm:$0xff]
        %v4403 = vld [vmem:[#allocation10 + $0x720] sm:$0xff]
        %v4404 = vld [vmem:[#allocation10 + $0x728] sm:$0xff]
        %v4405 = vld [vmem:[#allocation10 + $0x730] sm:$0xff]
        %v4406 = vld [vmem:[#allocation10 + $0x738] sm:$0xff]
        %v4407 = vld [vmem:[#allocation10 + $0x740] sm:$0xff]
        %v4408 = vld [vmem:[#allocation10 + $0x748] sm:$0xff]
        %v4409 = vld [vmem:[#allocation10 + $0x750] sm:$0xff]
        %v4410 = vld [vmem:[#allocation10 + $0x758] sm:$0xff]
        %v4411 = vld [vmem:[#allocation10 + $0x760] sm:$0xff]
        %v4412 = vld [vmem:[#allocation10 + $0x768] sm:$0xff]
        %v4413 = vld [vmem:[#allocation10 + $0x770] sm:$0xff]
        %v4414 = vld [vmem:[#allocation10 + $0x778] sm:$0xff]
        %v4415 = vld [vmem:[#allocation10 + $0x780] sm:$0xff]
        %v4416 = vld [vmem:[#allocation10 + $0x788] sm:$0xff]
        %v4417 = vld [vmem:[#allocation10 + $0x790] sm:$0xff]
        %v4418 = vld [vmem:[#allocation10 + $0x798] sm:$0xff]
        %v4419 = vld [vmem:[#allocation10 + $0x7a0] sm:$0xff]
        %v4420 = vld [vmem:[#allocation10 + $0x7a8] sm:$0xff]
        %v4421 = vld [vmem:[#allocation10 + $0x7b0] sm:$0xff]
        %v4422 = vld [vmem:[#allocation10 + $0x7b8] sm:$0xff]
        %v4423 = vld [vmem:[#allocation10 + $0x7c0] sm:$0xff]
        %v4424 = vld [vmem:[#allocation10 + $0x7c8] sm:$0xff]
        %v4425 = vld [vmem:[#allocation10 + $0x7d0] sm:$0xff]
        %v4426 = vld [vmem:[#allocation10 + $0x7d8] sm:$0xff]
        %v4427 = vld [vmem:[#allocation10 + $0x7e0] sm:$0xff]
        %v4428 = vld [vmem:[#allocation10 + $0x7e8] sm:$0xff]
        %v4429 = vld [vmem:[#allocation10 + $0x7f0] sm:$0xff]
        %v4430 = vld [vmem:[#allocation10 + $0x7f8] sm:$0xff]
        %v4431 = vld [vmem:[#allocation11] sm:$0xff]
        %v4688 = vunpack.c.l.b16 %v4175
        %v4689 = vunpack.c.h.b16 %v4175
        %v4690 = vunpack.c.l.b16 %v4176
        %v4691 = vunpack.c.h.b16 %v4176
        %v4692 = vunpack.c.l.b16 %v4177
        %v4693 = vunpack.c.h.b16 %v4177
        %v4694 = vunpack.c.l.b16 %v4178
        %v4695 = vunpack.c.h.b16 %v4178
        %v4696 = vunpack.c.l.b16 %v4179
        %v4697 = vunpack.c.h.b16 %v4179
        %v4698 = vunpack.c.l.b16 %v4180
        %v4699 = vunpack.c.h.b16 %v4180
        %v4700 = vunpack.c.l.b16 %v4181
        %v4701 = vunpack.c.h.b16 %v4181
        %v4702 = vunpack.c.l.b16 %v4182
        %v4703 = vunpack.c.h.b16 %v4182
        %v4704 = vunpack.c.l.b16 %v4183
        %v4705 = vunpack.c.h.b16 %v4183
        %v4706 = vunpack.c.l.b16 %v4184
        %v4707 = vunpack.c.h.b16 %v4184
        %v4708 = vunpack.c.l.b16 %v4185
        %v4709 = vunpack.c.h.b16 %v4185
        %v4710 = vunpack.c.l.b16 %v4186
        %v4711 = vunpack.c.h.b16 %v4186
        %v4712 = vunpack.c.l.b16 %v4187
        %v4713 = vunpack.c.h.b16 %v4187
        %v4714 = vunpack.c.l.b16 %v4188
        %v4715 = vunpack.c.h.b16 %v4188
        %v4716 = vunpack.c.l.b16 %v4189
        %v4717 = vunpack.c.h.b16 %v4189
        %v4718 = vunpack.c.l.b16 %v4190
        %v4719 = vunpack.c.h.b16 %v4190
        %v4720 = vunpack.c.l.b16 %v4191
        %v4721 = vunpack.c.h.b16 %v4191
        %v4722 = vunpack.c.l.b16 %v4192
        %v4723 = vunpack.c.h.b16 %v4192
        %v4724 = vunpack.c.l.b16 %v4193
        %v4725 = vunpack.c.h.b16 %v4193
        %v4726 = vunpack.c.l.b16 %v4194
        %v4727 = vunpack.c.h.b16 %v4194
        %v4728 = vunpack.c.l.b16 %v4195
        %v4729 = vunpack.c.h.b16 %v4195
        %v4730 = vunpack.c.l.b16 %v4196
        %v4731 = vunpack.c.h.b16 %v4196
        %v4732 = vunpack.c.l.b16 %v4197
        %v4733 = vunpack.c.h.b16 %v4197
        %v4734 = vunpack.c.l.b16 %v4198
        %v4735 = vunpack.c.h.b16 %v4198
        %v4736 = vunpack.c.l.b16 %v4199
        %v4737 = vunpack.c.h.b16 %v4199
        %v4738 = vunpack.c.l.b16 %v4200
        %v4739 = vunpack.c.h.b16 %v4200
        %v4740 = vunpack.c.l.b16 %v4201
        %v4741 = vunpack.c.h.b16 %v4201
        %v4742 = vunpack.c.l.b16 %v4202
        %v4743 = vunpack.c.h.b16 %v4202
        %v4744 = vunpack.c.l.b16 %v4203
        %v4745 = vunpack.c.h.b16 %v4203
        %v4746 = vunpack.c.l.b16 %v4204
        %v4747 = vunpack.c.h.b16 %v4204
        %v4748 = vunpack.c.l.b16 %v4205
        %v4749 = vunpack.c.h.b16 %v4205
        %v4750 = vunpack.c.l.b16 %v4206
        %v4751 = vunpack.c.h.b16 %v4206
        %v4752 = vunpack.c.l.b16 %v4207
        %v4753 = vunpack.c.h.b16 %v4207
        %v4754 = vunpack.c.l.b16 %v4208
        %v4755 = vunpack.c.h.b16 %v4208
        %v4756 = vunpack.c.l.b16 %v4209
        %v4757 = vunpack.c.h.b16 %v4209
        %v4758 = vunpack.c.l.b16 %v4210
        %v4759 = vunpack.c.h.b16 %v4210
        %v4760 = vunpack.c.l.b16 %v4211
        %v4761 = vunpack.c.h.b16 %v4211
        %v4762 = vunpack.c.l.b16 %v4212
        %v4763 = vunpack.c.h.b16 %v4212
        %v4764 = vunpack.c.l.b16 %v4213
        %v4765 = vunpack.c.h.b16 %v4213
        %v4766 = vunpack.c.l.b16 %v4214
        %v4767 = vunpack.c.h.b16 %v4214
        %v4768 = vunpack.c.l.b16 %v4215
        %v4769 = vunpack.c.h.b16 %v4215
        %v4770 = vunpack.c.l.b16 %v4216
        %v4771 = vunpack.c.h.b16 %v4216
        %v4772 = vunpack.c.l.b16 %v4217
        %v4773 = vunpack.c.h.b16 %v4217
        %v4774 = vunpack.c.l.b16 %v4218
        %v4775 = vunpack.c.h.b16 %v4218
        %v4776 = vunpack.c.l.b16 %v4219
        %v4777 = vunpack.c.h.b16 %v4219
        %v4778 = vunpack.c.l.b16 %v4220
        %v4779 = vunpack.c.h.b16 %v4220
        %v4780 = vunpack.c.l.b16 %v4221
        %v4781 = vunpack.c.h.b16 %v4221
        %v4782 = vunpack.c.l.b16 %v4222
        %v4783 = vunpack.c.h.b16 %v4222
        %v4784 = vunpack.c.l.b16 %v4223
        %v4785 = vunpack.c.h.b16 %v4223
        %v4786 = vunpack.c.l.b16 %v4224
        %v4787 = vunpack.c.h.b16 %v4224
        %v4788 = vunpack.c.l.b16 %v4225
        %v4789 = vunpack.c.h.b16 %v4225
        %v4790 = vunpack.c.l.b16 %v4226
        %v4791 = vunpack.c.h.b16 %v4226
        %v4792 = vunpack.c.l.b16 %v4227
        %v4793 = vunpack.c.h.b16 %v4227
        %v4794 = vunpack.c.l.b16 %v4228
        %v4795 = vunpack.c.h.b16 %v4228
        %v4796 = vunpack.c.l.b16 %v4229
        %v4797 = vunpack.c.h.b16 %v4229
        %v4798 = vunpack.c.l.b16 %v4230
        %v4799 = vunpack.c.h.b16 %v4230
        %v4800 = vunpack.c.l.b16 %v4231
        %v4801 = vunpack.c.h.b16 %v4231
        %v4802 = vunpack.c.l.b16 %v4232
        %v4803 = vunpack.c.h.b16 %v4232
        %v4804 = vunpack.c.l.b16 %v4233
        %v4805 = vunpack.c.h.b16 %v4233
        %v4806 = vunpack.c.l.b16 %v4234
        %v4807 = vunpack.c.h.b16 %v4234
        %v4808 = vunpack.c.l.b16 %v4235
        %v4809 = vunpack.c.h.b16 %v4235
        %v4810 = vunpack.c.l.b16 %v4236
        %v4811 = vunpack.c.h.b16 %v4236
        %v4812 = vunpack.c.l.b16 %v4237
        %v4813 = vunpack.c.h.b16 %v4237
        %v4814 = vunpack.c.l.b16 %v4238
        %v4815 = vunpack.c.h.b16 %v4238
        %v4816 = vunpack.c.l.b16 %v4239
        %v4817 = vunpack.c.h.b16 %v4239
        %v4818 = vunpack.c.l.b16 %v4240
        %v4819 = vunpack.c.h.b16 %v4240
        %v4820 = vunpack.c.l.b16 %v4241
        %v4821 = vunpack.c.h.b16 %v4241
        %v4822 = vunpack.c.l.b16 %v4242
        %v4823 = vunpack.c.h.b16 %v4242
        %v4824 = vunpack.c.l.b16 %v4243
        %v4825 = vunpack.c.h.b16 %v4243
        %v4826 = vunpack.c.l.b16 %v4244
        %v4827 = vunpack.c.h.b16 %v4244
        %v4828 = vunpack.c.l.b16 %v4245
        %v4829 = vunpack.c.h.b16 %v4245
        %v4830 = vunpack.c.l.b16 %v4246
        %v4831 = vunpack.c.h.b16 %v4246
        %v4832 = vunpack.c.l.b16 %v4247
        %v4833 = vunpack.c.h.b16 %v4247
        %v4834 = vunpack.c.l.b16 %v4248
        %v4835 = vunpack.c.h.b16 %v4248
        %v4836 = vunpack.c.l.b16 %v4249
        %v4837 = vunpack.c.h.b16 %v4249
        %v4838 = vunpack.c.l.b16 %v4250
        %v4839 = vunpack.c.h.b16 %v4250
        %v4840 = vunpack.c.l.b16 %v4251
        %v4841 = vunpack.c.h.b16 %v4251
        %v4842 = vunpack.c.l.b16 %v4252
        %v4843 = vunpack.c.h.b16 %v4252
        %v4844 = vunpack.c.l.b16 %v4253
        %v4845 = vunpack.c.h.b16 %v4253
        %v4846 = vunpack.c.l.b16 %v4254
        %v4847 = vunpack.c.h.b16 %v4254
        %v4848 = vunpack.c.l.b16 %v4255
        %v4849 = vunpack.c.h.b16 %v4255
        %v4850 = vunpack.c.l.b16 %v4256
        %v4851 = vunpack.c.h.b16 %v4256
        %v4852 = vunpack.c.l.b16 %v4257
        %v4853 = vunpack.c.h.b16 %v4257
        %v4854 = vunpack.c.l.b16 %v4258
        %v4855 = vunpack.c.h.b16 %v4258
        %v4856 = vunpack.c.l.b16 %v4259
        %v4857 = vunpack.c.h.b16 %v4259
        %v4858 = vunpack.c.l.b16 %v4260
        %v4859 = vunpack.c.h.b16 %v4260
        %v4860 = vunpack.c.l.b16 %v4261
        %v4861 = vunpack.c.h.b16 %v4261
        %v4862 = vunpack.c.l.b16 %v4262
        %v4863 = vunpack.c.h.b16 %v4262
        %v4864 = vunpack.c.l.b16 %v4263
        %v4865 = vunpack.c.h.b16 %v4263
        %v4866 = vunpack.c.l.b16 %v4264
        %v4867 = vunpack.c.h.b16 %v4264
        %v4868 = vunpack.c.l.b16 %v4265
        %v4869 = vunpack.c.h.b16 %v4265
        %v4870 = vunpack.c.l.b16 %v4266
        %v4871 = vunpack.c.h.b16 %v4266
        %v4872 = vunpack.c.l.b16 %v4267
        %v4873 = vunpack.c.h.b16 %v4267
        %v4874 = vunpack.c.l.b16 %v4268
        %v4875 = vunpack.c.h.b16 %v4268
        %v4876 = vunpack.c.l.b16 %v4269
        %v4877 = vunpack.c.h.b16 %v4269
        %v4878 = vunpack.c.l.b16 %v4270
        %v4879 = vunpack.c.h.b16 %v4270
        %v4880 = vunpack.c.l.b16 %v4271
        %v4881 = vunpack.c.h.b16 %v4271
        %v4882 = vunpack.c.l.b16 %v4272
        %v4883 = vunpack.c.h.b16 %v4272
        %v4884 = vunpack.c.l.b16 %v4273
        %v4885 = vunpack.c.h.b16 %v4273
        %v4886 = vunpack.c.l.b16 %v4274
        %v4887 = vunpack.c.h.b16 %v4274
        %v4888 = vunpack.c.l.b16 %v4275
        %v4889 = vunpack.c.h.b16 %v4275
        %v4890 = vunpack.c.l.b16 %v4276
        %v4891 = vunpack.c.h.b16 %v4276
        %v4892 = vunpack.c.l.b16 %v4277
        %v4893 = vunpack.c.h.b16 %v4277
        %v4894 = vunpack.c.l.b16 %v4278
        %v4895 = vunpack.c.h.b16 %v4278
        %v4896 = vunpack.c.l.b16 %v4279
        %v4897 = vunpack.c.h.b16 %v4279
        %v4898 = vunpack.c.l.b16 %v4280
        %v4899 = vunpack.c.h.b16 %v4280
        %v4900 = vunpack.c.l.b16 %v4281
        %v4901 = vunpack.c.h.b16 %v4281
        %v4902 = vunpack.c.l.b16 %v4282
        %v4903 = vunpack.c.h.b16 %v4282
        %v4904 = vunpack.c.l.b16 %v4283
        %v4905 = vunpack.c.h.b16 %v4283
        %v4906 = vunpack.c.l.b16 %v4284
        %v4907 = vunpack.c.h.b16 %v4284
        %v4908 = vunpack.c.l.b16 %v4285
        %v4909 = vunpack.c.h.b16 %v4285
        %v4910 = vunpack.c.l.b16 %v4286
        %v4911 = vunpack.c.h.b16 %v4286
        %v4912 = vunpack.c.l.b16 %v4287
        %v4913 = vunpack.c.h.b16 %v4287
        %v4914 = vunpack.c.l.b16 %v4288
        %v4915 = vunpack.c.h.b16 %v4288
        %v4916 = vunpack.c.l.b16 %v4289
        %v4917 = vunpack.c.h.b16 %v4289
        %v4918 = vunpack.c.l.b16 %v4290
        %v4919 = vunpack.c.h.b16 %v4290
        %v4920 = vunpack.c.l.b16 %v4291
        %v4921 = vunpack.c.h.b16 %v4291
        %v4922 = vunpack.c.l.b16 %v4292
        %v4923 = vunpack.c.h.b16 %v4292
        %v4924 = vunpack.c.l.b16 %v4293
        %v4925 = vunpack.c.h.b16 %v4293
        %v4926 = vunpack.c.l.b16 %v4294
        %v4927 = vunpack.c.h.b16 %v4294
        %v4928 = vunpack.c.l.b16 %v4295
        %v4929 = vunpack.c.h.b16 %v4295
        %v4930 = vunpack.c.l.b16 %v4296
        %v4931 = vunpack.c.h.b16 %v4296
        %v4932 = vunpack.c.l.b16 %v4297
        %v4933 = vunpack.c.h.b16 %v4297
        %v4934 = vunpack.c.l.b16 %v4298
        %v4935 = vunpack.c.h.b16 %v4298
        %v4936 = vunpack.c.l.b16 %v4299
        %v4937 = vunpack.c.h.b16 %v4299
        %v4938 = vunpack.c.l.b16 %v4300
        %v4939 = vunpack.c.h.b16 %v4300
        %v4940 = vunpack.c.l.b16 %v4301
        %v4941 = vunpack.c.h.b16 %v4301
        %v4942 = vunpack.c.l.b16 %v4302
        %v4943 = vunpack.c.h.b16 %v4302
        %v4944 = vunpack.c.l.b16 %v4303
        %v4945 = vunpack.c.h.b16 %v4303
        %v4946 = vunpack.c.l.b16 %v4304
        %v4947 = vunpack.c.h.b16 %v4304
        %v4948 = vunpack.c.l.b16 %v4305
        %v4949 = vunpack.c.h.b16 %v4305
        %v4950 = vunpack.c.l.b16 %v4306
        %v4951 = vunpack.c.h.b16 %v4306
        %v4952 = vunpack.c.l.b16 %v4307
        %v4953 = vunpack.c.h.b16 %v4307
        %v4954 = vunpack.c.l.b16 %v4308
        %v4955 = vunpack.c.h.b16 %v4308
        %v4956 = vunpack.c.l.b16 %v4309
        %v4957 = vunpack.c.h.b16 %v4309
        %v4958 = vunpack.c.l.b16 %v4310
        %v4959 = vunpack.c.h.b16 %v4310
        %v4960 = vunpack.c.l.b16 %v4311
        %v4961 = vunpack.c.h.b16 %v4311
        %v4962 = vunpack.c.l.b16 %v4312
        %v4963 = vunpack.c.h.b16 %v4312
        %v4964 = vunpack.c.l.b16 %v4313
        %v4965 = vunpack.c.h.b16 %v4313
        %v4966 = vunpack.c.l.b16 %v4314
        %v4967 = vunpack.c.h.b16 %v4314
        %v4968 = vunpack.c.l.b16 %v4315
        %v4969 = vunpack.c.h.b16 %v4315
        %v4970 = vunpack.c.l.b16 %v4316
        %v4971 = vunpack.c.h.b16 %v4316
        %v4972 = vunpack.c.l.b16 %v4317
        %v4973 = vunpack.c.h.b16 %v4317
        %v4974 = vunpack.c.l.b16 %v4318
        %v4975 = vunpack.c.h.b16 %v4318
        %v4976 = vunpack.c.l.b16 %v4319
        %v4977 = vunpack.c.h.b16 %v4319
        %v4978 = vunpack.c.l.b16 %v4320
        %v4979 = vunpack.c.h.b16 %v4320
        %v4980 = vunpack.c.l.b16 %v4321
        %v4981 = vunpack.c.h.b16 %v4321
        %v4982 = vunpack.c.l.b16 %v4322
        %v4983 = vunpack.c.h.b16 %v4322
        %v4984 = vunpack.c.l.b16 %v4323
        %v4985 = vunpack.c.h.b16 %v4323
        %v4986 = vunpack.c.l.b16 %v4324
        %v4987 = vunpack.c.h.b16 %v4324
        %v4988 = vunpack.c.l.b16 %v4325
        %v4989 = vunpack.c.h.b16 %v4325
        %v4990 = vunpack.c.l.b16 %v4326
        %v4991 = vunpack.c.h.b16 %v4326
        %v4992 = vunpack.c.l.b16 %v4327
        %v4993 = vunpack.c.h.b16 %v4327
        %v4994 = vunpack.c.l.b16 %v4328
        %v4995 = vunpack.c.h.b16 %v4328
        %v4996 = vunpack.c.l.b16 %v4329
        %v4997 = vunpack.c.h.b16 %v4329
        %v4998 = vunpack.c.l.b16 %v4330
        %v4999 = vunpack.c.h.b16 %v4330
        %v5000 = vunpack.c.l.b16 %v4331
        %v5001 = vunpack.c.h.b16 %v4331
        %v5002 = vunpack.c.l.b16 %v4332
        %v5003 = vunpack.c.h.b16 %v4332
        %v5004 = vunpack.c.l.b16 %v4333
        %v5005 = vunpack.c.h.b16 %v4333
        %v5006 = vunpack.c.l.b16 %v4334
        %v5007 = vunpack.c.h.b16 %v4334
        %v5008 = vunpack.c.l.b16 %v4335
        %v5009 = vunpack.c.h.b16 %v4335
        %v5010 = vunpack.c.l.b16 %v4336
        %v5011 = vunpack.c.h.b16 %v4336
        %v5012 = vunpack.c.l.b16 %v4337
        %v5013 = vunpack.c.h.b16 %v4337
        %v5014 = vunpack.c.l.b16 %v4338
        %v5015 = vunpack.c.h.b16 %v4338
        %v5016 = vunpack.c.l.b16 %v4339
        %v5017 = vunpack.c.h.b16 %v4339
        %v5018 = vunpack.c.l.b16 %v4340
        %v5019 = vunpack.c.h.b16 %v4340
        %v5020 = vunpack.c.l.b16 %v4341
        %v5021 = vunpack.c.h.b16 %v4341
        %v5022 = vunpack.c.l.b16 %v4342
        %v5023 = vunpack.c.h.b16 %v4342
        %v5024 = vunpack.c.l.b16 %v4343
        %v5025 = vunpack.c.h.b16 %v4343
        %v5026 = vunpack.c.l.b16 %v4344
        %v5027 = vunpack.c.h.b16 %v4344
        %v5028 = vunpack.c.l.b16 %v4345
        %v5029 = vunpack.c.h.b16 %v4345
        %v5030 = vunpack.c.l.b16 %v4346
        %v5031 = vunpack.c.h.b16 %v4346
        %v5032 = vunpack.c.l.b16 %v4347
        %v5033 = vunpack.c.h.b16 %v4347
        %v5034 = vunpack.c.l.b16 %v4348
        %v5035 = vunpack.c.h.b16 %v4348
        %v5036 = vunpack.c.l.b16 %v4349
        %v5037 = vunpack.c.h.b16 %v4349
        %v5038 = vunpack.c.l.b16 %v4350
        %v5039 = vunpack.c.h.b16 %v4350
        %v5040 = vunpack.c.l.b16 %v4351
        %v5041 = vunpack.c.h.b16 %v4351
        %v5042 = vunpack.c.l.b16 %v4352
        %v5043 = vunpack.c.h.b16 %v4352
        %v5044 = vunpack.c.l.b16 %v4353
        %v5045 = vunpack.c.h.b16 %v4353
        %v5046 = vunpack.c.l.b16 %v4354
        %v5047 = vunpack.c.h.b16 %v4354
        %v5048 = vunpack.c.l.b16 %v4355
        %v5049 = vunpack.c.h.b16 %v4355
        %v5050 = vunpack.c.l.b16 %v4356
        %v5051 = vunpack.c.h.b16 %v4356
        %v5052 = vunpack.c.l.b16 %v4357
        %v5053 = vunpack.c.h.b16 %v4357
        %v5054 = vunpack.c.l.b16 %v4358
        %v5055 = vunpack.c.h.b16 %v4358
        %v5056 = vunpack.c.l.b16 %v4359
        %v5057 = vunpack.c.h.b16 %v4359
        %v5058 = vunpack.c.l.b16 %v4360
        %v5059 = vunpack.c.h.b16 %v4360
        %v5060 = vunpack.c.l.b16 %v4361
        %v5061 = vunpack.c.h.b16 %v4361
        %v5062 = vunpack.c.l.b16 %v4362
        %v5063 = vunpack.c.h.b16 %v4362
        %v5064 = vunpack.c.l.b16 %v4363
        %v5065 = vunpack.c.h.b16 %v4363
        %v5066 = vunpack.c.l.b16 %v4364
        %v5067 = vunpack.c.h.b16 %v4364
        %v5068 = vunpack.c.l.b16 %v4365
        %v5069 = vunpack.c.h.b16 %v4365
        %v5070 = vunpack.c.l.b16 %v4366
        %v5071 = vunpack.c.h.b16 %v4366
        %v5072 = vunpack.c.l.b16 %v4367
        %v5073 = vunpack.c.h.b16 %v4367
        %v5074 = vunpack.c.l.b16 %v4368
        %v5075 = vunpack.c.h.b16 %v4368
        %v5076 = vunpack.c.l.b16 %v4369
        %v5077 = vunpack.c.h.b16 %v4369
        %v5078 = vunpack.c.l.b16 %v4370
        %v5079 = vunpack.c.h.b16 %v4370
        %v5080 = vunpack.c.l.b16 %v4371
        %v5081 = vunpack.c.h.b16 %v4371
        %v5082 = vunpack.c.l.b16 %v4372
        %v5083 = vunpack.c.h.b16 %v4372
        %v5084 = vunpack.c.l.b16 %v4373
        %v5085 = vunpack.c.h.b16 %v4373
        %v5086 = vunpack.c.l.b16 %v4374
        %v5087 = vunpack.c.h.b16 %v4374
        %v5088 = vunpack.c.l.b16 %v4375
        %v5089 = vunpack.c.h.b16 %v4375
        %v5090 = vunpack.c.l.b16 %v4376
        %v5091 = vunpack.c.h.b16 %v4376
        %v5092 = vunpack.c.l.b16 %v4377
        %v5093 = vunpack.c.h.b16 %v4377
        %v5094 = vunpack.c.l.b16 %v4378
        %v5095 = vunpack.c.h.b16 %v4378
        %v5096 = vunpack.c.l.b16 %v4379
        %v5097 = vunpack.c.h.b16 %v4379
        %v5098 = vunpack.c.l.b16 %v4380
        %v5099 = vunpack.c.h.b16 %v4380
        %v5100 = vunpack.c.l.b16 %v4381
        %v5101 = vunpack.c.h.b16 %v4381
        %v5102 = vunpack.c.l.b16 %v4382
        %v5103 = vunpack.c.h.b16 %v4382
        %v5104 = vunpack.c.l.b16 %v4383
        %v5105 = vunpack.c.h.b16 %v4383
        %v5106 = vunpack.c.l.b16 %v4384
        %v5107 = vunpack.c.h.b16 %v4384
        %v5108 = vunpack.c.l.b16 %v4385
        %v5109 = vunpack.c.h.b16 %v4385
        %v5110 = vunpack.c.l.b16 %v4386
        %v5111 = vunpack.c.h.b16 %v4386
        %v5112 = vunpack.c.l.b16 %v4387
        %v5113 = vunpack.c.h.b16 %v4387
        %v5114 = vunpack.c.l.b16 %v4388
        %v5115 = vunpack.c.h.b16 %v4388
        %v5116 = vunpack.c.l.b16 %v4389
        %v5117 = vunpack.c.h.b16 %v4389
        %v5118 = vunpack.c.l.b16 %v4390
        %v5119 = vunpack.c.h.b16 %v4390
        %v5120 = vunpack.c.l.b16 %v4391
        %v5121 = vunpack.c.h.b16 %v4391
        %v5122 = vunpack.c.l.b16 %v4392
        %v5123 = vunpack.c.h.b16 %v4392
        %v5124 = vunpack.c.l.b16 %v4393
        %v5125 = vunpack.c.h.b16 %v4393
        %v5126 = vunpack.c.l.b16 %v4394
        %v5127 = vunpack.c.h.b16 %v4394
        %v5128 = vunpack.c.l.b16 %v4395
        %v5129 = vunpack.c.h.b16 %v4395
        %v5130 = vunpack.c.l.b16 %v4396
        %v5131 = vunpack.c.h.b16 %v4396
        %v5132 = vunpack.c.l.b16 %v4397
        %v5133 = vunpack.c.h.b16 %v4397
        %v5134 = vunpack.c.l.b16 %v4398
        %v5135 = vunpack.c.h.b16 %v4398
        %v5136 = vunpack.c.l.b16 %v4399
        %v5137 = vunpack.c.h.b16 %v4399
        %v5138 = vunpack.c.l.b16 %v4400
        %v5139 = vunpack.c.h.b16 %v4400
        %v5140 = vunpack.c.l.b16 %v4401
        %v5141 = vunpack.c.h.b16 %v4401
        %v5142 = vunpack.c.l.b16 %v4402
        %v5143 = vunpack.c.h.b16 %v4402
        %v5144 = vunpack.c.l.b16 %v4403
        %v5145 = vunpack.c.h.b16 %v4403
        %v5146 = vunpack.c.l.b16 %v4404
        %v5147 = vunpack.c.h.b16 %v4404
        %v5148 = vunpack.c.l.b16 %v4405
        %v5149 = vunpack.c.h.b16 %v4405
        %v5150 = vunpack.c.l.b16 %v4406
        %v5151 = vunpack.c.h.b16 %v4406
        %v5152 = vunpack.c.l.b16 %v4407
        %v5153 = vunpack.c.h.b16 %v4407
        %v5154 = vunpack.c.l.b16 %v4408
        %v5155 = vunpack.c.h.b16 %v4408
        %v5156 = vunpack.c.l.b16 %v4409
        %v5157 = vunpack.c.h.b16 %v4409
        %v5158 = vunpack.c.l.b16 %v4410
        %v5159 = vunpack.c.h.b16 %v4410
        %v5160 = vunpack.c.l.b16 %v4411
        %v5161 = vunpack.c.h.b16 %v4411
        %v5162 = vunpack.c.l.b16 %v4412
        %v5163 = vunpack.c.h.b16 %v4412
        %v5164 = vunpack.c.l.b16 %v4413
        %v5165 = vunpack.c.h.b16 %v4413
        %v5166 = vunpack.c.l.b16 %v4414
        %v5167 = vunpack.c.h.b16 %v4414
        %v5168 = vunpack.c.l.b16 %v4415
        %v5169 = vunpack.c.h.b16 %v4415
        %v5170 = vunpack.c.l.b16 %v4416
        %v5171 = vunpack.c.h.b16 %v4416
        %v5172 = vunpack.c.l.b16 %v4417
        %v5173 = vunpack.c.h.b16 %v4417
        %v5174 = vunpack.c.l.b16 %v4418
        %v5175 = vunpack.c.h.b16 %v4418
        %v5176 = vunpack.c.l.b16 %v4419
        %v5177 = vunpack.c.h.b16 %v4419
        %v5178 = vunpack.c.l.b16 %v4420
        %v5179 = vunpack.c.h.b16 %v4420
        %v5180 = vunpack.c.l.b16 %v4421
        %v5181 = vunpack.c.h.b16 %v4421
        %v5182 = vunpack.c.l.b16 %v4422
        %v5183 = vunpack.c.h.b16 %v4422
        %v5184 = vunpack.c.l.b16 %v4423
        %v5185 = vunpack.c.h.b16 %v4423
        %v5186 = vunpack.c.l.b16 %v4424
        %v5187 = vunpack.c.h.b16 %v4424
        %v5188 = vunpack.c.l.b16 %v4425
        %v5189 = vunpack.c.h.b16 %v4425
        %v5190 = vunpack.c.l.b16 %v4426
        %v5191 = vunpack.c.h.b16 %v4426
        %v5192 = vunpack.c.l.b16 %v4427
        %v5193 = vunpack.c.h.b16 %v4427
        %v5194 = vunpack.c.l.b16 %v4428
        %v5195 = vunpack.c.h.b16 %v4428
        %v5196 = vunpack.c.l.b16 %v4429
        %v5197 = vunpack.c.h.b16 %v4429
        %v5198 = vunpack.c.l.b16 %v4430
        %v5199 = vunpack.c.h.b16 %v4430
        %v5200 = vpack.c.b16 %v4696, %v4688
        %v5201 = vpack.c.b16 %v4697, %v4689
        %v5202 = vpack.c.b16 %v4698, %v4690
        %v5203 = vpack.c.b16 %v4699, %v4691
        %v5204 = vpack.c.b16 %v4700, %v4692
        %v5205 = vpack.c.b16 %v4701, %v4693
        %v5206 = vpack.c.b16 %v4702, %v4694
        %v5207 = vpack.c.b16 %v4703, %v4695
        %v5208 = vpack.c.b16 %v4712, %v4704
        %v5209 = vpack.c.b16 %v4713, %v4705
        %v5210 = vpack.c.b16 %v4714, %v4706
        %v5211 = vpack.c.b16 %v4715, %v4707
        %v5212 = vpack.c.b16 %v4716, %v4708
        %v5213 = vpack.c.b16 %v4717, %v4709
        %v5214 = vpack.c.b16 %v4718, %v4710
        %v5215 = vpack.c.b16 %v4719, %v4711
        %v5216 = vpack.c.b16 %v4728, %v4720
        %v5217 = vpack.c.b16 %v4729, %v4721
        %v5218 = vpack.c.b16 %v4730, %v4722
        %v5219 = vpack.c.b16 %v4731, %v4723
        %v5220 = vpack.c.b16 %v4732, %v4724
        %v5221 = vpack.c.b16 %v4733, %v4725
        %v5222 = vpack.c.b16 %v4734, %v4726
        %v5223 = vpack.c.b16 %v4735, %v4727
        %v5224 = vpack.c.b16 %v4744, %v4736
        %v5225 = vpack.c.b16 %v4745, %v4737
        %v5226 = vpack.c.b16 %v4746, %v4738
        %v5227 = vpack.c.b16 %v4747, %v4739
        %v5228 = vpack.c.b16 %v4748, %v4740
        %v5229 = vpack.c.b16 %v4749, %v4741
        %v5230 = vpack.c.b16 %v4750, %v4742
        %v5231 = vpack.c.b16 %v4751, %v4743
        %v5232 = vpack.c.b16 %v4760, %v4752
        %v5233 = vpack.c.b16 %v4761, %v4753
        %v5234 = vpack.c.b16 %v4762, %v4754
        %v5235 = vpack.c.b16 %v4763, %v4755
        %v5236 = vpack.c.b16 %v4764, %v4756
        %v5237 = vpack.c.b16 %v4765, %v4757
        %v5238 = vpack.c.b16 %v4766, %v4758
        %v5239 = vpack.c.b16 %v4767, %v4759
        %v5240 = vpack.c.b16 %v4776, %v4768
        %v5241 = vpack.c.b16 %v4777, %v4769
        %v5242 = vpack.c.b16 %v4778, %v4770
        %v5243 = vpack.c.b16 %v4779, %v4771
        %v5244 = vpack.c.b16 %v4780, %v4772
        %v5245 = vpack.c.b16 %v4781, %v4773
        %v5246 = vpack.c.b16 %v4782, %v4774
        %v5247 = vpack.c.b16 %v4783, %v4775
        %v5248 = vpack.c.b16 %v4792, %v4784
        %v5249 = vpack.c.b16 %v4793, %v4785
        %v5250 = vpack.c.b16 %v4794, %v4786
        %v5251 = vpack.c.b16 %v4795, %v4787
        %v5252 = vpack.c.b16 %v4796, %v4788
        %v5253 = vpack.c.b16 %v4797, %v4789
        %v5254 = vpack.c.b16 %v4798, %v4790
        %v5255 = vpack.c.b16 %v4799, %v4791
        %v5256 = vpack.c.b16 %v4808, %v4800
        %v5257 = vpack.c.b16 %v4809, %v4801
        %v5258 = vpack.c.b16 %v4810, %v4802
        %v5259 = vpack.c.b16 %v4811, %v4803
        %v5260 = vpack.c.b16 %v4812, %v4804
        %v5261 = vpack.c.b16 %v4813, %v4805
        %v5262 = vpack.c.b16 %v4814, %v4806
        %v5263 = vpack.c.b16 %v4815, %v4807
        %v5264 = vpack.c.b16 %v4824, %v4816
        %v5265 = vpack.c.b16 %v4825, %v4817
        %v5266 = vpack.c.b16 %v4826, %v4818
        %v5267 = vpack.c.b16 %v4827, %v4819
        %v5268 = vpack.c.b16 %v4828, %v4820
        %v5269 = vpack.c.b16 %v4829, %v4821
        %v5270 = vpack.c.b16 %v4830, %v4822
        %v5271 = vpack.c.b16 %v4831, %v4823
        %v5272 = vpack.c.b16 %v4840, %v4832
        %v5273 = vpack.c.b16 %v4841, %v4833
        %v5274 = vpack.c.b16 %v4842, %v4834
        %v5275 = vpack.c.b16 %v4843, %v4835
        %v5276 = vpack.c.b16 %v4844, %v4836
        %v5277 = vpack.c.b16 %v4845, %v4837
        %v5278 = vpack.c.b16 %v4846, %v4838
        %v5279 = vpack.c.b16 %v4847, %v4839
        %v5280 = vpack.c.b16 %v4856, %v4848
        %v5281 = vpack.c.b16 %v4857, %v4849
        %v5282 = vpack.c.b16 %v4858, %v4850
        %v5283 = vpack.c.b16 %v4859, %v4851
        %v5284 = vpack.c.b16 %v4860, %v4852
        %v5285 = vpack.c.b16 %v4861, %v4853
        %v5286 = vpack.c.b16 %v4862, %v4854
        %v5287 = vpack.c.b16 %v4863, %v4855
        %v5288 = vpack.c.b16 %v4872, %v4864
        %v5289 = vpack.c.b16 %v4873, %v4865
        %v5290 = vpack.c.b16 %v4874, %v4866
        %v5291 = vpack.c.b16 %v4875, %v4867
        %v5292 = vpack.c.b16 %v4876, %v4868
        %v5293 = vpack.c.b16 %v4877, %v4869
        %v5294 = vpack.c.b16 %v4878, %v4870
        %v5295 = vpack.c.b16 %v4879, %v4871
        %v5296 = vpack.c.b16 %v4888, %v4880
        %v5297 = vpack.c.b16 %v4889, %v4881
        %v5298 = vpack.c.b16 %v4890, %v4882
        %v5299 = vpack.c.b16 %v4891, %v4883
        %v5300 = vpack.c.b16 %v4892, %v4884
        %v5301 = vpack.c.b16 %v4893, %v4885
        %v5302 = vpack.c.b16 %v4894, %v4886
        %v5303 = vpack.c.b16 %v4895, %v4887
        %v5304 = vpack.c.b16 %v4904, %v4896
        %v5305 = vpack.c.b16 %v4905, %v4897
        %v5306 = vpack.c.b16 %v4906, %v4898
        %v5307 = vpack.c.b16 %v4907, %v4899
        %v5308 = vpack.c.b16 %v4908, %v4900
        %v5309 = vpack.c.b16 %v4909, %v4901
        %v5310 = vpack.c.b16 %v4910, %v4902
        %v5311 = vpack.c.b16 %v4911, %v4903
        %v5312 = vpack.c.b16 %v4920, %v4912
        %v5313 = vpack.c.b16 %v4921, %v4913
        %v5314 = vpack.c.b16 %v4922, %v4914
        %v5315 = vpack.c.b16 %v4923, %v4915
        %v5316 = vpack.c.b16 %v4924, %v4916
        %v5317 = vpack.c.b16 %v4925, %v4917
        %v5318 = vpack.c.b16 %v4926, %v4918
        %v5319 = vpack.c.b16 %v4927, %v4919
        %v5320 = vpack.c.b16 %v4936, %v4928
        %v5321 = vpack.c.b16 %v4937, %v4929
        %v5322 = vpack.c.b16 %v4938, %v4930
        %v5323 = vpack.c.b16 %v4939, %v4931
        %v5324 = vpack.c.b16 %v4940, %v4932
        %v5325 = vpack.c.b16 %v4941, %v4933
        %v5326 = vpack.c.b16 %v4942, %v4934
        %v5327 = vpack.c.b16 %v4943, %v4935
        %v5328 = vpack.c.b16 %v4952, %v4944
        %v5329 = vpack.c.b16 %v4953, %v4945
        %v5330 = vpack.c.b16 %v4954, %v4946
        %v5331 = vpack.c.b16 %v4955, %v4947
        %v5332 = vpack.c.b16 %v4956, %v4948
        %v5333 = vpack.c.b16 %v4957, %v4949
        %v5334 = vpack.c.b16 %v4958, %v4950
        %v5335 = vpack.c.b16 %v4959, %v4951
        %v5336 = vpack.c.b16 %v4968, %v4960
        %v5337 = vpack.c.b16 %v4969, %v4961
        %v5338 = vpack.c.b16 %v4970, %v4962
        %v5339 = vpack.c.b16 %v4971, %v4963
        %v5340 = vpack.c.b16 %v4972, %v4964
        %v5341 = vpack.c.b16 %v4973, %v4965
        %v5342 = vpack.c.b16 %v4974, %v4966
        %v5343 = vpack.c.b16 %v4975, %v4967
        %v5344 = vpack.c.b16 %v4984, %v4976
        %v5345 = vpack.c.b16 %v4985, %v4977
        %v5346 = vpack.c.b16 %v4986, %v4978
        %v5347 = vpack.c.b16 %v4987, %v4979
        %v5348 = vpack.c.b16 %v4988, %v4980
        %v5349 = vpack.c.b16 %v4989, %v4981
        %v5350 = vpack.c.b16 %v4990, %v4982
        %v5351 = vpack.c.b16 %v4991, %v4983
        %v5352 = vpack.c.b16 %v5000, %v4992
        %v5353 = vpack.c.b16 %v5001, %v4993
        %v5354 = vpack.c.b16 %v5002, %v4994
        %v5355 = vpack.c.b16 %v5003, %v4995
        %v5356 = vpack.c.b16 %v5004, %v4996
        %v5357 = vpack.c.b16 %v5005, %v4997
        %v5358 = vpack.c.b16 %v5006, %v4998
        %v5359 = vpack.c.b16 %v5007, %v4999
        %v5360 = vpack.c.b16 %v5016, %v5008
        %v5361 = vpack.c.b16 %v5017, %v5009
        %v5362 = vpack.c.b16 %v5018, %v5010
        %v5363 = vpack.c.b16 %v5019, %v5011
        %v5364 = vpack.c.b16 %v5020, %v5012
        %v5365 = vpack.c.b16 %v5021, %v5013
        %v5366 = vpack.c.b16 %v5022, %v5014
        %v5367 = vpack.c.b16 %v5023, %v5015
        %v5368 = vpack.c.b16 %v5032, %v5024
        %v5369 = vpack.c.b16 %v5033, %v5025
        %v5370 = vpack.c.b16 %v5034, %v5026
        %v5371 = vpack.c.b16 %v5035, %v5027
        %v5372 = vpack.c.b16 %v5036, %v5028
        %v5373 = vpack.c.b16 %v5037, %v5029
        %v5374 = vpack.c.b16 %v5038, %v5030
        %v5375 = vpack.c.b16 %v5039, %v5031
        %v5376 = vpack.c.b16 %v5048, %v5040
        %v5377 = vpack.c.b16 %v5049, %v5041
        %v5378 = vpack.c.b16 %v5050, %v5042
        %v5379 = vpack.c.b16 %v5051, %v5043
        %v5380 = vpack.c.b16 %v5052, %v5044
        %v5381 = vpack.c.b16 %v5053, %v5045
        %v5382 = vpack.c.b16 %v5054, %v5046
        %v5383 = vpack.c.b16 %v5055, %v5047
        %v5384 = vpack.c.b16 %v5064, %v5056
        %v5385 = vpack.c.b16 %v5065, %v5057
        %v5386 = vpack.c.b16 %v5066, %v5058
        %v5387 = vpack.c.b16 %v5067, %v5059
        %v5388 = vpack.c.b16 %v5068, %v5060
        %v5389 = vpack.c.b16 %v5069, %v5061
        %v5390 = vpack.c.b16 %v5070, %v5062
        %v5391 = vpack.c.b16 %v5071, %v5063
        %v5392 = vpack.c.b16 %v5080, %v5072
        %v5393 = vpack.c.b16 %v5081, %v5073
        %v5394 = vpack.c.b16 %v5082, %v5074
        %v5395 = vpack.c.b16 %v5083, %v5075
        %v5396 = vpack.c.b16 %v5084, %v5076
        %v5397 = vpack.c.b16 %v5085, %v5077
        %v5398 = vpack.c.b16 %v5086, %v5078
        %v5399 = vpack.c.b16 %v5087, %v5079
        %v5400 = vpack.c.b16 %v5096, %v5088
        %v5401 = vpack.c.b16 %v5097, %v5089
        %v5402 = vpack.c.b16 %v5098, %v5090
        %v5403 = vpack.c.b16 %v5099, %v5091
        %v5404 = vpack.c.b16 %v5100, %v5092
        %v5405 = vpack.c.b16 %v5101, %v5093
        %v5406 = vpack.c.b16 %v5102, %v5094
        %v5407 = vpack.c.b16 %v5103, %v5095
        %v5408 = vpack.c.b16 %v5112, %v5104
        %v5409 = vpack.c.b16 %v5113, %v5105
        %v5410 = vpack.c.b16 %v5114, %v5106
        %v5411 = vpack.c.b16 %v5115, %v5107
        %v5412 = vpack.c.b16 %v5116, %v5108
        %v5413 = vpack.c.b16 %v5117, %v5109
        %v5414 = vpack.c.b16 %v5118, %v5110
        %v5415 = vpack.c.b16 %v5119, %v5111
        %v5416 = vpack.c.b16 %v5128, %v5120
        %v5417 = vpack.c.b16 %v5129, %v5121
        %v5418 = vpack.c.b16 %v5130, %v5122
        %v5419 = vpack.c.b16 %v5131, %v5123
        %v5420 = vpack.c.b16 %v5132, %v5124
        %v5421 = vpack.c.b16 %v5133, %v5125
        %v5422 = vpack.c.b16 %v5134, %v5126
        %v5423 = vpack.c.b16 %v5135, %v5127
        %v5424 = vpack.c.b16 %v5144, %v5136
        %v5425 = vpack.c.b16 %v5145, %v5137
        %v5426 = vpack.c.b16 %v5146, %v5138
        %v5427 = vpack.c.b16 %v5147, %v5139
        %v5428 = vpack.c.b16 %v5148, %v5140
        %v5429 = vpack.c.b16 %v5149, %v5141
        %v5430 = vpack.c.b16 %v5150, %v5142
        %v5431 = vpack.c.b16 %v5151, %v5143
        %v5432 = vpack.c.b16 %v5160, %v5152
        %v5433 = vpack.c.b16 %v5161, %v5153
        %v5434 = vpack.c.b16 %v5162, %v5154
        %v5435 = vpack.c.b16 %v5163, %v5155
        %v5436 = vpack.c.b16 %v5164, %v5156
        %v5437 = vpack.c.b16 %v5165, %v5157
        %v5438 = vpack.c.b16 %v5166, %v5158
        %v5439 = vpack.c.b16 %v5167, %v5159
        %v5440 = vpack.c.b16 %v5176, %v5168
        %v5441 = vpack.c.b16 %v5177, %v5169
        %v5442 = vpack.c.b16 %v5178, %v5170
        %v5443 = vpack.c.b16 %v5179, %v5171
        %v5444 = vpack.c.b16 %v5180, %v5172
        %v5445 = vpack.c.b16 %v5181, %v5173
        %v5446 = vpack.c.b16 %v5182, %v5174
        %v5447 = vpack.c.b16 %v5183, %v5175
        %v5448 = vpack.c.b16 %v5192, %v5184
        %v5449 = vpack.c.b16 %v5193, %v5185
        %v5450 = vpack.c.b16 %v5194, %v5186
        %v5451 = vpack.c.b16 %v5195, %v5187
        %v5452 = vpack.c.b16 %v5196, %v5188
        %v5453 = vpack.c.b16 %v5197, %v5189
        %v5454 = vpack.c.b16 %v5198, %v5190
        %v5455 = vpack.c.b16 %v5199, %v5191
        %v5713 = vlaneseq
        %v5714 = vshrl.u32 %v5713, 7
        %v5715 = vsub.s32 0, %v5714
        %v5716 = vrot.slane %v4431, %v5715
        %v5717 = vlaneseq
        %v5718 = vshrl.u32 %v5717, 7
        %v5719 = vsub.s32 1, %v5718
        %v5720 = vrot.slane %v4431, %v5719
        %v5721 = vlaneseq
        %v5722 = vshrl.u32 %v5721, 7
        %v5723 = vsub.s32 2, %v5722
        %v5724 = vrot.slane %v4431, %v5723
        %v5725 = vlaneseq
        %v5726 = vshrl.u32 %v5725, 7
        %v5727 = vsub.s32 3, %v5726
        %v5728 = vrot.slane %v4431, %v5727
        %v5729 = vlaneseq
        %v5730 = vshrl.u32 %v5729, 7
        %v5731 = vsub.s32 4, %v5730
        %v5732 = vrot.slane %v4431, %v5731
        %v5733 = vlaneseq
        %v5734 = vshrl.u32 %v5733, 7
        %v5735 = vsub.s32 5, %v5734
        %v5736 = vrot.slane %v4431, %v5735
        %v5737 = vlaneseq
        %v5738 = vshrl.u32 %v5737, 7
        %v5739 = vsub.s32 6, %v5738
        %v5740 = vrot.slane %v4431, %v5739
        %v5741 = vlaneseq
        %v5742 = vshrl.u32 %v5741, 7
        %v5743 = vsub.s32 7, %v5742
        %v5744 = vrot.slane %v4431, %v5743
        %5753 = vmatprep.subr.bf16.mxu0 %v5201
        %5754 = vmatpush1.bf16.msra.mxu0 %v5200
        %5755 = vmatprep.subr.bf16.mxu0 %v5209
        %5756 = vmatpush1.bf16.msra.mxu0 %v5208
        %5757 = vmatprep.subr.bf16.mxu0 %v5217
        %5758 = vmatpush1.bf16.msra.mxu0 %v5216
        %5759 = vmatprep.subr.bf16.mxu0 %v5225
        %5760 = vmatpush1.bf16.msra.mxu0 %v5224
        %5761 = vmatprep.subr.bf16.mxu0 %v5233
        %5762 = vmatpush1.bf16.msra.mxu0 %v5232
        %5763 = vmatprep.subr.bf16.mxu0 %v5241
        %5764 = vmatpush1.bf16.msra.mxu0 %v5240
        %5765 = vmatprep.subr.bf16.mxu0 %v5249
        %5766 = vmatpush1.bf16.msra.mxu0 %v5248
        %5767 = vmatprep.subr.bf16.mxu0 %v5257
        %5768 = vmatpush1.bf16.msra.mxu0 %v5256
        %5769 = vmatprep.subr.bf16.mxu0 %v5265
        %5770 = vmatpush1.bf16.msra.mxu0 %v5264
        %5771 = vmatprep.subr.bf16.mxu0 %v5273
        %5772 = vmatpush1.bf16.msra.mxu0 %v5272
        %5773 = vmatprep.subr.bf16.mxu0 %v5281
        %5774 = vmatpush1.bf16.msra.mxu0 %v5280
        %5775 = vmatprep.subr.bf16.mxu0 %v5289
        %5776 = vmatpush1.bf16.msra.mxu0 %v5288
        %5777 = vmatprep.subr.bf16.mxu0 %v5297
        %5778 = vmatpush1.bf16.msra.mxu0 %v5296
        %5779 = vmatprep.subr.bf16.mxu0 %v5305
        %5780 = vmatpush1.bf16.msra.mxu0 %v5304
        %5781 = vmatprep.subr.bf16.mxu0 %v5313
        %5782 = vmatpush1.bf16.msra.mxu0 %v5312
        %5783 = vmatprep.subr.bf16.mxu0 %v5321
        %5784 = vmatpush1.bf16.msra.mxu0 %v5320
        %5785 = vmatprep.mubr.bf16.mxu0 %v4172
        %5786 = vmatmul.mubr.bf16.gmra.mrb[0].mxu0 %v4171
        %v5787 = vpop.f32.mrb[0].mxu0
        %v5788 = vadd.f32 %v5716, %v5787
        %v5789 = vpop.f32.mrb[0].mxu0
        %v5790 = vadd.f32 %v5720, %v5789
        %v5791 = vpop.f32.mrb[0].mxu0
        %v5792 = vpop.f32.mrb[0].mxu0
        %5793 = vdwg.mxu0
        %5794 = vmatprep.subr.bf16.mxu0 %v5329
        %5795 = vmatpush1.bf16.msra.mxu0 %v5328
        %5796 = vmatprep.subr.bf16.mxu0 %v5337
        %5797 = vmatpush1.bf16.msra.mxu0 %v5336
        %5798 = vmatprep.subr.bf16.mxu0 %v5345
        %5799 = vmatpush1.bf16.msra.mxu0 %v5344
        %5800 = vmatprep.subr.bf16.mxu0 %v5353
        %5801 = vmatpush1.bf16.msra.mxu0 %v5352
        %5802 = vmatprep.subr.bf16.mxu0 %v5361
        %5803 = vmatpush1.bf16.msra.mxu0 %v5360
        %5804 = vmatprep.subr.bf16.mxu0 %v5369
        %5805 = vmatpush1.bf16.msra.mxu0 %v5368
        %5806 = vmatprep.subr.bf16.mxu0 %v5377
        %5807 = vmatpush1.bf16.msra.mxu0 %v5376
        %5808 = vmatprep.subr.bf16.mxu0 %v5385
        %5809 = vmatpush1.bf16.msra.mxu0 %v5384
        %5810 = vmatprep.subr.bf16.mxu0 %v5393
        %5811 = vmatpush1.bf16.msra.mxu0 %v5392
        %5812 = vmatprep.subr.bf16.mxu0 %v5401
        %5813 = vmatpush1.bf16.msra.mxu0 %v5400
        %5814 = vmatprep.subr.bf16.mxu0 %v5409
        %5815 = vmatpush1.bf16.msra.mxu0 %v5408
        %5816 = vmatprep.subr.bf16.mxu0 %v5417
        %5817 = vmatpush1.bf16.msra.mxu0 %v5416
        %5818 = vmatprep.subr.bf16.mxu0 %v5425
        %5819 = vmatpush1.bf16.msra.mxu0 %v5424
        %5820 = vmatprep.subr.bf16.mxu0 %v5433
        %5821 = vmatpush1.bf16.msra.mxu0 %v5432
        %5822 = vmatprep.subr.bf16.mxu0 %v5441
        %5823 = vmatpush1.bf16.msra.mxu0 %v5440
        %5824 = vmatprep.subr.bf16.mxu0 %v5449
        %5825 = vmatpush1.bf16.msra.mxu0 %v5448
        %5826 = vmatprep.mubr.bf16.mxu0 %v4174
        %5827 = vmatmul.mubr.bf16.gmra.mrb[0].mxu0 %v4173
        %v5828 = vpop.f32.mrb[0].mxu0
        %v5829 = vadd.f32 %v5788, %v5828
        %v5830 = vpop.f32.mrb[0].mxu0
        %v5831 = vadd.f32 %v5790, %v5830
        %v5832 = vpop.f32.mrb[0].mxu0
        %v5833 = vpop.f32.mrb[0].mxu0
        %5834 = vdwg.mxu0
        %5835 = vmatprep.subr.bf16.mxu0 %v5203
        %5836 = vmatpush1.bf16.msra.mxu0 %v5202
        %5837 = vmatprep.subr.bf16.mxu0 %v5211
        %5838 = vmatpush1.bf16.msra.mxu0 %v5210
        %5839 = vmatprep.subr.bf16.mxu0 %v5219
        %5840 = vmatpush1.bf16.msra.mxu0 %v5218
        %5841 = vmatprep.subr.bf16.mxu0 %v5227
        %5842 = vmatpush1.bf16.msra.mxu0 %v5226
        %5843 = vmatprep.subr.bf16.mxu0 %v5235
        %5844 = vmatpush1.bf16.msra.mxu0 %v5234
        %5845 = vmatprep.subr.bf16.mxu0 %v5243
        %5846 = vmatpush1.bf16.msra.mxu0 %v5242
        %5847 = vmatprep.subr.bf16.mxu0 %v5251
        %5848 = vmatpush1.bf16.msra.mxu0 %v5250
        %5849 = vmatprep.subr.bf16.mxu0 %v5259
        %5850 = vmatpush1.bf16.msra.mxu0 %v5258
        %5851 = vmatprep.subr.bf16.mxu0 %v5267
        %5852 = vmatpush1.bf16.msra.mxu0 %v5266
        %5853 = vmatprep.subr.bf16.mxu0 %v5275
        %5854 = vmatpush1.bf16.msra.mxu0 %v5274
        %5855 = vmatprep.subr.bf16.mxu0 %v5283
        %5856 = vmatpush1.bf16.msra.mxu0 %v5282
        %5857 = vmatprep.subr.bf16.mxu0 %v5291
        %5858 = vmatpush1.bf16.msra.mxu0 %v5290
        %5859 = vmatprep.subr.bf16.mxu0 %v5299
        %5860 = vmatpush1.bf16.msra.mxu0 %v5298
        %5861 = vmatprep.subr.bf16.mxu0 %v5307
        %5862 = vmatpush1.bf16.msra.mxu0 %v5306
        %5863 = vmatprep.subr.bf16.mxu0 %v5315
        %5864 = vmatpush1.bf16.msra.mxu0 %v5314
        %5865 = vmatprep.subr.bf16.mxu0 %v5323
        %5866 = vmatpush1.bf16.msra.mxu0 %v5322
        %5867 = vmatprep.mubr.bf16.mxu0 %v4172
        %5868 = vmatmul.mubr.bf16.gmra.mrb[0].mxu0 %v4171
        %v5869 = vpop.f32.mrb[0].mxu0
        %v5870 = vadd.f32 %v5724, %v5869
        %v5871 = vpop.f32.mrb[0].mxu0
        %v5872 = vadd.f32 %v5728, %v5871
        %v5873 = vpop.f32.mrb[0].mxu0
        %v5874 = vpop.f32.mrb[0].mxu0
        %5875 = vdwg.mxu0
        %5876 = vmatprep.subr.bf16.mxu0 %v5331
        %5877 = vmatpush1.bf16.msra.mxu0 %v5330
        %5878 = vmatprep.subr.bf16.mxu0 %v5339
        %5879 = vmatpush1.bf16.msra.mxu0 %v5338
        %5880 = vmatprep.subr.bf16.mxu0 %v5347
        %5881 = vmatpush1.bf16.msra.mxu0 %v5346
        %5882 = vmatprep.subr.bf16.mxu0 %v5355
        %5883 = vmatpush1.bf16.msra.mxu0 %v5354
        %5884 = vmatprep.subr.bf16.mxu0 %v5363
        %5885 = vmatpush1.bf16.msra.mxu0 %v5362
        %5886 = vmatprep.subr.bf16.mxu0 %v5371
        %5887 = vmatpush1.bf16.msra.mxu0 %v5370
        %5888 = vmatprep.subr.bf16.mxu0 %v5379
        %5889 = vmatpush1.bf16.msra.mxu0 %v5378
        %5890 = vmatprep.subr.bf16.mxu0 %v5387
        %5891 = vmatpush1.bf16.msra.mxu0 %v5386
        %5892 = vmatprep.subr.bf16.mxu0 %v5395
        %5893 = vmatpush1.bf16.msra.mxu0 %v5394
        %5894 = vmatprep.subr.bf16.mxu0 %v5403
        %5895 = vmatpush1.bf16.msra.mxu0 %v5402
        %5896 = vmatprep.subr.bf16.mxu0 %v5411
        %5897 = vmatpush1.bf16.msra.mxu0 %v5410
        %5898 = vmatprep.subr.bf16.mxu0 %v5419
        %5899 = vmatpush1.bf16.msra.mxu0 %v5418
        %5900 = vmatprep.subr.bf16.mxu0 %v5427
        %5901 = vmatpush1.bf16.msra.mxu0 %v5426
        %5902 = vmatprep.subr.bf16.mxu0 %v5435
        %5903 = vmatpush1.bf16.msra.mxu0 %v5434
        %5904 = vmatprep.subr.bf16.mxu0 %v5443
        %5905 = vmatpush1.bf16.msra.mxu0 %v5442
        %5906 = vmatprep.subr.bf16.mxu0 %v5451
        %5907 = vmatpush1.bf16.msra.mxu0 %v5450
        %5908 = vmatprep.mubr.bf16.mxu0 %v4174
        %5909 = vmatmul.mubr.bf16.gmra.mrb[0].mxu0 %v4173
        %v5910 = vpop.f32.mrb[0].mxu0
        %v5911 = vadd.f32 %v5870, %v5910
        %v5912 = vpop.f32.mrb[0].mxu0
        %v5913 = vadd.f32 %v5872, %v5912
        %v5914 = vpop.f32.mrb[0].mxu0
        %v5915 = vpop.f32.mrb[0].mxu0
        %5916 = vdwg.mxu0
        %5917 = vmatprep.subr.bf16.mxu0 %v5205
        %5918 = vmatpush1.bf16.msra.mxu0 %v5204
        %5919 = vmatprep.subr.bf16.mxu0 %v5213
        %5920 = vmatpush1.bf16.msra.mxu0 %v5212
        %5921 = vmatprep.subr.bf16.mxu0 %v5221
        %5922 = vmatpush1.bf16.msra.mxu0 %v5220
        %5923 = vmatprep.subr.bf16.mxu0 %v5229
        %5924 = vmatpush1.bf16.msra.mxu0 %v5228
        %5925 = vmatprep.subr.bf16.mxu0 %v5237
        %5926 = vmatpush1.bf16.msra.mxu0 %v5236
        %5927 = vmatprep.subr.bf16.mxu0 %v5245
        %5928 = vmatpush1.bf16.msra.mxu0 %v5244
        %5929 = vmatprep.subr.bf16.mxu0 %v5253
        %5930 = vmatpush1.bf16.msra.mxu0 %v5252
        %5931 = vmatprep.subr.bf16.mxu0 %v5261
        %5932 = vmatpush1.bf16.msra.mxu0 %v5260
        %5933 = vmatprep.subr.bf16.mxu0 %v5269
        %5934 = vmatpush1.bf16.msra.mxu0 %v5268
        %5935 = vmatprep.subr.bf16.mxu0 %v5277
        %5936 = vmatpush1.bf16.msra.mxu0 %v5276
        %5937 = vmatprep.subr.bf16.mxu0 %v5285
        %5938 = vmatpush1.bf16.msra.mxu0 %v5284
        %5939 = vmatprep.subr.bf16.mxu0 %v5293
        %5940 = vmatpush1.bf16.msra.mxu0 %v5292
        %5941 = vmatprep.subr.bf16.mxu0 %v5301
        %5942 = vmatpush1.bf16.msra.mxu0 %v5300
        %5943 = vmatprep.subr.bf16.mxu0 %v5309
        %5944 = vmatpush1.bf16.msra.mxu0 %v5308
        %5945 = vmatprep.subr.bf16.mxu0 %v5317
        %5946 = vmatpush1.bf16.msra.mxu0 %v5316
        %5947 = vmatprep.subr.bf16.mxu0 %v5325
        %5948 = vmatpush1.bf16.msra.mxu0 %v5324
        %5949 = vmatprep.mubr.bf16.mxu0 %v4172
        %5950 = vmatmul.mubr.bf16.gmra.mrb[0].mxu0 %v4171
        %v5951 = vpop.f32.mrb[0].mxu0
        %v5952 = vadd.f32 %v5732, %v5951
        %v5953 = vpop.f32.mrb[0].mxu0
        %v5954 = vadd.f32 %v5736, %v5953
        %v5955 = vpop.f32.mrb[0].mxu0
        %v5956 = vpop.f32.mrb[0].mxu0
        %5957 = vdwg.mxu0
        %5958 = vmatprep.subr.bf16.mxu0 %v5333
        %5959 = vmatpush1.bf16.msra.mxu0 %v5332
        %5960 = vmatprep.subr.bf16.mxu0 %v5341
        %5961 = vmatpush1.bf16.msra.mxu0 %v5340
        %5962 = vmatprep.subr.bf16.mxu0 %v5349
        %5963 = vmatpush1.bf16.msra.mxu0 %v5348
        %5964 = vmatprep.subr.bf16.mxu0 %v5357
        %5965 = vmatpush1.bf16.msra.mxu0 %v5356
        %5966 = vmatprep.subr.bf16.mxu0 %v5365
        %5967 = vmatpush1.bf16.msra.mxu0 %v5364
        %5968 = vmatprep.subr.bf16.mxu0 %v5373
        %5969 = vmatpush1.bf16.msra.mxu0 %v5372
        %5970 = vmatprep.subr.bf16.mxu0 %v5381
        %5971 = vmatpush1.bf16.msra.mxu0 %v5380
        %5972 = vmatprep.subr.bf16.mxu0 %v5389
        %5973 = vmatpush1.bf16.msra.mxu0 %v5388
        %5974 = vmatprep.subr.bf16.mxu0 %v5397
        %5975 = vmatpush1.bf16.msra.mxu0 %v5396
        %5976 = vmatprep.subr.bf16.mxu0 %v5405
        %5977 = vmatpush1.bf16.msra.mxu0 %v5404
        %5978 = vmatprep.subr.bf16.mxu0 %v5413
        %5979 = vmatpush1.bf16.msra.mxu0 %v5412
        %5980 = vmatprep.subr.bf16.mxu0 %v5421
        %5981 = vmatpush1.bf16.msra.mxu0 %v5420
        %5982 = vmatprep.subr.bf16.mxu0 %v5429
        %5983 = vmatpush1.bf16.msra.mxu0 %v5428
        %5984 = vmatprep.subr.bf16.mxu0 %v5437
        %5985 = vmatpush1.bf16.msra.mxu0 %v5436
        %5986 = vmatprep.subr.bf16.mxu0 %v5445
        %5987 = vmatpush1.bf16.msra.mxu0 %v5444
        %5988 = vmatprep.subr.bf16.mxu0 %v5453
        %5989 = vmatpush1.bf16.msra.mxu0 %v5452
        %5990 = vmatprep.mubr.bf16.mxu0 %v4174
        %5991 = vmatmul.mubr.bf16.gmra.mrb[0].mxu0 %v4173
        %v5992 = vpop.f32.mrb[0].mxu0
        %v5993 = vadd.f32 %v5952, %v5992
        %v5994 = vpop.f32.mrb[0].mxu0
        %v5995 = vadd.f32 %v5954, %v5994
        %v5996 = vpop.f32.mrb[0].mxu0
        %v5997 = vpop.f32.mrb[0].mxu0
        %5998 = vdwg.mxu0
        %5999 = vmatprep.subr.bf16.mxu0 %v5207
        %6000 = vmatpush1.bf16.msra.mxu0 %v5206
        %6001 = vmatprep.subr.bf16.mxu0 %v5215
        %6002 = vmatpush1.bf16.msra.mxu0 %v5214
        %6003 = vmatprep.subr.bf16.mxu0 %v5223
        %6004 = vmatpush1.bf16.msra.mxu0 %v5222
        %6005 = vmatprep.subr.bf16.mxu0 %v5231
        %6006 = vmatpush1.bf16.msra.mxu0 %v5230
        %6007 = vmatprep.subr.bf16.mxu0 %v5239
        %6008 = vmatpush1.bf16.msra.mxu0 %v5238
        %6009 = vmatprep.subr.bf16.mxu0 %v5247
        %6010 = vmatpush1.bf16.msra.mxu0 %v5246
        %6011 = vmatprep.subr.bf16.mxu0 %v5255
        %6012 = vmatpush1.bf16.msra.mxu0 %v5254
        %6013 = vmatprep.subr.bf16.mxu0 %v5263
        %6014 = vmatpush1.bf16.msra.mxu0 %v5262
        %6015 = vmatprep.subr.bf16.mxu0 %v5271
        %6016 = vmatpush1.bf16.msra.mxu0 %v5270
        %6017 = vmatprep.subr.bf16.mxu0 %v5279
        %6018 = vmatpush1.bf16.msra.mxu0 %v5278
        %6019 = vmatprep.subr.bf16.mxu0 %v5287
        %6020 = vmatpush1.bf16.msra.mxu0 %v5286
        %6021 = vmatprep.subr.bf16.mxu0 %v5295
        %6022 = vmatpush1.bf16.msra.mxu0 %v5294
        %6023 = vmatprep.subr.bf16.mxu0 %v5303
        %6024 = vmatpush1.bf16.msra.mxu0 %v5302
        %6025 = vmatprep.subr.bf16.mxu0 %v5311
        %6026 = vmatpush1.bf16.msra.mxu0 %v5310
        %6027 = vmatprep.subr.bf16.mxu0 %v5319
        %6028 = vmatpush1.bf16.msra.mxu0 %v5318
        %6029 = vmatprep.subr.bf16.mxu0 %v5327
        %6030 = vmatpush1.bf16.msra.mxu0 %v5326
        %6031 = vmatprep.mubr.bf16.mxu0 %v4172
        %6032 = vmatmul.mubr.bf16.gmra.mrb[0].mxu0 %v4171
        %v6033 = vpop.f32.mrb[0].mxu0
        %v6034 = vadd.f32 %v5740, %v6033
        %v6035 = vpop.f32.mrb[0].mxu0
        %v6036 = vadd.f32 %v5744, %v6035
        %v6037 = vpop.f32.mrb[0].mxu0
        %v6038 = vpop.f32.mrb[0].mxu0
        %6039 = vdwg.mxu0
        %6040 = vmatprep.subr.bf16.mxu0 %v5335
        %6041 = vmatpush1.bf16.msra.mxu0 %v5334
        %6042 = vmatprep.subr.bf16.mxu0 %v5343
        %6043 = vmatpush1.bf16.msra.mxu0 %v5342
        %6044 = vmatprep.subr.bf16.mxu0 %v5351
        %6045 = vmatpush1.bf16.msra.mxu0 %v5350
        %6046 = vmatprep.subr.bf16.mxu0 %v5359
        %6047 = vmatpush1.bf16.msra.mxu0 %v5358
        %6048 = vmatprep.subr.bf16.mxu0 %v5367
        %6049 = vmatpush1.bf16.msra.mxu0 %v5366
        %6050 = vmatprep.subr.bf16.mxu0 %v5375
        %6051 = vmatpush1.bf16.msra.mxu0 %v5374
        %6052 = vmatprep.subr.bf16.mxu0 %v5383
        %6053 = vmatpush1.bf16.msra.mxu0 %v5382
        %6054 = vmatprep.subr.bf16.mxu0 %v5391
        %6055 = vmatpush1.bf16.msra.mxu0 %v5390
        %6056 = vmatprep.subr.bf16.mxu0 %v5399
        %6057 = vmatpush1.bf16.msra.mxu0 %v5398
        %6058 = vmatprep.subr.bf16.mxu0 %v5407
        %6059 = vmatpush1.bf16.msra.mxu0 %v5406
        %6060 = vmatprep.subr.bf16.mxu0 %v5415
        %6061 = vmatpush1.bf16.msra.mxu0 %v5414
        %6062 = vmatprep.subr.bf16.mxu0 %v5423
        %6063 = vmatpush1.bf16.msra.mxu0 %v5422
        %6064 = vmatprep.subr.bf16.mxu0 %v5431
        %6065 = vmatpush1.bf16.msra.mxu0 %v5430
        %6066 = vmatprep.subr.bf16.mxu0 %v5439
        %6067 = vmatpush1.bf16.msra.mxu0 %v5438
        %6068 = vmatprep.subr.bf16.mxu0 %v5447
        %6069 = vmatpush1.bf16.msra.mxu0 %v5446
        %6070 = vmatprep.subr.bf16.mxu0 %v5455
        %6071 = vmatpush1.bf16.msra.mxu0 %v5454
        %6072 = vmatprep.mubr.bf16.mxu0 %v4174
        %6073 = vmatmul.mubr.bf16.gmra.mrb[0].mxu0 %v4173
        %v6074 = vpop.f32.mrb[0].mxu0
        %v6075 = vadd.f32 %v6034, %v6074
        %v6076 = vpop.f32.mrb[0].mxu0
        %v6077 = vadd.f32 %v6036, %v6076
        %v6078 = vpop.f32.mrb[0].mxu0
        %v6079 = vpop.f32.mrb[0].mxu0
        %6080 = vdwg.mxu0
        %v6081 = vmul.f32 %v5829, 0.5
        %v6082 = vmul.f32 %v5831, 0.5
        %v6083 = vmul.f32 %v5911, 0.5
        %v6084 = vmul.f32 %v5913, 0.5
        %v6085 = vmul.f32 %v5993, 0.5
        %v6086 = vmul.f32 %v5995, 0.5
        %v6087 = vmul.f32 %v6075, 0.5
        %v6088 = vmul.f32 %v6077, 0.5
        %v6089 = vmul.f32 %v5829, 0.70710677
        %v6090 = vmul.f32 %v5831, 0.70710677
        %v6091 = vmul.f32 %v5911, 0.70710677
        %v6092 = vmul.f32 %v5913, 0.70710677
        %v6093 = vmul.f32 %v5993, 0.70710677
        %v6094 = vmul.f32 %v5995, 0.70710677
        %v6095 = vmul.f32 %v6075, 0.70710677
        %v6096 = vmul.f32 %v6077, 0.70710677
        %vm6097 = vcmp.ge.f32.partialorder %v6089, 0.0
        %vm6098 = vcmp.ge.f32.partialorder %v6090, 0.0
        %vm6099 = vcmp.ge.f32.partialorder %v6091, 0.0
        %vm6100 = vcmp.ge.f32.partialorder %v6092, 0.0
        %vm6101 = vcmp.ge.f32.partialorder %v6093, 0.0
        %vm6102 = vcmp.ge.f32.partialorder %v6094, 0.0
        %vm6103 = vcmp.ge.f32.partialorder %v6095, 0.0
        %vm6104 = vcmp.ge.f32.partialorder %v6096, 0.0
        %v6105 = vsel %vm6097, 1.0, -1.0
        %v6106 = vsel %vm6098, 1.0, -1.0
        %v6107 = vsel %vm6099, 1.0, -1.0
        %v6108 = vsel %vm6100, 1.0, -1.0
        %v6109 = vsel %vm6101, 1.0, -1.0
        %v6110 = vsel %vm6102, 1.0, -1.0
        %v6111 = vsel %vm6103, 1.0, -1.0
        %v6112 = vsel %vm6104, 1.0, -1.0
        %v6113 = vand.u32 2147483647, %v6089
        %v6114 = vand.u32 2147483647, %v6090
        %v6115 = vand.u32 2147483647, %v6091
        %v6116 = vand.u32 2147483647, %v6092
        %v6117 = vand.u32 2147483647, %v6093
        %v6118 = vand.u32 2147483647, %v6094
        %v6119 = vand.u32 2147483647, %v6095
        %v6120 = vand.u32 2147483647, %v6096
        %v6121 = vmul.f32 %v6113, 0.3275911
        %v6122 = vmul.f32 %v6114, 0.3275911
        %v6123 = vmul.f32 %v6115, 0.3275911
        %v6124 = vmul.f32 %v6116, 0.3275911
        %v6125 = vmul.f32 %v6117, 0.3275911
        %v6126 = vmul.f32 %v6118, 0.3275911
        %v6127 = vmul.f32 %v6119, 0.3275911
        %v6128 = vmul.f32 %v6120, 0.3275911
        %v6129 = vadd.f32 %v6121, 1.0
        %v6130 = vadd.f32 %v6122, 1.0
        %v6131 = vadd.f32 %v6123, 1.0
        %v6132 = vadd.f32 %v6124, 1.0
        %v6133 = vadd.f32 %v6125, 1.0
        %v6134 = vadd.f32 %v6126, 1.0
        %v6135 = vadd.f32 %v6127, 1.0
        %v6136 = vadd.f32 %v6128, 1.0
        %v6137 = vrcp.pop %v6129
        %v6138 = vrcp.pop %v6130
        %v6139 = vrcp.pop %v6131
        %v6140 = vrcp.pop %v6132
        %v6141 = vrcp.pop %v6133
        %v6142 = vrcp.pop %v6134
        %v6143 = vrcp.pop %v6135
        %v6144 = vrcp.pop %v6136
        %v6145 = vmul.f32 %v6137, 1.0614054
        %v6146 = vmul.f32 %v6138, 1.0614054
        %v6147 = vmul.f32 %v6139, 1.0614054
        %v6148 = vmul.f32 %v6140, 1.0614054
        %v6149 = vmul.f32 %v6141, 1.0614054
        %v6150 = vmul.f32 %v6142, 1.0614054
        %v6151 = vmul.f32 %v6143, 1.0614054
        %v6152 = vmul.f32 %v6144, 1.0614054
        %v6153 = vadd.f32 %v6145, -1.4531521
        %v6154 = vadd.f32 %v6146, -1.4531521
        %v6155 = vadd.f32 %v6147, -1.4531521
        %v6156 = vadd.f32 %v6148, -1.4531521
        %v6157 = vadd.f32 %v6149, -1.4531521
        %v6158 = vadd.f32 %v6150, -1.4531521
        %v6159 = vadd.f32 %v6151, -1.4531521
        %v6160 = vadd.f32 %v6152, -1.4531521
        %v6161 = vmul.f32 %v6153, %v6137
        %v6162 = vmul.f32 %v6154, %v6138
        %v6163 = vmul.f32 %v6155, %v6139
        %v6164 = vmul.f32 %v6156, %v6140
        %v6165 = vmul.f32 %v6157, %v6141
        %v6166 = vmul.f32 %v6158, %v6142
        %v6167 = vmul.f32 %v6159, %v6143
        %v6168 = vmul.f32 %v6160, %v6144
        %v6169 = vadd.f32 %v6161, 1.4214138
        %v6170 = vadd.f32 %v6162, 1.4214138
        %v6171 = vadd.f32 %v6163, 1.4214138
        %v6172 = vadd.f32 %v6164, 1.4214138
        %v6173 = vadd.f32 %v6165, 1.4214138
        %v6174 = vadd.f32 %v6166, 1.4214138
        %v6175 = vadd.f32 %v6167, 1.4214138
        %v6176 = vadd.f32 %v6168, 1.4214138
        %v6177 = vmul.f32 %v6169, %v6137
        %v6178 = vmul.f32 %v6170, %v6138
        %v6179 = vmul.f32 %v6171, %v6139
        %v6180 = vmul.f32 %v6172, %v6140
        %v6181 = vmul.f32 %v6173, %v6141
        %v6182 = vmul.f32 %v6174, %v6142
        %v6183 = vmul.f32 %v6175, %v6143
        %v6184 = vmul.f32 %v6176, %v6144
        %v6185 = vadd.f32 %v6177, -0.28449672
        %v6186 = vadd.f32 %v6178, -0.28449672
        %v6187 = vadd.f32 %v6179, -0.28449672
        %v6188 = vadd.f32 %v6180, -0.28449672
        %v6189 = vadd.f32 %v6181, -0.28449672
        %v6190 = vadd.f32 %v6182, -0.28449672
        %v6191 = vadd.f32 %v6183, -0.28449672
        %v6192 = vadd.f32 %v6184, -0.28449672
        %v6193 = vmul.f32 %v6185, %v6137
        %v6194 = vmul.f32 %v6186, %v6138
        %v6195 = vmul.f32 %v6187, %v6139
        %v6196 = vmul.f32 %v6188, %v6140
        %v6197 = vmul.f32 %v6189, %v6141
        %v6198 = vmul.f32 %v6190, %v6142
        %v6199 = vmul.f32 %v6191, %v6143
        %v6200 = vmul.f32 %v6192, %v6144
        %v6201 = vadd.f32 %v6193, 0.2548296
        %v6202 = vadd.f32 %v6194, 0.2548296
        %v6203 = vadd.f32 %v6195, 0.2548296
        %v6204 = vadd.f32 %v6196, 0.2548296
        %v6205 = vadd.f32 %v6197, 0.2548296
        %v6206 = vadd.f32 %v6198, 0.2548296
        %v6207 = vadd.f32 %v6199, 0.2548296
        %v6208 = vadd.f32 %v6200, 0.2548296
        %v6209 = vmul.f32 %v6201, %v6137
        %v6210 = vmul.f32 %v6202, %v6138
        %v6211 = vmul.f32 %v6203, %v6139
        %v6212 = vmul.f32 %v6204, %v6140
        %v6213 = vmul.f32 %v6205, %v6141
        %v6214 = vmul.f32 %v6206, %v6142
        %v6215 = vmul.f32 %v6207, %v6143
        %v6216 = vmul.f32 %v6208, %v6144
        %v6217 = vsub.f32 0.0, %v6113
        %v6218 = vsub.f32 0.0, %v6114
        %v6219 = vsub.f32 0.0, %v6115
        %v6220 = vsub.f32 0.0, %v6116
        %v6221 = vsub.f32 0.0, %v6117
        %v6222 = vsub.f32 0.0, %v6118
        %v6223 = vsub.f32 0.0, %v6119
        %v6224 = vsub.f32 0.0, %v6120
        %v6225 = vmul.f32 %v6217, %v6113
        %v6226 = vmul.f32 %v6218, %v6114
        %v6227 = vmul.f32 %v6219, %v6115
        %v6228 = vmul.f32 %v6220, %v6116
        %v6229 = vmul.f32 %v6221, %v6117
        %v6230 = vmul.f32 %v6222, %v6118
        %v6231 = vmul.f32 %v6223, %v6119
        %v6232 = vmul.f32 %v6224, %v6120
        %v6233 = vmul.f32 %v6225, 1.442695
        %v6234 = vpow.pop %v6233
        %v6235 = vmul.f32 %v6226, 1.442695
        %v6236 = vpow.pop %v6235
        %v6237 = vmul.f32 %v6227, 1.442695
        %v6238 = vpow.pop %v6237
        %v6239 = vmul.f32 %v6228, 1.442695
        %v6240 = vpow.pop %v6239
        %v6241 = vmul.f32 %v6229, 1.442695
        %v6242 = vpow.pop %v6241
        %v6243 = vmul.f32 %v6230, 1.442695
        %v6244 = vpow.pop %v6243
        %v6245 = vmul.f32 %v6231, 1.442695
        %v6246 = vpow.pop %v6245
        %v6247 = vmul.f32 %v6232, 1.442695
        %v6248 = vpow.pop %v6247
        %v6249 = vmul.f32 %v6209, %v6234
        %v6250 = vmul.f32 %v6210, %v6236
        %v6251 = vmul.f32 %v6211, %v6238
        %v6252 = vmul.f32 %v6212, %v6240
        %v6253 = vmul.f32 %v6213, %v6242
        %v6254 = vmul.f32 %v6214, %v6244
        %v6255 = vmul.f32 %v6215, %v6246
        %v6256 = vmul.f32 %v6216, %v6248
        %v6257 = vsub.f32 1.0, %v6249
        %v6258 = vsub.f32 1.0, %v6250
        %v6259 = vsub.f32 1.0, %v6251
        %v6260 = vsub.f32 1.0, %v6252
        %v6261 = vsub.f32 1.0, %v6253
        %v6262 = vsub.f32 1.0, %v6254
        %v6263 = vsub.f32 1.0, %v6255
        %v6264 = vsub.f32 1.0, %v6256
        %v6265 = vmul.f32 %v6105, %v6257
        %v6266 = vmul.f32 %v6106, %v6258
        %v6267 = vmul.f32 %v6107, %v6259
        %v6268 = vmul.f32 %v6108, %v6260
        %v6269 = vmul.f32 %v6109, %v6261
        %v6270 = vmul.f32 %v6110, %v6262
        %v6271 = vmul.f32 %v6111, %v6263
        %v6272 = vmul.f32 %v6112, %v6264
        %v6273 = vadd.f32 %v6265, 1.0
        %v6274 = vadd.f32 %v6266, 1.0
        %v6275 = vadd.f32 %v6267, 1.0
        %v6276 = vadd.f32 %v6268, 1.0
        %v6277 = vadd.f32 %v6269, 1.0
        %v6278 = vadd.f32 %v6270, 1.0
        %v6279 = vadd.f32 %v6271, 1.0
        %v6280 = vadd.f32 %v6272, 1.0
        %v6281 = vmul.f32 %v6081, %v6273
        %v6282 = vmul.f32 %v6082, %v6274
        %v6283 = vmul.f32 %v6083, %v6275
        %v6284 = vmul.f32 %v6084, %v6276
        %v6285 = vmul.f32 %v6085, %v6277
        %v6286 = vmul.f32 %v6086, %v6278
        %v6287 = vmul.f32 %v6087, %v6279
        %v6288 = vmul.f32 %v6088, %v6280
        %v6289 = vpack.c.bf16 %v6281, %v6281
        %v6290 = vpack.c.bf16 %v6282, %v6282
        %v6291 = vpack.c.bf16 %v6283, %v6283
        %v6292 = vpack.c.bf16 %v6284, %v6284
        %v6293 = vpack.c.bf16 %v6285, %v6285
        %v6294 = vpack.c.bf16 %v6286, %v6286
        %v6295 = vpack.c.bf16 %v6287, %v6287
        %v6296 = vpack.c.bf16 %v6288, %v6288
        %v6297 = vld [vmem:[#allocation13] sm:$0xff]
        %v6298 = vld [vmem:[#allocation13 + $0x8] sm:$0xff]
        %v6299 = vld [vmem:[#allocation13 + $0x10] sm:$0xff]
        %v6300 = vld [vmem:[#allocation13 + $0x18] sm:$0xff]
        %v6301 = vld [vmem:[#allocation13 + $0x20] sm:$0xff]
        %v6302 = vld [vmem:[#allocation13 + $0x28] sm:$0xff]
        %v6303 = vld [vmem:[#allocation13 + $0x30] sm:$0xff]
        %v6304 = vld [vmem:[#allocation13 + $0x38] sm:$0xff]
        %v6305 = vld [vmem:[#allocation13 + $0x40] sm:$0xff]
        %v6306 = vld [vmem:[#allocation13 + $0x48] sm:$0xff]
        %v6307 = vld [vmem:[#allocation13 + $0x50] sm:$0xff]
        %v6308 = vld [vmem:[#allocation13 + $0x58] sm:$0xff]
        %v6309 = vld [vmem:[#allocation13 + $0x60] sm:$0xff]
        %v6310 = vld [vmem:[#allocation13 + $0x68] sm:$0xff]
        %v6311 = vld [vmem:[#allocation13 + $0x70] sm:$0xff]
        %v6312 = vld [vmem:[#allocation13 + $0x78] sm:$0xff]
        %v6313 = vld [vmem:[#allocation13 + $0x80] sm:$0xff]
        %v6314 = vld [vmem:[#allocation13 + $0x88] sm:$0xff]
        %v6315 = vld [vmem:[#allocation13 + $0x90] sm:$0xff]
        %v6316 = vld [vmem:[#allocation13 + $0x98] sm:$0xff]
        %v6317 = vld [vmem:[#allocation13 + $0xa0] sm:$0xff]
        %v6318 = vld [vmem:[#allocation13 + $0xa8] sm:$0xff]
        %v6319 = vld [vmem:[#allocation13 + $0xb0] sm:$0xff]
        %v6320 = vld [vmem:[#allocation13 + $0xb8] sm:$0xff]
        %v6321 = vld [vmem:[#allocation13 + $0xc0] sm:$0xff]
        %v6322 = vld [vmem:[#allocation13 + $0xc8] sm:$0xff]
        %v6323 = vld [vmem:[#allocation13 + $0xd0] sm:$0xff]
        %v6324 = vld [vmem:[#allocation13 + $0xd8] sm:$0xff]
        %v6325 = vld [vmem:[#allocation13 + $0xe0] sm:$0xff]
        %v6326 = vld [vmem:[#allocation13 + $0xe8] sm:$0xff]
        %v6327 = vld [vmem:[#allocation13 + $0xf0] sm:$0xff]
        %v6328 = vld [vmem:[#allocation13 + $0xf8] sm:$0xff]
        %v6329 = vld [vmem:[#allocation13 + $0x100] sm:$0xff]
        %v6330 = vld [vmem:[#allocation13 + $0x108] sm:$0xff]
        %v6331 = vld [vmem:[#allocation13 + $0x110] sm:$0xff]
        %v6332 = vld [vmem:[#allocation13 + $0x118] sm:$0xff]
        %v6333 = vld [vmem:[#allocation13 + $0x120] sm:$0xff]
        %v6334 = vld [vmem:[#allocation13 + $0x128] sm:$0xff]
        %v6335 = vld [vmem:[#allocation13 + $0x130] sm:$0xff]
        %v6336 = vld [vmem:[#allocation13 + $0x138] sm:$0xff]
        %v6337 = vld [vmem:[#allocation13 + $0x140] sm:$0xff]
        %v6338 = vld [vmem:[#allocation13 + $0x148] sm:$0xff]
        %v6339 = vld [vmem:[#allocation13 + $0x150] sm:$0xff]
        %v6340 = vld [vmem:[#allocation13 + $0x158] sm:$0xff]
        %v6341 = vld [vmem:[#allocation13 + $0x160] sm:$0xff]
        %v6342 = vld [vmem:[#allocation13 + $0x168] sm:$0xff]
        %v6343 = vld [vmem:[#allocation13 + $0x170] sm:$0xff]
        %v6344 = vld [vmem:[#allocation13 + $0x178] sm:$0xff]
        %v6345 = vld [vmem:[#allocation13 + $0x180] sm:$0xff]
        %v6346 = vld [vmem:[#allocation13 + $0x188] sm:$0xff]
        %v6347 = vld [vmem:[#allocation13 + $0x190] sm:$0xff]
        %v6348 = vld [vmem:[#allocation13 + $0x198] sm:$0xff]
        %v6349 = vld [vmem:[#allocation13 + $0x1a0] sm:$0xff]
        %v6350 = vld [vmem:[#allocation13 + $0x1a8] sm:$0xff]
        %v6351 = vld [vmem:[#allocation13 + $0x1b0] sm:$0xff]
        %v6352 = vld [vmem:[#allocation13 + $0x1b8] sm:$0xff]
        %v6353 = vld [vmem:[#allocation13 + $0x1c0] sm:$0xff]
        %v6354 = vld [vmem:[#allocation13 + $0x1c8] sm:$0xff]
        %v6355 = vld [vmem:[#allocation13 + $0x1d0] sm:$0xff]
        %v6356 = vld [vmem:[#allocation13 + $0x1d8] sm:$0xff]
        %v6357 = vld [vmem:[#allocation13 + $0x1e0] sm:$0xff]
        %v6358 = vld [vmem:[#allocation13 + $0x1e8] sm:$0xff]
        %v6359 = vld [vmem:[#allocation13 + $0x1f0] sm:$0xff]
        %v6360 = vld [vmem:[#allocation13 + $0x1f8] sm:$0xff]
        %v6361 = vld [vmem:[#allocation13 + $0x200] sm:$0xff]
        %v6362 = vld [vmem:[#allocation13 + $0x208] sm:$0xff]
        %v6363 = vld [vmem:[#allocation13 + $0x210] sm:$0xff]
        %v6364 = vld [vmem:[#allocation13 + $0x218] sm:$0xff]
        %v6365 = vld [vmem:[#allocation13 + $0x220] sm:$0xff]
        %v6366 = vld [vmem:[#allocation13 + $0x228] sm:$0xff]
        %v6367 = vld [vmem:[#allocation13 + $0x230] sm:$0xff]
        %v6368 = vld [vmem:[#allocation13 + $0x238] sm:$0xff]
        %v6369 = vld [vmem:[#allocation13 + $0x240] sm:$0xff]
        %v6370 = vld [vmem:[#allocation13 + $0x248] sm:$0xff]
        %v6371 = vld [vmem:[#allocation13 + $0x250] sm:$0xff]
        %v6372 = vld [vmem:[#allocation13 + $0x258] sm:$0xff]
        %v6373 = vld [vmem:[#allocation13 + $0x260] sm:$0xff]
        %v6374 = vld [vmem:[#allocation13 + $0x268] sm:$0xff]
        %v6375 = vld [vmem:[#allocation13 + $0x270] sm:$0xff]
        %v6376 = vld [vmem:[#allocation13 + $0x278] sm:$0xff]
        %v6377 = vld [vmem:[#allocation13 + $0x280] sm:$0xff]
        %v6378 = vld [vmem:[#allocation13 + $0x288] sm:$0xff]
        %v6379 = vld [vmem:[#allocation13 + $0x290] sm:$0xff]
        %v6380 = vld [vmem:[#allocation13 + $0x298] sm:$0xff]
        %v6381 = vld [vmem:[#allocation13 + $0x2a0] sm:$0xff]
        %v6382 = vld [vmem:[#allocation13 + $0x2a8] sm:$0xff]
        %v6383 = vld [vmem:[#allocation13 + $0x2b0] sm:$0xff]
        %v6384 = vld [vmem:[#allocation13 + $0x2b8] sm:$0xff]
        %v6385 = vld [vmem:[#allocation13 + $0x2c0] sm:$0xff]
        %v6386 = vld [vmem:[#allocation13 + $0x2c8] sm:$0xff]
        %v6387 = vld [vmem:[#allocation13 + $0x2d0] sm:$0xff]
        %v6388 = vld [vmem:[#allocation13 + $0x2d8] sm:$0xff]
        %v6389 = vld [vmem:[#allocation13 + $0x2e0] sm:$0xff]
        %v6390 = vld [vmem:[#allocation13 + $0x2e8] sm:$0xff]
        %v6391 = vld [vmem:[#allocation13 + $0x2f0] sm:$0xff]
        %v6392 = vld [vmem:[#allocation13 + $0x2f8] sm:$0xff]
        %v6393 = vld [vmem:[#allocation13 + $0x300] sm:$0xff]
        %v6394 = vld [vmem:[#allocation13 + $0x308] sm:$0xff]
        %v6395 = vld [vmem:[#allocation13 + $0x310] sm:$0xff]
        %v6396 = vld [vmem:[#allocation13 + $0x318] sm:$0xff]
        %v6397 = vld [vmem:[#allocation13 + $0x320] sm:$0xff]
        %v6398 = vld [vmem:[#allocation13 + $0x328] sm:$0xff]
        %v6399 = vld [vmem:[#allocation13 + $0x330] sm:$0xff]
        %v6400 = vld [vmem:[#allocation13 + $0x338] sm:$0xff]
        %v6401 = vld [vmem:[#allocation13 + $0x340] sm:$0xff]
        %v6402 = vld [vmem:[#allocation13 + $0x348] sm:$0xff]
        %v6403 = vld [vmem:[#allocation13 + $0x350] sm:$0xff]
        %v6404 = vld [vmem:[#allocation13 + $0x358] sm:$0xff]
        %v6405 = vld [vmem:[#allocation13 + $0x360] sm:$0xff]
        %v6406 = vld [vmem:[#allocation13 + $0x368] sm:$0xff]
        %v6407 = vld [vmem:[#allocation13 + $0x370] sm:$0xff]
        %v6408 = vld [vmem:[#allocation13 + $0x378] sm:$0xff]
        %v6409 = vld [vmem:[#allocation13 + $0x380] sm:$0xff]
        %v6410 = vld [vmem:[#allocation13 + $0x388] sm:$0xff]
        %v6411 = vld [vmem:[#allocation13 + $0x390] sm:$0xff]
        %v6412 = vld [vmem:[#allocation13 + $0x398] sm:$0xff]
        %v6413 = vld [vmem:[#allocation13 + $0x3a0] sm:$0xff]
        %v6414 = vld [vmem:[#allocation13 + $0x3a8] sm:$0xff]
        %v6415 = vld [vmem:[#allocation13 + $0x3b0] sm:$0xff]
        %v6416 = vld [vmem:[#allocation13 + $0x3b8] sm:$0xff]
        %v6417 = vld [vmem:[#allocation13 + $0x3c0] sm:$0xff]
        %v6418 = vld [vmem:[#allocation13 + $0x3c8] sm:$0xff]
        %v6419 = vld [vmem:[#allocation13 + $0x3d0] sm:$0xff]
        %v6420 = vld [vmem:[#allocation13 + $0x3d8] sm:$0xff]
        %v6421 = vld [vmem:[#allocation13 + $0x3e0] sm:$0xff]
        %v6422 = vld [vmem:[#allocation13 + $0x3e8] sm:$0xff]
        %v6423 = vld [vmem:[#allocation13 + $0x3f0] sm:$0xff]
        %v6424 = vld [vmem:[#allocation13 + $0x3f8] sm:$0xff]
        %v6425 = vld [vmem:[#allocation13 + $0x400] sm:$0xff]
        %v6426 = vld [vmem:[#allocation13 + $0x408] sm:$0xff]
        %v6427 = vld [vmem:[#allocation13 + $0x410] sm:$0xff]
        %v6428 = vld [vmem:[#allocation13 + $0x418] sm:$0xff]
        %v6429 = vld [vmem:[#allocation13 + $0x420] sm:$0xff]
        %v6430 = vld [vmem:[#allocation13 + $0x428] sm:$0xff]
        %v6431 = vld [vmem:[#allocation13 + $0x430] sm:$0xff]
        %v6432 = vld [vmem:[#allocation13 + $0x438] sm:$0xff]
        %v6433 = vld [vmem:[#allocation13 + $0x440] sm:$0xff]
        %v6434 = vld [vmem:[#allocation13 + $0x448] sm:$0xff]
        %v6435 = vld [vmem:[#allocation13 + $0x450] sm:$0xff]
        %v6436 = vld [vmem:[#allocation13 + $0x458] sm:$0xff]
        %v6437 = vld [vmem:[#allocation13 + $0x460] sm:$0xff]
        %v6438 = vld [vmem:[#allocation13 + $0x468] sm:$0xff]
        %v6439 = vld [vmem:[#allocation13 + $0x470] sm:$0xff]
        %v6440 = vld [vmem:[#allocation13 + $0x478] sm:$0xff]
        %v6441 = vld [vmem:[#allocation13 + $0x480] sm:$0xff]
        %v6442 = vld [vmem:[#allocation13 + $0x488] sm:$0xff]
        %v6443 = vld [vmem:[#allocation13 + $0x490] sm:$0xff]
        %v6444 = vld [vmem:[#allocation13 + $0x498] sm:$0xff]
        %v6445 = vld [vmem:[#allocation13 + $0x4a0] sm:$0xff]
        %v6446 = vld [vmem:[#allocation13 + $0x4a8] sm:$0xff]
        %v6447 = vld [vmem:[#allocation13 + $0x4b0] sm:$0xff]
        %v6448 = vld [vmem:[#allocation13 + $0x4b8] sm:$0xff]
        %v6449 = vld [vmem:[#allocation13 + $0x4c0] sm:$0xff]
        %v6450 = vld [vmem:[#allocation13 + $0x4c8] sm:$0xff]
        %v6451 = vld [vmem:[#allocation13 + $0x4d0] sm:$0xff]
        %v6452 = vld [vmem:[#allocation13 + $0x4d8] sm:$0xff]
        %v6453 = vld [vmem:[#allocation13 + $0x4e0] sm:$0xff]
        %v6454 = vld [vmem:[#allocation13 + $0x4e8] sm:$0xff]
        %v6455 = vld [vmem:[#allocation13 + $0x4f0] sm:$0xff]
        %v6456 = vld [vmem:[#allocation13 + $0x4f8] sm:$0xff]
        %v6457 = vld [vmem:[#allocation13 + $0x500] sm:$0xff]
        %v6458 = vld [vmem:[#allocation13 + $0x508] sm:$0xff]
        %v6459 = vld [vmem:[#allocation13 + $0x510] sm:$0xff]
        %v6460 = vld [vmem:[#allocation13 + $0x518] sm:$0xff]
        %v6461 = vld [vmem:[#allocation13 + $0x520] sm:$0xff]
        %v6462 = vld [vmem:[#allocation13 + $0x528] sm:$0xff]
        %v6463 = vld [vmem:[#allocation13 + $0x530] sm:$0xff]
        %v6464 = vld [vmem:[#allocation13 + $0x538] sm:$0xff]
        %v6465 = vld [vmem:[#allocation13 + $0x540] sm:$0xff]
        %v6466 = vld [vmem:[#allocation13 + $0x548] sm:$0xff]
        %v6467 = vld [vmem:[#allocation13 + $0x550] sm:$0xff]
        %v6468 = vld [vmem:[#allocation13 + $0x558] sm:$0xff]
        %v6469 = vld [vmem:[#allocation13 + $0x560] sm:$0xff]
        %v6470 = vld [vmem:[#allocation13 + $0x568] sm:$0xff]
        %v6471 = vld [vmem:[#allocation13 + $0x570] sm:$0xff]
        %v6472 = vld [vmem:[#allocation13 + $0x578] sm:$0xff]
        %v6473 = vld [vmem:[#allocation13 + $0x580] sm:$0xff]
        %v6474 = vld [vmem:[#allocation13 + $0x588] sm:$0xff]
        %v6475 = vld [vmem:[#allocation13 + $0x590] sm:$0xff]
        %v6476 = vld [vmem:[#allocation13 + $0x598] sm:$0xff]
        %v6477 = vld [vmem:[#allocation13 + $0x5a0] sm:$0xff]
        %v6478 = vld [vmem:[#allocation13 + $0x5a8] sm:$0xff]
        %v6479 = vld [vmem:[#allocation13 + $0x5b0] sm:$0xff]
        %v6480 = vld [vmem:[#allocation13 + $0x5b8] sm:$0xff]
        %v6481 = vld [vmem:[#allocation13 + $0x5c0] sm:$0xff]
        %v6482 = vld [vmem:[#allocation13 + $0x5c8] sm:$0xff]
        %v6483 = vld [vmem:[#allocation13 + $0x5d0] sm:$0xff]
        %v6484 = vld [vmem:[#allocation13 + $0x5d8] sm:$0xff]
        %v6485 = vld [vmem:[#allocation13 + $0x5e0] sm:$0xff]
        %v6486 = vld [vmem:[#allocation13 + $0x5e8] sm:$0xff]
        %v6487 = vld [vmem:[#allocation13 + $0x5f0] sm:$0xff]
        %v6488 = vld [vmem:[#allocation13 + $0x5f8] sm:$0xff]
        %v6489 = vld [vmem:[#allocation13 + $0x600] sm:$0xff]
        %v6490 = vld [vmem:[#allocation13 + $0x608] sm:$0xff]
        %v6491 = vld [vmem:[#allocation13 + $0x610] sm:$0xff]
        %v6492 = vld [vmem:[#allocation13 + $0x618] sm:$0xff]
        %v6493 = vld [vmem:[#allocation13 + $0x620] sm:$0xff]
        %v6494 = vld [vmem:[#allocation13 + $0x628] sm:$0xff]
        %v6495 = vld [vmem:[#allocation13 + $0x630] sm:$0xff]
        %v6496 = vld [vmem:[#allocation13 + $0x638] sm:$0xff]
        %v6497 = vld [vmem:[#allocation13 + $0x640] sm:$0xff]
        %v6498 = vld [vmem:[#allocation13 + $0x648] sm:$0xff]
        %v6499 = vld [vmem:[#allocation13 + $0x650] sm:$0xff]
        %v6500 = vld [vmem:[#allocation13 + $0x658] sm:$0xff]
        %v6501 = vld [vmem:[#allocation13 + $0x660] sm:$0xff]
        %v6502 = vld [vmem:[#allocation13 + $0x668] sm:$0xff]
        %v6503 = vld [vmem:[#allocation13 + $0x670] sm:$0xff]
        %v6504 = vld [vmem:[#allocation13 + $0x678] sm:$0xff]
        %v6505 = vld [vmem:[#allocation13 + $0x680] sm:$0xff]
        %v6506 = vld [vmem:[#allocation13 + $0x688] sm:$0xff]
        %v6507 = vld [vmem:[#allocation13 + $0x690] sm:$0xff]
        %v6508 = vld [vmem:[#allocation13 + $0x698] sm:$0xff]
        %v6509 = vld [vmem:[#allocation13 + $0x6a0] sm:$0xff]
        %v6510 = vld [vmem:[#allocation13 + $0x6a8] sm:$0xff]
        %v6511 = vld [vmem:[#allocation13 + $0x6b0] sm:$0xff]
        %v6512 = vld [vmem:[#allocation13 + $0x6b8] sm:$0xff]
        %v6513 = vld [vmem:[#allocation13 + $0x6c0] sm:$0xff]
        %v6514 = vld [vmem:[#allocation13 + $0x6c8] sm:$0xff]
        %v6515 = vld [vmem:[#allocation13 + $0x6d0] sm:$0xff]
        %v6516 = vld [vmem:[#allocation13 + $0x6d8] sm:$0xff]
        %v6517 = vld [vmem:[#allocation13 + $0x6e0] sm:$0xff]
        %v6518 = vld [vmem:[#allocation13 + $0x6e8] sm:$0xff]
        %v6519 = vld [vmem:[#allocation13 + $0x6f0] sm:$0xff]
        %v6520 = vld [vmem:[#allocation13 + $0x6f8] sm:$0xff]
        %v6521 = vld [vmem:[#allocation13 + $0x700] sm:$0xff]
        %v6522 = vld [vmem:[#allocation13 + $0x708] sm:$0xff]
        %v6523 = vld [vmem:[#allocation13 + $0x710] sm:$0xff]
        %v6524 = vld [vmem:[#allocation13 + $0x718] sm:$0xff]
        %v6525 = vld [vmem:[#allocation13 + $0x720] sm:$0xff]
        %v6526 = vld [vmem:[#allocation13 + $0x728] sm:$0xff]
        %v6527 = vld [vmem:[#allocation13 + $0x730] sm:$0xff]
        %v6528 = vld [vmem:[#allocation13 + $0x738] sm:$0xff]
        %v6529 = vld [vmem:[#allocation13 + $0x740] sm:$0xff]
        %v6530 = vld [vmem:[#allocation13 + $0x748] sm:$0xff]
        %v6531 = vld [vmem:[#allocation13 + $0x750] sm:$0xff]
        %v6532 = vld [vmem:[#allocation13 + $0x758] sm:$0xff]
        %v6533 = vld [vmem:[#allocation13 + $0x760] sm:$0xff]
        %v6534 = vld [vmem:[#allocation13 + $0x768] sm:$0xff]
        %v6535 = vld [vmem:[#allocation13 + $0x770] sm:$0xff]
        %v6536 = vld [vmem:[#allocation13 + $0x778] sm:$0xff]
        %v6537 = vld [vmem:[#allocation13 + $0x780] sm:$0xff]
        %v6538 = vld [vmem:[#allocation13 + $0x788] sm:$0xff]
        %v6539 = vld [vmem:[#allocation13 + $0x790] sm:$0xff]
        %v6540 = vld [vmem:[#allocation13 + $0x798] sm:$0xff]
        %v6541 = vld [vmem:[#allocation13 + $0x7a0] sm:$0xff]
        %v6542 = vld [vmem:[#allocation13 + $0x7a8] sm:$0xff]
        %v6543 = vld [vmem:[#allocation13 + $0x7b0] sm:$0xff]
        %v6544 = vld [vmem:[#allocation13 + $0x7b8] sm:$0xff]
        %v6545 = vld [vmem:[#allocation13 + $0x7c0] sm:$0xff]
        %v6546 = vld [vmem:[#allocation13 + $0x7c8] sm:$0xff]
        %v6547 = vld [vmem:[#allocation13 + $0x7d0] sm:$0xff]
        %v6548 = vld [vmem:[#allocation13 + $0x7d8] sm:$0xff]
        %v6549 = vld [vmem:[#allocation13 + $0x7e0] sm:$0xff]
        %v6550 = vld [vmem:[#allocation13 + $0x7e8] sm:$0xff]
        %v6551 = vld [vmem:[#allocation13 + $0x7f0] sm:$0xff]
        %v6552 = vld [vmem:[#allocation13 + $0x7f8] sm:$0xff]
        %v6553 = vld [vmem:[#allocation13 + $0x800] sm:$0xff]
        %v6554 = vld [vmem:[#allocation13 + $0x808] sm:$0xff]
        %v6555 = vld [vmem:[#allocation13 + $0x810] sm:$0xff]
        %v6556 = vld [vmem:[#allocation13 + $0x818] sm:$0xff]
        %v6557 = vld [vmem:[#allocation13 + $0x820] sm:$0xff]
        %v6558 = vld [vmem:[#allocation13 + $0x828] sm:$0xff]
        %v6559 = vld [vmem:[#allocation13 + $0x830] sm:$0xff]
        %v6560 = vld [vmem:[#allocation13 + $0x838] sm:$0xff]
        %v6561 = vld [vmem:[#allocation13 + $0x840] sm:$0xff]
        %v6562 = vld [vmem:[#allocation13 + $0x848] sm:$0xff]
        %v6563 = vld [vmem:[#allocation13 + $0x850] sm:$0xff]
        %v6564 = vld [vmem:[#allocation13 + $0x858] sm:$0xff]
        %v6565 = vld [vmem:[#allocation13 + $0x860] sm:$0xff]
        %v6566 = vld [vmem:[#allocation13 + $0x868] sm:$0xff]
        %v6567 = vld [vmem:[#allocation13 + $0x870] sm:$0xff]
        %v6568 = vld [vmem:[#allocation13 + $0x878] sm:$0xff]
        %v6569 = vld [vmem:[#allocation13 + $0x880] sm:$0xff]
        %v6570 = vld [vmem:[#allocation13 + $0x888] sm:$0xff]
        %v6571 = vld [vmem:[#allocation13 + $0x890] sm:$0xff]
        %v6572 = vld [vmem:[#allocation13 + $0x898] sm:$0xff]
        %v6573 = vld [vmem:[#allocation13 + $0x8a0] sm:$0xff]
        %v6574 = vld [vmem:[#allocation13 + $0x8a8] sm:$0xff]
        %v6575 = vld [vmem:[#allocation13 + $0x8b0] sm:$0xff]
        %v6576 = vld [vmem:[#allocation13 + $0x8b8] sm:$0xff]
        %v6577 = vld [vmem:[#allocation13 + $0x8c0] sm:$0xff]
        %v6578 = vld [vmem:[#allocation13 + $0x8c8] sm:$0xff]
        %v6579 = vld [vmem:[#allocation13 + $0x8d0] sm:$0xff]
        %v6580 = vld [vmem:[#allocation13 + $0x8d8] sm:$0xff]
        %v6581 = vld [vmem:[#allocation13 + $0x8e0] sm:$0xff]
        %v6582 = vld [vmem:[#allocation13 + $0x8e8] sm:$0xff]
        %v6583 = vld [vmem:[#allocation13 + $0x8f0] sm:$0xff]
        %v6584 = vld [vmem:[#allocation13 + $0x8f8] sm:$0xff]
        %v6585 = vld [vmem:[#allocation13 + $0x900] sm:$0xff]
        %v6586 = vld [vmem:[#allocation13 + $0x908] sm:$0xff]
        %v6587 = vld [vmem:[#allocation13 + $0x910] sm:$0xff]
        %v6588 = vld [vmem:[#allocation13 + $0x918] sm:$0xff]
        %v6589 = vld [vmem:[#allocation13 + $0x920] sm:$0xff]
        %v6590 = vld [vmem:[#allocation13 + $0x928] sm:$0xff]
        %v6591 = vld [vmem:[#allocation13 + $0x930] sm:$0xff]
        %v6592 = vld [vmem:[#allocation13 + $0x938] sm:$0xff]
        %v6593 = vld [vmem:[#allocation13 + $0x940] sm:$0xff]
        %v6594 = vld [vmem:[#allocation13 + $0x948] sm:$0xff]
        %v6595 = vld [vmem:[#allocation13 + $0x950] sm:$0xff]
        %v6596 = vld [vmem:[#allocation13 + $0x958] sm:$0xff]
        %v6597 = vld [vmem:[#allocation13 + $0x960] sm:$0xff]
        %v6598 = vld [vmem:[#allocation13 + $0x968] sm:$0xff]
        %v6599 = vld [vmem:[#allocation13 + $0x970] sm:$0xff]
        %v6600 = vld [vmem:[#allocation13 + $0x978] sm:$0xff]
        %v6601 = vld [vmem:[#allocation13 + $0x980] sm:$0xff]
        %v6602 = vld [vmem:[#allocation13 + $0x988] sm:$0xff]
        %v6603 = vld [vmem:[#allocation13 + $0x990] sm:$0xff]
        %v6604 = vld [vmem:[#allocation13 + $0x998] sm:$0xff]
        %v6605 = vld [vmem:[#allocation13 + $0x9a0] sm:$0xff]
        %v6606 = vld [vmem:[#allocation13 + $0x9a8] sm:$0xff]
        %v6607 = vld [vmem:[#allocation13 + $0x9b0] sm:$0xff]
        %v6608 = vld [vmem:[#allocation13 + $0x9b8] sm:$0xff]
        %v6609 = vld [vmem:[#allocation13 + $0x9c0] sm:$0xff]
        %v6610 = vld [vmem:[#allocation13 + $0x9c8] sm:$0xff]
        %v6611 = vld [vmem:[#allocation13 + $0x9d0] sm:$0xff]
        %v6612 = vld [vmem:[#allocation13 + $0x9d8] sm:$0xff]
        %v6613 = vld [vmem:[#allocation13 + $0x9e0] sm:$0xff]
        %v6614 = vld [vmem:[#allocation13 + $0x9e8] sm:$0xff]
        %v6615 = vld [vmem:[#allocation13 + $0x9f0] sm:$0xff]
        %v6616 = vld [vmem:[#allocation13 + $0x9f8] sm:$0xff]
        %v6617 = vld [vmem:[#allocation13 + $0xa00] sm:$0xff]
        %v6618 = vld [vmem:[#allocation13 + $0xa08] sm:$0xff]
        %v6619 = vld [vmem:[#allocation13 + $0xa10] sm:$0xff]
        %v6620 = vld [vmem:[#allocation13 + $0xa18] sm:$0xff]
        %v6621 = vld [vmem:[#allocation13 + $0xa20] sm:$0xff]
        %v6622 = vld [vmem:[#allocation13 + $0xa28] sm:$0xff]
        %v6623 = vld [vmem:[#allocation13 + $0xa30] sm:$0xff]
        %v6624 = vld [vmem:[#allocation13 + $0xa38] sm:$0xff]
        %v6625 = vld [vmem:[#allocation13 + $0xa40] sm:$0xff]
        %v6626 = vld [vmem:[#allocation13 + $0xa48] sm:$0xff]
        %v6627 = vld [vmem:[#allocation13 + $0xa50] sm:$0xff]
        %v6628 = vld [vmem:[#allocation13 + $0xa58] sm:$0xff]
        %v6629 = vld [vmem:[#allocation13 + $0xa60] sm:$0xff]
        %v6630 = vld [vmem:[#allocation13 + $0xa68] sm:$0xff]
        %v6631 = vld [vmem:[#allocation13 + $0xa70] sm:$0xff]
        %v6632 = vld [vmem:[#allocation13 + $0xa78] sm:$0xff]
        %v6633 = vld [vmem:[#allocation13 + $0xa80] sm:$0xff]
        %v6634 = vld [vmem:[#allocation13 + $0xa88] sm:$0xff]
        %v6635 = vld [vmem:[#allocation13 + $0xa90] sm:$0xff]
        %v6636 = vld [vmem:[#allocation13 + $0xa98] sm:$0xff]
        %v6637 = vld [vmem:[#allocation13 + $0xaa0] sm:$0xff]
        %v6638 = vld [vmem:[#allocation13 + $0xaa8] sm:$0xff]
        %v6639 = vld [vmem:[#allocation13 + $0xab0] sm:$0xff]
        %v6640 = vld [vmem:[#allocation13 + $0xab8] sm:$0xff]
        %v6641 = vld [vmem:[#allocation13 + $0xac0] sm:$0xff]
        %v6642 = vld [vmem:[#allocation13 + $0xac8] sm:$0xff]
        %v6643 = vld [vmem:[#allocation13 + $0xad0] sm:$0xff]
        %v6644 = vld [vmem:[#allocation13 + $0xad8] sm:$0xff]
        %v6645 = vld [vmem:[#allocation13 + $0xae0] sm:$0xff]
        %v6646 = vld [vmem:[#allocation13 + $0xae8] sm:$0xff]
        %v6647 = vld [vmem:[#allocation13 + $0xaf0] sm:$0xff]
        %v6648 = vld [vmem:[#allocation13 + $0xaf8] sm:$0xff]
        %v6649 = vld [vmem:[#allocation13 + $0xb00] sm:$0xff]
        %v6650 = vld [vmem:[#allocation13 + $0xb08] sm:$0xff]
        %v6651 = vld [vmem:[#allocation13 + $0xb10] sm:$0xff]
        %v6652 = vld [vmem:[#allocation13 + $0xb18] sm:$0xff]
        %v6653 = vld [vmem:[#allocation13 + $0xb20] sm:$0xff]
        %v6654 = vld [vmem:[#allocation13 + $0xb28] sm:$0xff]
        %v6655 = vld [vmem:[#allocation13 + $0xb30] sm:$0xff]
        %v6656 = vld [vmem:[#allocation13 + $0xb38] sm:$0xff]
        %v6657 = vld [vmem:[#allocation13 + $0xb40] sm:$0xff]
        %v6658 = vld [vmem:[#allocation13 + $0xb48] sm:$0xff]
        %v6659 = vld [vmem:[#allocation13 + $0xb50] sm:$0xff]
        %v6660 = vld [vmem:[#allocation13 + $0xb58] sm:$0xff]
        %v6661 = vld [vmem:[#allocation13 + $0xb60] sm:$0xff]
        %v6662 = vld [vmem:[#allocation13 + $0xb68] sm:$0xff]
        %v6663 = vld [vmem:[#allocation13 + $0xb70] sm:$0xff]
        %v6664 = vld [vmem:[#allocation13 + $0xb78] sm:$0xff]
        %v6665 = vld [vmem:[#allocation13 + $0xb80] sm:$0xff]
        %v6666 = vld [vmem:[#allocation13 + $0xb88] sm:$0xff]
        %v6667 = vld [vmem:[#allocation13 + $0xb90] sm:$0xff]
        %v6668 = vld [vmem:[#allocation13 + $0xb98] sm:$0xff]
        %v6669 = vld [vmem:[#allocation13 + $0xba0] sm:$0xff]
        %v6670 = vld [vmem:[#allocation13 + $0xba8] sm:$0xff]
        %v6671 = vld [vmem:[#allocation13 + $0xbb0] sm:$0xff]
        %v6672 = vld [vmem:[#allocation13 + $0xbb8] sm:$0xff]
        %v6673 = vld [vmem:[#allocation13 + $0xbc0] sm:$0xff]
        %v6674 = vld [vmem:[#allocation13 + $0xbc8] sm:$0xff]
        %v6675 = vld [vmem:[#allocation13 + $0xbd0] sm:$0xff]
        %v6676 = vld [vmem:[#allocation13 + $0xbd8] sm:$0xff]
        %v6677 = vld [vmem:[#allocation13 + $0xbe0] sm:$0xff]
        %v6678 = vld [vmem:[#allocation13 + $0xbe8] sm:$0xff]
        %v6679 = vld [vmem:[#allocation13 + $0xbf0] sm:$0xff]
        %v6680 = vld [vmem:[#allocation13 + $0xbf8] sm:$0xff]
        %v6681 = vld [vmem:[#allocation13 + $0xc00] sm:$0xff]
        %v6682 = vld [vmem:[#allocation13 + $0xc08] sm:$0xff]
        %v6683 = vld [vmem:[#allocation13 + $0xc10] sm:$0xff]
        %v6684 = vld [vmem:[#allocation13 + $0xc18] sm:$0xff]
        %v6685 = vld [vmem:[#allocation13 + $0xc20] sm:$0xff]
        %v6686 = vld [vmem:[#allocation13 + $0xc28] sm:$0xff]
        %v6687 = vld [vmem:[#allocation13 + $0xc30] sm:$0xff]
        %v6688 = vld [vmem:[#allocation13 + $0xc38] sm:$0xff]
        %v6689 = vld [vmem:[#allocation13 + $0xc40] sm:$0xff]
        %v6690 = vld [vmem:[#allocation13 + $0xc48] sm:$0xff]
        %v6691 = vld [vmem:[#allocation13 + $0xc50] sm:$0xff]
        %v6692 = vld [vmem:[#allocation13 + $0xc58] sm:$0xff]
        %v6693 = vld [vmem:[#allocation13 + $0xc60] sm:$0xff]
        %v6694 = vld [vmem:[#allocation13 + $0xc68] sm:$0xff]
        %v6695 = vld [vmem:[#allocation13 + $0xc70] sm:$0xff]
        %v6696 = vld [vmem:[#allocation13 + $0xc78] sm:$0xff]
        %v6697 = vld [vmem:[#allocation13 + $0xc80] sm:$0xff]
        %v6698 = vld [vmem:[#allocation13 + $0xc88] sm:$0xff]
        %v6699 = vld [vmem:[#allocation13 + $0xc90] sm:$0xff]
        %v6700 = vld [vmem:[#allocation13 + $0xc98] sm:$0xff]
        %v6701 = vld [vmem:[#allocation13 + $0xca0] sm:$0xff]
        %v6702 = vld [vmem:[#allocation13 + $0xca8] sm:$0xff]
        %v6703 = vld [vmem:[#allocation13 + $0xcb0] sm:$0xff]
        %v6704 = vld [vmem:[#allocation13 + $0xcb8] sm:$0xff]
        %v6705 = vld [vmem:[#allocation13 + $0xcc0] sm:$0xff]
        %v6706 = vld [vmem:[#allocation13 + $0xcc8] sm:$0xff]
        %v6707 = vld [vmem:[#allocation13 + $0xcd0] sm:$0xff]
        %v6708 = vld [vmem:[#allocation13 + $0xcd8] sm:$0xff]
        %v6709 = vld [vmem:[#allocation13 + $0xce0] sm:$0xff]
        %v6710 = vld [vmem:[#allocation13 + $0xce8] sm:$0xff]
        %v6711 = vld [vmem:[#allocation13 + $0xcf0] sm:$0xff]
        %v6712 = vld [vmem:[#allocation13 + $0xcf8] sm:$0xff]
        %v6713 = vld [vmem:[#allocation13 + $0xd00] sm:$0xff]
        %v6714 = vld [vmem:[#allocation13 + $0xd08] sm:$0xff]
        %v6715 = vld [vmem:[#allocation13 + $0xd10] sm:$0xff]
        %v6716 = vld [vmem:[#allocation13 + $0xd18] sm:$0xff]
        %v6717 = vld [vmem:[#allocation13 + $0xd20] sm:$0xff]
        %v6718 = vld [vmem:[#allocation13 + $0xd28] sm:$0xff]
        %v6719 = vld [vmem:[#allocation13 + $0xd30] sm:$0xff]
        %v6720 = vld [vmem:[#allocation13 + $0xd38] sm:$0xff]
        %v6721 = vld [vmem:[#allocation13 + $0xd40] sm:$0xff]
        %v6722 = vld [vmem:[#allocation13 + $0xd48] sm:$0xff]
        %v6723 = vld [vmem:[#allocation13 + $0xd50] sm:$0xff]
        %v6724 = vld [vmem:[#allocation13 + $0xd58] sm:$0xff]
        %v6725 = vld [vmem:[#allocation13 + $0xd60] sm:$0xff]
        %v6726 = vld [vmem:[#allocation13 + $0xd68] sm:$0xff]
        %v6727 = vld [vmem:[#allocation13 + $0xd70] sm:$0xff]
        %v6728 = vld [vmem:[#allocation13 + $0xd78] sm:$0xff]
        %v6729 = vld [vmem:[#allocation13 + $0xd80] sm:$0xff]
        %v6730 = vld [vmem:[#allocation13 + $0xd88] sm:$0xff]
        %v6731 = vld [vmem:[#allocation13 + $0xd90] sm:$0xff]
        %v6732 = vld [vmem:[#allocation13 + $0xd98] sm:$0xff]
        %v6733 = vld [vmem:[#allocation13 + $0xda0] sm:$0xff]
        %v6734 = vld [vmem:[#allocation13 + $0xda8] sm:$0xff]
        %v6735 = vld [vmem:[#allocation13 + $0xdb0] sm:$0xff]
        %v6736 = vld [vmem:[#allocation13 + $0xdb8] sm:$0xff]
        %v6737 = vld [vmem:[#allocation13 + $0xdc0] sm:$0xff]
        %v6738 = vld [vmem:[#allocation13 + $0xdc8] sm:$0xff]
        %v6739 = vld [vmem:[#allocation13 + $0xdd0] sm:$0xff]
        %v6740 = vld [vmem:[#allocation13 + $0xdd8] sm:$0xff]
        %v6741 = vld [vmem:[#allocation13 + $0xde0] sm:$0xff]
        %v6742 = vld [vmem:[#allocation13 + $0xde8] sm:$0xff]
        %v6743 = vld [vmem:[#allocation13 + $0xdf0] sm:$0xff]
        %v6744 = vld [vmem:[#allocation13 + $0xdf8] sm:$0xff]
        %v6745 = vld [vmem:[#allocation13 + $0xe00] sm:$0xff]
        %v6746 = vld [vmem:[#allocation13 + $0xe08] sm:$0xff]
        %v6747 = vld [vmem:[#allocation13 + $0xe10] sm:$0xff]
        %v6748 = vld [vmem:[#allocation13 + $0xe18] sm:$0xff]
        %v6749 = vld [vmem:[#allocation13 + $0xe20] sm:$0xff]
        %v6750 = vld [vmem:[#allocation13 + $0xe28] sm:$0xff]
        %v6751 = vld [vmem:[#allocation13 + $0xe30] sm:$0xff]
        %v6752 = vld [vmem:[#allocation13 + $0xe38] sm:$0xff]
        %v6753 = vld [vmem:[#allocation13 + $0xe40] sm:$0xff]
        %v6754 = vld [vmem:[#allocation13 + $0xe48] sm:$0xff]
        %v6755 = vld [vmem:[#allocation13 + $0xe50] sm:$0xff]
        %v6756 = vld [vmem:[#allocation13 + $0xe58] sm:$0xff]
        %v6757 = vld [vmem:[#allocation13 + $0xe60] sm:$0xff]
        %v6758 = vld [vmem:[#allocation13 + $0xe68] sm:$0xff]
        %v6759 = vld [vmem:[#allocation13 + $0xe70] sm:$0xff]
        %v6760 = vld [vmem:[#allocation13 + $0xe78] sm:$0xff]
        %v6761 = vld [vmem:[#allocation13 + $0xe80] sm:$0xff]
        %v6762 = vld [vmem:[#allocation13 + $0xe88] sm:$0xff]
        %v6763 = vld [vmem:[#allocation13 + $0xe90] sm:$0xff]
        %v6764 = vld [vmem:[#allocation13 + $0xe98] sm:$0xff]
        %v6765 = vld [vmem:[#allocation13 + $0xea0] sm:$0xff]
        %v6766 = vld [vmem:[#allocation13 + $0xea8] sm:$0xff]
        %v6767 = vld [vmem:[#allocation13 + $0xeb0] sm:$0xff]
        %v6768 = vld [vmem:[#allocation13 + $0xeb8] sm:$0xff]
        %v6769 = vld [vmem:[#allocation13 + $0xec0] sm:$0xff]
        %v6770 = vld [vmem:[#allocation13 + $0xec8] sm:$0xff]
        %v6771 = vld [vmem:[#allocation13 + $0xed0] sm:$0xff]
        %v6772 = vld [vmem:[#allocation13 + $0xed8] sm:$0xff]
        %v6773 = vld [vmem:[#allocation13 + $0xee0] sm:$0xff]
        %v6774 = vld [vmem:[#allocation13 + $0xee8] sm:$0xff]
        %v6775 = vld [vmem:[#allocation13 + $0xef0] sm:$0xff]
        %v6776 = vld [vmem:[#allocation13 + $0xef8] sm:$0xff]
        %v6777 = vld [vmem:[#allocation13 + $0xf00] sm:$0xff]
        %v6778 = vld [vmem:[#allocation13 + $0xf08] sm:$0xff]
        %v6779 = vld [vmem:[#allocation13 + $0xf10] sm:$0xff]
        %v6780 = vld [vmem:[#allocation13 + $0xf18] sm:$0xff]
        %v6781 = vld [vmem:[#allocation13 + $0xf20] sm:$0xff]
        %v6782 = vld [vmem:[#allocation13 + $0xf28] sm:$0xff]
        %v6783 = vld [vmem:[#allocation13 + $0xf30] sm:$0xff]
        %v6784 = vld [vmem:[#allocation13 + $0xf38] sm:$0xff]
        %v6785 = vld [vmem:[#allocation13 + $0xf40] sm:$0xff]
        %v6786 = vld [vmem:[#allocation13 + $0xf48] sm:$0xff]
        %v6787 = vld [vmem:[#allocation13 + $0xf50] sm:$0xff]
        %v6788 = vld [vmem:[#allocation13 + $0xf58] sm:$0xff]
        %v6789 = vld [vmem:[#allocation13 + $0xf60] sm:$0xff]
        %v6790 = vld [vmem:[#allocation13 + $0xf68] sm:$0xff]
        %v6791 = vld [vmem:[#allocation13 + $0xf70] sm:$0xff]
        %v6792 = vld [vmem:[#allocation13 + $0xf78] sm:$0xff]
        %v6793 = vld [vmem:[#allocation13 + $0xf80] sm:$0xff]
        %v6794 = vld [vmem:[#allocation13 + $0xf88] sm:$0xff]
        %v6795 = vld [vmem:[#allocation13 + $0xf90] sm:$0xff]
        %v6796 = vld [vmem:[#allocation13 + $0xf98] sm:$0xff]
        %v6797 = vld [vmem:[#allocation13 + $0xfa0] sm:$0xff]
        %v6798 = vld [vmem:[#allocation13 + $0xfa8] sm:$0xff]
        %v6799 = vld [vmem:[#allocation13 + $0xfb0] sm:$0xff]
        %v6800 = vld [vmem:[#allocation13 + $0xfb8] sm:$0xff]
        %v6801 = vld [vmem:[#allocation13 + $0xfc0] sm:$0xff]
        %v6802 = vld [vmem:[#allocation13 + $0xfc8] sm:$0xff]
        %v6803 = vld [vmem:[#allocation13 + $0xfd0] sm:$0xff]
        %v6804 = vld [vmem:[#allocation13 + $0xfd8] sm:$0xff]
        %v6805 = vld [vmem:[#allocation13 + $0xfe0] sm:$0xff]
        %v6806 = vld [vmem:[#allocation13 + $0xfe8] sm:$0xff]
        %v6807 = vld [vmem:[#allocation13 + $0xff0] sm:$0xff]
        %v6808 = vld [vmem:[#allocation13 + $0xff8] sm:$0xff]
        %v6809 = vld [vmem:[#allocation14] sm:$0xff]
        %v7322 = vunpack.c.l.b16 %v6297
        %v7323 = vunpack.c.h.b16 %v6297
        %v7324 = vunpack.c.l.b16 %v6298
        %v7325 = vunpack.c.h.b16 %v6298
        %v7326 = vunpack.c.l.b16 %v6299
        %v7327 = vunpack.c.h.b16 %v6299
        %v7328 = vunpack.c.l.b16 %v6300
        %v7329 = vunpack.c.h.b16 %v6300
        %v7330 = vunpack.c.l.b16 %v6301
        %v7331 = vunpack.c.h.b16 %v6301
        %v7332 = vunpack.c.l.b16 %v6302
        %v7333 = vunpack.c.h.b16 %v6302
        %v7334 = vunpack.c.l.b16 %v6303
        %v7335 = vunpack.c.h.b16 %v6303
        %v7336 = vunpack.c.l.b16 %v6304
        %v7337 = vunpack.c.h.b16 %v6304
        %v7338 = vunpack.c.l.b16 %v6305
        %v7339 = vunpack.c.h.b16 %v6305
        %v7340 = vunpack.c.l.b16 %v6306
        %v7341 = vunpack.c.h.b16 %v6306
        %v7342 = vunpack.c.l.b16 %v6307
        %v7343 = vunpack.c.h.b16 %v6307
        %v7344 = vunpack.c.l.b16 %v6308
        %v7345 = vunpack.c.h.b16 %v6308
        %v7346 = vunpack.c.l.b16 %v6309
        %v7347 = vunpack.c.h.b16 %v6309
        %v7348 = vunpack.c.l.b16 %v6310
        %v7349 = vunpack.c.h.b16 %v6310
        %v7350 = vunpack.c.l.b16 %v6311
        %v7351 = vunpack.c.h.b16 %v6311
        %v7352 = vunpack.c.l.b16 %v6312
        %v7353 = vunpack.c.h.b16 %v6312
        %v7354 = vunpack.c.l.b16 %v6313
        %v7355 = vunpack.c.h.b16 %v6313
        %v7356 = vunpack.c.l.b16 %v6314
        %v7357 = vunpack.c.h.b16 %v6314
        %v7358 = vunpack.c.l.b16 %v6315
        %v7359 = vunpack.c.h.b16 %v6315
        %v7360 = vunpack.c.l.b16 %v6316
        %v7361 = vunpack.c.h.b16 %v6316
        %v7362 = vunpack.c.l.b16 %v6317
        %v7363 = vunpack.c.h.b16 %v6317
        %v7364 = vunpack.c.l.b16 %v6318
        %v7365 = vunpack.c.h.b16 %v6318
        %v7366 = vunpack.c.l.b16 %v6319
        %v7367 = vunpack.c.h.b16 %v6319
        %v7368 = vunpack.c.l.b16 %v6320
        %v7369 = vunpack.c.h.b16 %v6320
        %v7370 = vunpack.c.l.b16 %v6321
        %v7371 = vunpack.c.h.b16 %v6321
        %v7372 = vunpack.c.l.b16 %v6322
        %v7373 = vunpack.c.h.b16 %v6322
        %v7374 = vunpack.c.l.b16 %v6323
        %v7375 = vunpack.c.h.b16 %v6323
        %v7376 = vunpack.c.l.b16 %v6324
        %v7377 = vunpack.c.h.b16 %v6324
        %v7378 = vunpack.c.l.b16 %v6325
        %v7379 = vunpack.c.h.b16 %v6325
        %v7380 = vunpack.c.l.b16 %v6326
        %v7381 = vunpack.c.h.b16 %v6326
        %v7382 = vunpack.c.l.b16 %v6327
        %v7383 = vunpack.c.h.b16 %v6327
        %v7384 = vunpack.c.l.b16 %v6328
        %v7385 = vunpack.c.h.b16 %v6328
        %v7386 = vunpack.c.l.b16 %v6329
        %v7387 = vunpack.c.h.b16 %v6329
        %v7388 = vunpack.c.l.b16 %v6330
        %v7389 = vunpack.c.h.b16 %v6330
        %v7390 = vunpack.c.l.b16 %v6331
        %v7391 = vunpack.c.h.b16 %v6331
        %v7392 = vunpack.c.l.b16 %v6332
        %v7393 = vunpack.c.h.b16 %v6332
        %v7394 = vunpack.c.l.b16 %v6333
        %v7395 = vunpack.c.h.b16 %v6333
        %v7396 = vunpack.c.l.b16 %v6334
        %v7397 = vunpack.c.h.b16 %v6334
        %v7398 = vunpack.c.l.b16 %v6335
        %v7399 = vunpack.c.h.b16 %v6335
        %v7400 = vunpack.c.l.b16 %v6336
        %v7401 = vunpack.c.h.b16 %v6336
        %v7402 = vunpack.c.l.b16 %v6337
        %v7403 = vunpack.c.h.b16 %v6337
        %v7404 = vunpack.c.l.b16 %v6338
        %v7405 = vunpack.c.h.b16 %v6338
        %v7406 = vunpack.c.l.b16 %v6339
        %v7407 = vunpack.c.h.b16 %v6339
        %v7408 = vunpack.c.l.b16 %v6340
        %v7409 = vunpack.c.h.b16 %v6340
        %v7410 = vunpack.c.l.b16 %v6341
        %v7411 = vunpack.c.h.b16 %v6341
        %v7412 = vunpack.c.l.b16 %v6342
        %v7413 = vunpack.c.h.b16 %v6342
        %v7414 = vunpack.c.l.b16 %v6343
        %v7415 = vunpack.c.h.b16 %v6343
        %v7416 = vunpack.c.l.b16 %v6344
        %v7417 = vunpack.c.h.b16 %v6344
        %v7418 = vunpack.c.l.b16 %v6345
        %v7419 = vunpack.c.h.b16 %v6345
        %v7420 = vunpack.c.l.b16 %v6346
        %v7421 = vunpack.c.h.b16 %v6346
        %v7422 = vunpack.c.l.b16 %v6347
        %v7423 = vunpack.c.h.b16 %v6347
        %v7424 = vunpack.c.l.b16 %v6348
        %v7425 = vunpack.c.h.b16 %v6348
        %v7426 = vunpack.c.l.b16 %v6349
        %v7427 = vunpack.c.h.b16 %v6349
        %v7428 = vunpack.c.l.b16 %v6350
        %v7429 = vunpack.c.h.b16 %v6350
        %v7430 = vunpack.c.l.b16 %v6351
        %v7431 = vunpack.c.h.b16 %v6351
        %v7432 = vunpack.c.l.b16 %v6352
        %v7433 = vunpack.c.h.b16 %v6352
        %v7434 = vunpack.c.l.b16 %v6353
        %v7435 = vunpack.c.h.b16 %v6353
        %v7436 = vunpack.c.l.b16 %v6354
        %v7437 = vunpack.c.h.b16 %v6354
        %v7438 = vunpack.c.l.b16 %v6355
        %v7439 = vunpack.c.h.b16 %v6355
        %v7440 = vunpack.c.l.b16 %v6356
        %v7441 = vunpack.c.h.b16 %v6356
        %v7442 = vunpack.c.l.b16 %v6357
        %v7443 = vunpack.c.h.b16 %v6357
        %v7444 = vunpack.c.l.b16 %v6358
        %v7445 = vunpack.c.h.b16 %v6358
        %v7446 = vunpack.c.l.b16 %v6359
        %v7447 = vunpack.c.h.b16 %v6359
        %v7448 = vunpack.c.l.b16 %v6360
        %v7449 = vunpack.c.h.b16 %v6360
        %v7450 = vunpack.c.l.b16 %v6361
        %v7451 = vunpack.c.h.b16 %v6361
        %v7452 = vunpack.c.l.b16 %v6362
        %v7453 = vunpack.c.h.b16 %v6362
        %v7454 = vunpack.c.l.b16 %v6363
        %v7455 = vunpack.c.h.b16 %v6363
        %v7456 = vunpack.c.l.b16 %v6364
        %v7457 = vunpack.c.h.b16 %v6364
        %v7458 = vunpack.c.l.b16 %v6365
        %v7459 = vunpack.c.h.b16 %v6365
        %v7460 = vunpack.c.l.b16 %v6366
        %v7461 = vunpack.c.h.b16 %v6366
        %v7462 = vunpack.c.l.b16 %v6367
        %v7463 = vunpack.c.h.b16 %v6367
        %v7464 = vunpack.c.l.b16 %v6368
        %v7465 = vunpack.c.h.b16 %v6368
        %v7466 = vunpack.c.l.b16 %v6369
        %v7467 = vunpack.c.h.b16 %v6369
        %v7468 = vunpack.c.l.b16 %v6370
        %v7469 = vunpack.c.h.b16 %v6370
        %v7470 = vunpack.c.l.b16 %v6371
        %v7471 = vunpack.c.h.b16 %v6371
        %v7472 = vunpack.c.l.b16 %v6372
        %v7473 = vunpack.c.h.b16 %v6372
        %v7474 = vunpack.c.l.b16 %v6373
        %v7475 = vunpack.c.h.b16 %v6373
        %v7476 = vunpack.c.l.b16 %v6374
        %v7477 = vunpack.c.h.b16 %v6374
        %v7478 = vunpack.c.l.b16 %v6375
        %v7479 = vunpack.c.h.b16 %v6375
        %v7480 = vunpack.c.l.b16 %v6376
        %v7481 = vunpack.c.h.b16 %v6376
        %v7482 = vunpack.c.l.b16 %v6377
        %v7483 = vunpack.c.h.b16 %v6377
        %v7484 = vunpack.c.l.b16 %v6378
        %v7485 = vunpack.c.h.b16 %v6378
        %v7486 = vunpack.c.l.b16 %v6379
        %v7487 = vunpack.c.h.b16 %v6379
        %v7488 = vunpack.c.l.b16 %v6380
        %v7489 = vunpack.c.h.b16 %v6380
        %v7490 = vunpack.c.l.b16 %v6381
        %v7491 = vunpack.c.h.b16 %v6381
        %v7492 = vunpack.c.l.b16 %v6382
        %v7493 = vunpack.c.h.b16 %v6382
        %v7494 = vunpack.c.l.b16 %v6383
        %v7495 = vunpack.c.h.b16 %v6383
        %v7496 = vunpack.c.l.b16 %v6384
        %v7497 = vunpack.c.h.b16 %v6384
        %v7498 = vunpack.c.l.b16 %v6385
        %v7499 = vunpack.c.h.b16 %v6385
        %v7500 = vunpack.c.l.b16 %v6386
        %v7501 = vunpack.c.h.b16 %v6386
        %v7502 = vunpack.c.l.b16 %v6387
        %v7503 = vunpack.c.h.b16 %v6387
        %v7504 = vunpack.c.l.b16 %v6388
        %v7505 = vunpack.c.h.b16 %v6388
        %v7506 = vunpack.c.l.b16 %v6389
        %v7507 = vunpack.c.h.b16 %v6389
        %v7508 = vunpack.c.l.b16 %v6390
        %v7509 = vunpack.c.h.b16 %v6390
        %v7510 = vunpack.c.l.b16 %v6391
        %v7511 = vunpack.c.h.b16 %v6391
        %v7512 = vunpack.c.l.b16 %v6392
        %v7513 = vunpack.c.h.b16 %v6392
        %v7514 = vunpack.c.l.b16 %v6393
        %v7515 = vunpack.c.h.b16 %v6393
        %v7516 = vunpack.c.l.b16 %v6394
        %v7517 = vunpack.c.h.b16 %v6394
        %v7518 = vunpack.c.l.b16 %v6395
        %v7519 = vunpack.c.h.b16 %v6395
        %v7520 = vunpack.c.l.b16 %v6396
        %v7521 = vunpack.c.h.b16 %v6396
        %v7522 = vunpack.c.l.b16 %v6397
        %v7523 = vunpack.c.h.b16 %v6397
        %v7524 = vunpack.c.l.b16 %v6398
        %v7525 = vunpack.c.h.b16 %v6398
        %v7526 = vunpack.c.l.b16 %v6399
        %v7527 = vunpack.c.h.b16 %v6399
        %v7528 = vunpack.c.l.b16 %v6400
        %v7529 = vunpack.c.h.b16 %v6400
        %v7530 = vunpack.c.l.b16 %v6401
        %v7531 = vunpack.c.h.b16 %v6401
        %v7532 = vunpack.c.l.b16 %v6402
        %v7533 = vunpack.c.h.b16 %v6402
        %v7534 = vunpack.c.l.b16 %v6403
        %v7535 = vunpack.c.h.b16 %v6403
        %v7536 = vunpack.c.l.b16 %v6404
        %v7537 = vunpack.c.h.b16 %v6404
        %v7538 = vunpack.c.l.b16 %v6405
        %v7539 = vunpack.c.h.b16 %v6405
        %v7540 = vunpack.c.l.b16 %v6406
        %v7541 = vunpack.c.h.b16 %v6406
        %v7542 = vunpack.c.l.b16 %v6407
        %v7543 = vunpack.c.h.b16 %v6407
        %v7544 = vunpack.c.l.b16 %v6408
        %v7545 = vunpack.c.h.b16 %v6408
        %v7546 = vunpack.c.l.b16 %v6409
        %v7547 = vunpack.c.h.b16 %v6409
        %v7548 = vunpack.c.l.b16 %v6410
        %v7549 = vunpack.c.h.b16 %v6410
        %v7550 = vunpack.c.l.b16 %v6411
        %v7551 = vunpack.c.h.b16 %v6411
        %v7552 = vunpack.c.l.b16 %v6412
        %v7553 = vunpack.c.h.b16 %v6412
        %v7554 = vunpack.c.l.b16 %v6413
        %v7555 = vunpack.c.h.b16 %v6413
        %v7556 = vunpack.c.l.b16 %v6414
        %v7557 = vunpack.c.h.b16 %v6414
        %v7558 = vunpack.c.l.b16 %v6415
        %v7559 = vunpack.c.h.b16 %v6415
        %v7560 = vunpack.c.l.b16 %v6416
        %v7561 = vunpack.c.h.b16 %v6416
        %v7562 = vunpack.c.l.b16 %v6417
        %v7563 = vunpack.c.h.b16 %v6417
        %v7564 = vunpack.c.l.b16 %v6418
        %v7565 = vunpack.c.h.b16 %v6418
        %v7566 = vunpack.c.l.b16 %v6419
        %v7567 = vunpack.c.h.b16 %v6419
        %v7568 = vunpack.c.l.b16 %v6420
        %v7569 = vunpack.c.h.b16 %v6420
        %v7570 = vunpack.c.l.b16 %v6421
        %v7571 = vunpack.c.h.b16 %v6421
        %v7572 = vunpack.c.l.b16 %v6422
        %v7573 = vunpack.c.h.b16 %v6422
        %v7574 = vunpack.c.l.b16 %v6423
        %v7575 = vunpack.c.h.b16 %v6423
        %v7576 = vunpack.c.l.b16 %v6424
        %v7577 = vunpack.c.h.b16 %v6424
        %v7578 = vunpack.c.l.b16 %v6425
        %v7579 = vunpack.c.h.b16 %v6425
        %v7580 = vunpack.c.l.b16 %v6426
        %v7581 = vunpack.c.h.b16 %v6426
        %v7582 = vunpack.c.l.b16 %v6427
        %v7583 = vunpack.c.h.b16 %v6427
        %v7584 = vunpack.c.l.b16 %v6428
        %v7585 = vunpack.c.h.b16 %v6428
        %v7586 = vunpack.c.l.b16 %v6429
        %v7587 = vunpack.c.h.b16 %v6429
        %v7588 = vunpack.c.l.b16 %v6430
        %v7589 = vunpack.c.h.b16 %v6430
        %v7590 = vunpack.c.l.b16 %v6431
        %v7591 = vunpack.c.h.b16 %v6431
        %v7592 = vunpack.c.l.b16 %v6432
        %v7593 = vunpack.c.h.b16 %v6432
        %v7594 = vunpack.c.l.b16 %v6433
        %v7595 = vunpack.c.h.b16 %v6433
        %v7596 = vunpack.c.l.b16 %v6434
        %v7597 = vunpack.c.h.b16 %v6434
        %v7598 = vunpack.c.l.b16 %v6435
        %v7599 = vunpack.c.h.b16 %v6435
        %v7600 = vunpack.c.l.b16 %v6436
        %v7601 = vunpack.c.h.b16 %v6436
        %v7602 = vunpack.c.l.b16 %v6437
        %v7603 = vunpack.c.h.b16 %v6437
        %v7604 = vunpack.c.l.b16 %v6438
        %v7605 = vunpack.c.h.b16 %v6438
        %v7606 = vunpack.c.l.b16 %v6439
        %v7607 = vunpack.c.h.b16 %v6439
        %v7608 = vunpack.c.l.b16 %v6440
        %v7609 = vunpack.c.h.b16 %v6440
        %v7610 = vunpack.c.l.b16 %v6441
        %v7611 = vunpack.c.h.b16 %v6441
        %v7612 = vunpack.c.l.b16 %v6442
        %v7613 = vunpack.c.h.b16 %v6442
        %v7614 = vunpack.c.l.b16 %v6443
        %v7615 = vunpack.c.h.b16 %v6443
        %v7616 = vunpack.c.l.b16 %v6444
        %v7617 = vunpack.c.h.b16 %v6444
        %v7618 = vunpack.c.l.b16 %v6445
        %v7619 = vunpack.c.h.b16 %v6445
        %v7620 = vunpack.c.l.b16 %v6446
        %v7621 = vunpack.c.h.b16 %v6446
        %v7622 = vunpack.c.l.b16 %v6447
        %v7623 = vunpack.c.h.b16 %v6447
        %v7624 = vunpack.c.l.b16 %v6448
        %v7625 = vunpack.c.h.b16 %v6448
        %v7626 = vunpack.c.l.b16 %v6449
        %v7627 = vunpack.c.h.b16 %v6449
        %v7628 = vunpack.c.l.b16 %v6450
        %v7629 = vunpack.c.h.b16 %v6450
        %v7630 = vunpack.c.l.b16 %v6451
        %v7631 = vunpack.c.h.b16 %v6451
        %v7632 = vunpack.c.l.b16 %v6452
        %v7633 = vunpack.c.h.b16 %v6452
        %v7634 = vunpack.c.l.b16 %v6453
        %v7635 = vunpack.c.h.b16 %v6453
        %v7636 = vunpack.c.l.b16 %v6454
        %v7637 = vunpack.c.h.b16 %v6454
        %v7638 = vunpack.c.l.b16 %v6455
        %v7639 = vunpack.c.h.b16 %v6455
        %v7640 = vunpack.c.l.b16 %v6456
        %v7641 = vunpack.c.h.b16 %v6456
        %v7642 = vunpack.c.l.b16 %v6457
        %v7643 = vunpack.c.h.b16 %v6457
        %v7644 = vunpack.c.l.b16 %v6458
        %v7645 = vunpack.c.h.b16 %v6458
        %v7646 = vunpack.c.l.b16 %v6459
        %v7647 = vunpack.c.h.b16 %v6459
        %v7648 = vunpack.c.l.b16 %v6460
        %v7649 = vunpack.c.h.b16 %v6460
        %v7650 = vunpack.c.l.b16 %v6461
        %v7651 = vunpack.c.h.b16 %v6461
        %v7652 = vunpack.c.l.b16 %v6462
        %v7653 = vunpack.c.h.b16 %v6462
        %v7654 = vunpack.c.l.b16 %v6463
        %v7655 = vunpack.c.h.b16 %v6463
        %v7656 = vunpack.c.l.b16 %v6464
        %v7657 = vunpack.c.h.b16 %v6464
        %v7658 = vunpack.c.l.b16 %v6465
        %v7659 = vunpack.c.h.b16 %v6465
        %v7660 = vunpack.c.l.b16 %v6466
        %v7661 = vunpack.c.h.b16 %v6466
        %v7662 = vunpack.c.l.b16 %v6467
        %v7663 = vunpack.c.h.b16 %v6467
        %v7664 = vunpack.c.l.b16 %v6468
        %v7665 = vunpack.c.h.b16 %v6468
        %v7666 = vunpack.c.l.b16 %v6469
        %v7667 = vunpack.c.h.b16 %v6469
        %v7668 = vunpack.c.l.b16 %v6470
        %v7669 = vunpack.c.h.b16 %v6470
        %v7670 = vunpack.c.l.b16 %v6471
        %v7671 = vunpack.c.h.b16 %v6471
        %v7672 = vunpack.c.l.b16 %v6472
        %v7673 = vunpack.c.h.b16 %v6472
        %v7674 = vunpack.c.l.b16 %v6473
        %v7675 = vunpack.c.h.b16 %v6473
        %v7676 = vunpack.c.l.b16 %v6474
        %v7677 = vunpack.c.h.b16 %v6474
        %v7678 = vunpack.c.l.b16 %v6475
        %v7679 = vunpack.c.h.b16 %v6475
        %v7680 = vunpack.c.l.b16 %v6476
        %v7681 = vunpack.c.h.b16 %v6476
        %v7682 = vunpack.c.l.b16 %v6477
        %v7683 = vunpack.c.h.b16 %v6477
        %v7684 = vunpack.c.l.b16 %v6478
        %v7685 = vunpack.c.h.b16 %v6478
        %v7686 = vunpack.c.l.b16 %v6479
        %v7687 = vunpack.c.h.b16 %v6479
        %v7688 = vunpack.c.l.b16 %v6480
        %v7689 = vunpack.c.h.b16 %v6480
        %v7690 = vunpack.c.l.b16 %v6481
        %v7691 = vunpack.c.h.b16 %v6481
        %v7692 = vunpack.c.l.b16 %v6482
        %v7693 = vunpack.c.h.b16 %v6482
        %v7694 = vunpack.c.l.b16 %v6483
        %v7695 = vunpack.c.h.b16 %v6483
        %v7696 = vunpack.c.l.b16 %v6484
        %v7697 = vunpack.c.h.b16 %v6484
        %v7698 = vunpack.c.l.b16 %v6485
        %v7699 = vunpack.c.h.b16 %v6485
        %v7700 = vunpack.c.l.b16 %v6486
        %v7701 = vunpack.c.h.b16 %v6486
        %v7702 = vunpack.c.l.b16 %v6487
        %v7703 = vunpack.c.h.b16 %v6487
        %v7704 = vunpack.c.l.b16 %v6488
        %v7705 = vunpack.c.h.b16 %v6488
        %v7706 = vunpack.c.l.b16 %v6489
        %v7707 = vunpack.c.h.b16 %v6489
        %v7708 = vunpack.c.l.b16 %v6490
        %v7709 = vunpack.c.h.b16 %v6490
        %v7710 = vunpack.c.l.b16 %v6491
        %v7711 = vunpack.c.h.b16 %v6491
        %v7712 = vunpack.c.l.b16 %v6492
        %v7713 = vunpack.c.h.b16 %v6492
        %v7714 = vunpack.c.l.b16 %v6493
        %v7715 = vunpack.c.h.b16 %v6493
        %v7716 = vunpack.c.l.b16 %v6494
        %v7717 = vunpack.c.h.b16 %v6494
        %v7718 = vunpack.c.l.b16 %v6495
        %v7719 = vunpack.c.h.b16 %v6495
        %v7720 = vunpack.c.l.b16 %v6496
        %v7721 = vunpack.c.h.b16 %v6496
        %v7722 = vunpack.c.l.b16 %v6497
        %v7723 = vunpack.c.h.b16 %v6497
        %v7724 = vunpack.c.l.b16 %v6498
        %v7725 = vunpack.c.h.b16 %v6498
        %v7726 = vunpack.c.l.b16 %v6499
        %v7727 = vunpack.c.h.b16 %v6499
        %v7728 = vunpack.c.l.b16 %v6500
        %v7729 = vunpack.c.h.b16 %v6500
        %v7730 = vunpack.c.l.b16 %v6501
        %v7731 = vunpack.c.h.b16 %v6501
        %v7732 = vunpack.c.l.b16 %v6502
        %v7733 = vunpack.c.h.b16 %v6502
        %v7734 = vunpack.c.l.b16 %v6503
        %v7735 = vunpack.c.h.b16 %v6503
        %v7736 = vunpack.c.l.b16 %v6504
        %v7737 = vunpack.c.h.b16 %v6504
        %v7738 = vunpack.c.l.b16 %v6505
        %v7739 = vunpack.c.h.b16 %v6505
        %v7740 = vunpack.c.l.b16 %v6506
        %v7741 = vunpack.c.h.b16 %v6506
        %v7742 = vunpack.c.l.b16 %v6507
        %v7743 = vunpack.c.h.b16 %v6507
        %v7744 = vunpack.c.l.b16 %v6508
        %v7745 = vunpack.c.h.b16 %v6508
        %v7746 = vunpack.c.l.b16 %v6509
        %v7747 = vunpack.c.h.b16 %v6509
        %v7748 = vunpack.c.l.b16 %v6510
        %v7749 = vunpack.c.h.b16 %v6510
        %v7750 = vunpack.c.l.b16 %v6511
        %v7751 = vunpack.c.h.b16 %v6511
        %v7752 = vunpack.c.l.b16 %v6512
        %v7753 = vunpack.c.h.b16 %v6512
        %v7754 = vunpack.c.l.b16 %v6513
        %v7755 = vunpack.c.h.b16 %v6513
        %v7756 = vunpack.c.l.b16 %v6514
        %v7757 = vunpack.c.h.b16 %v6514
        %v7758 = vunpack.c.l.b16 %v6515
        %v7759 = vunpack.c.h.b16 %v6515
        %v7760 = vunpack.c.l.b16 %v6516
        %v7761 = vunpack.c.h.b16 %v6516
        %v7762 = vunpack.c.l.b16 %v6517
        %v7763 = vunpack.c.h.b16 %v6517
        %v7764 = vunpack.c.l.b16 %v6518
        %v7765 = vunpack.c.h.b16 %v6518
        %v7766 = vunpack.c.l.b16 %v6519
        %v7767 = vunpack.c.h.b16 %v6519
        %v7768 = vunpack.c.l.b16 %v6520
        %v7769 = vunpack.c.h.b16 %v6520
        %v7770 = vunpack.c.l.b16 %v6521
        %v7771 = vunpack.c.h.b16 %v6521
        %v7772 = vunpack.c.l.b16 %v6522
        %v7773 = vunpack.c.h.b16 %v6522
        %v7774 = vunpack.c.l.b16 %v6523
        %v7775 = vunpack.c.h.b16 %v6523
        %v7776 = vunpack.c.l.b16 %v6524
        %v7777 = vunpack.c.h.b16 %v6524
        %v7778 = vunpack.c.l.b16 %v6525
        %v7779 = vunpack.c.h.b16 %v6525
        %v7780 = vunpack.c.l.b16 %v6526
        %v7781 = vunpack.c.h.b16 %v6526
        %v7782 = vunpack.c.l.b16 %v6527
        %v7783 = vunpack.c.h.b16 %v6527
        %v7784 = vunpack.c.l.b16 %v6528
        %v7785 = vunpack.c.h.b16 %v6528
        %v7786 = vunpack.c.l.b16 %v6529
        %v7787 = vunpack.c.h.b16 %v6529
        %v7788 = vunpack.c.l.b16 %v6530
        %v7789 = vunpack.c.h.b16 %v6530
        %v7790 = vunpack.c.l.b16 %v6531
        %v7791 = vunpack.c.h.b16 %v6531
        %v7792 = vunpack.c.l.b16 %v6532
        %v7793 = vunpack.c.h.b16 %v6532
        %v7794 = vunpack.c.l.b16 %v6533
        %v7795 = vunpack.c.h.b16 %v6533
        %v7796 = vunpack.c.l.b16 %v6534
        %v7797 = vunpack.c.h.b16 %v6534
        %v7798 = vunpack.c.l.b16 %v6535
        %v7799 = vunpack.c.h.b16 %v6535
        %v7800 = vunpack.c.l.b16 %v6536
        %v7801 = vunpack.c.h.b16 %v6536
        %v7802 = vunpack.c.l.b16 %v6537
        %v7803 = vunpack.c.h.b16 %v6537
        %v7804 = vunpack.c.l.b16 %v6538
        %v7805 = vunpack.c.h.b16 %v6538
        %v7806 = vunpack.c.l.b16 %v6539
        %v7807 = vunpack.c.h.b16 %v6539
        %v7808 = vunpack.c.l.b16 %v6540
        %v7809 = vunpack.c.h.b16 %v6540
        %v7810 = vunpack.c.l.b16 %v6541
        %v7811 = vunpack.c.h.b16 %v6541
        %v7812 = vunpack.c.l.b16 %v6542
        %v7813 = vunpack.c.h.b16 %v6542
        %v7814 = vunpack.c.l.b16 %v6543
        %v7815 = vunpack.c.h.b16 %v6543
        %v7816 = vunpack.c.l.b16 %v6544
        %v7817 = vunpack.c.h.b16 %v6544
        %v7818 = vunpack.c.l.b16 %v6545
        %v7819 = vunpack.c.h.b16 %v6545
        %v7820 = vunpack.c.l.b16 %v6546
        %v7821 = vunpack.c.h.b16 %v6546
        %v7822 = vunpack.c.l.b16 %v6547
        %v7823 = vunpack.c.h.b16 %v6547
        %v7824 = vunpack.c.l.b16 %v6548
        %v7825 = vunpack.c.h.b16 %v6548
        %v7826 = vunpack.c.l.b16 %v6549
        %v7827 = vunpack.c.h.b16 %v6549
        %v7828 = vunpack.c.l.b16 %v6550
        %v7829 = vunpack.c.h.b16 %v6550
        %v7830 = vunpack.c.l.b16 %v6551
        %v7831 = vunpack.c.h.b16 %v6551
        %v7832 = vunpack.c.l.b16 %v6552
        %v7833 = vunpack.c.h.b16 %v6552
        %v7834 = vunpack.c.l.b16 %v6553
        %v7835 = vunpack.c.h.b16 %v6553
        %v7836 = vunpack.c.l.b16 %v6554
        %v7837 = vunpack.c.h.b16 %v6554
        %v7838 = vunpack.c.l.b16 %v6555
        %v7839 = vunpack.c.h.b16 %v6555
        %v7840 = vunpack.c.l.b16 %v6556
        %v7841 = vunpack.c.h.b16 %v6556
        %v7842 = vunpack.c.l.b16 %v6557
        %v7843 = vunpack.c.h.b16 %v6557
        %v7844 = vunpack.c.l.b16 %v6558
        %v7845 = vunpack.c.h.b16 %v6558
        %v7846 = vunpack.c.l.b16 %v6559
        %v7847 = vunpack.c.h.b16 %v6559
        %v7848 = vunpack.c.l.b16 %v6560
        %v7849 = vunpack.c.h.b16 %v6560
        %v7850 = vunpack.c.l.b16 %v6561
        %v7851 = vunpack.c.h.b16 %v6561
        %v7852 = vunpack.c.l.b16 %v6562
        %v7853 = vunpack.c.h.b16 %v6562
        %v7854 = vunpack.c.l.b16 %v6563
        %v7855 = vunpack.c.h.b16 %v6563
        %v7856 = vunpack.c.l.b16 %v6564
        %v7857 = vunpack.c.h.b16 %v6564
        %v7858 = vunpack.c.l.b16 %v6565
        %v7859 = vunpack.c.h.b16 %v6565
        %v7860 = vunpack.c.l.b16 %v6566
        %v7861 = vunpack.c.h.b16 %v6566
        %v7862 = vunpack.c.l.b16 %v6567
        %v7863 = vunpack.c.h.b16 %v6567
        %v7864 = vunpack.c.l.b16 %v6568
        %v7865 = vunpack.c.h.b16 %v6568
        %v7866 = vunpack.c.l.b16 %v6569
        %v7867 = vunpack.c.h.b16 %v6569
        %v7868 = vunpack.c.l.b16 %v6570
        %v7869 = vunpack.c.h.b16 %v6570
        %v7870 = vunpack.c.l.b16 %v6571
        %v7871 = vunpack.c.h.b16 %v6571
        %v7872 = vunpack.c.l.b16 %v6572
        %v7873 = vunpack.c.h.b16 %v6572
        %v7874 = vunpack.c.l.b16 %v6573
        %v7875 = vunpack.c.h.b16 %v6573
        %v7876 = vunpack.c.l.b16 %v6574
        %v7877 = vunpack.c.h.b16 %v6574
        %v7878 = vunpack.c.l.b16 %v6575
        %v7879 = vunpack.c.h.b16 %v6575
        %v7880 = vunpack.c.l.b16 %v6576
        %v7881 = vunpack.c.h.b16 %v6576
        %v7882 = vunpack.c.l.b16 %v6577
        %v7883 = vunpack.c.h.b16 %v6577
        %v7884 = vunpack.c.l.b16 %v6578
        %v7885 = vunpack.c.h.b16 %v6578
        %v7886 = vunpack.c.l.b16 %v6579
        %v7887 = vunpack.c.h.b16 %v6579
        %v7888 = vunpack.c.l.b16 %v6580
        %v7889 = vunpack.c.h.b16 %v6580
        %v7890 = vunpack.c.l.b16 %v6581
        %v7891 = vunpack.c.h.b16 %v6581
        %v7892 = vunpack.c.l.b16 %v6582
        %v7893 = vunpack.c.h.b16 %v6582
        %v7894 = vunpack.c.l.b16 %v6583
        %v7895 = vunpack.c.h.b16 %v6583
        %v7896 = vunpack.c.l.b16 %v6584
        %v7897 = vunpack.c.h.b16 %v6584
        %v7898 = vunpack.c.l.b16 %v6585
        %v7899 = vunpack.c.h.b16 %v6585
        %v7900 = vunpack.c.l.b16 %v6586
        %v7901 = vunpack.c.h.b16 %v6586
        %v7902 = vunpack.c.l.b16 %v6587
        %v7903 = vunpack.c.h.b16 %v6587
        %v7904 = vunpack.c.l.b16 %v6588
        %v7905 = vunpack.c.h.b16 %v6588
        %v7906 = vunpack.c.l.b16 %v6589
        %v7907 = vunpack.c.h.b16 %v6589
        %v7908 = vunpack.c.l.b16 %v6590
        %v7909 = vunpack.c.h.b16 %v6590
        %v7910 = vunpack.c.l.b16 %v6591
        %v7911 = vunpack.c.h.b16 %v6591
        %v7912 = vunpack.c.l.b16 %v6592
        %v7913 = vunpack.c.h.b16 %v6592
        %v7914 = vunpack.c.l.b16 %v6593
        %v7915 = vunpack.c.h.b16 %v6593
        %v7916 = vunpack.c.l.b16 %v6594
        %v7917 = vunpack.c.h.b16 %v6594
        %v7918 = vunpack.c.l.b16 %v6595
        %v7919 = vunpack.c.h.b16 %v6595
        %v7920 = vunpack.c.l.b16 %v6596
        %v7921 = vunpack.c.h.b16 %v6596
        %v7922 = vunpack.c.l.b16 %v6597
        %v7923 = vunpack.c.h.b16 %v6597
        %v7924 = vunpack.c.l.b16 %v6598
        %v7925 = vunpack.c.h.b16 %v6598
        %v7926 = vunpack.c.l.b16 %v6599
        %v7927 = vunpack.c.h.b16 %v6599
        %v7928 = vunpack.c.l.b16 %v6600
        %v7929 = vunpack.c.h.b16 %v6600
        %v7930 = vunpack.c.l.b16 %v6601
        %v7931 = vunpack.c.h.b16 %v6601
        %v7932 = vunpack.c.l.b16 %v6602
        %v7933 = vunpack.c.h.b16 %v6602
        %v7934 = vunpack.c.l.b16 %v6603
        %v7935 = vunpack.c.h.b16 %v6603
        %v7936 = vunpack.c.l.b16 %v6604
        %v7937 = vunpack.c.h.b16 %v6604
        %v7938 = vunpack.c.l.b16 %v6605
        %v7939 = vunpack.c.h.b16 %v6605
        %v7940 = vunpack.c.l.b16 %v6606
        %v7941 = vunpack.c.h.b16 %v6606
        %v7942 = vunpack.c.l.b16 %v6607
        %v7943 = vunpack.c.h.b16 %v6607
        %v7944 = vunpack.c.l.b16 %v6608
        %v7945 = vunpack.c.h.b16 %v6608
        %v7946 = vunpack.c.l.b16 %v6609
        %v7947 = vunpack.c.h.b16 %v6609
        %v7948 = vunpack.c.l.b16 %v6610
        %v7949 = vunpack.c.h.b16 %v6610
        %v7950 = vunpack.c.l.b16 %v6611
        %v7951 = vunpack.c.h.b16 %v6611
        %v7952 = vunpack.c.l.b16 %v6612
        %v7953 = vunpack.c.h.b16 %v6612
        %v7954 = vunpack.c.l.b16 %v6613
        %v7955 = vunpack.c.h.b16 %v6613
        %v7956 = vunpack.c.l.b16 %v6614
        %v7957 = vunpack.c.h.b16 %v6614
        %v7958 = vunpack.c.l.b16 %v6615
        %v7959 = vunpack.c.h.b16 %v6615
        %v7960 = vunpack.c.l.b16 %v6616
        %v7961 = vunpack.c.h.b16 %v6616
        %v7962 = vunpack.c.l.b16 %v6617
        %v7963 = vunpack.c.h.b16 %v6617
        %v7964 = vunpack.c.l.b16 %v6618
        %v7965 = vunpack.c.h.b16 %v6618
        %v7966 = vunpack.c.l.b16 %v6619
        %v7967 = vunpack.c.h.b16 %v6619
        %v7968 = vunpack.c.l.b16 %v6620
        %v7969 = vunpack.c.h.b16 %v6620
        %v7970 = vunpack.c.l.b16 %v6621
        %v7971 = vunpack.c.h.b16 %v6621
        %v7972 = vunpack.c.l.b16 %v6622
        %v7973 = vunpack.c.h.b16 %v6622
        %v7974 = vunpack.c.l.b16 %v6623
        %v7975 = vunpack.c.h.b16 %v6623
        %v7976 = vunpack.c.l.b16 %v6624
        %v7977 = vunpack.c.h.b16 %v6624
        %v7978 = vunpack.c.l.b16 %v6625
        %v7979 = vunpack.c.h.b16 %v6625
        %v7980 = vunpack.c.l.b16 %v6626
        %v7981 = vunpack.c.h.b16 %v6626
        %v7982 = vunpack.c.l.b16 %v6627
        %v7983 = vunpack.c.h.b16 %v6627
        %v7984 = vunpack.c.l.b16 %v6628
        %v7985 = vunpack.c.h.b16 %v6628
        %v7986 = vunpack.c.l.b16 %v6629
        %v7987 = vunpack.c.h.b16 %v6629
        %v7988 = vunpack.c.l.b16 %v6630
        %v7989 = vunpack.c.h.b16 %v6630
        %v7990 = vunpack.c.l.b16 %v6631
        %v7991 = vunpack.c.h.b16 %v6631
        %v7992 = vunpack.c.l.b16 %v6632
        %v7993 = vunpack.c.h.b16 %v6632
        %v7994 = vunpack.c.l.b16 %v6633
        %v7995 = vunpack.c.h.b16 %v6633
        %v7996 = vunpack.c.l.b16 %v6634
        %v7997 = vunpack.c.h.b16 %v6634
        %v7998 = vunpack.c.l.b16 %v6635
        %v7999 = vunpack.c.h.b16 %v6635
        %v8000 = vunpack.c.l.b16 %v6636
        %v8001 = vunpack.c.h.b16 %v6636
        %v8002 = vunpack.c.l.b16 %v6637
        %v8003 = vunpack.c.h.b16 %v6637
        %v8004 = vunpack.c.l.b16 %v6638
        %v8005 = vunpack.c.h.b16 %v6638
        %v8006 = vunpack.c.l.b16 %v6639
        %v8007 = vunpack.c.h.b16 %v6639
        %v8008 = vunpack.c.l.b16 %v6640
        %v8009 = vunpack.c.h.b16 %v6640
        %v8010 = vunpack.c.l.b16 %v6641
        %v8011 = vunpack.c.h.b16 %v6641
        %v8012 = vunpack.c.l.b16 %v6642
        %v8013 = vunpack.c.h.b16 %v6642
        %v8014 = vunpack.c.l.b16 %v6643
        %v8015 = vunpack.c.h.b16 %v6643
        %v8016 = vunpack.c.l.b16 %v6644
        %v8017 = vunpack.c.h.b16 %v6644
        %v8018 = vunpack.c.l.b16 %v6645
        %v8019 = vunpack.c.h.b16 %v6645
        %v8020 = vunpack.c.l.b16 %v6646
        %v8021 = vunpack.c.h.b16 %v6646
        %v8022 = vunpack.c.l.b16 %v6647
        %v8023 = vunpack.c.h.b16 %v6647
        %v8024 = vunpack.c.l.b16 %v6648
        %v8025 = vunpack.c.h.b16 %v6648
        %v8026 = vunpack.c.l.b16 %v6649
        %v8027 = vunpack.c.h.b16 %v6649
        %v8028 = vunpack.c.l.b16 %v6650
        %v8029 = vunpack.c.h.b16 %v6650
        %v8030 = vunpack.c.l.b16 %v6651
        %v8031 = vunpack.c.h.b16 %v6651
        %v8032 = vunpack.c.l.b16 %v6652
        %v8033 = vunpack.c.h.b16 %v6652
        %v8034 = vunpack.c.l.b16 %v6653
        %v8035 = vunpack.c.h.b16 %v6653
        %v8036 = vunpack.c.l.b16 %v6654
        %v8037 = vunpack.c.h.b16 %v6654
        %v8038 = vunpack.c.l.b16 %v6655
        %v8039 = vunpack.c.h.b16 %v6655
        %v8040 = vunpack.c.l.b16 %v6656
        %v8041 = vunpack.c.h.b16 %v6656
        %v8042 = vunpack.c.l.b16 %v6657
        %v8043 = vunpack.c.h.b16 %v6657
        %v8044 = vunpack.c.l.b16 %v6658
        %v8045 = vunpack.c.h.b16 %v6658
        %v8046 = vunpack.c.l.b16 %v6659
        %v8047 = vunpack.c.h.b16 %v6659
        %v8048 = vunpack.c.l.b16 %v6660
        %v8049 = vunpack.c.h.b16 %v6660
        %v8050 = vunpack.c.l.b16 %v6661
        %v8051 = vunpack.c.h.b16 %v6661
        %v8052 = vunpack.c.l.b16 %v6662
        %v8053 = vunpack.c.h.b16 %v6662
        %v8054 = vunpack.c.l.b16 %v6663
        %v8055 = vunpack.c.h.b16 %v6663
        %v8056 = vunpack.c.l.b16 %v6664
        %v8057 = vunpack.c.h.b16 %v6664
        %v8058 = vunpack.c.l.b16 %v6665
        %v8059 = vunpack.c.h.b16 %v6665
        %v8060 = vunpack.c.l.b16 %v6666
        %v8061 = vunpack.c.h.b16 %v6666
        %v8062 = vunpack.c.l.b16 %v6667
        %v8063 = vunpack.c.h.b16 %v6667
        %v8064 = vunpack.c.l.b16 %v6668
        %v8065 = vunpack.c.h.b16 %v6668
        %v8066 = vunpack.c.l.b16 %v6669
        %v8067 = vunpack.c.h.b16 %v6669
        %v8068 = vunpack.c.l.b16 %v6670
        %v8069 = vunpack.c.h.b16 %v6670
        %v8070 = vunpack.c.l.b16 %v6671
        %v8071 = vunpack.c.h.b16 %v6671
        %v8072 = vunpack.c.l.b16 %v6672
        %v8073 = vunpack.c.h.b16 %v6672
        %v8074 = vunpack.c.l.b16 %v6673
        %v8075 = vunpack.c.h.b16 %v6673
        %v8076 = vunpack.c.l.b16 %v6674
        %v8077 = vunpack.c.h.b16 %v6674
        %v8078 = vunpack.c.l.b16 %v6675
        %v8079 = vunpack.c.h.b16 %v6675
        %v8080 = vunpack.c.l.b16 %v6676
        %v8081 = vunpack.c.h.b16 %v6676
        %v8082 = vunpack.c.l.b16 %v6677
        %v8083 = vunpack.c.h.b16 %v6677
        %v8084 = vunpack.c.l.b16 %v6678
        %v8085 = vunpack.c.h.b16 %v6678
        %v8086 = vunpack.c.l.b16 %v6679
        %v8087 = vunpack.c.h.b16 %v6679
        %v8088 = vunpack.c.l.b16 %v6680
        %v8089 = vunpack.c.h.b16 %v6680
        %v8090 = vunpack.c.l.b16 %v6681
        %v8091 = vunpack.c.h.b16 %v6681
        %v8092 = vunpack.c.l.b16 %v6682
        %v8093 = vunpack.c.h.b16 %v6682
        %v8094 = vunpack.c.l.b16 %v6683
        %v8095 = vunpack.c.h.b16 %v6683
        %v8096 = vunpack.c.l.b16 %v6684
        %v8097 = vunpack.c.h.b16 %v6684
        %v8098 = vunpack.c.l.b16 %v6685
        %v8099 = vunpack.c.h.b16 %v6685
        %v8100 = vunpack.c.l.b16 %v6686
        %v8101 = vunpack.c.h.b16 %v6686
        %v8102 = vunpack.c.l.b16 %v6687
        %v8103 = vunpack.c.h.b16 %v6687
        %v8104 = vunpack.c.l.b16 %v6688
        %v8105 = vunpack.c.h.b16 %v6688
        %v8106 = vunpack.c.l.b16 %v6689
        %v8107 = vunpack.c.h.b16 %v6689
        %v8108 = vunpack.c.l.b16 %v6690
        %v8109 = vunpack.c.h.b16 %v6690
        %v8110 = vunpack.c.l.b16 %v6691
        %v8111 = vunpack.c.h.b16 %v6691
        %v8112 = vunpack.c.l.b16 %v6692
        %v8113 = vunpack.c.h.b16 %v6692
        %v8114 = vunpack.c.l.b16 %v6693
        %v8115 = vunpack.c.h.b16 %v6693
        %v8116 = vunpack.c.l.b16 %v6694
        %v8117 = vunpack.c.h.b16 %v6694
        %v8118 = vunpack.c.l.b16 %v6695
        %v8119 = vunpack.c.h.b16 %v6695
        %v8120 = vunpack.c.l.b16 %v6696
        %v8121 = vunpack.c.h.b16 %v6696
        %v8122 = vunpack.c.l.b16 %v6697
        %v8123 = vunpack.c.h.b16 %v6697
        %v8124 = vunpack.c.l.b16 %v6698
        %v8125 = vunpack.c.h.b16 %v6698
        %v8126 = vunpack.c.l.b16 %v6699
        %v8127 = vunpack.c.h.b16 %v6699
        %v8128 = vunpack.c.l.b16 %v6700
        %v8129 = vunpack.c.h.b16 %v6700
        %v8130 = vunpack.c.l.b16 %v6701
        %v8131 = vunpack.c.h.b16 %v6701
        %v8132 = vunpack.c.l.b16 %v6702
        %v8133 = vunpack.c.h.b16 %v6702
        %v8134 = vunpack.c.l.b16 %v6703
        %v8135 = vunpack.c.h.b16 %v6703
        %v8136 = vunpack.c.l.b16 %v6704
        %v8137 = vunpack.c.h.b16 %v6704
        %v8138 = vunpack.c.l.b16 %v6705
        %v8139 = vunpack.c.h.b16 %v6705
        %v8140 = vunpack.c.l.b16 %v6706
        %v8141 = vunpack.c.h.b16 %v6706
        %v8142 = vunpack.c.l.b16 %v6707
        %v8143 = vunpack.c.h.b16 %v6707
        %v8144 = vunpack.c.l.b16 %v6708
        %v8145 = vunpack.c.h.b16 %v6708
        %v8146 = vunpack.c.l.b16 %v6709
        %v8147 = vunpack.c.h.b16 %v6709
        %v8148 = vunpack.c.l.b16 %v6710
        %v8149 = vunpack.c.h.b16 %v6710
        %v8150 = vunpack.c.l.b16 %v6711
        %v8151 = vunpack.c.h.b16 %v6711
        %v8152 = vunpack.c.l.b16 %v6712
        %v8153 = vunpack.c.h.b16 %v6712
        %v8154 = vunpack.c.l.b16 %v6713
        %v8155 = vunpack.c.h.b16 %v6713
        %v8156 = vunpack.c.l.b16 %v6714
        %v8157 = vunpack.c.h.b16 %v6714
        %v8158 = vunpack.c.l.b16 %v6715
        %v8159 = vunpack.c.h.b16 %v6715
        %v8160 = vunpack.c.l.b16 %v6716
        %v8161 = vunpack.c.h.b16 %v6716
        %v8162 = vunpack.c.l.b16 %v6717
        %v8163 = vunpack.c.h.b16 %v6717
        %v8164 = vunpack.c.l.b16 %v6718
        %v8165 = vunpack.c.h.b16 %v6718
        %v8166 = vunpack.c.l.b16 %v6719
        %v8167 = vunpack.c.h.b16 %v6719
        %v8168 = vunpack.c.l.b16 %v6720
        %v8169 = vunpack.c.h.b16 %v6720
        %v8170 = vunpack.c.l.b16 %v6721
        %v8171 = vunpack.c.h.b16 %v6721
        %v8172 = vunpack.c.l.b16 %v6722
        %v8173 = vunpack.c.h.b16 %v6722
        %v8174 = vunpack.c.l.b16 %v6723
        %v8175 = vunpack.c.h.b16 %v6723
        %v8176 = vunpack.c.l.b16 %v6724
        %v8177 = vunpack.c.h.b16 %v6724
        %v8178 = vunpack.c.l.b16 %v6725
        %v8179 = vunpack.c.h.b16 %v6725
        %v8180 = vunpack.c.l.b16 %v6726
        %v8181 = vunpack.c.h.b16 %v6726
        %v8182 = vunpack.c.l.b16 %v6727
        %v8183 = vunpack.c.h.b16 %v6727
        %v8184 = vunpack.c.l.b16 %v6728
        %v8185 = vunpack.c.h.b16 %v6728
        %v8186 = vunpack.c.l.b16 %v6729
        %v8187 = vunpack.c.h.b16 %v6729
        %v8188 = vunpack.c.l.b16 %v6730
        %v8189 = vunpack.c.h.b16 %v6730
        %v8190 = vunpack.c.l.b16 %v6731
        %v8191 = vunpack.c.h.b16 %v6731
        %v8192 = vunpack.c.l.b16 %v6732
        %v8193 = vunpack.c.h.b16 %v6732
        %v8194 = vunpack.c.l.b16 %v6733
        %v8195 = vunpack.c.h.b16 %v6733
        %v8196 = vunpack.c.l.b16 %v6734
        %v8197 = vunpack.c.h.b16 %v6734
        %v8198 = vunpack.c.l.b16 %v6735
        %v8199 = vunpack.c.h.b16 %v6735
        %v8200 = vunpack.c.l.b16 %v6736
        %v8201 = vunpack.c.h.b16 %v6736
        %v8202 = vunpack.c.l.b16 %v6737
        %v8203 = vunpack.c.h.b16 %v6737
        %v8204 = vunpack.c.l.b16 %v6738
        %v8205 = vunpack.c.h.b16 %v6738
        %v8206 = vunpack.c.l.b16 %v6739
        %v8207 = vunpack.c.h.b16 %v6739
        %v8208 = vunpack.c.l.b16 %v6740
        %v8209 = vunpack.c.h.b16 %v6740
        %v8210 = vunpack.c.l.b16 %v6741
        %v8211 = vunpack.c.h.b16 %v6741
        %v8212 = vunpack.c.l.b16 %v6742
        %v8213 = vunpack.c.h.b16 %v6742
        %v8214 = vunpack.c.l.b16 %v6743
        %v8215 = vunpack.c.h.b16 %v6743
        %v8216 = vunpack.c.l.b16 %v6744
        %v8217 = vunpack.c.h.b16 %v6744
        %v8218 = vunpack.c.l.b16 %v6745
        %v8219 = vunpack.c.h.b16 %v6745
        %v8220 = vunpack.c.l.b16 %v6746
        %v8221 = vunpack.c.h.b16 %v6746
        %v8222 = vunpack.c.l.b16 %v6747
        %v8223 = vunpack.c.h.b16 %v6747
        %v8224 = vunpack.c.l.b16 %v6748
        %v8225 = vunpack.c.h.b16 %v6748
        %v8226 = vunpack.c.l.b16 %v6749
        %v8227 = vunpack.c.h.b16 %v6749
        %v8228 = vunpack.c.l.b16 %v6750
        %v8229 = vunpack.c.h.b16 %v6750
        %v8230 = vunpack.c.l.b16 %v6751
        %v8231 = vunpack.c.h.b16 %v6751
        %v8232 = vunpack.c.l.b16 %v6752
        %v8233 = vunpack.c.h.b16 %v6752
        %v8234 = vunpack.c.l.b16 %v6753
        %v8235 = vunpack.c.h.b16 %v6753
        %v8236 = vunpack.c.l.b16 %v6754
        %v8237 = vunpack.c.h.b16 %v6754
        %v8238 = vunpack.c.l.b16 %v6755
        %v8239 = vunpack.c.h.b16 %v6755
        %v8240 = vunpack.c.l.b16 %v6756
        %v8241 = vunpack.c.h.b16 %v6756
        %v8242 = vunpack.c.l.b16 %v6757
        %v8243 = vunpack.c.h.b16 %v6757
        %v8244 = vunpack.c.l.b16 %v6758
        %v8245 = vunpack.c.h.b16 %v6758
        %v8246 = vunpack.c.l.b16 %v6759
        %v8247 = vunpack.c.h.b16 %v6759
        %v8248 = vunpack.c.l.b16 %v6760
        %v8249 = vunpack.c.h.b16 %v6760
        %v8250 = vunpack.c.l.b16 %v6761
        %v8251 = vunpack.c.h.b16 %v6761
        %v8252 = vunpack.c.l.b16 %v6762
        %v8253 = vunpack.c.h.b16 %v6762
        %v8254 = vunpack.c.l.b16 %v6763
        %v8255 = vunpack.c.h.b16 %v6763
        %v8256 = vunpack.c.l.b16 %v6764
        %v8257 = vunpack.c.h.b16 %v6764
        %v8258 = vunpack.c.l.b16 %v6765
        %v8259 = vunpack.c.h.b16 %v6765
        %v8260 = vunpack.c.l.b16 %v6766
        %v8261 = vunpack.c.h.b16 %v6766
        %v8262 = vunpack.c.l.b16 %v6767
        %v8263 = vunpack.c.h.b16 %v6767
        %v8264 = vunpack.c.l.b16 %v6768
        %v8265 = vunpack.c.h.b16 %v6768
        %v8266 = vunpack.c.l.b16 %v6769
        %v8267 = vunpack.c.h.b16 %v6769
        %v8268 = vunpack.c.l.b16 %v6770
        %v8269 = vunpack.c.h.b16 %v6770
        %v8270 = vunpack.c.l.b16 %v6771
        %v8271 = vunpack.c.h.b16 %v6771
        %v8272 = vunpack.c.l.b16 %v6772
        %v8273 = vunpack.c.h.b16 %v6772
        %v8274 = vunpack.c.l.b16 %v6773
        %v8275 = vunpack.c.h.b16 %v6773
        %v8276 = vunpack.c.l.b16 %v6774
        %v8277 = vunpack.c.h.b16 %v6774
        %v8278 = vunpack.c.l.b16 %v6775
        %v8279 = vunpack.c.h.b16 %v6775
        %v8280 = vunpack.c.l.b16 %v6776
        %v8281 = vunpack.c.h.b16 %v6776
        %v8282 = vunpack.c.l.b16 %v6777
        %v8283 = vunpack.c.h.b16 %v6777
        %v8284 = vunpack.c.l.b16 %v6778
        %v8285 = vunpack.c.h.b16 %v6778
        %v8286 = vunpack.c.l.b16 %v6779
        %v8287 = vunpack.c.h.b16 %v6779
        %v8288 = vunpack.c.l.b16 %v6780
        %v8289 = vunpack.c.h.b16 %v6780
        %v8290 = vunpack.c.l.b16 %v6781
        %v8291 = vunpack.c.h.b16 %v6781
        %v8292 = vunpack.c.l.b16 %v6782
        %v8293 = vunpack.c.h.b16 %v6782
        %v8294 = vunpack.c.l.b16 %v6783
        %v8295 = vunpack.c.h.b16 %v6783
        %v8296 = vunpack.c.l.b16 %v6784
        %v8297 = vunpack.c.h.b16 %v6784
        %v8298 = vunpack.c.l.b16 %v6785
        %v8299 = vunpack.c.h.b16 %v6785
        %v8300 = vunpack.c.l.b16 %v6786
        %v8301 = vunpack.c.h.b16 %v6786
        %v8302 = vunpack.c.l.b16 %v6787
        %v8303 = vunpack.c.h.b16 %v6787
        %v8304 = vunpack.c.l.b16 %v6788
        %v8305 = vunpack.c.h.b16 %v6788
        %v8306 = vunpack.c.l.b16 %v6789
        %v8307 = vunpack.c.h.b16 %v6789
        %v8308 = vunpack.c.l.b16 %v6790
        %v8309 = vunpack.c.h.b16 %v6790
        %v8310 = vunpack.c.l.b16 %v6791
        %v8311 = vunpack.c.h.b16 %v6791
        %v8312 = vunpack.c.l.b16 %v6792
        %v8313 = vunpack.c.h.b16 %v6792
        %v8314 = vunpack.c.l.b16 %v6793
        %v8315 = vunpack.c.h.b16 %v6793
        %v8316 = vunpack.c.l.b16 %v6794
        %v8317 = vunpack.c.h.b16 %v6794
        %v8318 = vunpack.c.l.b16 %v6795
        %v8319 = vunpack.c.h.b16 %v6795
        %v8320 = vunpack.c.l.b16 %v6796
        %v8321 = vunpack.c.h.b16 %v6796
        %v8322 = vunpack.c.l.b16 %v6797
        %v8323 = vunpack.c.h.b16 %v6797
        %v8324 = vunpack.c.l.b16 %v6798
        %v8325 = vunpack.c.h.b16 %v6798
        %v8326 = vunpack.c.l.b16 %v6799
        %v8327 = vunpack.c.h.b16 %v6799
        %v8328 = vunpack.c.l.b16 %v6800
        %v8329 = vunpack.c.h.b16 %v6800
        %v8330 = vunpack.c.l.b16 %v6801
        %v8331 = vunpack.c.h.b16 %v6801
        %v8332 = vunpack.c.l.b16 %v6802
        %v8333 = vunpack.c.h.b16 %v6802
        %v8334 = vunpack.c.l.b16 %v6803
        %v8335 = vunpack.c.h.b16 %v6803
        %v8336 = vunpack.c.l.b16 %v6804
        %v8337 = vunpack.c.h.b16 %v6804
        %v8338 = vunpack.c.l.b16 %v6805
        %v8339 = vunpack.c.h.b16 %v6805
        %v8340 = vunpack.c.l.b16 %v6806
        %v8341 = vunpack.c.h.b16 %v6806
        %v8342 = vunpack.c.l.b16 %v6807
        %v8343 = vunpack.c.h.b16 %v6807
        %v8344 = vunpack.c.l.b16 %v6808
        %v8345 = vunpack.c.h.b16 %v6808
        %v8346 = vpack.c.b16 %v7330, %v7322
        %v8347 = vpack.c.b16 %v7331, %v7323
        %v8348 = vpack.c.b16 %v7332, %v7324
        %v8349 = vpack.c.b16 %v7333, %v7325
        %v8350 = vpack.c.b16 %v7334, %v7326
        %v8351 = vpack.c.b16 %v7335, %v7327
        %v8352 = vpack.c.b16 %v7336, %v7328
        %v8353 = vpack.c.b16 %v7337, %v7329
        %v8354 = vpack.c.b16 %v7346, %v7338
        %v8355 = vpack.c.b16 %v7347, %v7339
        %v8356 = vpack.c.b16 %v7348, %v7340
        %v8357 = vpack.c.b16 %v7349, %v7341
        %v8358 = vpack.c.b16 %v7350, %v7342
        %v8359 = vpack.c.b16 %v7351, %v7343
        %v8360 = vpack.c.b16 %v7352, %v7344
        %v8361 = vpack.c.b16 %v7353, %v7345
        %v8362 = vpack.c.b16 %v7362, %v7354
        %v8363 = vpack.c.b16 %v7363, %v7355
        %v8364 = vpack.c.b16 %v7364, %v7356
        %v8365 = vpack.c.b16 %v7365, %v7357
        %v8366 = vpack.c.b16 %v7366, %v7358
        %v8367 = vpack.c.b16 %v7367, %v7359
        %v8368 = vpack.c.b16 %v7368, %v7360
        %v8369 = vpack.c.b16 %v7369, %v7361
        %v8370 = vpack.c.b16 %v7378, %v7370
        %v8371 = vpack.c.b16 %v7379, %v7371
        %v8372 = vpack.c.b16 %v7380, %v7372
        %v8373 = vpack.c.b16 %v7381, %v7373
        %v8374 = vpack.c.b16 %v7382, %v7374
        %v8375 = vpack.c.b16 %v7383, %v7375
        %v8376 = vpack.c.b16 %v7384, %v7376
        %v8377 = vpack.c.b16 %v7385, %v7377
        %v8378 = vpack.c.b16 %v7394, %v7386
        %v8379 = vpack.c.b16 %v7395, %v7387
        %v8380 = vpack.c.b16 %v7396, %v7388
        %v8381 = vpack.c.b16 %v7397, %v7389
        %v8382 = vpack.c.b16 %v7398, %v7390
        %v8383 = vpack.c.b16 %v7399, %v7391
        %v8384 = vpack.c.b16 %v7400, %v7392
        %v8385 = vpack.c.b16 %v7401, %v7393
        %v8386 = vpack.c.b16 %v7410, %v7402
        %v8387 = vpack.c.b16 %v7411, %v7403
        %v8388 = vpack.c.b16 %v7412, %v7404
        %v8389 = vpack.c.b16 %v7413, %v7405
        %v8390 = vpack.c.b16 %v7414, %v7406
        %v8391 = vpack.c.b16 %v7415, %v7407
        %v8392 = vpack.c.b16 %v7416, %v7408
        %v8393 = vpack.c.b16 %v7417, %v7409
        %v8394 = vpack.c.b16 %v7426, %v7418
        %v8395 = vpack.c.b16 %v7427, %v7419
        %v8396 = vpack.c.b16 %v7428, %v7420
        %v8397 = vpack.c.b16 %v7429, %v7421
        %v8398 = vpack.c.b16 %v7430, %v7422
        %v8399 = vpack.c.b16 %v7431, %v7423
        %v8400 = vpack.c.b16 %v7432, %v7424
        %v8401 = vpack.c.b16 %v7433, %v7425
        %v8402 = vpack.c.b16 %v7442, %v7434
        %v8403 = vpack.c.b16 %v7443, %v7435
        %v8404 = vpack.c.b16 %v7444, %v7436
        %v8405 = vpack.c.b16 %v7445, %v7437
        %v8406 = vpack.c.b16 %v7446, %v7438
        %v8407 = vpack.c.b16 %v7447, %v7439
        %v8408 = vpack.c.b16 %v7448, %v7440
        %v8409 = vpack.c.b16 %v7449, %v7441
        %v8410 = vpack.c.b16 %v7458, %v7450
        %v8411 = vpack.c.b16 %v7459, %v7451
        %v8412 = vpack.c.b16 %v7460, %v7452
        %v8413 = vpack.c.b16 %v7461, %v7453
        %v8414 = vpack.c.b16 %v7462, %v7454
        %v8415 = vpack.c.b16 %v7463, %v7455
        %v8416 = vpack.c.b16 %v7464, %v7456
        %v8417 = vpack.c.b16 %v7465, %v7457
        %v8418 = vpack.c.b16 %v7474, %v7466
        %v8419 = vpack.c.b16 %v7475, %v7467
        %v8420 = vpack.c.b16 %v7476, %v7468
        %v8421 = vpack.c.b16 %v7477, %v7469
        %v8422 = vpack.c.b16 %v7478, %v7470
        %v8423 = vpack.c.b16 %v7479, %v7471
        %v8424 = vpack.c.b16 %v7480, %v7472
        %v8425 = vpack.c.b16 %v7481, %v7473
        %v8426 = vpack.c.b16 %v7490, %v7482
        %v8427 = vpack.c.b16 %v7491, %v7483
        %v8428 = vpack.c.b16 %v7492, %v7484
        %v8429 = vpack.c.b16 %v7493, %v7485
        %v8430 = vpack.c.b16 %v7494, %v7486
        %v8431 = vpack.c.b16 %v7495, %v7487
        %v8432 = vpack.c.b16 %v7496, %v7488
        %v8433 = vpack.c.b16 %v7497, %v7489
        %v8434 = vpack.c.b16 %v7506, %v7498
        %v8435 = vpack.c.b16 %v7507, %v7499
        %v8436 = vpack.c.b16 %v7508, %v7500
        %v8437 = vpack.c.b16 %v7509, %v7501
        %v8438 = vpack.c.b16 %v7510, %v7502
        %v8439 = vpack.c.b16 %v7511, %v7503
        %v8440 = vpack.c.b16 %v7512, %v7504
        %v8441 = vpack.c.b16 %v7513, %v7505
        %v8442 = vpack.c.b16 %v7522, %v7514
        %v8443 = vpack.c.b16 %v7523, %v7515
        %v8444 = vpack.c.b16 %v7524, %v7516
        %v8445 = vpack.c.b16 %v7525, %v7517
        %v8446 = vpack.c.b16 %v7526, %v7518
        %v8447 = vpack.c.b16 %v7527, %v7519
        %v8448 = vpack.c.b16 %v7528, %v7520
        %v8449 = vpack.c.b16 %v7529, %v7521
        %v8450 = vpack.c.b16 %v7538, %v7530
        %v8451 = vpack.c.b16 %v7539, %v7531
        %v8452 = vpack.c.b16 %v7540, %v7532
        %v8453 = vpack.c.b16 %v7541, %v7533
        %v8454 = vpack.c.b16 %v7542, %v7534
        %v8455 = vpack.c.b16 %v7543, %v7535
        %v8456 = vpack.c.b16 %v7544, %v7536
        %v8457 = vpack.c.b16 %v7545, %v7537
        %v8458 = vpack.c.b16 %v7554, %v7546
        %v8459 = vpack.c.b16 %v7555, %v7547
        %v8460 = vpack.c.b16 %v7556, %v7548
        %v8461 = vpack.c.b16 %v7557, %v7549
        %v8462 = vpack.c.b16 %v7558, %v7550
        %v8463 = vpack.c.b16 %v7559, %v7551
        %v8464 = vpack.c.b16 %v7560, %v7552
        %v8465 = vpack.c.b16 %v7561, %v7553
        %v8466 = vpack.c.b16 %v7570, %v7562
        %v8467 = vpack.c.b16 %v7571, %v7563
        %v8468 = vpack.c.b16 %v7572, %v7564
        %v8469 = vpack.c.b16 %v7573, %v7565
        %v8470 = vpack.c.b16 %v7574, %v7566
        %v8471 = vpack.c.b16 %v7575, %v7567
        %v8472 = vpack.c.b16 %v7576, %v7568
        %v8473 = vpack.c.b16 %v7577, %v7569
        %v8474 = vpack.c.b16 %v7586, %v7578
        %v8475 = vpack.c.b16 %v7587, %v7579
        %v8476 = vpack.c.b16 %v7588, %v7580
        %v8477 = vpack.c.b16 %v7589, %v7581
        %v8478 = vpack.c.b16 %v7590, %v7582
        %v8479 = vpack.c.b16 %v7591, %v7583
        %v8480 = vpack.c.b16 %v7592, %v7584
        %v8481 = vpack.c.b16 %v7593, %v7585
        %v8482 = vpack.c.b16 %v7602, %v7594
        %v8483 = vpack.c.b16 %v7603, %v7595
        %v8484 = vpack.c.b16 %v7604, %v7596
        %v8485 = vpack.c.b16 %v7605, %v7597
        %v8486 = vpack.c.b16 %v7606, %v7598
        %v8487 = vpack.c.b16 %v7607, %v7599
        %v8488 = vpack.c.b16 %v7608, %v7600
        %v8489 = vpack.c.b16 %v7609, %v7601
        %v8490 = vpack.c.b16 %v7618, %v7610
        %v8491 = vpack.c.b16 %v7619, %v7611
        %v8492 = vpack.c.b16 %v7620, %v7612
        %v8493 = vpack.c.b16 %v7621, %v7613
        %v8494 = vpack.c.b16 %v7622, %v7614
        %v8495 = vpack.c.b16 %v7623, %v7615
        %v8496 = vpack.c.b16 %v7624, %v7616
        %v8497 = vpack.c.b16 %v7625, %v7617
        %v8498 = vpack.c.b16 %v7634, %v7626
        %v8499 = vpack.c.b16 %v7635, %v7627
        %v8500 = vpack.c.b16 %v7636, %v7628
        %v8501 = vpack.c.b16 %v7637, %v7629
        %v8502 = vpack.c.b16 %v7638, %v7630
        %v8503 = vpack.c.b16 %v7639, %v7631
        %v8504 = vpack.c.b16 %v7640, %v7632
        %v8505 = vpack.c.b16 %v7641, %v7633
        %v8506 = vpack.c.b16 %v7650, %v7642
        %v8507 = vpack.c.b16 %v7651, %v7643
        %v8508 = vpack.c.b16 %v7652, %v7644
        %v8509 = vpack.c.b16 %v7653, %v7645
        %v8510 = vpack.c.b16 %v7654, %v7646
        %v8511 = vpack.c.b16 %v7655, %v7647
        %v8512 = vpack.c.b16 %v7656, %v7648
        %v8513 = vpack.c.b16 %v7657, %v7649
        %v8514 = vpack.c.b16 %v7666, %v7658
        %v8515 = vpack.c.b16 %v7667, %v7659
        %v8516 = vpack.c.b16 %v7668, %v7660
        %v8517 = vpack.c.b16 %v7669, %v7661
        %v8518 = vpack.c.b16 %v7670, %v7662
        %v8519 = vpack.c.b16 %v7671, %v7663
        %v8520 = vpack.c.b16 %v7672, %v7664
        %v8521 = vpack.c.b16 %v7673, %v7665
        %v8522 = vpack.c.b16 %v7682, %v7674
        %v8523 = vpack.c.b16 %v7683, %v7675
        %v8524 = vpack.c.b16 %v7684, %v7676
        %v8525 = vpack.c.b16 %v7685, %v7677
        %v8526 = vpack.c.b16 %v7686, %v7678
        %v8527 = vpack.c.b16 %v7687, %v7679
        %v8528 = vpack.c.b16 %v7688, %v7680
        %v8529 = vpack.c.b16 %v7689, %v7681
        %v8530 = vpack.c.b16 %v7698, %v7690
        %v8531 = vpack.c.b16 %v7699, %v7691
        %v8532 = vpack.c.b16 %v7700, %v7692
        %v8533 = vpack.c.b16 %v7701, %v7693
        %v8534 = vpack.c.b16 %v7702, %v7694
        %v8535 = vpack.c.b16 %v7703, %v7695
        %v8536 = vpack.c.b16 %v7704, %v7696
        %v8537 = vpack.c.b16 %v7705, %v7697
        %v8538 = vpack.c.b16 %v7714, %v7706
        %v8539 = vpack.c.b16 %v7715, %v7707
        %v8540 = vpack.c.b16 %v7716, %v7708
        %v8541 = vpack.c.b16 %v7717, %v7709
        %v8542 = vpack.c.b16 %v7718, %v7710
        %v8543 = vpack.c.b16 %v7719, %v7711
        %v8544 = vpack.c.b16 %v7720, %v7712
        %v8545 = vpack.c.b16 %v7721, %v7713
        %v8546 = vpack.c.b16 %v7730, %v7722
        %v8547 = vpack.c.b16 %v7731, %v7723
        %v8548 = vpack.c.b16 %v7732, %v7724
        %v8549 = vpack.c.b16 %v7733, %v7725
        %v8550 = vpack.c.b16 %v7734, %v7726
        %v8551 = vpack.c.b16 %v7735, %v7727
        %v8552 = vpack.c.b16 %v7736, %v7728
        %v8553 = vpack.c.b16 %v7737, %v7729
        %v8554 = vpack.c.b16 %v7746, %v7738
        %v8555 = vpack.c.b16 %v7747, %v7739
        %v8556 = vpack.c.b16 %v7748, %v7740
        %v8557 = vpack.c.b16 %v7749, %v7741
        %v8558 = vpack.c.b16 %v7750, %v7742
        %v8559 = vpack.c.b16 %v7751, %v7743
        %v8560 = vpack.c.b16 %v7752, %v7744
        %v8561 = vpack.c.b16 %v7753, %v7745
        %v8562 = vpack.c.b16 %v7762, %v7754
        %v8563 = vpack.c.b16 %v7763, %v7755
        %v8564 = vpack.c.b16 %v7764, %v7756
        %v8565 = vpack.c.b16 %v7765, %v7757
        %v8566 = vpack.c.b16 %v7766, %v7758
        %v8567 = vpack.c.b16 %v7767, %v7759
        %v8568 = vpack.c.b16 %v7768, %v7760
        %v8569 = vpack.c.b16 %v7769, %v7761
        %v8570 = vpack.c.b16 %v7778, %v7770
        %v8571 = vpack.c.b16 %v7779, %v7771
        %v8572 = vpack.c.b16 %v7780, %v7772
        %v8573 = vpack.c.b16 %v7781, %v7773
        %v8574 = vpack.c.b16 %v7782, %v7774
        %v8575 = vpack.c.b16 %v7783, %v7775
        %v8576 = vpack.c.b16 %v7784, %v7776
        %v8577 = vpack.c.b16 %v7785, %v7777
        %v8578 = vpack.c.b16 %v7794, %v7786
        %v8579 = vpack.c.b16 %v7795, %v7787
        %v8580 = vpack.c.b16 %v7796, %v7788
        %v8581 = vpack.c.b16 %v7797, %v7789
        %v8582 = vpack.c.b16 %v7798, %v7790
        %v8583 = vpack.c.b16 %v7799, %v7791
        %v8584 = vpack.c.b16 %v7800, %v7792
        %v8585 = vpack.c.b16 %v7801, %v7793
        %v8586 = vpack.c.b16 %v7810, %v7802
        %v8587 = vpack.c.b16 %v7811, %v7803
        %v8588 = vpack.c.b16 %v7812, %v7804
        %v8589 = vpack.c.b16 %v7813, %v7805
        %v8590 = vpack.c.b16 %v7814, %v7806
        %v8591 = vpack.c.b16 %v7815, %v7807
        %v8592 = vpack.c.b16 %v7816, %v7808
        %v8593 = vpack.c.b16 %v7817, %v7809
        %v8594 = vpack.c.b16 %v7826, %v7818
        %v8595 = vpack.c.b16 %v7827, %v7819
        %v8596 = vpack.c.b16 %v7828, %v7820
        %v8597 = vpack.c.b16 %v7829, %v7821
        %v8598 = vpack.c.b16 %v7830, %v7822
        %v8599 = vpack.c.b16 %v7831, %v7823
        %v8600 = vpack.c.b16 %v7832, %v7824
        %v8601 = vpack.c.b16 %v7833, %v7825
        %v8602 = vpack.c.b16 %v7842, %v7834
        %v8603 = vpack.c.b16 %v7843, %v7835
        %v8604 = vpack.c.b16 %v7844, %v7836
        %v8605 = vpack.c.b16 %v7845, %v7837
        %v8606 = vpack.c.b16 %v7846, %v7838
        %v8607 = vpack.c.b16 %v7847, %v7839
        %v8608 = vpack.c.b16 %v7848, %v7840
        %v8609 = vpack.c.b16 %v7849, %v7841
        %v8610 = vpack.c.b16 %v7858, %v7850
        %v8611 = vpack.c.b16 %v7859, %v7851
        %v8612 = vpack.c.b16 %v7860, %v7852
        %v8613 = vpack.c.b16 %v7861, %v7853
        %v8614 = vpack.c.b16 %v7862, %v7854
        %v8615 = vpack.c.b16 %v7863, %v7855
        %v8616 = vpack.c.b16 %v7864, %v7856
        %v8617 = vpack.c.b16 %v7865, %v7857
        %v8618 = vpack.c.b16 %v7874, %v7866
        %v8619 = vpack.c.b16 %v7875, %v7867
        %v8620 = vpack.c.b16 %v7876, %v7868
        %v8621 = vpack.c.b16 %v7877, %v7869
        %v8622 = vpack.c.b16 %v7878, %v7870
        %v8623 = vpack.c.b16 %v7879, %v7871
        %v8624 = vpack.c.b16 %v7880, %v7872
        %v8625 = vpack.c.b16 %v7881, %v7873
        %v8626 = vpack.c.b16 %v7890, %v7882
        %v8627 = vpack.c.b16 %v7891, %v7883
        %v8628 = vpack.c.b16 %v7892, %v7884
        %v8629 = vpack.c.b16 %v7893, %v7885
        %v8630 = vpack.c.b16 %v7894, %v7886
        %v8631 = vpack.c.b16 %v7895, %v7887
        %v8632 = vpack.c.b16 %v7896, %v7888
        %v8633 = vpack.c.b16 %v7897, %v7889
        %v8634 = vpack.c.b16 %v7906, %v7898
        %v8635 = vpack.c.b16 %v7907, %v7899
        %v8636 = vpack.c.b16 %v7908, %v7900
        %v8637 = vpack.c.b16 %v7909, %v7901
        %v8638 = vpack.c.b16 %v7910, %v7902
        %v8639 = vpack.c.b16 %v7911, %v7903
        %v8640 = vpack.c.b16 %v7912, %v7904
        %v8641 = vpack.c.b16 %v7913, %v7905
        %v8642 = vpack.c.b16 %v7922, %v7914
        %v8643 = vpack.c.b16 %v7923, %v7915
        %v8644 = vpack.c.b16 %v7924, %v7916
        %v8645 = vpack.c.b16 %v7925, %v7917
        %v8646 = vpack.c.b16 %v7926, %v7918
        %v8647 = vpack.c.b16 %v7927, %v7919
        %v8648 = vpack.c.b16 %v7928, %v7920
        %v8649 = vpack.c.b16 %v7929, %v7921
        %v8650 = vpack.c.b16 %v7938, %v7930
        %v8651 = vpack.c.b16 %v7939, %v7931
        %v8652 = vpack.c.b16 %v7940, %v7932
        %v8653 = vpack.c.b16 %v7941, %v7933
        %v8654 = vpack.c.b16 %v7942, %v7934
        %v8655 = vpack.c.b16 %v7943, %v7935
        %v8656 = vpack.c.b16 %v7944, %v7936
        %v8657 = vpack.c.b16 %v7945, %v7937
        %v8658 = vpack.c.b16 %v7954, %v7946
        %v8659 = vpack.c.b16 %v7955, %v7947
        %v8660 = vpack.c.b16 %v7956, %v7948
        %v8661 = vpack.c.b16 %v7957, %v7949
        %v8662 = vpack.c.b16 %v7958, %v7950
        %v8663 = vpack.c.b16 %v7959, %v7951
        %v8664 = vpack.c.b16 %v7960, %v7952
        %v8665 = vpack.c.b16 %v7961, %v7953
        %v8666 = vpack.c.b16 %v7970, %v7962
        %v8667 = vpack.c.b16 %v7971, %v7963
        %v8668 = vpack.c.b16 %v7972, %v7964
        %v8669 = vpack.c.b16 %v7973, %v7965
        %v8670 = vpack.c.b16 %v7974, %v7966
        %v8671 = vpack.c.b16 %v7975, %v7967
        %v8672 = vpack.c.b16 %v7976, %v7968
        %v8673 = vpack.c.b16 %v7977, %v7969
        %v8674 = vpack.c.b16 %v7986, %v7978
        %v8675 = vpack.c.b16 %v7987, %v7979
        %v8676 = vpack.c.b16 %v7988, %v7980
        %v8677 = vpack.c.b16 %v7989, %v7981
        %v8678 = vpack.c.b16 %v7990, %v7982
        %v8679 = vpack.c.b16 %v7991, %v7983
        %v8680 = vpack.c.b16 %v7992, %v7984
        %v8681 = vpack.c.b16 %v7993, %v7985
        %v8682 = vpack.c.b16 %v8002, %v7994
        %v8683 = vpack.c.b16 %v8003, %v7995
        %v8684 = vpack.c.b16 %v8004, %v7996
        %v8685 = vpack.c.b16 %v8005, %v7997
        %v8686 = vpack.c.b16 %v8006, %v7998
        %v8687 = vpack.c.b16 %v8007, %v7999
        %v8688 = vpack.c.b16 %v8008, %v8000
        %v8689 = vpack.c.b16 %v8009, %v8001
        %v8690 = vpack.c.b16 %v8018, %v8010
        %v8691 = vpack.c.b16 %v8019, %v8011
        %v8692 = vpack.c.b16 %v8020, %v8012
        %v8693 = vpack.c.b16 %v8021, %v8013
        %v8694 = vpack.c.b16 %v8022, %v8014
        %v8695 = vpack.c.b16 %v8023, %v8015
        %v8696 = vpack.c.b16 %v8024, %v8016
        %v8697 = vpack.c.b16 %v8025, %v8017
        %v8698 = vpack.c.b16 %v8034, %v8026
        %v8699 = vpack.c.b16 %v8035, %v8027
        %v8700 = vpack.c.b16 %v8036, %v8028
        %v8701 = vpack.c.b16 %v8037, %v8029
        %v8702 = vpack.c.b16 %v8038, %v8030
        %v8703 = vpack.c.b16 %v8039, %v8031
        %v8704 = vpack.c.b16 %v8040, %v8032
        %v8705 = vpack.c.b16 %v8041, %v8033
        %v8706 = vpack.c.b16 %v8050, %v8042
        %v8707 = vpack.c.b16 %v8051, %v8043
        %v8708 = vpack.c.b16 %v8052, %v8044
        %v8709 = vpack.c.b16 %v8053, %v8045
        %v8710 = vpack.c.b16 %v8054, %v8046
        %v8711 = vpack.c.b16 %v8055, %v8047
        %v8712 = vpack.c.b16 %v8056, %v8048
        %v8713 = vpack.c.b16 %v8057, %v8049
        %v8714 = vpack.c.b16 %v8066, %v8058
        %v8715 = vpack.c.b16 %v8067, %v8059
        %v8716 = vpack.c.b16 %v8068, %v8060
        %v8717 = vpack.c.b16 %v8069, %v8061
        %v8718 = vpack.c.b16 %v8070, %v8062
        %v8719 = vpack.c.b16 %v8071, %v8063
        %v8720 = vpack.c.b16 %v8072, %v8064
        %v8721 = vpack.c.b16 %v8073, %v8065
        %v8722 = vpack.c.b16 %v8082, %v8074
        %v8723 = vpack.c.b16 %v8083, %v8075
        %v8724 = vpack.c.b16 %v8084, %v8076
        %v8725 = vpack.c.b16 %v8085, %v8077
        %v8726 = vpack.c.b16 %v8086, %v8078
        %v8727 = vpack.c.b16 %v8087, %v8079
        %v8728 = vpack.c.b16 %v8088, %v8080
        %v8729 = vpack.c.b16 %v8089, %v8081
        %v8730 = vpack.c.b16 %v8098, %v8090
        %v8731 = vpack.c.b16 %v8099, %v8091
        %v8732 = vpack.c.b16 %v8100, %v8092
        %v8733 = vpack.c.b16 %v8101, %v8093
        %v8734 = vpack.c.b16 %v8102, %v8094
        %v8735 = vpack.c.b16 %v8103, %v8095
        %v8736 = vpack.c.b16 %v8104, %v8096
        %v8737 = vpack.c.b16 %v8105, %v8097
        %v8738 = vpack.c.b16 %v8114, %v8106
        %v8739 = vpack.c.b16 %v8115, %v8107
        %v8740 = vpack.c.b16 %v8116, %v8108
        %v8741 = vpack.c.b16 %v8117, %v8109
        %v8742 = vpack.c.b16 %v8118, %v8110
        %v8743 = vpack.c.b16 %v8119, %v8111
        %v8744 = vpack.c.b16 %v8120, %v8112
        %v8745 = vpack.c.b16 %v8121, %v8113
        %v8746 = vpack.c.b16 %v8130, %v8122
        %v8747 = vpack.c.b16 %v8131, %v8123
        %v8748 = vpack.c.b16 %v8132, %v8124
        %v8749 = vpack.c.b16 %v8133, %v8125
        %v8750 = vpack.c.b16 %v8134, %v8126
        %v8751 = vpack.c.b16 %v8135, %v8127
        %v8752 = vpack.c.b16 %v8136, %v8128
        %v8753 = vpack.c.b16 %v8137, %v8129
        %v8754 = vpack.c.b16 %v8146, %v8138
        %v8755 = vpack.c.b16 %v8147, %v8139
        %v8756 = vpack.c.b16 %v8148, %v8140
        %v8757 = vpack.c.b16 %v8149, %v8141
        %v8758 = vpack.c.b16 %v8150, %v8142
        %v8759 = vpack.c.b16 %v8151, %v8143
        %v8760 = vpack.c.b16 %v8152, %v8144
        %v8761 = vpack.c.b16 %v8153, %v8145
        %v8762 = vpack.c.b16 %v8162, %v8154
        %v8763 = vpack.c.b16 %v8163, %v8155
        %v8764 = vpack.c.b16 %v8164, %v8156
        %v8765 = vpack.c.b16 %v8165, %v8157
        %v8766 = vpack.c.b16 %v8166, %v8158
        %v8767 = vpack.c.b16 %v8167, %v8159
        %v8768 = vpack.c.b16 %v8168, %v8160
        %v8769 = vpack.c.b16 %v8169, %v8161
        %v8770 = vpack.c.b16 %v8178, %v8170
        %v8771 = vpack.c.b16 %v8179, %v8171
        %v8772 = vpack.c.b16 %v8180, %v8172
        %v8773 = vpack.c.b16 %v8181, %v8173
        %v8774 = vpack.c.b16 %v8182, %v8174
        %v8775 = vpack.c.b16 %v8183, %v8175
        %v8776 = vpack.c.b16 %v8184, %v8176
        %v8777 = vpack.c.b16 %v8185, %v8177
        %v8778 = vpack.c.b16 %v8194, %v8186
        %v8779 = vpack.c.b16 %v8195, %v8187
        %v8780 = vpack.c.b16 %v8196, %v8188
        %v8781 = vpack.c.b16 %v8197, %v8189
        %v8782 = vpack.c.b16 %v8198, %v8190
        %v8783 = vpack.c.b16 %v8199, %v8191
        %v8784 = vpack.c.b16 %v8200, %v8192
        %v8785 = vpack.c.b16 %v8201, %v8193
        %v8786 = vpack.c.b16 %v8210, %v8202
        %v8787 = vpack.c.b16 %v8211, %v8203
        %v8788 = vpack.c.b16 %v8212, %v8204
        %v8789 = vpack.c.b16 %v8213, %v8205
        %v8790 = vpack.c.b16 %v8214, %v8206
        %v8791 = vpack.c.b16 %v8215, %v8207
        %v8792 = vpack.c.b16 %v8216, %v8208
        %v8793 = vpack.c.b16 %v8217, %v8209
        %v8794 = vpack.c.b16 %v8226, %v8218
        %v8795 = vpack.c.b16 %v8227, %v8219
        %v8796 = vpack.c.b16 %v8228, %v8220
        %v8797 = vpack.c.b16 %v8229, %v8221
        %v8798 = vpack.c.b16 %v8230, %v8222
        %v8799 = vpack.c.b16 %v8231, %v8223
        %v8800 = vpack.c.b16 %v8232, %v8224
        %v8801 = vpack.c.b16 %v8233, %v8225
        %v8802 = vpack.c.b16 %v8242, %v8234
        %v8803 = vpack.c.b16 %v8243, %v8235
        %v8804 = vpack.c.b16 %v8244, %v8236
        %v8805 = vpack.c.b16 %v8245, %v8237
        %v8806 = vpack.c.b16 %v8246, %v8238
        %v8807 = vpack.c.b16 %v8247, %v8239
        %v8808 = vpack.c.b16 %v8248, %v8240
        %v8809 = vpack.c.b16 %v8249, %v8241
        %v8810 = vpack.c.b16 %v8258, %v8250
        %v8811 = vpack.c.b16 %v8259, %v8251
        %v8812 = vpack.c.b16 %v8260, %v8252
        %v8813 = vpack.c.b16 %v8261, %v8253
        %v8814 = vpack.c.b16 %v8262, %v8254
        %v8815 = vpack.c.b16 %v8263, %v8255
        %v8816 = vpack.c.b16 %v8264, %v8256
        %v8817 = vpack.c.b16 %v8265, %v8257
        %v8818 = vpack.c.b16 %v8274, %v8266
        %v8819 = vpack.c.b16 %v8275, %v8267
        %v8820 = vpack.c.b16 %v8276, %v8268
        %v8821 = vpack.c.b16 %v8277, %v8269
        %v8822 = vpack.c.b16 %v8278, %v8270
        %v8823 = vpack.c.b16 %v8279, %v8271
        %v8824 = vpack.c.b16 %v8280, %v8272
        %v8825 = vpack.c.b16 %v8281, %v8273
        %v8826 = vpack.c.b16 %v8290, %v8282
        %v8827 = vpack.c.b16 %v8291, %v8283
        %v8828 = vpack.c.b16 %v8292, %v8284
        %v8829 = vpack.c.b16 %v8293, %v8285
        %v8830 = vpack.c.b16 %v8294, %v8286
        %v8831 = vpack.c.b16 %v8295, %v8287
        %v8832 = vpack.c.b16 %v8296, %v8288
        %v8833 = vpack.c.b16 %v8297, %v8289
        %v8834 = vpack.c.b16 %v8306, %v8298
        %v8835 = vpack.c.b16 %v8307, %v8299
        %v8836 = vpack.c.b16 %v8308, %v8300
        %v8837 = vpack.c.b16 %v8309, %v8301
        %v8838 = vpack.c.b16 %v8310, %v8302
        %v8839 = vpack.c.b16 %v8311, %v8303
        %v8840 = vpack.c.b16 %v8312, %v8304
        %v8841 = vpack.c.b16 %v8313, %v8305
        %v8842 = vpack.c.b16 %v8322, %v8314
        %v8843 = vpack.c.b16 %v8323, %v8315
        %v8844 = vpack.c.b16 %v8324, %v8316
        %v8845 = vpack.c.b16 %v8325, %v8317
        %v8846 = vpack.c.b16 %v8326, %v8318
        %v8847 = vpack.c.b16 %v8327, %v8319
        %v8848 = vpack.c.b16 %v8328, %v8320
        %v8849 = vpack.c.b16 %v8329, %v8321
        %v8850 = vpack.c.b16 %v8338, %v8330
        %v8851 = vpack.c.b16 %v8339, %v8331
        %v8852 = vpack.c.b16 %v8340, %v8332
        %v8853 = vpack.c.b16 %v8341, %v8333
        %v8854 = vpack.c.b16 %v8342, %v8334
        %v8855 = vpack.c.b16 %v8343, %v8335
        %v8856 = vpack.c.b16 %v8344, %v8336
        %v8857 = vpack.c.b16 %v8345, %v8337
        %v9371 = vlaneseq
        %v9372 = vshrl.u32 %v9371, 7
        %v9373 = vsub.s32 0, %v9372
        %v9374 = vrot.slane %v6809, %v9373
        %v9375 = vlaneseq
        %v9376 = vshrl.u32 %v9375, 7
        %v9377 = vsub.s32 1, %v9376
        %v9378 = vrot.slane %v6809, %v9377
        %v9379 = vlaneseq
        %v9380 = vshrl.u32 %v9379, 7
        %v9381 = vsub.s32 2, %v9380
        %v9382 = vrot.slane %v6809, %v9381
        %v9383 = vlaneseq
        %v9384 = vshrl.u32 %v9383, 7
        %v9385 = vsub.s32 3, %v9384
        %v9386 = vrot.slane %v6809, %v9385
        %v9387 = vlaneseq
        %v9388 = vshrl.u32 %v9387, 7
        %v9389 = vsub.s32 4, %v9388
        %v9390 = vrot.slane %v6809, %v9389
        %v9391 = vlaneseq
        %v9392 = vshrl.u32 %v9391, 7
        %v9393 = vsub.s32 5, %v9392
        %v9394 = vrot.slane %v6809, %v9393
        %v9395 = vlaneseq
        %v9396 = vshrl.u32 %v9395, 7
        %v9397 = vsub.s32 6, %v9396
        %v9398 = vrot.slane %v6809, %v9397
        %v9399 = vlaneseq
        %v9400 = vshrl.u32 %v9399, 7
        %v9401 = vsub.s32 7, %v9400
        %v9402 = vrot.slane %v6809, %v9401
        %9411 = vmatprep.subr.bf16.mxu0 %v8347
        %9412 = vmatpush1.bf16.msra.mxu0 %v8346
        %9413 = vmatprep.subr.bf16.mxu0 %v8355
        %9414 = vmatpush1.bf16.msra.mxu0 %v8354
        %9415 = vmatprep.subr.bf16.mxu0 %v8363
        %9416 = vmatpush1.bf16.msra.mxu0 %v8362
        %9417 = vmatprep.subr.bf16.mxu0 %v8371
        %9418 = vmatpush1.bf16.msra.mxu0 %v8370
        %9419 = vmatprep.subr.bf16.mxu0 %v8379
        %9420 = vmatpush1.bf16.msra.mxu0 %v8378
        %9421 = vmatprep.subr.bf16.mxu0 %v8387
        %9422 = vmatpush1.bf16.msra.mxu0 %v8386
        %9423 = vmatprep.subr.bf16.mxu0 %v8395
        %9424 = vmatpush1.bf16.msra.mxu0 %v8394
        %9425 = vmatprep.subr.bf16.mxu0 %v8403
        %9426 = vmatpush1.bf16.msra.mxu0 %v8402
        %9427 = vmatprep.subr.bf16.mxu0 %v8411
        %9428 = vmatpush1.bf16.msra.mxu0 %v8410
        %9429 = vmatprep.subr.bf16.mxu0 %v8419
        %9430 = vmatpush1.bf16.msra.mxu0 %v8418
        %9431 = vmatprep.subr.bf16.mxu0 %v8427
        %9432 = vmatpush1.bf16.msra.mxu0 %v8426
        %9433 = vmatprep.subr.bf16.mxu0 %v8435
        %9434 = vmatpush1.bf16.msra.mxu0 %v8434
        %9435 = vmatprep.subr.bf16.mxu0 %v8443
        %9436 = vmatpush1.bf16.msra.mxu0 %v8442
        %9437 = vmatprep.subr.bf16.mxu0 %v8451
        %9438 = vmatpush1.bf16.msra.mxu0 %v8450
        %9439 = vmatprep.subr.bf16.mxu0 %v8459
        %9440 = vmatpush1.bf16.msra.mxu0 %v8458
        %9441 = vmatprep.subr.bf16.mxu0 %v8467
        %9442 = vmatpush1.bf16.msra.mxu0 %v8466
        %9443 = vmatprep.mubr.bf16.mxu0 %v6290
        %9444 = vmatmul.mubr.bf16.gmra.mrb[0].mxu0 %v6289
        %v9445 = vpop.f32.mrb[0].mxu0
        %v9446 = vadd.f32 %v9374, %v9445
        %v9447 = vpop.f32.mrb[0].mxu0
        %v9448 = vadd.f32 %v9378, %v9447
        %v9449 = vpop.f32.mrb[0].mxu0
        %v9450 = vpop.f32.mrb[0].mxu0
        %9451 = vdwg.mxu0
        %9452 = vmatprep.subr.bf16.mxu0 %v8475
        %9453 = vmatpush1.bf16.msra.mxu0 %v8474
        %9454 = vmatprep.subr.bf16.mxu0 %v8483
        %9455 = vmatpush1.bf16.msra.mxu0 %v8482
        %9456 = vmatprep.subr.bf16.mxu0 %v8491
        %9457 = vmatpush1.bf16.msra.mxu0 %v8490
        %9458 = vmatprep.subr.bf16.mxu0 %v8499
        %9459 = vmatpush1.bf16.msra.mxu0 %v8498
        %9460 = vmatprep.subr.bf16.mxu0 %v8507
        %9461 = vmatpush1.bf16.msra.mxu0 %v8506
        %9462 = vmatprep.subr.bf16.mxu0 %v8515
        %9463 = vmatpush1.bf16.msra.mxu0 %v8514
        %9464 = vmatprep.subr.bf16.mxu0 %v8523
        %9465 = vmatpush1.bf16.msra.mxu0 %v8522
        %9466 = vmatprep.subr.bf16.mxu0 %v8531
        %9467 = vmatpush1.bf16.msra.mxu0 %v8530
        %9468 = vmatprep.subr.bf16.mxu0 %v8539
        %9469 = vmatpush1.bf16.msra.mxu0 %v8538
        %9470 = vmatprep.subr.bf16.mxu0 %v8547
        %9471 = vmatpush1.bf16.msra.mxu0 %v8546
        %9472 = vmatprep.subr.bf16.mxu0 %v8555
        %9473 = vmatpush1.bf16.msra.mxu0 %v8554
        %9474 = vmatprep.subr.bf16.mxu0 %v8563
        %9475 = vmatpush1.bf16.msra.mxu0 %v8562
        %9476 = vmatprep.subr.bf16.mxu0 %v8571
        %9477 = vmatpush1.bf16.msra.mxu0 %v8570
        %9478 = vmatprep.subr.bf16.mxu0 %v8579
        %9479 = vmatpush1.bf16.msra.mxu0 %v8578
        %9480 = vmatprep.subr.bf16.mxu0 %v8587
        %9481 = vmatpush1.bf16.msra.mxu0 %v8586
        %9482 = vmatprep.subr.bf16.mxu0 %v8595
        %9483 = vmatpush1.bf16.msra.mxu0 %v8594
        %9484 = vmatprep.mubr.bf16.mxu0 %v6292
        %9485 = vmatmul.mubr.bf16.gmra.mrb[0].mxu0 %v6291
        %v9486 = vpop.f32.mrb[0].mxu0
        %v9487 = vadd.f32 %v9446, %v9486
        %v9488 = vpop.f32.mrb[0].mxu0
        %v9489 = vadd.f32 %v9448, %v9488
        %v9490 = vpop.f32.mrb[0].mxu0
        %v9491 = vpop.f32.mrb[0].mxu0
        %9492 = vdwg.mxu0
        %9493 = vmatprep.subr.bf16.mxu0 %v8603
        %9494 = vmatpush1.bf16.msra.mxu0 %v8602
        %9495 = vmatprep.subr.bf16.mxu0 %v8611
        %9496 = vmatpush1.bf16.msra.mxu0 %v8610
        %9497 = vmatprep.subr.bf16.mxu0 %v8619
        %9498 = vmatpush1.bf16.msra.mxu0 %v8618
        %9499 = vmatprep.subr.bf16.mxu0 %v8627
        %9500 = vmatpush1.bf16.msra.mxu0 %v8626
        %9501 = vmatprep.subr.bf16.mxu0 %v8635
        %9502 = vmatpush1.bf16.msra.mxu0 %v8634
        %9503 = vmatprep.subr.bf16.mxu0 %v8643
        %9504 = vmatpush1.bf16.msra.mxu0 %v8642
        %9505 = vmatprep.subr.bf16.mxu0 %v8651
        %9506 = vmatpush1.bf16.msra.mxu0 %v8650
        %9507 = vmatprep.subr.bf16.mxu0 %v8659
        %9508 = vmatpush1.bf16.msra.mxu0 %v8658
        %9509 = vmatprep.subr.bf16.mxu0 %v8667
        %9510 = vmatpush1.bf16.msra.mxu0 %v8666
        %9511 = vmatprep.subr.bf16.mxu0 %v8675
        %9512 = vmatpush1.bf16.msra.mxu0 %v8674
        %9513 = vmatprep.subr.bf16.mxu0 %v8683
        %9514 = vmatpush1.bf16.msra.mxu0 %v8682
        %9515 = vmatprep.subr.bf16.mxu0 %v8691
        %9516 = vmatpush1.bf16.msra.mxu0 %v8690
        %9517 = vmatprep.subr.bf16.mxu0 %v8699
        %9518 = vmatpush1.bf16.msra.mxu0 %v8698
        %9519 = vmatprep.subr.bf16.mxu0 %v8707
        %9520 = vmatpush1.bf16.msra.mxu0 %v8706
        %9521 = vmatprep.subr.bf16.mxu0 %v8715
        %9522 = vmatpush1.bf16.msra.mxu0 %v8714
        %9523 = vmatprep.subr.bf16.mxu0 %v8723
        %9524 = vmatpush1.bf16.msra.mxu0 %v8722
        %9525 = vmatprep.mubr.bf16.mxu0 %v6294
        %9526 = vmatmul.mubr.bf16.gmra.mrb[0].mxu0 %v6293
        %v9527 = vpop.f32.mrb[0].mxu0
        %v9528 = vadd.f32 %v9487, %v9527
        %v9529 = vpop.f32.mrb[0].mxu0
        %v9530 = vadd.f32 %v9489, %v9529
        %v9531 = vpop.f32.mrb[0].mxu0
        %v9532 = vpop.f32.mrb[0].mxu0
        %9533 = vdwg.mxu0
        %9534 = vmatprep.subr.bf16.mxu0 %v8731
        %9535 = vmatpush1.bf16.msra.mxu0 %v8730
        %9536 = vmatprep.subr.bf16.mxu0 %v8739
        %9537 = vmatpush1.bf16.msra.mxu0 %v8738
        %9538 = vmatprep.subr.bf16.mxu0 %v8747
        %9539 = vmatpush1.bf16.msra.mxu0 %v8746
        %9540 = vmatprep.subr.bf16.mxu0 %v8755
        %9541 = vmatpush1.bf16.msra.mxu0 %v8754
        %9542 = vmatprep.subr.bf16.mxu0 %v8763
        %9543 = vmatpush1.bf16.msra.mxu0 %v8762
        %9544 = vmatprep.subr.bf16.mxu0 %v8771
        %9545 = vmatpush1.bf16.msra.mxu0 %v8770
        %9546 = vmatprep.subr.bf16.mxu0 %v8779
        %9547 = vmatpush1.bf16.msra.mxu0 %v8778
        %9548 = vmatprep.subr.bf16.mxu0 %v8787
        %9549 = vmatpush1.bf16.msra.mxu0 %v8786
        %9550 = vmatprep.subr.bf16.mxu0 %v8795
        %9551 = vmatpush1.bf16.msra.mxu0 %v8794
        %9552 = vmatprep.subr.bf16.mxu0 %v8803
        %9553 = vmatpush1.bf16.msra.mxu0 %v8802
        %9554 = vmatprep.subr.bf16.mxu0 %v8811
        %9555 = vmatpush1.bf16.msra.mxu0 %v8810
        %9556 = vmatprep.subr.bf16.mxu0 %v8819
        %9557 = vmatpush1.bf16.msra.mxu0 %v8818
        %9558 = vmatprep.subr.bf16.mxu0 %v8827
        %9559 = vmatpush1.bf16.msra.mxu0 %v8826
        %9560 = vmatprep.subr.bf16.mxu0 %v8835
        %9561 = vmatpush1.bf16.msra.mxu0 %v8834
        %9562 = vmatprep.subr.bf16.mxu0 %v8843
        %9563 = vmatpush1.bf16.msra.mxu0 %v8842
        %9564 = vmatprep.subr.bf16.mxu0 %v8851
        %9565 = vmatpush1.bf16.msra.mxu0 %v8850
        %9566 = vmatprep.mubr.bf16.mxu0 %v6296
        %9567 = vmatmul.mubr.bf16.gmra.mrb[0].mxu0 %v6295
        %v9568 = vpop.f32.mrb[0].mxu0
        %v9569 = vadd.f32 %v9528, %v9568
        %v9570 = vpop.f32.mrb[0].mxu0
        %v9571 = vadd.f32 %v9530, %v9570
        %v9572 = vpop.f32.mrb[0].mxu0
        %v9573 = vpop.f32.mrb[0].mxu0
        %9574 = vdwg.mxu0
        %9575 = vmatprep.subr.bf16.mxu0 %v8349
        %9576 = vmatpush1.bf16.msra.mxu0 %v8348
        %9577 = vmatprep.subr.bf16.mxu0 %v8357
        %9578 = vmatpush1.bf16.msra.mxu0 %v8356
        %9579 = vmatprep.subr.bf16.mxu0 %v8365
        %9580 = vmatpush1.bf16.msra.mxu0 %v8364
        %9581 = vmatprep.subr.bf16.mxu0 %v8373
        %9582 = vmatpush1.bf16.msra.mxu0 %v8372
        %9583 = vmatprep.subr.bf16.mxu0 %v8381
        %9584 = vmatpush1.bf16.msra.mxu0 %v8380
        %9585 = vmatprep.subr.bf16.mxu0 %v8389
        %9586 = vmatpush1.bf16.msra.mxu0 %v8388
        %9587 = vmatprep.subr.bf16.mxu0 %v8397
        %9588 = vmatpush1.bf16.msra.mxu0 %v8396
        %9589 = vmatprep.subr.bf16.mxu0 %v8405
        %9590 = vmatpush1.bf16.msra.mxu0 %v8404
        %9591 = vmatprep.subr.bf16.mxu0 %v8413
        %9592 = vmatpush1.bf16.msra.mxu0 %v8412
        %9593 = vmatprep.subr.bf16.mxu0 %v8421
        %9594 = vmatpush1.bf16.msra.mxu0 %v8420
        %9595 = vmatprep.subr.bf16.mxu0 %v8429
        %9596 = vmatpush1.bf16.msra.mxu0 %v8428
        %9597 = vmatprep.subr.bf16.mxu0 %v8437
        %9598 = vmatpush1.bf16.msra.mxu0 %v8436
        %9599 = vmatprep.subr.bf16.mxu0 %v8445
        %9600 = vmatpush1.bf16.msra.mxu0 %v8444
        %9601 = vmatprep.subr.bf16.mxu0 %v8453
        %9602 = vmatpush1.bf16.msra.mxu0 %v8452
        %9603 = vmatprep.subr.bf16.mxu0 %v8461
        %9604 = vmatpush1.bf16.msra.mxu0 %v8460
        %9605 = vmatprep.subr.bf16.mxu0 %v8469
        %9606 = vmatpush1.bf16.msra.mxu0 %v8468
        %9607 = vmatprep.mubr.bf16.mxu0 %v6290
        %9608 = vmatmul.mubr.bf16.gmra.mrb[0].mxu0 %v6289
        %v9609 = vpop.f32.mrb[0].mxu0
        %v9610 = vadd.f32 %v9382, %v9609
        %v9611 = vpop.f32.mrb[0].mxu0
        %v9612 = vadd.f32 %v9386, %v9611
        %v9613 = vpop.f32.mrb[0].mxu0
        %v9614 = vpop.f32.mrb[0].mxu0
        %9615 = vdwg.mxu0
        %9616 = vmatprep.subr.bf16.mxu0 %v8477
        %9617 = vmatpush1.bf16.msra.mxu0 %v8476
        %9618 = vmatprep.subr.bf16.mxu0 %v8485
        %9619 = vmatpush1.bf16.msra.mxu0 %v8484
        %9620 = vmatprep.subr.bf16.mxu0 %v8493
        %9621 = vmatpush1.bf16.msra.mxu0 %v8492
        %9622 = vmatprep.subr.bf16.mxu0 %v8501
        %9623 = vmatpush1.bf16.msra.mxu0 %v8500
        %9624 = vmatprep.subr.bf16.mxu0 %v8509
        %9625 = vmatpush1.bf16.msra.mxu0 %v8508
        %9626 = vmatprep.subr.bf16.mxu0 %v8517
        %9627 = vmatpush1.bf16.msra.mxu0 %v8516
        %9628 = vmatprep.subr.bf16.mxu0 %v8525
        %9629 = vmatpush1.bf16.msra.mxu0 %v8524
        %9630 = vmatprep.subr.bf16.mxu0 %v8533
        %9631 = vmatpush1.bf16.msra.mxu0 %v8532
        %9632 = vmatprep.subr.bf16.mxu0 %v8541
        %9633 = vmatpush1.bf16.msra.mxu0 %v8540
        %9634 = vmatprep.subr.bf16.mxu0 %v8549
        %9635 = vmatpush1.bf16.msra.mxu0 %v8548
        %9636 = vmatprep.subr.bf16.mxu0 %v8557
        %9637 = vmatpush1.bf16.msra.mxu0 %v8556
        %9638 = vmatprep.subr.bf16.mxu0 %v8565
        %9639 = vmatpush1.bf16.msra.mxu0 %v8564
        %9640 = vmatprep.subr.bf16.mxu0 %v8573
        %9641 = vmatpush1.bf16.msra.mxu0 %v8572
        %9642 = vmatprep.subr.bf16.mxu0 %v8581
        %9643 = vmatpush1.bf16.msra.mxu0 %v8580
        %9644 = vmatprep.subr.bf16.mxu0 %v8589
        %9645 = vmatpush1.bf16.msra.mxu0 %v8588
        %9646 = vmatprep.subr.bf16.mxu0 %v8597
        %9647 = vmatpush1.bf16.msra.mxu0 %v8596
        %9648 = vmatprep.mubr.bf16.mxu0 %v6292
        %9649 = vmatmul.mubr.bf16.gmra.mrb[0].mxu0 %v6291
        %v9650 = vpop.f32.mrb[0].mxu0
        %v9651 = vadd.f32 %v9610, %v9650
        %v9652 = vpop.f32.mrb[0].mxu0
        %v9653 = vadd.f32 %v9612, %v9652
        %v9654 = vpop.f32.mrb[0].mxu0
        %v9655 = vpop.f32.mrb[0].mxu0
        %9656 = vdwg.mxu0
        %9657 = vmatprep.subr.bf16.mxu0 %v8605
        %9658 = vmatpush1.bf16.msra.mxu0 %v8604
        %9659 = vmatprep.subr.bf16.mxu0 %v8613
        %9660 = vmatpush1.bf16.msra.mxu0 %v8612
        %9661 = vmatprep.subr.bf16.mxu0 %v8621
        %9662 = vmatpush1.bf16.msra.mxu0 %v8620
        %9663 = vmatprep.subr.bf16.mxu0 %v8629
        %9664 = vmatpush1.bf16.msra.mxu0 %v8628
        %9665 = vmatprep.subr.bf16.mxu0 %v8637
        %9666 = vmatpush1.bf16.msra.mxu0 %v8636
        %9667 = vmatprep.subr.bf16.mxu0 %v8645
        %9668 = vmatpush1.bf16.msra.mxu0 %v8644
        %9669 = vmatprep.subr.bf16.mxu0 %v8653
        %9670 = vmatpush1.bf16.msra.mxu0 %v8652
        %9671 = vmatprep.subr.bf16.mxu0 %v8661
        %9672 = vmatpush1.bf16.msra.mxu0 %v8660
        %9673 = vmatprep.subr.bf16.mxu0 %v8669
        %9674 = vmatpush1.bf16.msra.mxu0 %v8668
        %9675 = vmatprep.subr.bf16.mxu0 %v8677
        %9676 = vmatpush1.bf16.msra.mxu0 %v8676
        %9677 = vmatprep.subr.bf16.mxu0 %v8685
        %9678 = vmatpush1.bf16.msra.mxu0 %v8684
        %9679 = vmatprep.subr.bf16.mxu0 %v8693
        %9680 = vmatpush1.bf16.msra.mxu0 %v8692
        %9681 = vmatprep.subr.bf16.mxu0 %v8701
        %9682 = vmatpush1.bf16.msra.mxu0 %v8700
        %9683 = vmatprep.subr.bf16.mxu0 %v8709
        %9684 = vmatpush1.bf16.msra.mxu0 %v8708
        %9685 = vmatprep.subr.bf16.mxu0 %v8717
        %9686 = vmatpush1.bf16.msra.mxu0 %v8716
        %9687 = vmatprep.subr.bf16.mxu0 %v8725
        %9688 = vmatpush1.bf16.msra.mxu0 %v8724
        %9689 = vmatprep.mubr.bf16.mxu0 %v6294
        %9690 = vmatmul.mubr.bf16.gmra.mrb[0].mxu0 %v6293
        %v9691 = vpop.f32.mrb[0].mxu0
        %v9692 = vadd.f32 %v9651, %v9691
        %v9693 = vpop.f32.mrb[0].mxu0
        %v9694 = vadd.f32 %v9653, %v9693
        %v9695 = vpop.f32.mrb[0].mxu0
        %v9696 = vpop.f32.mrb[0].mxu0
        %9697 = vdwg.mxu0
        %9698 = vmatprep.subr.bf16.mxu0 %v8733
        %9699 = vmatpush1.bf16.msra.mxu0 %v8732
        %9700 = vmatprep.subr.bf16.mxu0 %v8741
        %9701 = vmatpush1.bf16.msra.mxu0 %v8740
        %9702 = vmatprep.subr.bf16.mxu0 %v8749
        %9703 = vmatpush1.bf16.msra.mxu0 %v8748
        %9704 = vmatprep.subr.bf16.mxu0 %v8757
        %9705 = vmatpush1.bf16.msra.mxu0 %v8756
        %9706 = vmatprep.subr.bf16.mxu0 %v8765
        %9707 = vmatpush1.bf16.msra.mxu0 %v8764
        %9708 = vmatprep.subr.bf16.mxu0 %v8773
        %9709 = vmatpush1.bf16.msra.mxu0 %v8772
        %9710 = vmatprep.subr.bf16.mxu0 %v8781
        %9711 = vmatpush1.bf16.msra.mxu0 %v8780
        %9712 = vmatprep.subr.bf16.mxu0 %v8789
        %9713 = vmatpush1.bf16.msra.mxu0 %v8788
        %9714 = vmatprep.subr.bf16.mxu0 %v8797
        %9715 = vmatpush1.bf16.msra.mxu0 %v8796
        %9716 = vmatprep.subr.bf16.mxu0 %v8805
        %9717 = vmatpush1.bf16.msra.mxu0 %v8804
        %9718 = vmatprep.subr.bf16.mxu0 %v8813
        %9719 = vmatpush1.bf16.msra.mxu0 %v8812
        %9720 = vmatprep.subr.bf16.mxu0 %v8821
        %9721 = vmatpush1.bf16.msra.mxu0 %v8820
        %9722 = vmatprep.subr.bf16.mxu0 %v8829
        %9723 = vmatpush1.bf16.msra.mxu0 %v8828
        %9724 = vmatprep.subr.bf16.mxu0 %v8837
        %9725 = vmatpush1.bf16.msra.mxu0 %v8836
        %9726 = vmatprep.subr.bf16.mxu0 %v8845
        %9727 = vmatpush1.bf16.msra.mxu0 %v8844
        %9728 = vmatprep.subr.bf16.mxu0 %v8853
        %9729 = vmatpush1.bf16.msra.mxu0 %v8852
        %9730 = vmatprep.mubr.bf16.mxu0 %v6296
        %9731 = vmatmul.mubr.bf16.gmra.mrb[0].mxu0 %v6295
        %v9732 = vpop.f32.mrb[0].mxu0
        %v9733 = vadd.f32 %v9692, %v9732
        %v9734 = vpop.f32.mrb[0].mxu0
        %v9735 = vadd.f32 %v9694, %v9734
        %v9736 = vpop.f32.mrb[0].mxu0
        %v9737 = vpop.f32.mrb[0].mxu0
        %9738 = vdwg.mxu0
        %9739 = vmatprep.subr.bf16.mxu0 %v8351
        %9740 = vmatpush1.bf16.msra.mxu0 %v8350
        %9741 = vmatprep.subr.bf16.mxu0 %v8359
        %9742 = vmatpush1.bf16.msra.mxu0 %v8358
        %9743 = vmatprep.subr.bf16.mxu0 %v8367
        %9744 = vmatpush1.bf16.msra.mxu0 %v8366
        %9745 = vmatprep.subr.bf16.mxu0 %v8375
        %9746 = vmatpush1.bf16.msra.mxu0 %v8374
        %9747 = vmatprep.subr.bf16.mxu0 %v8383
        %9748 = vmatpush1.bf16.msra.mxu0 %v8382
        %9749 = vmatprep.subr.bf16.mxu0 %v8391
        %9750 = vmatpush1.bf16.msra.mxu0 %v8390
        %9751 = vmatprep.subr.bf16.mxu0 %v8399
        %9752 = vmatpush1.bf16.msra.mxu0 %v8398
        %9753 = vmatprep.subr.bf16.mxu0 %v8407
        %9754 = vmatpush1.bf16.msra.mxu0 %v8406
        %9755 = vmatprep.subr.bf16.mxu0 %v8415
        %9756 = vmatpush1.bf16.msra.mxu0 %v8414
        %9757 = vmatprep.subr.bf16.mxu0 %v8423
        %9758 = vmatpush1.bf16.msra.mxu0 %v8422
        %9759 = vmatprep.subr.bf16.mxu0 %v8431
        %9760 = vmatpush1.bf16.msra.mxu0 %v8430
        %9761 = vmatprep.subr.bf16.mxu0 %v8439
        %9762 = vmatpush1.bf16.msra.mxu0 %v8438
        %9763 = vmatprep.subr.bf16.mxu0 %v8447
        %9764 = vmatpush1.bf16.msra.mxu0 %v8446
        %9765 = vmatprep.subr.bf16.mxu0 %v8455
        %9766 = vmatpush1.bf16.msra.mxu0 %v8454
        %9767 = vmatprep.subr.bf16.mxu0 %v8463
        %9768 = vmatpush1.bf16.msra.mxu0 %v8462
        %9769 = vmatprep.subr.bf16.mxu0 %v8471
        %9770 = vmatpush1.bf16.msra.mxu0 %v8470
        %9771 = vmatprep.mubr.bf16.mxu0 %v6290
        %9772 = vmatmul.mubr.bf16.gmra.mrb[0].mxu0 %v6289
        %v9773 = vpop.f32.mrb[0].mxu0
        %v9774 = vadd.f32 %v9390, %v9773
        %v9775 = vpop.f32.mrb[0].mxu0
        %v9776 = vadd.f32 %v9394, %v9775
        %v9777 = vpop.f32.mrb[0].mxu0
        %v9778 = vpop.f32.mrb[0].mxu0
        %9779 = vdwg.mxu0
        %9780 = vmatprep.subr.bf16.mxu0 %v8479
        %9781 = vmatpush1.bf16.msra.mxu0 %v8478
        %9782 = vmatprep.subr.bf16.mxu0 %v8487
        %9783 = vmatpush1.bf16.msra.mxu0 %v8486
        %9784 = vmatprep.subr.bf16.mxu0 %v8495
        %9785 = vmatpush1.bf16.msra.mxu0 %v8494
        %9786 = vmatprep.subr.bf16.mxu0 %v8503
        %9787 = vmatpush1.bf16.msra.mxu0 %v8502
        %9788 = vmatprep.subr.bf16.mxu0 %v8511
        %9789 = vmatpush1.bf16.msra.mxu0 %v8510
        %9790 = vmatprep.subr.bf16.mxu0 %v8519
        %9791 = vmatpush1.bf16.msra.mxu0 %v8518
        %9792 = vmatprep.subr.bf16.mxu0 %v8527
        %9793 = vmatpush1.bf16.msra.mxu0 %v8526
        %9794 = vmatprep.subr.bf16.mxu0 %v8535
        %9795 = vmatpush1.bf16.msra.mxu0 %v8534
        %9796 = vmatprep.subr.bf16.mxu0 %v8543
        %9797 = vmatpush1.bf16.msra.mxu0 %v8542
        %9798 = vmatprep.subr.bf16.mxu0 %v8551
        %9799 = vmatpush1.bf16.msra.mxu0 %v8550
        %9800 = vmatprep.subr.bf16.mxu0 %v8559
        %9801 = vmatpush1.bf16.msra.mxu0 %v8558
        %9802 = vmatprep.subr.bf16.mxu0 %v8567
        %9803 = vmatpush1.bf16.msra.mxu0 %v8566
        %9804 = vmatprep.subr.bf16.mxu0 %v8575
        %9805 = vmatpush1.bf16.msra.mxu0 %v8574
        %9806 = vmatprep.subr.bf16.mxu0 %v8583
        %9807 = vmatpush1.bf16.msra.mxu0 %v8582
        %9808 = vmatprep.subr.bf16.mxu0 %v8591
        %9809 = vmatpush1.bf16.msra.mxu0 %v8590
        %9810 = vmatprep.subr.bf16.mxu0 %v8599
        %9811 = vmatpush1.bf16.msra.mxu0 %v8598
        %9812 = vmatprep.mubr.bf16.mxu0 %v6292
        %9813 = vmatmul.mubr.bf16.gmra.mrb[0].mxu0 %v6291
        %v9814 = vpop.f32.mrb[0].mxu0
        %v9815 = vadd.f32 %v9774, %v9814
        %v9816 = vpop.f32.mrb[0].mxu0
        %v9817 = vadd.f32 %v9776, %v9816
        %v9818 = vpop.f32.mrb[0].mxu0
        %v9819 = vpop.f32.mrb[0].mxu0
        %9820 = vdwg.mxu0
        %9821 = vmatprep.subr.bf16.mxu0 %v8607
        %9822 = vmatpush1.bf16.msra.mxu0 %v8606
        %9823 = vmatprep.subr.bf16.mxu0 %v8615
        %9824 = vmatpush1.bf16.msra.mxu0 %v8614
        %9825 = vmatprep.subr.bf16.mxu0 %v8623
        %9826 = vmatpush1.bf16.msra.mxu0 %v8622
        %9827 = vmatprep.subr.bf16.mxu0 %v8631
        %9828 = vmatpush1.bf16.msra.mxu0 %v8630
        %9829 = vmatprep.subr.bf16.mxu0 %v8639
        %9830 = vmatpush1.bf16.msra.mxu0 %v8638
        %9831 = vmatprep.subr.bf16.mxu0 %v8647
        %9832 = vmatpush1.bf16.msra.mxu0 %v8646
        %9833 = vmatprep.subr.bf16.mxu0 %v8655
        %9834 = vmatpush1.bf16.msra.mxu0 %v8654
        %9835 = vmatprep.subr.bf16.mxu0 %v8663
        %9836 = vmatpush1.bf16.msra.mxu0 %v8662
        %9837 = vmatprep.subr.bf16.mxu0 %v8671
        %9838 = vmatpush1.bf16.msra.mxu0 %v8670
        %9839 = vmatprep.subr.bf16.mxu0 %v8679
        %9840 = vmatpush1.bf16.msra.mxu0 %v8678
        %9841 = vmatprep.subr.bf16.mxu0 %v8687
        %9842 = vmatpush1.bf16.msra.mxu0 %v8686
        %9843 = vmatprep.subr.bf16.mxu0 %v8695
        %9844 = vmatpush1.bf16.msra.mxu0 %v8694
        %9845 = vmatprep.subr.bf16.mxu0 %v8703
        %9846 = vmatpush1.bf16.msra.mxu0 %v8702
        %9847 = vmatprep.subr.bf16.mxu0 %v8711
        %9848 = vmatpush1.bf16.msra.mxu0 %v8710
        %9849 = vmatprep.subr.bf16.mxu0 %v8719
        %9850 = vmatpush1.bf16.msra.mxu0 %v8718
        %9851 = vmatprep.subr.bf16.mxu0 %v8727
        %9852 = vmatpush1.bf16.msra.mxu0 %v8726
        %9853 = vmatprep.mubr.bf16.mxu0 %v6294
        %9854 = vmatmul.mubr.bf16.gmra.mrb[0].mxu0 %v6293
        %v9855 = vpop.f32.mrb[0].mxu0
        %v9856 = vadd.f32 %v9815, %v9855
        %v9857 = vpop.f32.mrb[0].mxu0
        %v9858 = vadd.f32 %v9817, %v9857
        %v9859 = vpop.f32.mrb[0].mxu0
        %v9860 = vpop.f32.mrb[0].mxu0
        %9861 = vdwg.mxu0
        %9862 = vmatprep.subr.bf16.mxu0 %v8735
        %9863 = vmatpush1.bf16.msra.mxu0 %v8734
        %9864 = vmatprep.subr.bf16.mxu0 %v8743
        %9865 = vmatpush1.bf16.msra.mxu0 %v8742
        %9866 = vmatprep.subr.bf16.mxu0 %v8751
        %9867 = vmatpush1.bf16.msra.mxu0 %v8750
        %9868 = vmatprep.subr.bf16.mxu0 %v8759
        %9869 = vmatpush1.bf16.msra.mxu0 %v8758
        %9870 = vmatprep.subr.bf16.mxu0 %v8767
        %9871 = vmatpush1.bf16.msra.mxu0 %v8766
        %9872 = vmatprep.subr.bf16.mxu0 %v8775
        %9873 = vmatpush1.bf16.msra.mxu0 %v8774
        %9874 = vmatprep.subr.bf16.mxu0 %v8783
        %9875 = vmatpush1.bf16.msra.mxu0 %v8782
        %9876 = vmatprep.subr.bf16.mxu0 %v8791
        %9877 = vmatpush1.bf16.msra.mxu0 %v8790
        %9878 = vmatprep.subr.bf16.mxu0 %v8799
        %9879 = vmatpush1.bf16.msra.mxu0 %v8798
        %9880 = vmatprep.subr.bf16.mxu0 %v8807
        %9881 = vmatpush1.bf16.msra.mxu0 %v8806
        %9882 = vmatprep.subr.bf16.mxu0 %v8815
        %9883 = vmatpush1.bf16.msra.mxu0 %v8814
        %9884 = vmatprep.subr.bf16.mxu0 %v8823
        %9885 = vmatpush1.bf16.msra.mxu0 %v8822
        %9886 = vmatprep.subr.bf16.mxu0 %v8831
        %9887 = vmatpush1.bf16.msra.mxu0 %v8830
        %9888 = vmatprep.subr.bf16.mxu0 %v8839
        %9889 = vmatpush1.bf16.msra.mxu0 %v8838
        %9890 = vmatprep.subr.bf16.mxu0 %v8847
        %9891 = vmatpush1.bf16.msra.mxu0 %v8846
        %9892 = vmatprep.subr.bf16.mxu0 %v8855
        %9893 = vmatpush1.bf16.msra.mxu0 %v8854
        %9894 = vmatprep.mubr.bf16.mxu0 %v6296
        %9895 = vmatmul.mubr.bf16.gmra.mrb[0].mxu0 %v6295
        %v9896 = vpop.f32.mrb[0].mxu0
        %v9897 = vadd.f32 %v9856, %v9896
        %v9898 = vpop.f32.mrb[0].mxu0
        %v9899 = vadd.f32 %v9858, %v9898
        %v9900 = vpop.f32.mrb[0].mxu0
        %v9901 = vpop.f32.mrb[0].mxu0
        %9902 = vdwg.mxu0
        %9903 = vmatprep.subr.bf16.mxu0 %v8353
        %9904 = vmatpush1.bf16.msra.mxu0 %v8352
        %9905 = vmatprep.subr.bf16.mxu0 %v8361
        %9906 = vmatpush1.bf16.msra.mxu0 %v8360
        %9907 = vmatprep.subr.bf16.mxu0 %v8369
        %9908 = vmatpush1.bf16.msra.mxu0 %v8368
        %9909 = vmatprep.subr.bf16.mxu0 %v8377
        %9910 = vmatpush1.bf16.msra.mxu0 %v8376
        %9911 = vmatprep.subr.bf16.mxu0 %v8385
        %9912 = vmatpush1.bf16.msra.mxu0 %v8384
        %9913 = vmatprep.subr.bf16.mxu0 %v8393
        %9914 = vmatpush1.bf16.msra.mxu0 %v8392
        %9915 = vmatprep.subr.bf16.mxu0 %v8401
        %9916 = vmatpush1.bf16.msra.mxu0 %v8400
        %9917 = vmatprep.subr.bf16.mxu0 %v8409
        %9918 = vmatpush1.bf16.msra.mxu0 %v8408
        %9919 = vmatprep.subr.bf16.mxu0 %v8417
        %9920 = vmatpush1.bf16.msra.mxu0 %v8416
        %9921 = vmatprep.subr.bf16.mxu0 %v8425
        %9922 = vmatpush1.bf16.msra.mxu0 %v8424
        %9923 = vmatprep.subr.bf16.mxu0 %v8433
        %9924 = vmatpush1.bf16.msra.mxu0 %v8432
        %9925 = vmatprep.subr.bf16.mxu0 %v8441
        %9926 = vmatpush1.bf16.msra.mxu0 %v8440
        %9927 = vmatprep.subr.bf16.mxu0 %v8449
        %9928 = vmatpush1.bf16.msra.mxu0 %v8448
        %9929 = vmatprep.subr.bf16.mxu0 %v8457
        %9930 = vmatpush1.bf16.msra.mxu0 %v8456
        %9931 = vmatprep.subr.bf16.mxu0 %v8465
        %9932 = vmatpush1.bf16.msra.mxu0 %v8464
        %9933 = vmatprep.subr.bf16.mxu0 %v8473
        %9934 = vmatpush1.bf16.msra.mxu0 %v8472
        %9935 = vmatprep.mubr.bf16.mxu0 %v6290
        %9936 = vmatmul.mubr.bf16.gmra.mrb[0].mxu0 %v6289
        %v9937 = vpop.f32.mrb[0].mxu0
        %v9938 = vadd.f32 %v9398, %v9937
        %v9939 = vpop.f32.mrb[0].mxu0
        %v9940 = vadd.f32 %v9402, %v9939
        %v9941 = vpop.f32.mrb[0].mxu0
        %v9942 = vpop.f32.mrb[0].mxu0
        %9943 = vdwg.mxu0
        %9944 = vmatprep.subr.bf16.mxu0 %v8481
        %9945 = vmatpush1.bf16.msra.mxu0 %v8480
        %9946 = vmatprep.subr.bf16.mxu0 %v8489
        %9947 = vmatpush1.bf16.msra.mxu0 %v8488
        %9948 = vmatprep.subr.bf16.mxu0 %v8497
        %9949 = vmatpush1.bf16.msra.mxu0 %v8496
        %9950 = vmatprep.subr.bf16.mxu0 %v8505
        %9951 = vmatpush1.bf16.msra.mxu0 %v8504
        %9952 = vmatprep.subr.bf16.mxu0 %v8513
        %9953 = vmatpush1.bf16.msra.mxu0 %v8512
        %9954 = vmatprep.subr.bf16.mxu0 %v8521
        %9955 = vmatpush1.bf16.msra.mxu0 %v8520
        %9956 = vmatprep.subr.bf16.mxu0 %v8529
        %9957 = vmatpush1.bf16.msra.mxu0 %v8528
        %9958 = vmatprep.subr.bf16.mxu0 %v8537
        %9959 = vmatpush1.bf16.msra.mxu0 %v8536
        %9960 = vmatprep.subr.bf16.mxu0 %v8545
        %9961 = vmatpush1.bf16.msra.mxu0 %v8544
        %9962 = vmatprep.subr.bf16.mxu0 %v8553
        %9963 = vmatpush1.bf16.msra.mxu0 %v8552
        %9964 = vmatprep.subr.bf16.mxu0 %v8561
        %9965 = vmatpush1.bf16.msra.mxu0 %v8560
        %9966 = vmatprep.subr.bf16.mxu0 %v8569
        %9967 = vmatpush1.bf16.msra.mxu0 %v8568
        %9968 = vmatprep.subr.bf16.mxu0 %v8577
        %9969 = vmatpush1.bf16.msra.mxu0 %v8576
        %9970 = vmatprep.subr.bf16.mxu0 %v8585
        %9971 = vmatpush1.bf16.msra.mxu0 %v8584
        %9972 = vmatprep.subr.bf16.mxu0 %v8593
        %9973 = vmatpush1.bf16.msra.mxu0 %v8592
        %9974 = vmatprep.subr.bf16.mxu0 %v8601
        %9975 = vmatpush1.bf16.msra.mxu0 %v8600
        %9976 = vmatprep.mubr.bf16.mxu0 %v6292
        %9977 = vmatmul.mubr.bf16.gmra.mrb[0].mxu0 %v6291
        %v9978 = vpop.f32.mrb[0].mxu0
        %v9979 = vadd.f32 %v9938, %v9978
        %v9980 = vpop.f32.mrb[0].mxu0
        %v9981 = vadd.f32 %v9940, %v9980
        %v9982 = vpop.f32.mrb[0].mxu0
        %v9983 = vpop.f32.mrb[0].mxu0
        %9984 = vdwg.mxu0
        %9985 = vmatprep.subr.bf16.mxu0 %v8609
        %9986 = vmatpush1.bf16.msra.mxu0 %v8608
        %9987 = vmatprep.subr.bf16.mxu0 %v8617
        %9988 = vmatpush1.bf16.msra.mxu0 %v8616
        %9989 = vmatprep.subr.bf16.mxu0 %v8625
        %9990 = vmatpush1.bf16.msra.mxu0 %v8624
        %9991 = vmatprep.subr.bf16.mxu0 %v8633
        %9992 = vmatpush1.bf16.msra.mxu0 %v8632
        %9993 = vmatprep.subr.bf16.mxu0 %v8641
        %9994 = vmatpush1.bf16.msra.mxu0 %v8640
        %9995 = vmatprep.subr.bf16.mxu0 %v8649
        %9996 = vmatpush1.bf16.msra.mxu0 %v8648
        %9997 = vmatprep.subr.bf16.mxu0 %v8657
        %9998 = vmatpush1.bf16.msra.mxu0 %v8656
        %9999 = vmatprep.subr.bf16.mxu0 %v8665
        %10000 = vmatpush1.bf16.msra.mxu0 %v8664
        %10001 = vmatprep.subr.bf16.mxu0 %v8673
        %10002 = vmatpush1.bf16.msra.mxu0 %v8672
        %10003 = vmatprep.subr.bf16.mxu0 %v8681
        %10004 = vmatpush1.bf16.msra.mxu0 %v8680
        %10005 = vmatprep.subr.bf16.mxu0 %v8689
        %10006 = vmatpush1.bf16.msra.mxu0 %v8688
        %10007 = vmatprep.subr.bf16.mxu0 %v8697
        %10008 = vmatpush1.bf16.msra.mxu0 %v8696
        %10009 = vmatprep.subr.bf16.mxu0 %v8705
        %10010 = vmatpush1.bf16.msra.mxu0 %v8704
        %10011 = vmatprep.subr.bf16.mxu0 %v8713
        %10012 = vmatpush1.bf16.msra.mxu0 %v8712
        %10013 = vmatprep.subr.bf16.mxu0 %v8721
        %10014 = vmatpush1.bf16.msra.mxu0 %v8720
        %10015 = vmatprep.subr.bf16.mxu0 %v8729
        %10016 = vmatpush1.bf16.msra.mxu0 %v8728
        %10017 = vmatprep.mubr.bf16.mxu0 %v6294
        %10018 = vmatmul.mubr.bf16.gmra.mrb[0].mxu0 %v6293
        %v10019 = vpop.f32.mrb[0].mxu0
        %v10020 = vadd.f32 %v9979, %v10019
        %v10021 = vpop.f32.mrb[0].mxu0
        %v10022 = vadd.f32 %v9981, %v10021
        %v10023 = vpop.f32.mrb[0].mxu0
        %v10024 = vpop.f32.mrb[0].mxu0
        %10025 = vdwg.mxu0
        %10026 = vmatprep.subr.bf16.mxu0 %v8737
        %10027 = vmatpush1.bf16.msra.mxu0 %v8736
        %10028 = vmatprep.subr.bf16.mxu0 %v8745
        %10029 = vmatpush1.bf16.msra.mxu0 %v8744
        %10030 = vmatprep.subr.bf16.mxu0 %v8753
        %10031 = vmatpush1.bf16.msra.mxu0 %v8752
        %10032 = vmatprep.subr.bf16.mxu0 %v8761
        %10033 = vmatpush1.bf16.msra.mxu0 %v8760
        %10034 = vmatprep.subr.bf16.mxu0 %v8769
        %10035 = vmatpush1.bf16.msra.mxu0 %v8768
        %10036 = vmatprep.subr.bf16.mxu0 %v8777
        %10037 = vmatpush1.bf16.msra.mxu0 %v8776
        %10038 = vmatprep.subr.bf16.mxu0 %v8785
        %10039 = vmatpush1.bf16.msra.mxu0 %v8784
        %10040 = vmatprep.subr.bf16.mxu0 %v8793
        %10041 = vmatpush1.bf16.msra.mxu0 %v8792
        %10042 = vmatprep.subr.bf16.mxu0 %v8801
        %10043 = vmatpush1.bf16.msra.mxu0 %v8800
        %10044 = vmatprep.subr.bf16.mxu0 %v8809
        %10045 = vmatpush1.bf16.msra.mxu0 %v8808
        %10046 = vmatprep.subr.bf16.mxu0 %v8817
        %10047 = vmatpush1.bf16.msra.mxu0 %v8816
        %10048 = vmatprep.subr.bf16.mxu0 %v8825
        %10049 = vmatpush1.bf16.msra.mxu0 %v8824
        %10050 = vmatprep.subr.bf16.mxu0 %v8833
        %10051 = vmatpush1.bf16.msra.mxu0 %v8832
        %10052 = vmatprep.subr.bf16.mxu0 %v8841
        %10053 = vmatpush1.bf16.msra.mxu0 %v8840
        %10054 = vmatprep.subr.bf16.mxu0 %v8849
        %10055 = vmatpush1.bf16.msra.mxu0 %v8848
        %10056 = vmatprep.subr.bf16.mxu0 %v8857
        %10057 = vmatpush1.bf16.msra.mxu0 %v8856
        %10058 = vmatprep.mubr.bf16.mxu0 %v6296
        %10059 = vmatmul.mubr.bf16.gmra.mrb[0].mxu0 %v6295
        %v10060 = vpop.f32.mrb[0].mxu0
        %v10061 = vadd.f32 %v10020, %v10060
        %v10062 = vpop.f32.mrb[0].mxu0
        %v10063 = vadd.f32 %v10022, %v10062
        %v10064 = vpop.f32.mrb[0].mxu0
        %v10065 = vpop.f32.mrb[0].mxu0
        %10066 = vdwg.mxu0
        %v10067 = vmul.f32 %v9569, 0.5
        %v10068 = vmul.f32 %v9571, 0.5
        %v10069 = vmul.f32 %v9733, 0.5
        %v10070 = vmul.f32 %v9735, 0.5
        %v10071 = vmul.f32 %v9897, 0.5
        %v10072 = vmul.f32 %v9899, 0.5
        %v10073 = vmul.f32 %v10061, 0.5
        %v10074 = vmul.f32 %v10063, 0.5
        %v10075 = vmul.f32 %v9569, 0.70710677
        %v10076 = vmul.f32 %v9571, 0.70710677
        %v10077 = vmul.f32 %v9733, 0.70710677
        %v10078 = vmul.f32 %v9735, 0.70710677
        %v10079 = vmul.f32 %v9897, 0.70710677
        %v10080 = vmul.f32 %v9899, 0.70710677
        %v10081 = vmul.f32 %v10061, 0.70710677
        %v10082 = vmul.f32 %v10063, 0.70710677
        %vm10083 = vcmp.ge.f32.partialorder %v10075, 0.0
        %vm10084 = vcmp.ge.f32.partialorder %v10076, 0.0
        %vm10085 = vcmp.ge.f32.partialorder %v10077, 0.0
        %vm10086 = vcmp.ge.f32.partialorder %v10078, 0.0
        %vm10087 = vcmp.ge.f32.partialorder %v10079, 0.0
        %vm10088 = vcmp.ge.f32.partialorder %v10080, 0.0
        %vm10089 = vcmp.ge.f32.partialorder %v10081, 0.0
        %vm10090 = vcmp.ge.f32.partialorder %v10082, 0.0
        %v10091 = vsel %vm10083, 1.0, -1.0
        %v10092 = vsel %vm10084, 1.0, -1.0
        %v10093 = vsel %vm10085, 1.0, -1.0
        %v10094 = vsel %vm10086, 1.0, -1.0
        %v10095 = vsel %vm10087, 1.0, -1.0
        %v10096 = vsel %vm10088, 1.0, -1.0
        %v10097 = vsel %vm10089, 1.0, -1.0
        %v10098 = vsel %vm10090, 1.0, -1.0
        %v10099 = vand.u32 2147483647, %v10075
        %v10100 = vand.u32 2147483647, %v10076
        %v10101 = vand.u32 2147483647, %v10077
        %v10102 = vand.u32 2147483647, %v10078
        %v10103 = vand.u32 2147483647, %v10079
        %v10104 = vand.u32 2147483647, %v10080
        %v10105 = vand.u32 2147483647, %v10081
        %v10106 = vand.u32 2147483647, %v10082
        %v10107 = vmul.f32 %v10099, 0.3275911
        %v10108 = vmul.f32 %v10100, 0.3275911
        %v10109 = vmul.f32 %v10101, 0.3275911
        %v10110 = vmul.f32 %v10102, 0.3275911
        %v10111 = vmul.f32 %v10103, 0.3275911
        %v10112 = vmul.f32 %v10104, 0.3275911
        %v10113 = vmul.f32 %v10105, 0.3275911
        %v10114 = vmul.f32 %v10106, 0.3275911
        %v10115 = vadd.f32 %v10107, 1.0
        %v10116 = vadd.f32 %v10108, 1.0
        %v10117 = vadd.f32 %v10109, 1.0
        %v10118 = vadd.f32 %v10110, 1.0
        %v10119 = vadd.f32 %v10111, 1.0
        %v10120 = vadd.f32 %v10112, 1.0
        %v10121 = vadd.f32 %v10113, 1.0
        %v10122 = vadd.f32 %v10114, 1.0
        %v10123 = vrcp.pop %v10115
        %v10124 = vrcp.pop %v10116
        %v10125 = vrcp.pop %v10117
        %v10126 = vrcp.pop %v10118
        %v10127 = vrcp.pop %v10119
        %v10128 = vrcp.pop %v10120
        %v10129 = vrcp.pop %v10121
        %v10130 = vrcp.pop %v10122
        %v10131 = vmul.f32 %v10123, 1.0614054
        %v10132 = vmul.f32 %v10124, 1.0614054
        %v10133 = vmul.f32 %v10125, 1.0614054
        %v10134 = vmul.f32 %v10126, 1.0614054
        %v10135 = vmul.f32 %v10127, 1.0614054
        %v10136 = vmul.f32 %v10128, 1.0614054
        %v10137 = vmul.f32 %v10129, 1.0614054
        %v10138 = vmul.f32 %v10130, 1.0614054
        %v10139 = vadd.f32 %v10131, -1.4531521
        %v10140 = vadd.f32 %v10132, -1.4531521
        %v10141 = vadd.f32 %v10133, -1.4531521
        %v10142 = vadd.f32 %v10134, -1.4531521
        %v10143 = vadd.f32 %v10135, -1.4531521
        %v10144 = vadd.f32 %v10136, -1.4531521
        %v10145 = vadd.f32 %v10137, -1.4531521
        %v10146 = vadd.f32 %v10138, -1.4531521
        %v10147 = vmul.f32 %v10139, %v10123
        %v10148 = vmul.f32 %v10140, %v10124
        %v10149 = vmul.f32 %v10141, %v10125
        %v10150 = vmul.f32 %v10142, %v10126
        %v10151 = vmul.f32 %v10143, %v10127
        %v10152 = vmul.f32 %v10144, %v10128
        %v10153 = vmul.f32 %v10145, %v10129
        %v10154 = vmul.f32 %v10146, %v10130
        %v10155 = vadd.f32 %v10147, 1.4214138
        %v10156 = vadd.f32 %v10148, 1.4214138
        %v10157 = vadd.f32 %v10149, 1.4214138
        %v10158 = vadd.f32 %v10150, 1.4214138
        %v10159 = vadd.f32 %v10151, 1.4214138
        %v10160 = vadd.f32 %v10152, 1.4214138
        %v10161 = vadd.f32 %v10153, 1.4214138
        %v10162 = vadd.f32 %v10154, 1.4214138
        %v10163 = vmul.f32 %v10155, %v10123
        %v10164 = vmul.f32 %v10156, %v10124
        %v10165 = vmul.f32 %v10157, %v10125
        %v10166 = vmul.f32 %v10158, %v10126
        %v10167 = vmul.f32 %v10159, %v10127
        %v10168 = vmul.f32 %v10160, %v10128
        %v10169 = vmul.f32 %v10161, %v10129
        %v10170 = vmul.f32 %v10162, %v10130
        %v10171 = vadd.f32 %v10163, -0.28449672
        %v10172 = vadd.f32 %v10164, -0.28449672
        %v10173 = vadd.f32 %v10165, -0.28449672
        %v10174 = vadd.f32 %v10166, -0.28449672
        %v10175 = vadd.f32 %v10167, -0.28449672
        %v10176 = vadd.f32 %v10168, -0.28449672
        %v10177 = vadd.f32 %v10169, -0.28449672
        %v10178 = vadd.f32 %v10170, -0.28449672
        %v10179 = vmul.f32 %v10171, %v10123
        %v10180 = vmul.f32 %v10172, %v10124
        %v10181 = vmul.f32 %v10173, %v10125
        %v10182 = vmul.f32 %v10174, %v10126
        %v10183 = vmul.f32 %v10175, %v10127
        %v10184 = vmul.f32 %v10176, %v10128
        %v10185 = vmul.f32 %v10177, %v10129
        %v10186 = vmul.f32 %v10178, %v10130
        %v10187 = vadd.f32 %v10179, 0.2548296
        %v10188 = vadd.f32 %v10180, 0.2548296
        %v10189 = vadd.f32 %v10181, 0.2548296
        %v10190 = vadd.f32 %v10182, 0.2548296
        %v10191 = vadd.f32 %v10183, 0.2548296
        %v10192 = vadd.f32 %v10184, 0.2548296
        %v10193 = vadd.f32 %v10185, 0.2548296
        %v10194 = vadd.f32 %v10186, 0.2548296
        %v10195 = vmul.f32 %v10187, %v10123
        %v10196 = vmul.f32 %v10188, %v10124
        %v10197 = vmul.f32 %v10189, %v10125
        %v10198 = vmul.f32 %v10190, %v10126
        %v10199 = vmul.f32 %v10191, %v10127
        %v10200 = vmul.f32 %v10192, %v10128
        %v10201 = vmul.f32 %v10193, %v10129
        %v10202 = vmul.f32 %v10194, %v10130
        %v10203 = vsub.f32 0.0, %v10099
        %v10204 = vsub.f32 0.0, %v10100
        %v10205 = vsub.f32 0.0, %v10101
        %v10206 = vsub.f32 0.0, %v10102
        %v10207 = vsub.f32 0.0, %v10103
        %v10208 = vsub.f32 0.0, %v10104
        %v10209 = vsub.f32 0.0, %v10105
        %v10210 = vsub.f32 0.0, %v10106
        %v10211 = vmul.f32 %v10203, %v10099
        %v10212 = vmul.f32 %v10204, %v10100
        %v10213 = vmul.f32 %v10205, %v10101
        %v10214 = vmul.f32 %v10206, %v10102
        %v10215 = vmul.f32 %v10207, %v10103
        %v10216 = vmul.f32 %v10208, %v10104
        %v10217 = vmul.f32 %v10209, %v10105
        %v10218 = vmul.f32 %v10210, %v10106
        %v10219 = vmul.f32 %v10211, 1.442695
        %v10220 = vpow.pop %v10219
        %v10221 = vmul.f32 %v10212, 1.442695
        %v10222 = vpow.pop %v10221
        %v10223 = vmul.f32 %v10213, 1.442695
        %v10224 = vpow.pop %v10223
        %v10225 = vmul.f32 %v10214, 1.442695
        %v10226 = vpow.pop %v10225
        %v10227 = vmul.f32 %v10215, 1.442695
        %v10228 = vpow.pop %v10227
        %v10229 = vmul.f32 %v10216, 1.442695
        %v10230 = vpow.pop %v10229
        %v10231 = vmul.f32 %v10217, 1.442695
        %v10232 = vpow.pop %v10231
        %v10233 = vmul.f32 %v10218, 1.442695
        %v10234 = vpow.pop %v10233
        %v10235 = vmul.f32 %v10195, %v10220
        %v10236 = vmul.f32 %v10196, %v10222
        %v10237 = vmul.f32 %v10197, %v10224
        %v10238 = vmul.f32 %v10198, %v10226
        %v10239 = vmul.f32 %v10199, %v10228
        %v10240 = vmul.f32 %v10200, %v10230
        %v10241 = vmul.f32 %v10201, %v10232
        %v10242 = vmul.f32 %v10202, %v10234
        %v10243 = vsub.f32 1.0, %v10235
        %v10244 = vsub.f32 1.0, %v10236
        %v10245 = vsub.f32 1.0, %v10237
        %v10246 = vsub.f32 1.0, %v10238
        %v10247 = vsub.f32 1.0, %v10239
        %v10248 = vsub.f32 1.0, %v10240
        %v10249 = vsub.f32 1.0, %v10241
        %v10250 = vsub.f32 1.0, %v10242
        %v10251 = vmul.f32 %v10091, %v10243
        %v10252 = vmul.f32 %v10092, %v10244
        %v10253 = vmul.f32 %v10093, %v10245
        %v10254 = vmul.f32 %v10094, %v10246
        %v10255 = vmul.f32 %v10095, %v10247
        %v10256 = vmul.f32 %v10096, %v10248
        %v10257 = vmul.f32 %v10097, %v10249
        %v10258 = vmul.f32 %v10098, %v10250
        %v10259 = vadd.f32 %v10251, 1.0
        %v10260 = vadd.f32 %v10252, 1.0
        %v10261 = vadd.f32 %v10253, 1.0
        %v10262 = vadd.f32 %v10254, 1.0
        %v10263 = vadd.f32 %v10255, 1.0
        %v10264 = vadd.f32 %v10256, 1.0
        %v10265 = vadd.f32 %v10257, 1.0
        %v10266 = vadd.f32 %v10258, 1.0
        %v10267 = vmul.f32 %v10067, %v10259
        %v10268 = vmul.f32 %v10068, %v10260
        %v10269 = vmul.f32 %v10069, %v10261
        %v10270 = vmul.f32 %v10070, %v10262
        %v10271 = vmul.f32 %v10071, %v10263
        %v10272 = vmul.f32 %v10072, %v10264
        %v10273 = vmul.f32 %v10073, %v10265
        %v10274 = vmul.f32 %v10074, %v10266
        %v10275 = vpack.c.bf16 %v10267, %v10267
        %v10276 = vpack.c.bf16 %v10268, %v10268
        %v10277 = vpack.c.bf16 %v10269, %v10269
        %v10278 = vpack.c.bf16 %v10270, %v10270
        %v10279 = vpack.c.bf16 %v10271, %v10271
        %v10280 = vpack.c.bf16 %v10272, %v10272
        %v10281 = vpack.c.bf16 %v10273, %v10273
        %v10282 = vpack.c.bf16 %v10274, %v10274
        %v10283 = vld [vmem:[#allocation16] sm:$0xf]
        %v10284 = vld [vmem:[#allocation16 + $0x4] sm:$0xf]
        %v10285 = vld [vmem:[#allocation16 + $0x8] sm:$0xf]
        %v10286 = vld [vmem:[#allocation16 + $0xc] sm:$0xf]
        %v10287 = vld [vmem:[#allocation16 + $0x10] sm:$0xf]
        %v10288 = vld [vmem:[#allocation16 + $0x14] sm:$0xf]
        %v10289 = vld [vmem:[#allocation16 + $0x18] sm:$0xf]
        %v10290 = vld [vmem:[#allocation16 + $0x1c] sm:$0xf]
        %v10291 = vld [vmem:[#allocation16 + $0x20] sm:$0xf]
        %v10292 = vld [vmem:[#allocation16 + $0x24] sm:$0xf]
        %v10293 = vld [vmem:[#allocation16 + $0x28] sm:$0xf]
        %v10294 = vld [vmem:[#allocation16 + $0x2c] sm:$0xf]
        %v10295 = vld [vmem:[#allocation16 + $0x30] sm:$0xf]
        %v10296 = vld [vmem:[#allocation16 + $0x34] sm:$0xf]
        %v10297 = vld [vmem:[#allocation16 + $0x38] sm:$0xf]
        %v10298 = vld [vmem:[#allocation16 + $0x3c] sm:$0xf]
        %v10299 = vld [vmem:[#allocation16 + $0x40] sm:$0xf]
        %v10300 = vld [vmem:[#allocation16 + $0x44] sm:$0xf]
        %v10301 = vld [vmem:[#allocation16 + $0x48] sm:$0xf]
        %v10302 = vld [vmem:[#allocation16 + $0x4c] sm:$0xf]
        %v10303 = vld [vmem:[#allocation16 + $0x50] sm:$0xf]
        %v10304 = vld [vmem:[#allocation16 + $0x54] sm:$0xf]
        %v10305 = vld [vmem:[#allocation16 + $0x58] sm:$0xf]
        %v10306 = vld [vmem:[#allocation16 + $0x5c] sm:$0xf]
        %v10307 = vld [vmem:[#allocation16 + $0x60] sm:$0xf]
        %v10308 = vld [vmem:[#allocation16 + $0x64] sm:$0xf]
        %v10309 = vld [vmem:[#allocation16 + $0x68] sm:$0xf]
        %v10310 = vld [vmem:[#allocation16 + $0x6c] sm:$0xf]
        %v10311 = vld [vmem:[#allocation16 + $0x70] sm:$0xf]
        %v10312 = vld [vmem:[#allocation16 + $0x74] sm:$0xf]
        %v10313 = vld [vmem:[#allocation16 + $0x78] sm:$0xf]
        %v10314 = vld [vmem:[#allocation16 + $0x7c] sm:$0xf]
        %v10315 = vld [vmem:[#allocation16 + $0x80] sm:$0xf]
        %v10316 = vld [vmem:[#allocation16 + $0x84] sm:$0xf]
        %v10317 = vld [vmem:[#allocation16 + $0x88] sm:$0xf]
        %v10318 = vld [vmem:[#allocation16 + $0x8c] sm:$0xf]
        %v10319 = vld [vmem:[#allocation16 + $0x90] sm:$0xf]
        %v10320 = vld [vmem:[#allocation16 + $0x94] sm:$0xf]
        %v10321 = vld [vmem:[#allocation16 + $0x98] sm:$0xf]
        %v10322 = vld [vmem:[#allocation16 + $0x9c] sm:$0xf]
        %v10323 = vld [vmem:[#allocation16 + $0xa0] sm:$0xf]
        %v10324 = vld [vmem:[#allocation16 + $0xa4] sm:$0xf]
        %v10325 = vld [vmem:[#allocation16 + $0xa8] sm:$0xf]
        %v10326 = vld [vmem:[#allocation16 + $0xac] sm:$0xf]
        %v10327 = vld [vmem:[#allocation16 + $0xb0] sm:$0xf]
        %v10328 = vld [vmem:[#allocation16 + $0xb4] sm:$0xf]
        %v10329 = vld [vmem:[#allocation16 + $0xb8] sm:$0xf]
        %v10330 = vld [vmem:[#allocation16 + $0xbc] sm:$0xf]
        %v10331 = vld [vmem:[#allocation16 + $0xc0] sm:$0xf]
        %v10332 = vld [vmem:[#allocation16 + $0xc4] sm:$0xf]
        %v10333 = vld [vmem:[#allocation16 + $0xc8] sm:$0xf]
        %v10334 = vld [vmem:[#allocation16 + $0xcc] sm:$0xf]
        %v10335 = vld [vmem:[#allocation16 + $0xd0] sm:$0xf]
        %v10336 = vld [vmem:[#allocation16 + $0xd4] sm:$0xf]
        %v10337 = vld [vmem:[#allocation16 + $0xd8] sm:$0xf]
        %v10338 = vld [vmem:[#allocation16 + $0xdc] sm:$0xf]
        %v10339 = vld [vmem:[#allocation16 + $0xe0] sm:$0xf]
        %v10340 = vld [vmem:[#allocation16 + $0xe4] sm:$0xf]
        %v10341 = vld [vmem:[#allocation16 + $0xe8] sm:$0xf]
        %v10342 = vld [vmem:[#allocation16 + $0xec] sm:$0xf]
        %v10343 = vld [vmem:[#allocation16 + $0xf0] sm:$0xf]
        %v10344 = vld [vmem:[#allocation16 + $0xf4] sm:$0xf]
        %v10345 = vld [vmem:[#allocation16 + $0xf8] sm:$0xf]
        %v10346 = vld [vmem:[#allocation16 + $0xfc] sm:$0xf]
        %v10347 = vld [vmem:[#allocation16 + $0x100] sm:$0xf]
        %v10348 = vld [vmem:[#allocation16 + $0x104] sm:$0xf]
        %v10349 = vld [vmem:[#allocation16 + $0x108] sm:$0xf]
        %v10350 = vld [vmem:[#allocation16 + $0x10c] sm:$0xf]
        %v10351 = vld [vmem:[#allocation16 + $0x110] sm:$0xf]
        %v10352 = vld [vmem:[#allocation16 + $0x114] sm:$0xf]
        %v10353 = vld [vmem:[#allocation16 + $0x118] sm:$0xf]
        %v10354 = vld [vmem:[#allocation16 + $0x11c] sm:$0xf]
        %v10355 = vld [vmem:[#allocation16 + $0x120] sm:$0xf]
        %v10356 = vld [vmem:[#allocation16 + $0x124] sm:$0xf]
        %v10357 = vld [vmem:[#allocation16 + $0x128] sm:$0xf]
        %v10358 = vld [vmem:[#allocation16 + $0x12c] sm:$0xf]
        %v10359 = vld [vmem:[#allocation16 + $0x130] sm:$0xf]
        %v10360 = vld [vmem:[#allocation16 + $0x134] sm:$0xf]
        %v10361 = vld [vmem:[#allocation16 + $0x138] sm:$0xf]
        %v10362 = vld [vmem:[#allocation16 + $0x13c] sm:$0xf]
        %v10363 = vld [vmem:[#allocation16 + $0x140] sm:$0xf]
        %v10364 = vld [vmem:[#allocation16 + $0x144] sm:$0xf]
        %v10365 = vld [vmem:[#allocation16 + $0x148] sm:$0xf]
        %v10366 = vld [vmem:[#allocation16 + $0x14c] sm:$0xf]
        %v10367 = vld [vmem:[#allocation16 + $0x150] sm:$0xf]
        %v10368 = vld [vmem:[#allocation16 + $0x154] sm:$0xf]
        %v10369 = vld [vmem:[#allocation16 + $0x158] sm:$0xf]
        %v10370 = vld [vmem:[#allocation16 + $0x15c] sm:$0xf]
        %v10371 = vld [vmem:[#allocation16 + $0x160] sm:$0xf]
        %v10372 = vld [vmem:[#allocation16 + $0x164] sm:$0xf]
        %v10373 = vld [vmem:[#allocation16 + $0x168] sm:$0xf]
        %v10374 = vld [vmem:[#allocation16 + $0x16c] sm:$0xf]
        %v10375 = vld [vmem:[#allocation16 + $0x170] sm:$0xf]
        %v10376 = vld [vmem:[#allocation16 + $0x174] sm:$0xf]
        %v10377 = vld [vmem:[#allocation16 + $0x178] sm:$0xf]
        %v10378 = vld [vmem:[#allocation16 + $0x17c] sm:$0xf]
        %v10379 = vld [vmem:[#allocation16 + $0x180] sm:$0xf]
        %v10380 = vld [vmem:[#allocation16 + $0x184] sm:$0xf]
        %v10381 = vld [vmem:[#allocation16 + $0x188] sm:$0xf]
        %v10382 = vld [vmem:[#allocation16 + $0x18c] sm:$0xf]
        %v10383 = vld [vmem:[#allocation16 + $0x190] sm:$0xf]
        %v10384 = vld [vmem:[#allocation16 + $0x194] sm:$0xf]
        %v10385 = vld [vmem:[#allocation16 + $0x198] sm:$0xf]
        %v10386 = vld [vmem:[#allocation16 + $0x19c] sm:$0xf]
        %v10387 = vld [vmem:[#allocation16 + $0x1a0] sm:$0xf]
        %v10388 = vld [vmem:[#allocation16 + $0x1a4] sm:$0xf]
        %v10389 = vld [vmem:[#allocation16 + $0x1a8] sm:$0xf]
        %v10390 = vld [vmem:[#allocation16 + $0x1ac] sm:$0xf]
        %v10391 = vld [vmem:[#allocation16 + $0x1b0] sm:$0xf]
        %v10392 = vld [vmem:[#allocation16 + $0x1b4] sm:$0xf]
        %v10393 = vld [vmem:[#allocation16 + $0x1b8] sm:$0xf]
        %v10394 = vld [vmem:[#allocation16 + $0x1bc] sm:$0xf]
        %v10395 = vld [vmem:[#allocation16 + $0x1c0] sm:$0xf]
        %v10396 = vld [vmem:[#allocation16 + $0x1c4] sm:$0xf]
        %v10397 = vld [vmem:[#allocation16 + $0x1c8] sm:$0xf]
        %v10398 = vld [vmem:[#allocation16 + $0x1cc] sm:$0xf]
        %v10399 = vld [vmem:[#allocation16 + $0x1d0] sm:$0xf]
        %v10400 = vld [vmem:[#allocation16 + $0x1d4] sm:$0xf]
        %v10401 = vld [vmem:[#allocation16 + $0x1d8] sm:$0xf]
        %v10402 = vld [vmem:[#allocation16 + $0x1dc] sm:$0xf]
        %v10403 = vld [vmem:[#allocation16 + $0x1e0] sm:$0xf]
        %v10404 = vld [vmem:[#allocation16 + $0x1e4] sm:$0xf]
        %v10405 = vld [vmem:[#allocation16 + $0x1e8] sm:$0xf]
        %v10406 = vld [vmem:[#allocation16 + $0x1ec] sm:$0xf]
        %v10407 = vld [vmem:[#allocation16 + $0x1f0] sm:$0xf]
        %v10408 = vld [vmem:[#allocation16 + $0x1f4] sm:$0xf]
        %v10409 = vld [vmem:[#allocation16 + $0x1f8] sm:$0xf]
        %v10410 = vld [vmem:[#allocation16 + $0x1fc] sm:$0xf]
        %v10411 = vld [vmem:[#allocation17] sm:$0x1]
        %v10540 = vunpack.c.l.b16 %v10283
        %v10541 = vunpack.c.l.b16 %v10284
        %v10542 = vunpack.c.l.b16 %v10285
        %v10543 = vunpack.c.l.b16 %v10286
        %v10544 = vunpack.c.l.b16 %v10287
        %v10545 = vunpack.c.l.b16 %v10288
        %v10546 = vunpack.c.l.b16 %v10289
        %v10547 = vunpack.c.l.b16 %v10290
        %v10548 = vunpack.c.l.b16 %v10291
        %v10549 = vunpack.c.l.b16 %v10292
        %v10550 = vunpack.c.l.b16 %v10293
        %v10551 = vunpack.c.l.b16 %v10294
        %v10552 = vunpack.c.l.b16 %v10295
        %v10553 = vunpack.c.l.b16 %v10296
        %v10554 = vunpack.c.l.b16 %v10297
        %v10555 = vunpack.c.l.b16 %v10298
        %v10556 = vunpack.c.l.b16 %v10299
        %v10557 = vunpack.c.l.b16 %v10300
        %v10558 = vunpack.c.l.b16 %v10301
        %v10559 = vunpack.c.l.b16 %v10302
        %v10560 = vunpack.c.l.b16 %v10303
        %v10561 = vunpack.c.l.b16 %v10304
        %v10562 = vunpack.c.l.b16 %v10305
        %v10563 = vunpack.c.l.b16 %v10306
        %v10564 = vunpack.c.l.b16 %v10307
        %v10565 = vunpack.c.l.b16 %v10308
        %v10566 = vunpack.c.l.b16 %v10309
        %v10567 = vunpack.c.l.b16 %v10310
        %v10568 = vunpack.c.l.b16 %v10311
        %v10569 = vunpack.c.l.b16 %v10312
        %v10570 = vunpack.c.l.b16 %v10313
        %v10571 = vunpack.c.l.b16 %v10314
        %v10572 = vunpack.c.l.b16 %v10315
        %v10573 = vunpack.c.l.b16 %v10316
        %v10574 = vunpack.c.l.b16 %v10317
        %v10575 = vunpack.c.l.b16 %v10318
        %v10576 = vunpack.c.l.b16 %v10319
        %v10577 = vunpack.c.l.b16 %v10320
        %v10578 = vunpack.c.l.b16 %v10321
        %v10579 = vunpack.c.l.b16 %v10322
        %v10580 = vunpack.c.l.b16 %v10323
        %v10581 = vunpack.c.l.b16 %v10324
        %v10582 = vunpack.c.l.b16 %v10325
        %v10583 = vunpack.c.l.b16 %v10326
        %v10584 = vunpack.c.l.b16 %v10327
        %v10585 = vunpack.c.l.b16 %v10328
        %v10586 = vunpack.c.l.b16 %v10329
        %v10587 = vunpack.c.l.b16 %v10330
        %v10588 = vunpack.c.l.b16 %v10331
        %v10589 = vunpack.c.l.b16 %v10332
        %v10590 = vunpack.c.l.b16 %v10333
        %v10591 = vunpack.c.l.b16 %v10334
        %v10592 = vunpack.c.l.b16 %v10335
        %v10593 = vunpack.c.l.b16 %v10336
        %v10594 = vunpack.c.l.b16 %v10337
        %v10595 = vunpack.c.l.b16 %v10338
        %v10596 = vunpack.c.l.b16 %v10339
        %v10597 = vunpack.c.l.b16 %v10340
        %v10598 = vunpack.c.l.b16 %v10341
        %v10599 = vunpack.c.l.b16 %v10342
        %v10600 = vunpack.c.l.b16 %v10343
        %v10601 = vunpack.c.l.b16 %v10344
        %v10602 = vunpack.c.l.b16 %v10345
        %v10603 = vunpack.c.l.b16 %v10346
        %v10604 = vunpack.c.l.b16 %v10347
        %v10605 = vunpack.c.l.b16 %v10348
        %v10606 = vunpack.c.l.b16 %v10349
        %v10607 = vunpack.c.l.b16 %v10350
        %v10608 = vunpack.c.l.b16 %v10351
        %v10609 = vunpack.c.l.b16 %v10352
        %v10610 = vunpack.c.l.b16 %v10353
        %v10611 = vunpack.c.l.b16 %v10354
        %v10612 = vunpack.c.l.b16 %v10355
        %v10613 = vunpack.c.l.b16 %v10356
        %v10614 = vunpack.c.l.b16 %v10357
        %v10615 = vunpack.c.l.b16 %v10358
        %v10616 = vunpack.c.l.b16 %v10359
        %v10617 = vunpack.c.l.b16 %v10360
        %v10618 = vunpack.c.l.b16 %v10361
        %v10619 = vunpack.c.l.b16 %v10362
        %v10620 = vunpack.c.l.b16 %v10363
        %v10621 = vunpack.c.l.b16 %v10364
        %v10622 = vunpack.c.l.b16 %v10365
        %v10623 = vunpack.c.l.b16 %v10366
        %v10624 = vunpack.c.l.b16 %v10367
        %v10625 = vunpack.c.l.b16 %v10368
        %v10626 = vunpack.c.l.b16 %v10369
        %v10627 = vunpack.c.l.b16 %v10370
        %v10628 = vunpack.c.l.b16 %v10371
        %v10629 = vunpack.c.l.b16 %v10372
        %v10630 = vunpack.c.l.b16 %v10373
        %v10631 = vunpack.c.l.b16 %v10374
        %v10632 = vunpack.c.l.b16 %v10375
        %v10633 = vunpack.c.l.b16 %v10376
        %v10634 = vunpack.c.l.b16 %v10377
        %v10635 = vunpack.c.l.b16 %v10378
        %v10636 = vunpack.c.l.b16 %v10379
        %v10637 = vunpack.c.l.b16 %v10380
        %v10638 = vunpack.c.l.b16 %v10381
        %v10639 = vunpack.c.l.b16 %v10382
        %v10640 = vunpack.c.l.b16 %v10383
        %v10641 = vunpack.c.l.b16 %v10384
        %v10642 = vunpack.c.l.b16 %v10385
        %v10643 = vunpack.c.l.b16 %v10386
        %v10644 = vunpack.c.l.b16 %v10387
        %v10645 = vunpack.c.l.b16 %v10388
        %v10646 = vunpack.c.l.b16 %v10389
        %v10647 = vunpack.c.l.b16 %v10390
        %v10648 = vunpack.c.l.b16 %v10391
        %v10649 = vunpack.c.l.b16 %v10392
        %v10650 = vunpack.c.l.b16 %v10393
        %v10651 = vunpack.c.l.b16 %v10394
        %v10652 = vunpack.c.l.b16 %v10395
        %v10653 = vunpack.c.l.b16 %v10396
        %v10654 = vunpack.c.l.b16 %v10397
        %v10655 = vunpack.c.l.b16 %v10398
        %v10656 = vunpack.c.l.b16 %v10399
        %v10657 = vunpack.c.l.b16 %v10400
        %v10658 = vunpack.c.l.b16 %v10401
        %v10659 = vunpack.c.l.b16 %v10402
        %v10660 = vunpack.c.l.b16 %v10403
        %v10661 = vunpack.c.l.b16 %v10404
        %v10662 = vunpack.c.l.b16 %v10405
        %v10663 = vunpack.c.l.b16 %v10406
        %v10664 = vunpack.c.l.b16 %v10407
        %v10665 = vunpack.c.l.b16 %v10408
        %v10666 = vunpack.c.l.b16 %v10409
        %v10667 = vunpack.c.l.b16 %v10410
        %v10668 = vpack.c.b16 %v10541, %v10540
        %v10669 = vpack.c.b16 %v10543, %v10542
        %v10670 = vpack.c.b16 %v10545, %v10544
        %v10671 = vpack.c.b16 %v10547, %v10546
        %v10672 = vpack.c.b16 %v10549, %v10548
        %v10673 = vpack.c.b16 %v10551, %v10550
        %v10674 = vpack.c.b16 %v10553, %v10552
        %v10675 = vpack.c.b16 %v10555, %v10554
        %v10676 = vpack.c.b16 %v10557, %v10556
        %v10677 = vpack.c.b16 %v10559, %v10558
        %v10678 = vpack.c.b16 %v10561, %v10560
        %v10679 = vpack.c.b16 %v10563, %v10562
        %v10680 = vpack.c.b16 %v10565, %v10564
        %v10681 = vpack.c.b16 %v10567, %v10566
        %v10682 = vpack.c.b16 %v10569, %v10568
        %v10683 = vpack.c.b16 %v10571, %v10570
        %v10684 = vpack.c.b16 %v10573, %v10572
        %v10685 = vpack.c.b16 %v10575, %v10574
        %v10686 = vpack.c.b16 %v10577, %v10576
        %v10687 = vpack.c.b16 %v10579, %v10578
        %v10688 = vpack.c.b16 %v10581, %v10580
        %v10689 = vpack.c.b16 %v10583, %v10582
        %v10690 = vpack.c.b16 %v10585, %v10584
        %v10691 = vpack.c.b16 %v10587, %v10586
        %v10692 = vpack.c.b16 %v10589, %v10588
        %v10693 = vpack.c.b16 %v10591, %v10590
        %v10694 = vpack.c.b16 %v10593, %v10592
        %v10695 = vpack.c.b16 %v10595, %v10594
        %v10696 = vpack.c.b16 %v10597, %v10596
        %v10697 = vpack.c.b16 %v10599, %v10598
        %v10698 = vpack.c.b16 %v10601, %v10600
        %v10699 = vpack.c.b16 %v10603, %v10602
        %v10700 = vpack.c.b16 %v10605, %v10604
        %v10701 = vpack.c.b16 %v10607, %v10606
        %v10702 = vpack.c.b16 %v10609, %v10608
        %v10703 = vpack.c.b16 %v10611, %v10610
        %v10704 = vpack.c.b16 %v10613, %v10612
        %v10705 = vpack.c.b16 %v10615, %v10614
        %v10706 = vpack.c.b16 %v10617, %v10616
        %v10707 = vpack.c.b16 %v10619, %v10618
        %v10708 = vpack.c.b16 %v10621, %v10620
        %v10709 = vpack.c.b16 %v10623, %v10622
        %v10710 = vpack.c.b16 %v10625, %v10624
        %v10711 = vpack.c.b16 %v10627, %v10626
        %v10712 = vpack.c.b16 %v10629, %v10628
        %v10713 = vpack.c.b16 %v10631, %v10630
        %v10714 = vpack.c.b16 %v10633, %v10632
        %v10715 = vpack.c.b16 %v10635, %v10634
        %v10716 = vpack.c.b16 %v10637, %v10636
        %v10717 = vpack.c.b16 %v10639, %v10638
        %v10718 = vpack.c.b16 %v10641, %v10640
        %v10719 = vpack.c.b16 %v10643, %v10642
        %v10720 = vpack.c.b16 %v10645, %v10644
        %v10721 = vpack.c.b16 %v10647, %v10646
        %v10722 = vpack.c.b16 %v10649, %v10648
        %v10723 = vpack.c.b16 %v10651, %v10650
        %v10724 = vpack.c.b16 %v10653, %v10652
        %v10725 = vpack.c.b16 %v10655, %v10654
        %v10726 = vpack.c.b16 %v10657, %v10656
        %v10727 = vpack.c.b16 %v10659, %v10658
        %v10728 = vpack.c.b16 %v10661, %v10660
        %v10729 = vpack.c.b16 %v10663, %v10662
        %v10730 = vpack.c.b16 %v10665, %v10664
        %v10731 = vpack.c.b16 %v10667, %v10666
        %10796 = vmatprep.subr.bf16.mxu0 0
        %10797 = vmatpush1.bf16.msra.mxu0 %v10668
        %10798 = vmatprep.subr.bf16.mxu0 0
        %10799 = vmatpush1.bf16.msra.mxu0 %v10669
        %10800 = vmatprep.subr.bf16.mxu0 0
        %10801 = vmatpush1.bf16.msra.mxu0 %v10670
        %10802 = vmatprep.subr.bf16.mxu0 0
        %10803 = vmatpush1.bf16.msra.mxu0 %v10671
        %10804 = vmatprep.subr.bf16.mxu0 0
        %10805 = vmatpush1.bf16.msra.mxu0 %v10672
        %10806 = vmatprep.subr.bf16.mxu0 0
        %10807 = vmatpush1.bf16.msra.mxu0 %v10673
        %10808 = vmatprep.subr.bf16.mxu0 0
        %10809 = vmatpush1.bf16.msra.mxu0 %v10674
        %10810 = vmatprep.subr.bf16.mxu0 0
        %10811 = vmatpush1.bf16.msra.mxu0 %v10675
        %10812 = vmatprep.subr.bf16.mxu0 0
        %10813 = vmatpush1.bf16.msra.mxu0 %v10676
        %10814 = vmatprep.subr.bf16.mxu0 0
        %10815 = vmatpush1.bf16.msra.mxu0 %v10677
        %10816 = vmatprep.subr.bf16.mxu0 0
        %10817 = vmatpush1.bf16.msra.mxu0 %v10678
        %10818 = vmatprep.subr.bf16.mxu0 0
        %10819 = vmatpush1.bf16.msra.mxu0 %v10679
        %10820 = vmatprep.subr.bf16.mxu0 0
        %10821 = vmatpush1.bf16.msra.mxu0 %v10680
        %10822 = vmatprep.subr.bf16.mxu0 0
        %10823 = vmatpush1.bf16.msra.mxu0 %v10681
        %10824 = vmatprep.subr.bf16.mxu0 0
        %10825 = vmatpush1.bf16.msra.mxu0 %v10682
        %10826 = vmatprep.subr.bf16.mxu0 0
        %10827 = vmatpush1.bf16.msra.mxu0 %v10683
        %10828 = vmatprep.mubr.bf16.mxu0 %v10276
        %10829 = vmatmul.mubr.bf16.gmra.mrb[0].mxu0 %v10275
        %v10830 = vpop.f32.mrb[0].mxu0
        %v10831 = vadd.f32 %v10411, %v10830
        %v10832 = vpop.f32.mrb[0].mxu0
        %v10833 = vpop.f32.mrb[0].mxu0
        %v10834 = vpop.f32.mrb[0].mxu0
        %10835 = vdwg.mxu0
        %10836 = vmatprep.subr.bf16.mxu0 0
        %10837 = vmatpush1.bf16.msra.mxu0 %v10684
        %10838 = vmatprep.subr.bf16.mxu0 0
        %10839 = vmatpush1.bf16.msra.mxu0 %v10685
        %10840 = vmatprep.subr.bf16.mxu0 0
        %10841 = vmatpush1.bf16.msra.mxu0 %v10686
        %10842 = vmatprep.subr.bf16.mxu0 0
        %10843 = vmatpush1.bf16.msra.mxu0 %v10687
        %10844 = vmatprep.subr.bf16.mxu0 0
        %10845 = vmatpush1.bf16.msra.mxu0 %v10688
        %10846 = vmatprep.subr.bf16.mxu0 0
        %10847 = vmatpush1.bf16.msra.mxu0 %v10689
        %10848 = vmatprep.subr.bf16.mxu0 0
        %10849 = vmatpush1.bf16.msra.mxu0 %v10690
        %10850 = vmatprep.subr.bf16.mxu0 0
        %10851 = vmatpush1.bf16.msra.mxu0 %v10691
        %10852 = vmatprep.subr.bf16.mxu0 0
        %10853 = vmatpush1.bf16.msra.mxu0 %v10692
        %10854 = vmatprep.subr.bf16.mxu0 0
        %10855 = vmatpush1.bf16.msra.mxu0 %v10693
        %10856 = vmatprep.subr.bf16.mxu0 0
        %10857 = vmatpush1.bf16.msra.mxu0 %v10694
        %10858 = vmatprep.subr.bf16.mxu0 0
        %10859 = vmatpush1.bf16.msra.mxu0 %v10695
        %10860 = vmatprep.subr.bf16.mxu0 0
        %10861 = vmatpush1.bf16.msra.mxu0 %v10696
        %10862 = vmatprep.subr.bf16.mxu0 0
        %10863 = vmatpush1.bf16.msra.mxu0 %v10697
        %10864 = vmatprep.subr.bf16.mxu0 0
        %10865 = vmatpush1.bf16.msra.mxu0 %v10698
        %10866 = vmatprep.subr.bf16.mxu0 0
        %10867 = vmatpush1.bf16.msra.mxu0 %v10699
        %10868 = vmatprep.mubr.bf16.mxu0 %v10278
        %10869 = vmatmul.mubr.bf16.gmra.mrb[0].mxu0 %v10277
        %v10870 = vpop.f32.mrb[0].mxu0
        %v10871 = vadd.f32 %v10831, %v10870
        %v10872 = vpop.f32.mrb[0].mxu0
        %v10873 = vpop.f32.mrb[0].mxu0
        %v10874 = vpop.f32.mrb[0].mxu0
        %10875 = vdwg.mxu0
        %10876 = vmatprep.subr.bf16.mxu0 0
        %10877 = vmatpush1.bf16.msra.mxu0 %v10700
        %10878 = vmatprep.subr.bf16.mxu0 0
        %10879 = vmatpush1.bf16.msra.mxu0 %v10701
        %10880 = vmatprep.subr.bf16.mxu0 0
        %10881 = vmatpush1.bf16.msra.mxu0 %v10702
        %10882 = vmatprep.subr.bf16.mxu0 0
        %10883 = vmatpush1.bf16.msra.mxu0 %v10703
        %10884 = vmatprep.subr.bf16.mxu0 0
        %10885 = vmatpush1.bf16.msra.mxu0 %v10704
        %10886 = vmatprep.subr.bf16.mxu0 0
        %10887 = vmatpush1.bf16.msra.mxu0 %v10705
        %10888 = vmatprep.subr.bf16.mxu0 0
        %10889 = vmatpush1.bf16.msra.mxu0 %v10706
        %10890 = vmatprep.subr.bf16.mxu0 0
        %10891 = vmatpush1.bf16.msra.mxu0 %v10707
        %10892 = vmatprep.subr.bf16.mxu0 0
        %10893 = vmatpush1.bf16.msra.mxu0 %v10708
        %10894 = vmatprep.subr.bf16.mxu0 0
        %10895 = vmatpush1.bf16.msra.mxu0 %v10709
        %10896 = vmatprep.subr.bf16.mxu0 0
        %10897 = vmatpush1.bf16.msra.mxu0 %v10710
        %10898 = vmatprep.subr.bf16.mxu0 0
        %10899 = vmatpush1.bf16.msra.mxu0 %v10711
        %10900 = vmatprep.subr.bf16.mxu0 0
        %10901 = vmatpush1.bf16.msra.mxu0 %v10712
        %10902 = vmatprep.subr.bf16.mxu0 0
        %10903 = vmatpush1.bf16.msra.mxu0 %v10713
        %10904 = vmatprep.subr.bf16.mxu0 0
        %10905 = vmatpush1.bf16.msra.mxu0 %v10714
        %10906 = vmatprep.subr.bf16.mxu0 0
        %10907 = vmatpush1.bf16.msra.mxu0 %v10715
        %10908 = vmatprep.mubr.bf16.mxu0 %v10280
        %10909 = vmatmul.mubr.bf16.gmra.mrb[0].mxu0 %v10279
        %v10910 = vpop.f32.mrb[0].mxu0
        %v10911 = vadd.f32 %v10871, %v10910
        %v10912 = vpop.f32.mrb[0].mxu0
        %v10913 = vpop.f32.mrb[0].mxu0
        %v10914 = vpop.f32.mrb[0].mxu0
        %10915 = vdwg.mxu0
        %10916 = vmatprep.subr.bf16.mxu0 0
        %10917 = vmatpush1.bf16.msra.mxu0 %v10716
        %10918 = vmatprep.subr.bf16.mxu0 0
        %10919 = vmatpush1.bf16.msra.mxu0 %v10717
        %10920 = vmatprep.subr.bf16.mxu0 0
        %10921 = vmatpush1.bf16.msra.mxu0 %v10718
        %10922 = vmatprep.subr.bf16.mxu0 0
        %10923 = vmatpush1.bf16.msra.mxu0 %v10719
        %10924 = vmatprep.subr.bf16.mxu0 0
        %10925 = vmatpush1.bf16.msra.mxu0 %v10720
        %10926 = vmatprep.subr.bf16.mxu0 0
        %10927 = vmatpush1.bf16.msra.mxu0 %v10721
        %10928 = vmatprep.subr.bf16.mxu0 0
        %10929 = vmatpush1.bf16.msra.mxu0 %v10722
        %10930 = vmatprep.subr.bf16.mxu0 0
        %10931 = vmatpush1.bf16.msra.mxu0 %v10723
        %10932 = vmatprep.subr.bf16.mxu0 0
        %10933 = vmatpush1.bf16.msra.mxu0 %v10724
        %10934 = vmatprep.subr.bf16.mxu0 0
        %10935 = vmatpush1.bf16.msra.mxu0 %v10725
        %10936 = vmatprep.subr.bf16.mxu0 0
        %10937 = vmatpush1.bf16.msra.mxu0 %v10726
        %10938 = vmatprep.subr.bf16.mxu0 0
        %10939 = vmatpush1.bf16.msra.mxu0 %v10727
        %10940 = vmatprep.subr.bf16.mxu0 0
        %10941 = vmatpush1.bf16.msra.mxu0 %v10728
        %10942 = vmatprep.subr.bf16.mxu0 0
        %10943 = vmatpush1.bf16.msra.mxu0 %v10729
        %10944 = vmatprep.subr.bf16.mxu0 0
        %10945 = vmatpush1.bf16.msra.mxu0 %v10730
        %10946 = vmatprep.subr.bf16.mxu0 0
        %10947 = vmatpush1.bf16.msra.mxu0 %v10731
        %10948 = vmatprep.mubr.bf16.mxu0 %v10282
        %10949 = vmatmul.mubr.bf16.gmra.mrb[0].mxu0 %v10281
        %v10950 = vpop.f32.mrb[0].mxu0
        %v10951 = vadd.f32 %v10911, %v10950
        %v10952 = vpop.f32.mrb[0].mxu0
        %v10953 = vpop.f32.mrb[0].mxu0
        %v10954 = vpop.f32.mrb[0].mxu0
        %10955 = vdwg.mxu0
        %v10956 = vmul.f32 %v10951, 0.5
        %v10957 = vmul.f32 %v10951, 0.70710677
        %vm10958 = vcmp.ge.f32.partialorder %v10957, 0.0
        %v10959 = vsel %vm10958, 1.0, -1.0
        %v10960 = vand.u32 2147483647, %v10957
        %v10961 = vmul.f32 %v10960, 0.3275911
        %v10962 = vadd.f32 %v10961, 1.0
        %v10963 = vrcp.pop %v10962
        %v10964 = vmul.f32 %v10963, 1.0614054
        %v10965 = vadd.f32 %v10964, -1.4531521
        %v10966 = vmul.f32 %v10965, %v10963
        %v10967 = vadd.f32 %v10966, 1.4214138
        %v10968 = vmul.f32 %v10967, %v10963
        %v10969 = vadd.f32 %v10968, -0.28449672
        %v10970 = vmul.f32 %v10969, %v10963
        %v10971 = vadd.f32 %v10970, 0.2548296
        %v10972 = vmul.f32 %v10971, %v10963
        %v10973 = vsub.f32 0.0, %v10960
        %v10974 = vmul.f32 %v10973, %v10960
        %v10975 = vmul.f32 %v10974, 1.442695
        %v10976 = vpow.pop %v10975
        %v10977 = vmul.f32 %v10972, %v10976
        %v10978 = vsub.f32 1.0, %v10977
        %v10979 = vmul.f32 %v10959, %v10978
        %v10980 = vadd.f32 %v10979, 1.0
        %v10981 = vmul.f32 %v10956, %v10980
        %10982 = vst [vmem:[%s516] sm:$0x1] %v10981
        %s10983 = sand.u32 %s275, 1
        %s10984 = scalar_lea.sflag [#allocation4], %s10983
        %s10985 = sand.u32 %s275, 1
        %s10986 = scalar_lea.vmem [#allocation19], %s10985
        // Predicated region
        $region105: #{classification_head_forward.1} parent=63 // pred_check
          %p10987 = pneg %p285
        $region106: #{classification_head_forward.1} parent=63 // pred_check_branch
          %10989 = sbr.rel (%p10987) target = $region108
        $region107: #{classification_head_forward.1} parent=63 // pred_region
          %s10991 = ssub.s32 16, 16
          %10992 = vsyncadd %s10984, %s10991
          %s10993 = smul.addr %s31, 16
          %s10994 = scalar_lea.hbm %s11, %s10993
          %s10996 = sshll.u32 %s10986, 4
          %s10997 = int_to_ptr.vmem [resolvable:$true] %s10996
          %10999 = dma.vmem_to_hbm [thread:$0]  %s10997, 16, %s10994, %s10984
        $region108: #{classification_head_forward.1} parent=63 // pred_fallthru
          _
      $region64: #{classification_head_forward.1} parent=5 // pred_fallthru
        _
      %p11000 = scmp.le.s32.totalorder 2, %s26
      // Predicated region
      $region109: #{classification_head_forward.1} parent=5 // pred_check
        %p11001 = pneg %p11000
      $region110: #{classification_head_forward.1} parent=5 // pred_check_branch
        %11003 = sbr.rel (%p11001) target = $region112
      $region111: #{classification_head_forward.1} parent=5 // pred_region
        %s11004 = ssub.s32 %s26, 2
        // Predicated region
        $region113: #{classification_head_forward.1} parent=111 // pred_check
          %p11005 = pneg %p291
        $region114: #{classification_head_forward.1} parent=111 // pred_check_branch
          %11007 = sbr.rel (%p11005) target = $region116
        $region115: #{classification_head_forward.1} parent=111 // pred_region
          %s11008 = sand.u32 %s276, 1
          %s11009 = scalar_lea.sflag [#allocation4], %s11008
          %s11010 = sand.u32 %s276, 1
          %s11011 = scalar_lea.vmem [#allocation19], %s11010
          %11012 = dma.done %s11009, 16
        $region116: #{classification_head_forward.1} parent=111 // pred_fallthru
          _
      $region112: #{classification_head_forward.1} parent=5 // pred_fallthru
        _
    $region6: #{classification_head_forward.1} parent=1 // loop_footer
      %s30 = sadd.s32 1, %s26
    $region7: #{classification_head_forward.1} parent=1 // loop_footer_branch
      %25 = sbr.rel target = $region3
    $region8: #{classification_head_forward.1} parent=1 // loop_exit
      _
    %11013 = vsyncpa [#allocation3], 1
    %s11014 = scalar_lea.sflag [#allocation3], 1
    %11015 = vsyncpa %s11014, 1
    %11016 = vsyncpa [#allocation6], 1
    %11017 = vsyncpa [#allocation9], 1
    %11018 = vsyncpa [#allocation12], 1
    %11019 = vsyncpa [#allocation15], 1
    %11020 = vsyncpa [#allocation18], 1
    %11021 = vsyncpa [#allocation4], 1
    %s11022 = scalar_lea.sflag [#allocation4], 1
    %11023 = vsyncpa %s11022, 1

</llo_original>
